<compile_context>
chip_gen: v7x
topology: tpu7x:2x2x1
jax: 0.10.0
libtpu: 0.0.40
codegen_flags: <defaults>
</compile_context>

<pallas_src>
import jax
import jax.numpy as jnp
from jax.experimental import pallas as pl
from jax.experimental.pallas import tpu as pltpu

# ---- scaled-down ViT config (same architecture as vit_base_patch16_224, tiny sizes) ----
PATCH = 8
IMG = 32
IN_CHANS = 3
EMBED = 64
DEPTH = 2
HEADS = 4
HEAD_DIM = EMBED // HEADS
MLP_HIDDEN = 4 * EMBED
NUM_CLASSES = 20              # matches the replaced head: nn.Linear(in_features, 20)
LN_EPS = 1e-6                 # timm ViT LayerNorm eps

GRID_HW = IMG // PATCH                   # 4 patches per side
N_PATCH = GRID_HW * GRID_HW              # 16
S_REAL = N_PATCH + 1                     # 17 tokens (CLS + patches)
S_PAD = 32                               # padded sequence (multiple of 8 sublanes)
PATCH_DIM = IN_CHANS * PATCH * PATCH     # 192
ATTN_SCALE = HEAD_DIM ** -0.5
C_PAD = 128                              # classes padded to a full lane group


# --------------------------- in-kernel helpers ---------------------------
def _layernorm(x, g=None, b=None):
    mu = jnp.mean(x, axis=-1, keepdims=True)
    xc = x - mu
    var = jnp.mean(xc * xc, axis=-1, keepdims=True)
    y = xc * jax.lax.rsqrt(var + LN_EPS)
    if g is not None:                      # affine applied only where not folded host-side
        y = y * g + b
    return y


_SQRT_2_OVER_PI = 0.7978845608028654


def _gelu_tanh(x):
    # TODO(synk): nn.GELU() default is the exact erf form; Mosaic has no guaranteed erf
    # lowering, so we use the tanh approximation (|error| ~ 1e-3, below bf16 matmul noise).
    u = _SQRT_2_OVER_PI * (x + 0.044715 * x * x * x)
    return 0.5 * x * (1.0 + jnp.tanh(u))


# --------------------------- fused ViT kernel ---------------------------
def _make_vit_kernel(b_tile):
    def kernel(patches_ref, kmask_ref, pw_ref, tokb_ref,
               ln1g_ref, ln1b_ref, a_ref, aw_ref, c_ref, cb_ref, pjb_ref,
               fc1w_ref, fc1b_ref, fc2w_ref, fc2b_ref,
               headw_ref, headb_ref, o_ref):
        # ---- patch embedding: one bf16 matmul over all B_TILE*S_PAD token rows ----
        # tokb already contains patch bias + pos embed + CLS token per row (host-folded).
        x = jnp.dot(patches_ref[...], pw_ref[...],
                    preferred_element_type=jnp.float32) + tokb_ref[...]      # (M, E) f32
        kmask = kmask_ref[...]                                               # (1, S_PAD)

        for d in range(DEPTH):
            # ---------------- MHSA sub-block (pre-LN) ----------------
            y = _layernorm(x, ln1g_ref[d], ln1b_ref[d])
            yb = y.astype(jnp.bfloat16)

            # token-parallel per-head projections (K=64, N=64 -- no 16-lane slices)
            score_l, z = [], []
            for h in range(HEADS):
                idx = d * HEADS + h
                sl = jnp.dot(yb, a_ref[idx],
                             preferred_element_type=jnp.float32) + aw_ref[idx]
                score_l.append(sl.astype(jnp.bfloat16))                      # (M, E)
                zh = jnp.dot(yb, c_ref[idx],
                             preferred_element_type=jnp.float32) + cb_ref[idx]
                z.append(zh.astype(jnp.bfloat16))                            # (M, E)

            # per-batch attention (rows are sublane-aligned 32-row slices)
            outs = []
            for b in range(b_tile):
                r0 = b * S_PAD
                yb_b = yb[r0:r0 + S_PAD, :]
                acc = jnp.zeros((S_PAD, EMBED), jnp.float32)
                for h in range(HEADS):
                    s = jax.lax.dot_general(
                        score_l[h][r0:r0 + S_PAD, :], yb_b,
                        (((1,), (1,)), ((), ())),
                        preferred_element_type=jnp.float32) + kmask          # (S, S)
                    m = jnp.max(s, axis=-1, keepdims=True)
                    p = jnp.exp(s - m)
                    p = p * pl.reciprocal(jnp.sum(p, axis=-1, keepdims=True),
                                          approx=True)
                    acc = acc + jnp.dot(p.astype(jnp.bfloat16),
                                        z[h][r0:r0 + S_PAD, :],
                                        preferred_element_type=jnp.float32)  # (S, E)
                outs.append(acc)
            x = x + jnp.concatenate(outs, axis=0) + pjb_ref[d]

            # ---------------- MLP sub-block (pre-LN; LN2 affine folded into fc1) --------
            yn = _layernorm(x).astype(jnp.bfloat16)
            h1 = jnp.dot(yn, fc1w_ref[d],
                         preferred_element_type=jnp.float32) + fc1b_ref[d]   # (M, MLP)
            h1 = _gelu_tanh(h1)
            h2 = jnp.dot(h1.astype(jnp.bfloat16), fc2w_ref[d],
                         preferred_element_type=jnp.float32) + fc2b_ref[d]   # (M, E)
            x = x + h2

        # ---- final LN (affine folded into head) + head on the CLS rows ----
        cls = jnp.concatenate([x[b * S_PAD:b * S_PAD + 1, :] for b in range(b_tile)],
                              axis=0)                                        # (B_TILE, E)
        cls = _layernorm(cls).astype(jnp.bfloat16)
        logits = jnp.dot(cls, headw_ref[...],
                         preferred_element_type=jnp.float32) + headb_ref[...]  # (B_TILE, 128)
        o_ref[0] = logits

    return kernel


# --------------------------- parameters (torch-like layout) ---------------------------
def init_params(key):
    keys = jax.random.split(key, 8 + DEPTH)

    def nrm(k, shape, std=0.02):
        return std * jax.random.normal(k, shape, dtype=jnp.float32)

    blocks = []
    for d in range(DEPTH):
        bk = jax.random.split(keys[8 + d], 8)
        blocks.append({
            'ln1_g': jnp.ones((EMBED,), jnp.float32),
            'ln1_b': jnp.zeros((EMBED,), jnp.float32),
            'qkv_w': nrm(bk[0], (EMBED, 3 * EMBED)),
            'qkv_b': nrm(bk[1], (3 * EMBED,)),
            'proj_w': nrm(bk[2], (EMBED, EMBED)),
            'proj_b': nrm(bk[3], (EMBED,)),
            'ln2_g': jnp.ones((EMBED,), jnp.float32),
            'ln2_b': jnp.zeros((EMBED,), jnp.float32),
            'fc1_w': nrm(bk[4], (EMBED, MLP_HIDDEN)),
            'fc1_b': nrm(bk[5], (MLP_HIDDEN,)),
            'fc2_w': nrm(bk[6], (MLP_HIDDEN, EMBED)),
            'fc2_b': nrm(bk[7], (EMBED,)),
        })
    stacked = {k: jnp.stack([blk[k] for blk in blocks]) for k in blocks[0]}

    params = {
        'patch_w': nrm(keys[0], (PATCH_DIM, EMBED)),       # conv kernel as matmul
        'patch_b': nrm(keys[1], (EMBED,)),
        'cls_token': nrm(keys[2], (EMBED,)),
        'pos_embed': nrm(keys[3], (S_REAL, EMBED)),
        'norm_g': jnp.ones((EMBED,), jnp.float32),
        'norm_b': jnp.zeros((EMBED,), jnp.float32),
        'head_w': nrm(keys[4], (EMBED, NUM_CLASSES)),
        'head_b': nrm(keys[5], (NUM_CLASSES,)),
    }
    params.update(stacked)
    return params


# --------------------------- host-side weight folding ---------------------------
def prepare_weights(params):
    E, H, Dh = EMBED, HEADS, HEAD_DIM
    bf = jnp.bfloat16

    # patch bias + positional embedding + CLS token -> one additive per-row token bias
    tok_bias = jnp.zeros((S_PAD, E), jnp.float32)
    pos = params['pos_embed']                                   # (S_REAL, E)
    tok_bias = tok_bias.at[0].set(pos[0] + params['cls_token'])
    tok_bias = tok_bias.at[1:S_REAL].set(pos[1:] + params['patch_b'][None, :])

    # attention folds per (layer, head):
    #   A_h  = scale * Wq_h Wk_h^T          (query/key weight product)
    #   w_h  = scale * Wk_h bq_h            (the only bias term that is not softmax-invariant)
    #   C_h  = Wv_h Wproj_h,  cb_h = bv_h Wproj_h   (value folded through the output proj)
    A, W, C, CB = [], [], [], []
    for d in range(DEPTH):
        qkv_w, qkv_b = params['qkv_w'][d], params['qkv_b'][d]
        proj_w = params['proj_w'][d]
        for h in range(H):
            lo, hi = h * Dh, (h + 1) * Dh
            wq = qkv_w[:, lo:hi]
            wk = qkv_w[:, E + lo:E + hi]
            wv = qkv_w[:, 2 * E + lo:2 * E + hi]
            bq = qkv_b[lo:hi]
            bv = qkv_b[2 * E + lo:2 * E + hi]
            wp = proj_w[lo:hi, :]
            A.append(ATTN_SCALE * (wq @ wk.T))                  # (E, E)
            W.append(ATTN_SCALE * (wk @ bq))                    # (E,)
            C.append(wv @ wp)                                   # (E, E)
            CB.append(bv @ wp)                                  # (E,)
    A = jnp.stack(A)                                            # (D*H, E, E)
    W = jnp.stack(W)[:, None, :]                                # (D*H, 1, E)
    C = jnp.stack(C)
    CB = jnp.stack(CB)[:, None, :]

    # LN2 affine folded into fc1
    fc1_w = params['ln2_g'][:, :, None] * params['fc1_w']                        # (D, E, MLP)
    fc1_b = jnp.einsum('de,dem->dm', params['ln2_b'], params['fc1_w']) + params['fc1_b']

    # final-LN affine folded into the (lane-padded) classification head
    head_w = params['norm_g'][:, None] * params['head_w']                        # (E, 20)
    head_b = params['norm_b'] @ params['head_w'] + params['head_b']              # (20,)
    head_w = jnp.pad(head_w, ((0, 0), (0, C_PAD - NUM_CLASSES)))
    head_b = jnp.pad(head_b, (0, C_PAD - NUM_CLASSES))

    # additive key-padding mask (keys >= S_REAL are sequence padding)
    kmask = jnp.where(jnp.arange(S_PAD) < S_REAL, 0.0, -1e30).astype(jnp.float32)[None, :]

    return dict(
        patch_w=params['patch_w'].astype(bf),
        tok_bias=tok_bias,
        kmask=kmask,
        ln1_g=params['ln1_g'][:, None, :],        # (D, 1, E)
        ln1_b=params['ln1_b'][:, None, :],
        attn_a=A.astype(bf),
        attn_w=W,
        attn_c=C.astype(bf),
        attn_cb=CB,
        proj_b=params['proj_b'][:, None, :],      # (D, 1, E)
        fc1_w=fc1_w.astype(bf),
        fc1_b=fc1_b[:, None, :],                  # (D, 1, MLP)
        fc2_w=params['fc2_w'].astype(bf),
        fc2_b=params['fc2_b'][:, None, :],
        head_w=head_w.astype(bf),
        head_b=head_b[None, :],
    )


# --------------------------- forward pass ---------------------------
def vit_forward(x, params, b_tile=None):
    B = x.shape[0]
    if b_tile is None:
        # 4*32 = 128 token rows fills a 128x128 MXU; for tiny batches collapse the grid.
        b_tile = max(1, min(B, 4))
    n_steps = pl.cdiv(B, b_tile)
    B_pad = n_steps * b_tile

    w = prepare_weights(params)

    # NCHW -> (B, N_PATCH, C*P*P): non-overlapping patches, channel-major flattening
    # (matches PyTorch Conv2d(kernel=stride=PATCH) weight layout).
    p = x.reshape(B, IN_CHANS, GRID_HW, PATCH, GRID_HW, PATCH)
    p = p.transpose(0, 2, 4, 1, 3, 5).reshape(B, N_PATCH, PATCH_DIM)
    # token rows: 0 = CLS placeholder (zeros), 1..N_PATCH = patches, rest = padding.
    patches = jnp.pad(p, ((0, B_pad - B), (1, S_PAD - 1 - N_PATCH), (0, 0)))
    patches = patches.reshape(B_pad * S_PAD, PATCH_DIM).astype(jnp.bfloat16)

    tok_bias = jnp.tile(w['tok_bias'], (b_tile, 1))             # (b_tile*S_PAD, E)

    def whole(a):
        # full-array block, constant block index -> DMA'd once, resident across the grid
        return pl.BlockSpec(a.shape, lambda g, _n=a.ndim: (0,) * _n)

    weight_args = (
        w['kmask'], w['patch_w'], tok_bias,
        w['ln1_g'], w['ln1_b'], w['attn_a'], w['attn_w'], w['attn_c'], w['attn_cb'],
        w['proj_b'], w['fc1_w'], w['fc1_b'], w['fc2_w'], w['fc2_b'],
        w['head_w'], w['head_b'],
    )

    out = pl.pallas_call(
        _make_vit_kernel(b_tile),
        out_shape=jax.ShapeDtypeStruct((n_steps, b_tile, C_PAD), jnp.float32),
        grid=(n_steps,),
        in_specs=[pl.BlockSpec((b_tile * S_PAD, PATCH_DIM), lambda g: (g, 0))]
                 + [whole(a) for a in weight_args],
        out_specs=pl.BlockSpec((1, b_tile, C_PAD), lambda g: (g, 0, 0)),
        # v7x: with >1 grid step, switch this axis to pltpu.CORE_PARALLEL so both
        # TensorCores take batch tiles; for the collapsed 1-step grid it is moot.
        compiler_params=pltpu.CompilerParams(
            dimension_semantics=("parallel",)),
    )(patches, *weight_args)

    return out.reshape(B_pad, C_PAD)[:B, :NUM_CLASSES]


if __name__ == "__main__":
    key = jax.random.PRNGKey(0)
    pkey, xkey = jax.random.split(key)
    params = init_params(pkey)
    x = jax.random.normal(xkey, (2, IN_CHANS, IMG, IMG), dtype=jnp.float32)

    logits = jax.jit(vit_forward)(x, params)
    jax.block_until_ready(logits)
    assert logits.shape == (2, NUM_CLASSES), logits.shape
    assert bool(jnp.all(jnp.isfinite(logits)))
    print("KERNEL_OK")
</pallas_src>

<mosaic_0001>
module attributes {stable_mosaic.version = 11 : i64} {
  func.func @kernel(%arg0: i32, %arg1: memref<64x192xbf16, #tpu.memory_space<vmem>>, %arg2: memref<1x32xf32, #tpu.memory_space<vmem>>, %arg3: memref<192x64xbf16, #tpu.memory_space<vmem>>, %arg4: memref<64x64xf32, #tpu.memory_space<vmem>>, %arg5: memref<2x1x64xf32, #tpu.memory_space<vmem>>, %arg6: memref<2x1x64xf32, #tpu.memory_space<vmem>>, %arg7: memref<8x64x64xbf16, #tpu.memory_space<vmem>>, %arg8: memref<8x1x64xf32, #tpu.memory_space<vmem>>, %arg9: memref<8x64x64xbf16, #tpu.memory_space<vmem>>, %arg10: memref<8x1x64xf32, #tpu.memory_space<vmem>>, %arg11: memref<2x1x64xf32, #tpu.memory_space<vmem>>, %arg12: memref<2x64x256xbf16, #tpu.memory_space<vmem>>, %arg13: memref<2x1x256xf32, #tpu.memory_space<vmem>>, %arg14: memref<2x256x64xbf16, #tpu.memory_space<vmem>>, %arg15: memref<2x1x64xf32, #tpu.memory_space<vmem>>, %arg16: memref<64x128xbf16, #tpu.memory_space<vmem>>, %arg17: memref<1x128xf32, #tpu.memory_space<vmem>>, %arg18: memref<1x2x128xf32, #tpu.memory_space<vmem>>) attributes {dimension_semantics = [#tpu.dimension_semantics<parallel>], iteration_bounds = array<i64: 1>, scalar_prefetch = 0 : i64, scratch_operands = 0 : i64, tpu.core_type = #tpu.core_type<tc>, window_params = [{transform_indices = @transform_0, window_bounds = array<i64: 64, 192>}, {pipeline_mode = #tpu.pipeline_mode<synchronous>, transform_indices = @transform_1, window_bounds = array<i64: 1, 32>}, {pipeline_mode = #tpu.pipeline_mode<synchronous>, transform_indices = @transform_2, window_bounds = array<i64: 192, 64>}, {pipeline_mode = #tpu.pipeline_mode<synchronous>, transform_indices = @transform_3, window_bounds = array<i64: 64, 64>}, {pipeline_mode = #tpu.pipeline_mode<synchronous>, transform_indices = @transform_4, window_bounds = array<i64: 2, 1, 64>}, {pipeline_mode = #tpu.pipeline_mode<synchronous>, transform_indices = @transform_5, window_bounds = array<i64: 2, 1, 64>}, {pipeline_mode = #tpu.pipeline_mode<synchronous>, transform_indices = @transform_6, window_bounds = array<i64: 8, 64, 64>}, {pipeline_mode = #tpu.pipeline_mode<synchronous>, transform_indices = @transform_7, window_bounds = array<i64: 8, 1, 64>}, {pipeline_mode = #tpu.pipeline_mode<synchronous>, transform_indices = @transform_8, window_bounds = array<i64: 8, 64, 64>}, {pipeline_mode = #tpu.pipeline_mode<synchronous>, transform_indices = @transform_9, window_bounds = array<i64: 8, 1, 64>}, {pipeline_mode = #tpu.pipeline_mode<synchronous>, transform_indices = @transform_10, window_bounds = array<i64: 2, 1, 64>}, {pipeline_mode = #tpu.pipeline_mode<synchronous>, transform_indices = @transform_11, window_bounds = array<i64: 2, 64, 256>}, {pipeline_mode = #tpu.pipeline_mode<synchronous>, transform_indices = @transform_12, window_bounds = array<i64: 2, 1, 256>}, {pipeline_mode = #tpu.pipeline_mode<synchronous>, transform_indices = @transform_13, window_bounds = array<i64: 2, 256, 64>}, {pipeline_mode = #tpu.pipeline_mode<synchronous>, transform_indices = @transform_14, window_bounds = array<i64: 2, 1, 64>}, {pipeline_mode = #tpu.pipeline_mode<synchronous>, transform_indices = @transform_15, window_bounds = array<i64: 64, 128>}, {pipeline_mode = #tpu.pipeline_mode<synchronous>, transform_indices = @transform_16, window_bounds = array<i64: 1, 128>}, {transform_indices = @transform_17, window_bounds = array<i64: 1, 2, 128>}]} {
    %c0 = arith.constant 0 : index
    %c0_0 = arith.constant 0 : index
    %0 = vector.load %arg1[%c0, %c0_0] : memref<64x192xbf16, #tpu.memory_space<vmem>>, vector<64x192xbf16>
    %c0_1 = arith.constant 0 : index
    %c0_2 = arith.constant 0 : index
    %1 = vector.load %arg3[%c0_1, %c0_2] : memref<192x64xbf16, #tpu.memory_space<vmem>>, vector<192x64xbf16>
    %cst = arith.constant dense<0.000000e+00> : vector<64x64xf32>
    %2 = tpu.matmul %0, %1, %cst {dimension_numbers = #tpu.dot_dimension_numbers<[1], [0], [0], [1], [0, 0, 1, 1], [], []>} : vector<64x192xbf16>, vector<192x64xbf16>, vector<64x64xf32> -> vector<64x64xf32>
    %c0_3 = arith.constant 0 : index
    %c0_4 = arith.constant 0 : index
    %3 = vector.load %arg4[%c0_3, %c0_4] : memref<64x64xf32, #tpu.memory_space<vmem>>, vector<64x64xf32>
    %4 = arith.addf %2, %3 : vector<64x64xf32>
    %c0_5 = arith.constant 0 : index
    %c0_6 = arith.constant 0 : index
    %5 = vector.load %arg2[%c0_5, %c0_6] : memref<1x32xf32, #tpu.memory_space<vmem>>, vector<1x32xf32>
    %c0_7 = arith.constant 0 : index
    %c0_8 = arith.constant 0 : index
    %c0_9 = arith.constant 0 : index
    %6 = vector.load %arg5[%c0_7, %c0_8, %c0_9] : memref<2x1x64xf32, #tpu.memory_space<vmem>>, vector<1x1x64xf32>
    %7 = vector.shape_cast %6 : vector<1x1x64xf32> to vector<1x64xf32>
    %c0_10 = arith.constant 0 : index
    %c0_11 = arith.constant 0 : index
    %c0_12 = arith.constant 0 : index
    %8 = vector.load %arg6[%c0_10, %c0_11, %c0_12] : memref<2x1x64xf32, #tpu.memory_space<vmem>>, vector<1x1x64xf32>
    %9 = vector.shape_cast %8 : vector<1x1x64xf32> to vector<1x64xf32>
    %cst_13 = arith.constant dense<0.000000e+00> : vector<64xf32>
    %10 = vector.multi_reduction <add>, %4, %cst_13 [1] : vector<64x64xf32> to vector<64xf32>
    %11 = vector.shape_cast %10 : vector<64xf32> to vector<64x1xf32>
    %cst_14 = arith.constant 6.400000e+01 : f32
    %12 = vector.broadcast %cst_14 : f32 to vector<64x1xf32>
    %13 = arith.divf %11, %12 : vector<64x1xf32>
    %14 = vector.broadcast %13 : vector<64x1xf32> to vector<64x64xf32>
    %15 = arith.subf %4, %14 : vector<64x64xf32>
    %16 = arith.mulf %15, %15 : vector<64x64xf32>
    %cst_15 = arith.constant dense<0.000000e+00> : vector<64xf32>
    %17 = vector.multi_reduction <add>, %16, %cst_15 [1] : vector<64x64xf32> to vector<64xf32>
    %18 = vector.shape_cast %17 : vector<64xf32> to vector<64x1xf32>
    %cst_16 = arith.constant 6.400000e+01 : f32
    %19 = vector.broadcast %cst_16 : f32 to vector<64x1xf32>
    %20 = arith.divf %18, %19 : vector<64x1xf32>
    %cst_17 = arith.constant 9.99999997E-7 : f32
    %21 = vector.broadcast %cst_17 : f32 to vector<64x1xf32>
    %22 = arith.addf %20, %21 : vector<64x1xf32>
    %23 = math.rsqrt %22 : vector<64x1xf32>
    %24 = vector.broadcast %23 : vector<64x1xf32> to vector<64x64xf32>
    %25 = arith.mulf %15, %24 : vector<64x64xf32>
    %26 = vector.broadcast %7 : vector<1x64xf32> to vector<64x64xf32>
    %27 = arith.mulf %25, %26 : vector<64x64xf32>
    %28 = vector.broadcast %9 : vector<1x64xf32> to vector<64x64xf32>
    %29 = arith.addf %27, %28 : vector<64x64xf32>
    %30 = arith.truncf %29 : vector<64x64xf32> to vector<64x64xbf16>
    %c0_18 = arith.constant 0 : index
    %c0_19 = arith.constant 0 : index
    %c0_20 = arith.constant 0 : index
    %31 = vector.load %arg7[%c0_18, %c0_19, %c0_20] : memref<8x64x64xbf16, #tpu.memory_space<vmem>>, vector<1x64x64xbf16>
    %32 = vector.shape_cast %31 : vector<1x64x64xbf16> to vector<64x64xbf16>
    %cst_21 = arith.constant dense<0.000000e+00> : vector<64x64xf32>
    %33 = tpu.matmul %30, %32, %cst_21 {dimension_numbers = #tpu.dot_dimension_numbers<[1], [0], [0], [1], [0, 0, 1, 1], [], []>} : vector<64x64xbf16>, vector<64x64xbf16>, vector<64x64xf32> -> vector<64x64xf32>
    %c0_22 = arith.constant 0 : index
    %c0_23 = arith.constant 0 : index
    %c0_24 = arith.constant 0 : index
    %34 = vector.load %arg8[%c0_22, %c0_23, %c0_24] : memref<8x1x64xf32, #tpu.memory_space<vmem>>, vector<1x1x64xf32>
    %35 = vector.shape_cast %34 : vector<1x1x64xf32> to vector<1x64xf32>
    %36 = vector.broadcast %35 : vector<1x64xf32> to vector<64x64xf32>
    %37 = arith.addf %33, %36 : vector<64x64xf32>
    %38 = arith.truncf %37 : vector<64x64xf32> to vector<64x64xbf16>
    %c0_25 = arith.constant 0 : index
    %c0_26 = arith.constant 0 : index
    %c0_27 = arith.constant 0 : index
    %39 = vector.load %arg9[%c0_25, %c0_26, %c0_27] : memref<8x64x64xbf16, #tpu.memory_space<vmem>>, vector<1x64x64xbf16>
    %40 = vector.shape_cast %39 : vector<1x64x64xbf16> to vector<64x64xbf16>
    %cst_28 = arith.constant dense<0.000000e+00> : vector<64x64xf32>
    %41 = tpu.matmul %30, %40, %cst_28 {dimension_numbers = #tpu.dot_dimension_numbers<[1], [0], [0], [1], [0, 0, 1, 1], [], []>} : vector<64x64xbf16>, vector<64x64xbf16>, vector<64x64xf32> -> vector<64x64xf32>
    %c0_29 = arith.constant 0 : index
    %c0_30 = arith.constant 0 : index
    %c0_31 = arith.constant 0 : index
    %42 = vector.load %arg10[%c0_29, %c0_30, %c0_31] : memref<8x1x64xf32, #tpu.memory_space<vmem>>, vector<1x1x64xf32>
    %43 = vector.shape_cast %42 : vector<1x1x64xf32> to vector<1x64xf32>
    %44 = vector.broadcast %43 : vector<1x64xf32> to vector<64x64xf32>
    %45 = arith.addf %41, %44 : vector<64x64xf32>
    %46 = arith.truncf %45 : vector<64x64xf32> to vector<64x64xbf16>
    %c1 = arith.constant 1 : index
    %c0_32 = arith.constant 0 : index
    %c0_33 = arith.constant 0 : index
    %47 = vector.load %arg7[%c1, %c0_32, %c0_33] : memref<8x64x64xbf16, #tpu.memory_space<vmem>>, vector<1x64x64xbf16>
    %48 = vector.shape_cast %47 : vector<1x64x64xbf16> to vector<64x64xbf16>
    %cst_34 = arith.constant dense<0.000000e+00> : vector<64x64xf32>
    %49 = tpu.matmul %30, %48, %cst_34 {dimension_numbers = #tpu.dot_dimension_numbers<[1], [0], [0], [1], [0, 0, 1, 1], [], []>} : vector<64x64xbf16>, vector<64x64xbf16>, vector<64x64xf32> -> vector<64x64xf32>
    %c1_35 = arith.constant 1 : index
    %c0_36 = arith.constant 0 : index
    %c0_37 = arith.constant 0 : index
    %50 = vector.load %arg8[%c1_35, %c0_36, %c0_37] : memref<8x1x64xf32, #tpu.memory_space<vmem>>, vector<1x1x64xf32>
    %51 = vector.shape_cast %50 : vector<1x1x64xf32> to vector<1x64xf32>
    %52 = vector.broadcast %51 : vector<1x64xf32> to vector<64x64xf32>
    %53 = arith.addf %49, %52 : vector<64x64xf32>
    %54 = arith.truncf %53 : vector<64x64xf32> to vector<64x64xbf16>
    %c1_38 = arith.constant 1 : index
    %c0_39 = arith.constant 0 : index
    %c0_40 = arith.constant 0 : index
    %55 = vector.load %arg9[%c1_38, %c0_39, %c0_40] : memref<8x64x64xbf16, #tpu.memory_space<vmem>>, vector<1x64x64xbf16>
    %56 = vector.shape_cast %55 : vector<1x64x64xbf16> to vector<64x64xbf16>
    %cst_41 = arith.constant dense<0.000000e+00> : vector<64x64xf32>
    %57 = tpu.matmul %30, %56, %cst_41 {dimension_numbers = #tpu.dot_dimension_numbers<[1], [0], [0], [1], [0, 0, 1, 1], [], []>} : vector<64x64xbf16>, vector<64x64xbf16>, vector<64x64xf32> -> vector<64x64xf32>
    %c1_42 = arith.constant 1 : index
    %c0_43 = arith.constant 0 : index
    %c0_44 = arith.constant 0 : index
    %58 = vector.load %arg10[%c1_42, %c0_43, %c0_44] : memref<8x1x64xf32, #tpu.memory_space<vmem>>, vector<1x1x64xf32>
    %59 = vector.shape_cast %58 : vector<1x1x64xf32> to vector<1x64xf32>
    %60 = vector.broadcast %59 : vector<1x64xf32> to vector<64x64xf32>
    %61 = arith.addf %57, %60 : vector<64x64xf32>
    %62 = arith.truncf %61 : vector<64x64xf32> to vector<64x64xbf16>
    %c2 = arith.constant 2 : index
    %c0_45 = arith.constant 0 : index
    %c0_46 = arith.constant 0 : index
    %63 = vector.load %arg7[%c2, %c0_45, %c0_46] : memref<8x64x64xbf16, #tpu.memory_space<vmem>>, vector<1x64x64xbf16>
    %64 = vector.shape_cast %63 : vector<1x64x64xbf16> to vector<64x64xbf16>
    %cst_47 = arith.constant dense<0.000000e+00> : vector<64x64xf32>
    %65 = tpu.matmul %30, %64, %cst_47 {dimension_numbers = #tpu.dot_dimension_numbers<[1], [0], [0], [1], [0, 0, 1, 1], [], []>} : vector<64x64xbf16>, vector<64x64xbf16>, vector<64x64xf32> -> vector<64x64xf32>
    %c2_48 = arith.constant 2 : index
    %c0_49 = arith.constant 0 : index
    %c0_50 = arith.constant 0 : index
    %66 = vector.load %arg8[%c2_48, %c0_49, %c0_50] : memref<8x1x64xf32, #tpu.memory_space<vmem>>, vector<1x1x64xf32>
    %67 = vector.shape_cast %66 : vector<1x1x64xf32> to vector<1x64xf32>
    %68 = vector.broadcast %67 : vector<1x64xf32> to vector<64x64xf32>
    %69 = arith.addf %65, %68 : vector<64x64xf32>
    %70 = arith.truncf %69 : vector<64x64xf32> to vector<64x64xbf16>
    %c2_51 = arith.constant 2 : index
    %c0_52 = arith.constant 0 : index
    %c0_53 = arith.constant 0 : index
    %71 = vector.load %arg9[%c2_51, %c0_52, %c0_53] : memref<8x64x64xbf16, #tpu.memory_space<vmem>>, vector<1x64x64xbf16>
    %72 = vector.shape_cast %71 : vector<1x64x64xbf16> to vector<64x64xbf16>
    %cst_54 = arith.constant dense<0.000000e+00> : vector<64x64xf32>
    %73 = tpu.matmul %30, %72, %cst_54 {dimension_numbers = #tpu.dot_dimension_numbers<[1], [0], [0], [1], [0, 0, 1, 1], [], []>} : vector<64x64xbf16>, vector<64x64xbf16>, vector<64x64xf32> -> vector<64x64xf32>
    %c2_55 = arith.constant 2 : index
    %c0_56 = arith.constant 0 : index
    %c0_57 = arith.constant 0 : index
    %74 = vector.load %arg10[%c2_55, %c0_56, %c0_57] : memref<8x1x64xf32, #tpu.memory_space<vmem>>, vector<1x1x64xf32>
    %75 = vector.shape_cast %74 : vector<1x1x64xf32> to vector<1x64xf32>
    %76 = vector.broadcast %75 : vector<1x64xf32> to vector<64x64xf32>
    %77 = arith.addf %73, %76 : vector<64x64xf32>
    %78 = arith.truncf %77 : vector<64x64xf32> to vector<64x64xbf16>
    %c3 = arith.constant 3 : index
    %c0_58 = arith.constant 0 : index
    %c0_59 = arith.constant 0 : index
    %79 = vector.load %arg7[%c3, %c0_58, %c0_59] : memref<8x64x64xbf16, #tpu.memory_space<vmem>>, vector<1x64x64xbf16>
    %80 = vector.shape_cast %79 : vector<1x64x64xbf16> to vector<64x64xbf16>
    %cst_60 = arith.constant dense<0.000000e+00> : vector<64x64xf32>
    %81 = tpu.matmul %30, %80, %cst_60 {dimension_numbers = #tpu.dot_dimension_numbers<[1], [0], [0], [1], [0, 0, 1, 1], [], []>} : vector<64x64xbf16>, vector<64x64xbf16>, vector<64x64xf32> -> vector<64x64xf32>
    %c3_61 = arith.constant 3 : index
    %c0_62 = arith.constant 0 : index
    %c0_63 = arith.constant 0 : index
    %82 = vector.load %arg8[%c3_61, %c0_62, %c0_63] : memref<8x1x64xf32, #tpu.memory_space<vmem>>, vector<1x1x64xf32>
    %83 = vector.shape_cast %82 : vector<1x1x64xf32> to vector<1x64xf32>
    %84 = vector.broadcast %83 : vector<1x64xf32> to vector<64x64xf32>
    %85 = arith.addf %81, %84 : vector<64x64xf32>
    %86 = arith.truncf %85 : vector<64x64xf32> to vector<64x64xbf16>
    %c3_64 = arith.constant 3 : index
    %c0_65 = arith.constant 0 : index
    %c0_66 = arith.constant 0 : index
    %87 = vector.load %arg9[%c3_64, %c0_65, %c0_66] : memref<8x64x64xbf16, #tpu.memory_space<vmem>>, vector<1x64x64xbf16>
    %88 = vector.shape_cast %87 : vector<1x64x64xbf16> to vector<64x64xbf16>
    %cst_67 = arith.constant dense<0.000000e+00> : vector<64x64xf32>
    %89 = tpu.matmul %30, %88, %cst_67 {dimension_numbers = #tpu.dot_dimension_numbers<[1], [0], [0], [1], [0, 0, 1, 1], [], []>} : vector<64x64xbf16>, vector<64x64xbf16>, vector<64x64xf32> -> vector<64x64xf32>
    %c3_68 = arith.constant 3 : index
    %c0_69 = arith.constant 0 : index
    %c0_70 = arith.constant 0 : index
    %90 = vector.load %arg10[%c3_68, %c0_69, %c0_70] : memref<8x1x64xf32, #tpu.memory_space<vmem>>, vector<1x1x64xf32>
    %91 = vector.shape_cast %90 : vector<1x1x64xf32> to vector<1x64xf32>
    %92 = vector.broadcast %91 : vector<1x64xf32> to vector<64x64xf32>
    %93 = arith.addf %89, %92 : vector<64x64xf32>
    %94 = arith.truncf %93 : vector<64x64xf32> to vector<64x64xbf16>
    %95 = vector.extract_strided_slice %30 {offsets = [0, 0], sizes = [32, 64], strides = [1, 1]} : vector<64x64xbf16> to vector<32x64xbf16>
    %cst_71 = arith.constant 0.000000e+00 : f32
    %96 = vector.broadcast %cst_71 : f32 to vector<32x64xf32>
    %97 = vector.extract_strided_slice %38 {offsets = [0, 0], sizes = [32, 64], strides = [1, 1]} : vector<64x64xbf16> to vector<32x64xbf16>
    %cst_72 = arith.constant dense<0.000000e+00> : vector<32x32xf32>
    %98 = tpu.matmul %97, %95, %cst_72 {dimension_numbers = #tpu.dot_dimension_numbers<[1], [1], [0], [0], [0, 0, 1, 0], [], []>} : vector<32x64xbf16>, vector<32x64xbf16>, vector<32x32xf32> -> vector<32x32xf32>
    %99 = vector.broadcast %5 : vector<1x32xf32> to vector<32x32xf32>
    %100 = arith.addf %98, %99 : vector<32x32xf32>
    %cst_73 = arith.constant dense<0xFF800000> : vector<32xf32>
    %101 = vector.multi_reduction <maximumf>, %100, %cst_73 [1] : vector<32x32xf32> to vector<32xf32>
    %102 = vector.shape_cast %101 : vector<32xf32> to vector<32x1xf32>
    %103 = vector.broadcast %102 : vector<32x1xf32> to vector<32x32xf32>
    %104 = arith.subf %100, %103 : vector<32x32xf32>
    %105 = math.exp %104 : vector<32x32xf32>
    %cst_74 = arith.constant dense<0.000000e+00> : vector<32xf32>
    %106 = vector.multi_reduction <add>, %105, %cst_74 [1] : vector<32x32xf32> to vector<32xf32>
    %107 = vector.shape_cast %106 : vector<32xf32> to vector<32x1xf32>
    %108 = tpu.reciprocal %107 {approx = true} : vector<32x1xf32> -> vector<32x1xf32>
    %109 = vector.broadcast %108 : vector<32x1xf32> to vector<32x32xf32>
    %110 = arith.mulf %105, %109 : vector<32x32xf32>
    %111 = arith.truncf %110 : vector<32x32xf32> to vector<32x32xbf16>
    %112 = vector.extract_strided_slice %46 {offsets = [0, 0], sizes = [32, 64], strides = [1, 1]} : vector<64x64xbf16> to vector<32x64xbf16>
    %cst_75 = arith.constant dense<0.000000e+00> : vector<32x64xf32>
    %113 = tpu.matmul %111, %112, %cst_75 {dimension_numbers = #tpu.dot_dimension_numbers<[1], [0], [0], [1], [0, 0, 1, 1], [], []>} : vector<32x32xbf16>, vector<32x64xbf16>, vector<32x64xf32> -> vector<32x64xf32>
    %114 = arith.addf %96, %113 : vector<32x64xf32>
    %115 = vector.extract_strided_slice %54 {offsets = [0, 0], sizes = [32, 64], strides = [1, 1]} : vector<64x64xbf16> to vector<32x64xbf16>
    %cst_76 = arith.constant dense<0.000000e+00> : vector<32x32xf32>
    %116 = tpu.matmul %115, %95, %cst_76 {dimension_numbers = #tpu.dot_dimension_numbers<[1], [1], [0], [0], [0, 0, 1, 0], [], []>} : vector<32x64xbf16>, vector<32x64xbf16>, vector<32x32xf32> -> vector<32x32xf32>
    %117 = vector.broadcast %5 : vector<1x32xf32> to vector<32x32xf32>
    %118 = arith.addf %116, %117 : vector<32x32xf32>
    %cst_77 = arith.constant dense<0xFF800000> : vector<32xf32>
    %119 = vector.multi_reduction <maximumf>, %118, %cst_77 [1] : vector<32x32xf32> to vector<32xf32>
    %120 = vector.shape_cast %119 : vector<32xf32> to vector<32x1xf32>
    %121 = vector.broadcast %120 : vector<32x1xf32> to vector<32x32xf32>
    %122 = arith.subf %118, %121 : vector<32x32xf32>
    %123 = math.exp %122 : vector<32x32xf32>
    %cst_78 = arith.constant dense<0.000000e+00> : vector<32xf32>
    %124 = vector.multi_reduction <add>, %123, %cst_78 [1] : vector<32x32xf32> to vector<32xf32>
    %125 = vector.shape_cast %124 : vector<32xf32> to vector<32x1xf32>
    %126 = tpu.reciprocal %125 {approx = true} : vector<32x1xf32> -> vector<32x1xf32>
    %127 = vector.broadcast %126 : vector<32x1xf32> to vector<32x32xf32>
    %128 = arith.mulf %123, %127 : vector<32x32xf32>
    %129 = arith.truncf %128 : vector<32x32xf32> to vector<32x32xbf16>
    %130 = vector.extract_strided_slice %62 {offsets = [0, 0], sizes = [32, 64], strides = [1, 1]} : vector<64x64xbf16> to vector<32x64xbf16>
    %cst_79 = arith.constant dense<0.000000e+00> : vector<32x64xf32>
    %131 = tpu.matmul %129, %130, %cst_79 {dimension_numbers = #tpu.dot_dimension_numbers<[1], [0], [0], [1], [0, 0, 1, 1], [], []>} : vector<32x32xbf16>, vector<32x64xbf16>, vector<32x64xf32> -> vector<32x64xf32>
    %132 = arith.addf %114, %131 : vector<32x64xf32>
    %133 = vector.extract_strided_slice %70 {offsets = [0, 0], sizes = [32, 64], strides = [1, 1]} : vector<64x64xbf16> to vector<32x64xbf16>
    %cst_80 = arith.constant dense<0.000000e+00> : vector<32x32xf32>
    %134 = tpu.matmul %133, %95, %cst_80 {dimension_numbers = #tpu.dot_dimension_numbers<[1], [1], [0], [0], [0, 0, 1, 0], [], []>} : vector<32x64xbf16>, vector<32x64xbf16>, vector<32x32xf32> -> vector<32x32xf32>
    %135 = vector.broadcast %5 : vector<1x32xf32> to vector<32x32xf32>
    %136 = arith.addf %134, %135 : vector<32x32xf32>
    %cst_81 = arith.constant dense<0xFF800000> : vector<32xf32>
    %137 = vector.multi_reduction <maximumf>, %136, %cst_81 [1] : vector<32x32xf32> to vector<32xf32>
    %138 = vector.shape_cast %137 : vector<32xf32> to vector<32x1xf32>
    %139 = vector.broadcast %138 : vector<32x1xf32> to vector<32x32xf32>
    %140 = arith.subf %136, %139 : vector<32x32xf32>
    %141 = math.exp %140 : vector<32x32xf32>
    %cst_82 = arith.constant dense<0.000000e+00> : vector<32xf32>
    %142 = vector.multi_reduction <add>, %141, %cst_82 [1] : vector<32x32xf32> to vector<32xf32>
    %143 = vector.shape_cast %142 : vector<32xf32> to vector<32x1xf32>
    %144 = tpu.reciprocal %143 {approx = true} : vector<32x1xf32> -> vector<32x1xf32>
    %145 = vector.broadcast %144 : vector<32x1xf32> to vector<32x32xf32>
    %146 = arith.mulf %141, %145 : vector<32x32xf32>
    %147 = arith.truncf %146 : vector<32x32xf32> to vector<32x32xbf16>
    %148 = vector.extract_strided_slice %78 {offsets = [0, 0], sizes = [32, 64], strides = [1, 1]} : vector<64x64xbf16> to vector<32x64xbf16>
    %cst_83 = arith.constant dense<0.000000e+00> : vector<32x64xf32>
    %149 = tpu.matmul %147, %148, %cst_83 {dimension_numbers = #tpu.dot_dimension_numbers<[1], [0], [0], [1], [0, 0, 1, 1], [], []>} : vector<32x32xbf16>, vector<32x64xbf16>, vector<32x64xf32> -> vector<32x64xf32>
    %150 = arith.addf %132, %149 : vector<32x64xf32>
    %151 = vector.extract_strided_slice %86 {offsets = [0, 0], sizes = [32, 64], strides = [1, 1]} : vector<64x64xbf16> to vector<32x64xbf16>
    %cst_84 = arith.constant dense<0.000000e+00> : vector<32x32xf32>
    %152 = tpu.matmul %151, %95, %cst_84 {dimension_numbers = #tpu.dot_dimension_numbers<[1], [1], [0], [0], [0, 0, 1, 0], [], []>} : vector<32x64xbf16>, vector<32x64xbf16>, vector<32x32xf32> -> vector<32x32xf32>
    %153 = vector.broadcast %5 : vector<1x32xf32> to vector<32x32xf32>
    %154 = arith.addf %152, %153 : vector<32x32xf32>
    %cst_85 = arith.constant dense<0xFF800000> : vector<32xf32>
    %155 = vector.multi_reduction <maximumf>, %154, %cst_85 [1] : vector<32x32xf32> to vector<32xf32>
    %156 = vector.shape_cast %155 : vector<32xf32> to vector<32x1xf32>
    %157 = vector.broadcast %156 : vector<32x1xf32> to vector<32x32xf32>
    %158 = arith.subf %154, %157 : vector<32x32xf32>
    %159 = math.exp %158 : vector<32x32xf32>
    %cst_86 = arith.constant dense<0.000000e+00> : vector<32xf32>
    %160 = vector.multi_reduction <add>, %159, %cst_86 [1] : vector<32x32xf32> to vector<32xf32>
    %161 = vector.shape_cast %160 : vector<32xf32> to vector<32x1xf32>
    %162 = tpu.reciprocal %161 {approx = true} : vector<32x1xf32> -> vector<32x1xf32>
    %163 = vector.broadcast %162 : vector<32x1xf32> to vector<32x32xf32>
    %164 = arith.mulf %159, %163 : vector<32x32xf32>
    %165 = arith.truncf %164 : vector<32x32xf32> to vector<32x32xbf16>
    %166 = vector.extract_strided_slice %94 {offsets = [0, 0], sizes = [32, 64], strides = [1, 1]} : vector<64x64xbf16> to vector<32x64xbf16>
    %cst_87 = arith.constant dense<0.000000e+00> : vector<32x64xf32>
    %167 = tpu.matmul %165, %166, %cst_87 {dimension_numbers = #tpu.dot_dimension_numbers<[1], [0], [0], [1], [0, 0, 1, 1], [], []>} : vector<32x32xbf16>, vector<32x64xbf16>, vector<32x64xf32> -> vector<32x64xf32>
    %168 = arith.addf %150, %167 : vector<32x64xf32>
    %169 = vector.extract_strided_slice %30 {offsets = [32, 0], sizes = [32, 64], strides = [1, 1]} : vector<64x64xbf16> to vector<32x64xbf16>
    %cst_88 = arith.constant 0.000000e+00 : f32
    %170 = vector.broadcast %cst_88 : f32 to vector<32x64xf32>
    %171 = vector.extract_strided_slice %38 {offsets = [32, 0], sizes = [32, 64], strides = [1, 1]} : vector<64x64xbf16> to vector<32x64xbf16>
    %cst_89 = arith.constant dense<0.000000e+00> : vector<32x32xf32>
    %172 = tpu.matmul %171, %169, %cst_89 {dimension_numbers = #tpu.dot_dimension_numbers<[1], [1], [0], [0], [0, 0, 1, 0], [], []>} : vector<32x64xbf16>, vector<32x64xbf16>, vector<32x32xf32> -> vector<32x32xf32>
    %173 = vector.broadcast %5 : vector<1x32xf32> to vector<32x32xf32>
    %174 = arith.addf %172, %173 : vector<32x32xf32>
    %cst_90 = arith.constant dense<0xFF800000> : vector<32xf32>
    %175 = vector.multi_reduction <maximumf>, %174, %cst_90 [1] : vector<32x32xf32> to vector<32xf32>
    %176 = vector.shape_cast %175 : vector<32xf32> to vector<32x1xf32>
    %177 = vector.broadcast %176 : vector<32x1xf32> to vector<32x32xf32>
    %178 = arith.subf %174, %177 : vector<32x32xf32>
    %179 = math.exp %178 : vector<32x32xf32>
    %cst_91 = arith.constant dense<0.000000e+00> : vector<32xf32>
    %180 = vector.multi_reduction <add>, %179, %cst_91 [1] : vector<32x32xf32> to vector<32xf32>
    %181 = vector.shape_cast %180 : vector<32xf32> to vector<32x1xf32>
    %182 = tpu.reciprocal %181 {approx = true} : vector<32x1xf32> -> vector<32x1xf32>
    %183 = vector.broadcast %182 : vector<32x1xf32> to vector<32x32xf32>
    %184 = arith.mulf %179, %183 : vector<32x32xf32>
    %185 = arith.truncf %184 : vector<32x32xf32> to vector<32x32xbf16>
    %186 = vector.extract_strided_slice %46 {offsets = [32, 0], sizes = [32, 64], strides = [1, 1]} : vector<64x64xbf16> to vector<32x64xbf16>
    %cst_92 = arith.constant dense<0.000000e+00> : vector<32x64xf32>
    %187 = tpu.matmul %185, %186, %cst_92 {dimension_numbers = #tpu.dot_dimension_numbers<[1], [0], [0], [1], [0, 0, 1, 1], [], []>} : vector<32x32xbf16>, vector<32x64xbf16>, vector<32x64xf32> -> vector<32x64xf32>
    %188 = arith.addf %170, %187 : vector<32x64xf32>
    %189 = vector.extract_strided_slice %54 {offsets = [32, 0], sizes = [32, 64], strides = [1, 1]} : vector<64x64xbf16> to vector<32x64xbf16>
    %cst_93 = arith.constant dense<0.000000e+00> : vector<32x32xf32>
    %190 = tpu.matmul %189, %169, %cst_93 {dimension_numbers = #tpu.dot_dimension_numbers<[1], [1], [0], [0], [0, 0, 1, 0], [], []>} : vector<32x64xbf16>, vector<32x64xbf16>, vector<32x32xf32> -> vector<32x32xf32>
    %191 = vector.broadcast %5 : vector<1x32xf32> to vector<32x32xf32>
    %192 = arith.addf %190, %191 : vector<32x32xf32>
    %cst_94 = arith.constant dense<0xFF800000> : vector<32xf32>
    %193 = vector.multi_reduction <maximumf>, %192, %cst_94 [1] : vector<32x32xf32> to vector<32xf32>
    %194 = vector.shape_cast %193 : vector<32xf32> to vector<32x1xf32>
    %195 = vector.broadcast %194 : vector<32x1xf32> to vector<32x32xf32>
    %196 = arith.subf %192, %195 : vector<32x32xf32>
    %197 = math.exp %196 : vector<32x32xf32>
    %cst_95 = arith.constant dense<0.000000e+00> : vector<32xf32>
    %198 = vector.multi_reduction <add>, %197, %cst_95 [1] : vector<32x32xf32> to vector<32xf32>
    %199 = vector.shape_cast %198 : vector<32xf32> to vector<32x1xf32>
    %200 = tpu.reciprocal %199 {approx = true} : vector<32x1xf32> -> vector<32x1xf32>
    %201 = vector.broadcast %200 : vector<32x1xf32> to vector<32x32xf32>
    %202 = arith.mulf %197, %201 : vector<32x32xf32>
    %203 = arith.truncf %202 : vector<32x32xf32> to vector<32x32xbf16>
    %204 = vector.extract_strided_slice %62 {offsets = [32, 0], sizes = [32, 64], strides = [1, 1]} : vector<64x64xbf16> to vector<32x64xbf16>
    %cst_96 = arith.constant dense<0.000000e+00> : vector<32x64xf32>
    %205 = tpu.matmul %203, %204, %cst_96 {dimension_numbers = #tpu.dot_dimension_numbers<[1], [0], [0], [1], [0, 0, 1, 1], [], []>} : vector<32x32xbf16>, vector<32x64xbf16>, vector<32x64xf32> -> vector<32x64xf32>
    %206 = arith.addf %188, %205 : vector<32x64xf32>
    %207 = vector.extract_strided_slice %70 {offsets = [32, 0], sizes = [32, 64], strides = [1, 1]} : vector<64x64xbf16> to vector<32x64xbf16>
    %cst_97 = arith.constant dense<0.000000e+00> : vector<32x32xf32>
    %208 = tpu.matmul %207, %169, %cst_97 {dimension_numbers = #tpu.dot_dimension_numbers<[1], [1], [0], [0], [0, 0, 1, 0], [], []>} : vector<32x64xbf16>, vector<32x64xbf16>, vector<32x32xf32> -> vector<32x32xf32>
    %209 = vector.broadcast %5 : vector<1x32xf32> to vector<32x32xf32>
    %210 = arith.addf %208, %209 : vector<32x32xf32>
    %cst_98 = arith.constant dense<0xFF800000> : vector<32xf32>
    %211 = vector.multi_reduction <maximumf>, %210, %cst_98 [1] : vector<32x32xf32> to vector<32xf32>
    %212 = vector.shape_cast %211 : vector<32xf32> to vector<32x1xf32>
    %213 = vector.broadcast %212 : vector<32x1xf32> to vector<32x32xf32>
    %214 = arith.subf %210, %213 : vector<32x32xf32>
    %215 = math.exp %214 : vector<32x32xf32>
    %cst_99 = arith.constant dense<0.000000e+00> : vector<32xf32>
    %216 = vector.multi_reduction <add>, %215, %cst_99 [1] : vector<32x32xf32> to vector<32xf32>
    %217 = vector.shape_cast %216 : vector<32xf32> to vector<32x1xf32>
    %218 = tpu.reciprocal %217 {approx = true} : vector<32x1xf32> -> vector<32x1xf32>
    %219 = vector.broadcast %218 : vector<32x1xf32> to vector<32x32xf32>
    %220 = arith.mulf %215, %219 : vector<32x32xf32>
    %221 = arith.truncf %220 : vector<32x32xf32> to vector<32x32xbf16>
    %222 = vector.extract_strided_slice %78 {offsets = [32, 0], sizes = [32, 64], strides = [1, 1]} : vector<64x64xbf16> to vector<32x64xbf16>
    %cst_100 = arith.constant dense<0.000000e+00> : vector<32x64xf32>
    %223 = tpu.matmul %221, %222, %cst_100 {dimension_numbers = #tpu.dot_dimension_numbers<[1], [0], [0], [1], [0, 0, 1, 1], [], []>} : vector<32x32xbf16>, vector<32x64xbf16>, vector<32x64xf32> -> vector<32x64xf32>
    %224 = arith.addf %206, %223 : vector<32x64xf32>
    %225 = vector.extract_strided_slice %86 {offsets = [32, 0], sizes = [32, 64], strides = [1, 1]} : vector<64x64xbf16> to vector<32x64xbf16>
    %cst_101 = arith.constant dense<0.000000e+00> : vector<32x32xf32>
    %226 = tpu.matmul %225, %169, %cst_101 {dimension_numbers = #tpu.dot_dimension_numbers<[1], [1], [0], [0], [0, 0, 1, 0], [], []>} : vector<32x64xbf16>, vector<32x64xbf16>, vector<32x32xf32> -> vector<32x32xf32>
    %227 = vector.broadcast %5 : vector<1x32xf32> to vector<32x32xf32>
    %228 = arith.addf %226, %227 : vector<32x32xf32>
    %cst_102 = arith.constant dense<0xFF800000> : vector<32xf32>
    %229 = vector.multi_reduction <maximumf>, %228, %cst_102 [1] : vector<32x32xf32> to vector<32xf32>
    %230 = vector.shape_cast %229 : vector<32xf32> to vector<32x1xf32>
    %231 = vector.broadcast %230 : vector<32x1xf32> to vector<32x32xf32>
    %232 = arith.subf %228, %231 : vector<32x32xf32>
    %233 = math.exp %232 : vector<32x32xf32>
    %cst_103 = arith.constant dense<0.000000e+00> : vector<32xf32>
    %234 = vector.multi_reduction <add>, %233, %cst_103 [1] : vector<32x32xf32> to vector<32xf32>
    %235 = vector.shape_cast %234 : vector<32xf32> to vector<32x1xf32>
    %236 = tpu.reciprocal %235 {approx = true} : vector<32x1xf32> -> vector<32x1xf32>
    %237 = vector.broadcast %236 : vector<32x1xf32> to vector<32x32xf32>
    %238 = arith.mulf %233, %237 : vector<32x32xf32>
    %239 = arith.truncf %238 : vector<32x32xf32> to vector<32x32xbf16>
    %240 = vector.extract_strided_slice %94 {offsets = [32, 0], sizes = [32, 64], strides = [1, 1]} : vector<64x64xbf16> to vector<32x64xbf16>
    %cst_104 = arith.constant dense<0.000000e+00> : vector<32x64xf32>
    %241 = tpu.matmul %239, %240, %cst_104 {dimension_numbers = #tpu.dot_dimension_numbers<[1], [0], [0], [1], [0, 0, 1, 1], [], []>} : vector<32x32xbf16>, vector<32x64xbf16>, vector<32x64xf32> -> vector<32x64xf32>
    %242 = arith.addf %224, %241 : vector<32x64xf32>
    %243 = tpu.concatenate %168, %242 in 0 : vector<32x64xf32>, vector<32x64xf32> -> vector<64x64xf32>
    %244 = arith.addf %4, %243 : vector<64x64xf32>
    %c0_105 = arith.constant 0 : index
    %c0_106 = arith.constant 0 : index
    %c0_107 = arith.constant 0 : index
    %245 = vector.load %arg11[%c0_105, %c0_106, %c0_107] : memref<2x1x64xf32, #tpu.memory_space<vmem>>, vector<1x1x64xf32>
    %246 = vector.shape_cast %245 : vector<1x1x64xf32> to vector<1x64xf32>
    %247 = vector.broadcast %246 : vector<1x64xf32> to vector<64x64xf32>
    %248 = arith.addf %244, %247 : vector<64x64xf32>
    %cst_108 = arith.constant dense<0.000000e+00> : vector<64xf32>
    %249 = vector.multi_reduction <add>, %248, %cst_108 [1] : vector<64x64xf32> to vector<64xf32>
    %250 = vector.shape_cast %249 : vector<64xf32> to vector<64x1xf32>
    %cst_109 = arith.constant 6.400000e+01 : f32
    %251 = vector.broadcast %cst_109 : f32 to vector<64x1xf32>
    %252 = arith.divf %250, %251 : vector<64x1xf32>
    %253 = vector.broadcast %252 : vector<64x1xf32> to vector<64x64xf32>
    %254 = arith.subf %248, %253 : vector<64x64xf32>
    %255 = arith.mulf %254, %254 : vector<64x64xf32>
    %cst_110 = arith.constant dense<0.000000e+00> : vector<64xf32>
    %256 = vector.multi_reduction <add>, %255, %cst_110 [1] : vector<64x64xf32> to vector<64xf32>
    %257 = vector.shape_cast %256 : vector<64xf32> to vector<64x1xf32>
    %cst_111 = arith.constant 6.400000e+01 : f32
    %258 = vector.broadcast %cst_111 : f32 to vector<64x1xf32>
    %259 = arith.divf %257, %258 : vector<64x1xf32>
    %cst_112 = arith.constant 9.99999997E-7 : f32
    %260 = vector.broadcast %cst_112 : f32 to vector<64x1xf32>
    %261 = arith.addf %259, %260 : vector<64x1xf32>
    %262 = math.rsqrt %261 : vector<64x1xf32>
    %263 = vector.broadcast %262 : vector<64x1xf32> to vector<64x64xf32>
    %264 = arith.mulf %254, %263 : vector<64x64xf32>
    %265 = arith.truncf %264 : vector<64x64xf32> to vector<64x64xbf16>
    %c0_113 = arith.constant 0 : index
    %c0_114 = arith.constant 0 : index
    %c0_115 = arith.constant 0 : index
    %266 = vector.load %arg12[%c0_113, %c0_114, %c0_115] : memref<2x64x256xbf16, #tpu.memory_space<vmem>>, vector<1x64x256xbf16>
    %267 = vector.shape_cast %266 : vector<1x64x256xbf16> to vector<64x256xbf16>
    %cst_116 = arith.constant dense<0.000000e+00> : vector<64x256xf32>
    %268 = tpu.matmul %265, %267, %cst_116 {dimension_numbers = #tpu.dot_dimension_numbers<[1], [0], [0], [1], [0, 0, 1, 1], [], []>} : vector<64x64xbf16>, vector<64x256xbf16>, vector<64x256xf32> -> vector<64x256xf32>
    %c0_117 = arith.constant 0 : index
    %c0_118 = arith.constant 0 : index
    %c0_119 = arith.constant 0 : index
    %269 = vector.load %arg13[%c0_117, %c0_118, %c0_119] : memref<2x1x256xf32, #tpu.memory_space<vmem>>, vector<1x1x256xf32>
    %270 = vector.shape_cast %269 : vector<1x1x256xf32> to vector<1x256xf32>
    %271 = vector.broadcast %270 : vector<1x256xf32> to vector<64x256xf32>
    %272 = arith.addf %268, %271 : vector<64x256xf32>
    %cst_120 = arith.constant 4.471500e-02 : f32
    %273 = vector.broadcast %cst_120 : f32 to vector<64x256xf32>
    %274 = arith.mulf %273, %272 : vector<64x256xf32>
    %275 = arith.mulf %274, %272 : vector<64x256xf32>
    %276 = arith.mulf %275, %272 : vector<64x256xf32>
    %277 = arith.addf %272, %276 : vector<64x256xf32>
    %cst_121 = arith.constant 0.797884583 : f32
    %278 = vector.broadcast %cst_121 : f32 to vector<64x256xf32>
    %279 = arith.mulf %278, %277 : vector<64x256xf32>
    %cst_122 = arith.constant 5.000000e-01 : f32
    %280 = vector.broadcast %cst_122 : f32 to vector<64x256xf32>
    %281 = arith.mulf %280, %272 : vector<64x256xf32>
    %282 = math.tanh %279 : vector<64x256xf32>
    %cst_123 = arith.constant 1.000000e+00 : f32
    %283 = vector.broadcast %cst_123 : f32 to vector<64x256xf32>
    %284 = arith.addf %283, %282 : vector<64x256xf32>
    %285 = arith.mulf %281, %284 : vector<64x256xf32>
    %286 = arith.truncf %285 : vector<64x256xf32> to vector<64x256xbf16>
    %c0_124 = arith.constant 0 : index
    %c0_125 = arith.constant 0 : index
    %c0_126 = arith.constant 0 : index
    %287 = vector.load %arg14[%c0_124, %c0_125, %c0_126] : memref<2x256x64xbf16, #tpu.memory_space<vmem>>, vector<1x256x64xbf16>
    %288 = vector.shape_cast %287 : vector<1x256x64xbf16> to vector<256x64xbf16>
    %cst_127 = arith.constant dense<0.000000e+00> : vector<64x64xf32>
    %289 = tpu.matmul %286, %288, %cst_127 {dimension_numbers = #tpu.dot_dimension_numbers<[1], [0], [0], [1], [0, 0, 1, 1], [], []>} : vector<64x256xbf16>, vector<256x64xbf16>, vector<64x64xf32> -> vector<64x64xf32>
    %c0_128 = arith.constant 0 : index
    %c0_129 = arith.constant 0 : index
    %c0_130 = arith.constant 0 : index
    %290 = vector.load %arg15[%c0_128, %c0_129, %c0_130] : memref<2x1x64xf32, #tpu.memory_space<vmem>>, vector<1x1x64xf32>
    %291 = vector.shape_cast %290 : vector<1x1x64xf32> to vector<1x64xf32>
    %292 = vector.broadcast %291 : vector<1x64xf32> to vector<64x64xf32>
    %293 = arith.addf %289, %292 : vector<64x64xf32>
    %294 = arith.addf %248, %293 : vector<64x64xf32>
    %c1_131 = arith.constant 1 : index
    %c0_132 = arith.constant 0 : index
    %c0_133 = arith.constant 0 : index
    %295 = vector.load %arg5[%c1_131, %c0_132, %c0_133] : memref<2x1x64xf32, #tpu.memory_space<vmem>>, vector<1x1x64xf32>
    %296 = vector.shape_cast %295 : vector<1x1x64xf32> to vector<1x64xf32>
    %c1_134 = arith.constant 1 : index
    %c0_135 = arith.constant 0 : index
    %c0_136 = arith.constant 0 : index
    %297 = vector.load %arg6[%c1_134, %c0_135, %c0_136] : memref<2x1x64xf32, #tpu.memory_space<vmem>>, vector<1x1x64xf32>
    %298 = vector.shape_cast %297 : vector<1x1x64xf32> to vector<1x64xf32>
    %cst_137 = arith.constant dense<0.000000e+00> : vector<64xf32>
    %299 = vector.multi_reduction <add>, %294, %cst_137 [1] : vector<64x64xf32> to vector<64xf32>
    %300 = vector.shape_cast %299 : vector<64xf32> to vector<64x1xf32>
    %cst_138 = arith.constant 6.400000e+01 : f32
    %301 = vector.broadcast %cst_138 : f32 to vector<64x1xf32>
    %302 = arith.divf %300, %301 : vector<64x1xf32>
    %303 = vector.broadcast %302 : vector<64x1xf32> to vector<64x64xf32>
    %304 = arith.subf %294, %303 : vector<64x64xf32>
    %305 = arith.mulf %304, %304 : vector<64x64xf32>
    %cst_139 = arith.constant dense<0.000000e+00> : vector<64xf32>
    %306 = vector.multi_reduction <add>, %305, %cst_139 [1] : vector<64x64xf32> to vector<64xf32>
    %307 = vector.shape_cast %306 : vector<64xf32> to vector<64x1xf32>
    %cst_140 = arith.constant 6.400000e+01 : f32
    %308 = vector.broadcast %cst_140 : f32 to vector<64x1xf32>
    %309 = arith.divf %307, %308 : vector<64x1xf32>
    %cst_141 = arith.constant 9.99999997E-7 : f32
    %310 = vector.broadcast %cst_141 : f32 to vector<64x1xf32>
    %311 = arith.addf %309, %310 : vector<64x1xf32>
    %312 = math.rsqrt %311 : vector<64x1xf32>
    %313 = vector.broadcast %312 : vector<64x1xf32> to vector<64x64xf32>
    %314 = arith.mulf %304, %313 : vector<64x64xf32>
    %315 = vector.broadcast %296 : vector<1x64xf32> to vector<64x64xf32>
    %316 = arith.mulf %314, %315 : vector<64x64xf32>
    %317 = vector.broadcast %298 : vector<1x64xf32> to vector<64x64xf32>
    %318 = arith.addf %316, %317 : vector<64x64xf32>
    %319 = arith.truncf %318 : vector<64x64xf32> to vector<64x64xbf16>
    %c4 = arith.constant 4 : index
    %c0_142 = arith.constant 0 : index
    %c0_143 = arith.constant 0 : index
    %320 = vector.load %arg7[%c4, %c0_142, %c0_143] : memref<8x64x64xbf16, #tpu.memory_space<vmem>>, vector<1x64x64xbf16>
    %321 = vector.shape_cast %320 : vector<1x64x64xbf16> to vector<64x64xbf16>
    %cst_144 = arith.constant dense<0.000000e+00> : vector<64x64xf32>
    %322 = tpu.matmul %319, %321, %cst_144 {dimension_numbers = #tpu.dot_dimension_numbers<[1], [0], [0], [1], [0, 0, 1, 1], [], []>} : vector<64x64xbf16>, vector<64x64xbf16>, vector<64x64xf32> -> vector<64x64xf32>
    %c4_145 = arith.constant 4 : index
    %c0_146 = arith.constant 0 : index
    %c0_147 = arith.constant 0 : index
    %323 = vector.load %arg8[%c4_145, %c0_146, %c0_147] : memref<8x1x64xf32, #tpu.memory_space<vmem>>, vector<1x1x64xf32>
    %324 = vector.shape_cast %323 : vector<1x1x64xf32> to vector<1x64xf32>
    %325 = vector.broadcast %324 : vector<1x64xf32> to vector<64x64xf32>
    %326 = arith.addf %322, %325 : vector<64x64xf32>
    %327 = arith.truncf %326 : vector<64x64xf32> to vector<64x64xbf16>
    %c4_148 = arith.constant 4 : index
    %c0_149 = arith.constant 0 : index
    %c0_150 = arith.constant 0 : index
    %328 = vector.load %arg9[%c4_148, %c0_149, %c0_150] : memref<8x64x64xbf16, #tpu.memory_space<vmem>>, vector<1x64x64xbf16>
    %329 = vector.shape_cast %328 : vector<1x64x64xbf16> to vector<64x64xbf16>
    %cst_151 = arith.constant dense<0.000000e+00> : vector<64x64xf32>
    %330 = tpu.matmul %319, %329, %cst_151 {dimension_numbers = #tpu.dot_dimension_numbers<[1], [0], [0], [1], [0, 0, 1, 1], [], []>} : vector<64x64xbf16>, vector<64x64xbf16>, vector<64x64xf32> -> vector<64x64xf32>
    %c4_152 = arith.constant 4 : index
    %c0_153 = arith.constant 0 : index
    %c0_154 = arith.constant 0 : index
    %331 = vector.load %arg10[%c4_152, %c0_153, %c0_154] : memref<8x1x64xf32, #tpu.memory_space<vmem>>, vector<1x1x64xf32>
    %332 = vector.shape_cast %331 : vector<1x1x64xf32> to vector<1x64xf32>
    %333 = vector.broadcast %332 : vector<1x64xf32> to vector<64x64xf32>
    %334 = arith.addf %330, %333 : vector<64x64xf32>
    %335 = arith.truncf %334 : vector<64x64xf32> to vector<64x64xbf16>
    %c5 = arith.constant 5 : index
    %c0_155 = arith.constant 0 : index
    %c0_156 = arith.constant 0 : index
    %336 = vector.load %arg7[%c5, %c0_155, %c0_156] : memref<8x64x64xbf16, #tpu.memory_space<vmem>>, vector<1x64x64xbf16>
    %337 = vector.shape_cast %336 : vector<1x64x64xbf16> to vector<64x64xbf16>
    %cst_157 = arith.constant dense<0.000000e+00> : vector<64x64xf32>
    %338 = tpu.matmul %319, %337, %cst_157 {dimension_numbers = #tpu.dot_dimension_numbers<[1], [0], [0], [1], [0, 0, 1, 1], [], []>} : vector<64x64xbf16>, vector<64x64xbf16>, vector<64x64xf32> -> vector<64x64xf32>
    %c5_158 = arith.constant 5 : index
    %c0_159 = arith.constant 0 : index
    %c0_160 = arith.constant 0 : index
    %339 = vector.load %arg8[%c5_158, %c0_159, %c0_160] : memref<8x1x64xf32, #tpu.memory_space<vmem>>, vector<1x1x64xf32>
    %340 = vector.shape_cast %339 : vector<1x1x64xf32> to vector<1x64xf32>
    %341 = vector.broadcast %340 : vector<1x64xf32> to vector<64x64xf32>
    %342 = arith.addf %338, %341 : vector<64x64xf32>
    %343 = arith.truncf %342 : vector<64x64xf32> to vector<64x64xbf16>
    %c5_161 = arith.constant 5 : index
    %c0_162 = arith.constant 0 : index
    %c0_163 = arith.constant 0 : index
    %344 = vector.load %arg9[%c5_161, %c0_162, %c0_163] : memref<8x64x64xbf16, #tpu.memory_space<vmem>>, vector<1x64x64xbf16>
    %345 = vector.shape_cast %344 : vector<1x64x64xbf16> to vector<64x64xbf16>
    %cst_164 = arith.constant dense<0.000000e+00> : vector<64x64xf32>
    %346 = tpu.matmul %319, %345, %cst_164 {dimension_numbers = #tpu.dot_dimension_numbers<[1], [0], [0], [1], [0, 0, 1, 1], [], []>} : vector<64x64xbf16>, vector<64x64xbf16>, vector<64x64xf32> -> vector<64x64xf32>
    %c5_165 = arith.constant 5 : index
    %c0_166 = arith.constant 0 : index
    %c0_167 = arith.constant 0 : index
    %347 = vector.load %arg10[%c5_165, %c0_166, %c0_167] : memref<8x1x64xf32, #tpu.memory_space<vmem>>, vector<1x1x64xf32>
    %348 = vector.shape_cast %347 : vector<1x1x64xf32> to vector<1x64xf32>
    %349 = vector.broadcast %348 : vector<1x64xf32> to vector<64x64xf32>
    %350 = arith.addf %346, %349 : vector<64x64xf32>
    %351 = arith.truncf %350 : vector<64x64xf32> to vector<64x64xbf16>
    %c6 = arith.constant 6 : index
    %c0_168 = arith.constant 0 : index
    %c0_169 = arith.constant 0 : index
    %352 = vector.load %arg7[%c6, %c0_168, %c0_169] : memref<8x64x64xbf16, #tpu.memory_space<vmem>>, vector<1x64x64xbf16>
    %353 = vector.shape_cast %352 : vector<1x64x64xbf16> to vector<64x64xbf16>
    %cst_170 = arith.constant dense<0.000000e+00> : vector<64x64xf32>
    %354 = tpu.matmul %319, %353, %cst_170 {dimension_numbers = #tpu.dot_dimension_numbers<[1], [0], [0], [1], [0, 0, 1, 1], [], []>} : vector<64x64xbf16>, vector<64x64xbf16>, vector<64x64xf32> -> vector<64x64xf32>
    %c6_171 = arith.constant 6 : index
    %c0_172 = arith.constant 0 : index
    %c0_173 = arith.constant 0 : index
    %355 = vector.load %arg8[%c6_171, %c0_172, %c0_173] : memref<8x1x64xf32, #tpu.memory_space<vmem>>, vector<1x1x64xf32>
    %356 = vector.shape_cast %355 : vector<1x1x64xf32> to vector<1x64xf32>
    %357 = vector.broadcast %356 : vector<1x64xf32> to vector<64x64xf32>
    %358 = arith.addf %354, %357 : vector<64x64xf32>
    %359 = arith.truncf %358 : vector<64x64xf32> to vector<64x64xbf16>
    %c6_174 = arith.constant 6 : index
    %c0_175 = arith.constant 0 : index
    %c0_176 = arith.constant 0 : index
    %360 = vector.load %arg9[%c6_174, %c0_175, %c0_176] : memref<8x64x64xbf16, #tpu.memory_space<vmem>>, vector<1x64x64xbf16>
    %361 = vector.shape_cast %360 : vector<1x64x64xbf16> to vector<64x64xbf16>
    %cst_177 = arith.constant dense<0.000000e+00> : vector<64x64xf32>
    %362 = tpu.matmul %319, %361, %cst_177 {dimension_numbers = #tpu.dot_dimension_numbers<[1], [0], [0], [1], [0, 0, 1, 1], [], []>} : vector<64x64xbf16>, vector<64x64xbf16>, vector<64x64xf32> -> vector<64x64xf32>
    %c6_178 = arith.constant 6 : index
    %c0_179 = arith.constant 0 : index
    %c0_180 = arith.constant 0 : index
    %363 = vector.load %arg10[%c6_178, %c0_179, %c0_180] : memref<8x1x64xf32, #tpu.memory_space<vmem>>, vector<1x1x64xf32>
    %364 = vector.shape_cast %363 : vector<1x1x64xf32> to vector<1x64xf32>
    %365 = vector.broadcast %364 : vector<1x64xf32> to vector<64x64xf32>
    %366 = arith.addf %362, %365 : vector<64x64xf32>
    %367 = arith.truncf %366 : vector<64x64xf32> to vector<64x64xbf16>
    %c7 = arith.constant 7 : index
    %c0_181 = arith.constant 0 : index
    %c0_182 = arith.constant 0 : index
    %368 = vector.load %arg7[%c7, %c0_181, %c0_182] : memref<8x64x64xbf16, #tpu.memory_space<vmem>>, vector<1x64x64xbf16>
    %369 = vector.shape_cast %368 : vector<1x64x64xbf16> to vector<64x64xbf16>
    %cst_183 = arith.constant dense<0.000000e+00> : vector<64x64xf32>
    %370 = tpu.matmul %319, %369, %cst_183 {dimension_numbers = #tpu.dot_dimension_numbers<[1], [0], [0], [1], [0, 0, 1, 1], [], []>} : vector<64x64xbf16>, vector<64x64xbf16>, vector<64x64xf32> -> vector<64x64xf32>
    %c7_184 = arith.constant 7 : index
    %c0_185 = arith.constant 0 : index
    %c0_186 = arith.constant 0 : index
    %371 = vector.load %arg8[%c7_184, %c0_185, %c0_186] : memref<8x1x64xf32, #tpu.memory_space<vmem>>, vector<1x1x64xf32>
    %372 = vector.shape_cast %371 : vector<1x1x64xf32> to vector<1x64xf32>
    %373 = vector.broadcast %372 : vector<1x64xf32> to vector<64x64xf32>
    %374 = arith.addf %370, %373 : vector<64x64xf32>
    %375 = arith.truncf %374 : vector<64x64xf32> to vector<64x64xbf16>
    %c7_187 = arith.constant 7 : index
    %c0_188 = arith.constant 0 : index
    %c0_189 = arith.constant 0 : index
    %376 = vector.load %arg9[%c7_187, %c0_188, %c0_189] : memref<8x64x64xbf16, #tpu.memory_space<vmem>>, vector<1x64x64xbf16>
    %377 = vector.shape_cast %376 : vector<1x64x64xbf16> to vector<64x64xbf16>
    %cst_190 = arith.constant dense<0.000000e+00> : vector<64x64xf32>
    %378 = tpu.matmul %319, %377, %cst_190 {dimension_numbers = #tpu.dot_dimension_numbers<[1], [0], [0], [1], [0, 0, 1, 1], [], []>} : vector<64x64xbf16>, vector<64x64xbf16>, vector<64x64xf32> -> vector<64x64xf32>
    %c7_191 = arith.constant 7 : index
    %c0_192 = arith.constant 0 : index
    %c0_193 = arith.constant 0 : index
    %379 = vector.load %arg10[%c7_191, %c0_192, %c0_193] : memref<8x1x64xf32, #tpu.memory_space<vmem>>, vector<1x1x64xf32>
    %380 = vector.shape_cast %379 : vector<1x1x64xf32> to vector<1x64xf32>
    %381 = vector.broadcast %380 : vector<1x64xf32> to vector<64x64xf32>
    %382 = arith.addf %378, %381 : vector<64x64xf32>
    %383 = arith.truncf %382 : vector<64x64xf32> to vector<64x64xbf16>
    %384 = vector.extract_strided_slice %319 {offsets = [0, 0], sizes = [32, 64], strides = [1, 1]} : vector<64x64xbf16> to vector<32x64xbf16>
    %cst_194 = arith.constant 0.000000e+00 : f32
    %385 = vector.broadcast %cst_194 : f32 to vector<32x64xf32>
    %386 = vector.extract_strided_slice %327 {offsets = [0, 0], sizes = [32, 64], strides = [1, 1]} : vector<64x64xbf16> to vector<32x64xbf16>
    %cst_195 = arith.constant dense<0.000000e+00> : vector<32x32xf32>
    %387 = tpu.matmul %386, %384, %cst_195 {dimension_numbers = #tpu.dot_dimension_numbers<[1], [1], [0], [0], [0, 0, 1, 0], [], []>} : vector<32x64xbf16>, vector<32x64xbf16>, vector<32x32xf32> -> vector<32x32xf32>
    %388 = vector.broadcast %5 : vector<1x32xf32> to vector<32x32xf32>
    %389 = arith.addf %387, %388 : vector<32x32xf32>
    %cst_196 = arith.constant dense<0xFF800000> : vector<32xf32>
    %390 = vector.multi_reduction <maximumf>, %389, %cst_196 [1] : vector<32x32xf32> to vector<32xf32>
    %391 = vector.shape_cast %390 : vector<32xf32> to vector<32x1xf32>
    %392 = vector.broadcast %391 : vector<32x1xf32> to vector<32x32xf32>
    %393 = arith.subf %389, %392 : vector<32x32xf32>
    %394 = math.exp %393 : vector<32x32xf32>
    %cst_197 = arith.constant dense<0.000000e+00> : vector<32xf32>
    %395 = vector.multi_reduction <add>, %394, %cst_197 [1] : vector<32x32xf32> to vector<32xf32>
    %396 = vector.shape_cast %395 : vector<32xf32> to vector<32x1xf32>
    %397 = tpu.reciprocal %396 {approx = true} : vector<32x1xf32> -> vector<32x1xf32>
    %398 = vector.broadcast %397 : vector<32x1xf32> to vector<32x32xf32>
    %399 = arith.mulf %394, %398 : vector<32x32xf32>
    %400 = arith.truncf %399 : vector<32x32xf32> to vector<32x32xbf16>
    %401 = vector.extract_strided_slice %335 {offsets = [0, 0], sizes = [32, 64], strides = [1, 1]} : vector<64x64xbf16> to vector<32x64xbf16>
    %cst_198 = arith.constant dense<0.000000e+00> : vector<32x64xf32>
    %402 = tpu.matmul %400, %401, %cst_198 {dimension_numbers = #tpu.dot_dimension_numbers<[1], [0], [0], [1], [0, 0, 1, 1], [], []>} : vector<32x32xbf16>, vector<32x64xbf16>, vector<32x64xf32> -> vector<32x64xf32>
    %403 = arith.addf %385, %402 : vector<32x64xf32>
    %404 = vector.extract_strided_slice %343 {offsets = [0, 0], sizes = [32, 64], strides = [1, 1]} : vector<64x64xbf16> to vector<32x64xbf16>
    %cst_199 = arith.constant dense<0.000000e+00> : vector<32x32xf32>
    %405 = tpu.matmul %404, %384, %cst_199 {dimension_numbers = #tpu.dot_dimension_numbers<[1], [1], [0], [0], [0, 0, 1, 0], [], []>} : vector<32x64xbf16>, vector<32x64xbf16>, vector<32x32xf32> -> vector<32x32xf32>
    %406 = vector.broadcast %5 : vector<1x32xf32> to vector<32x32xf32>
    %407 = arith.addf %405, %406 : vector<32x32xf32>
    %cst_200 = arith.constant dense<0xFF800000> : vector<32xf32>
    %408 = vector.multi_reduction <maximumf>, %407, %cst_200 [1] : vector<32x32xf32> to vector<32xf32>
    %409 = vector.shape_cast %408 : vector<32xf32> to vector<32x1xf32>
    %410 = vector.broadcast %409 : vector<32x1xf32> to vector<32x32xf32>
    %411 = arith.subf %407, %410 : vector<32x32xf32>
    %412 = math.exp %411 : vector<32x32xf32>
    %cst_201 = arith.constant dense<0.000000e+00> : vector<32xf32>
    %413 = vector.multi_reduction <add>, %412, %cst_201 [1] : vector<32x32xf32> to vector<32xf32>
    %414 = vector.shape_cast %413 : vector<32xf32> to vector<32x1xf32>
    %415 = tpu.reciprocal %414 {approx = true} : vector<32x1xf32> -> vector<32x1xf32>
    %416 = vector.broadcast %415 : vector<32x1xf32> to vector<32x32xf32>
    %417 = arith.mulf %412, %416 : vector<32x32xf32>
    %418 = arith.truncf %417 : vector<32x32xf32> to vector<32x32xbf16>
    %419 = vector.extract_strided_slice %351 {offsets = [0, 0], sizes = [32, 64], strides = [1, 1]} : vector<64x64xbf16> to vector<32x64xbf16>
    %cst_202 = arith.constant dense<0.000000e+00> : vector<32x64xf32>
    %420 = tpu.matmul %418, %419, %cst_202 {dimension_numbers = #tpu.dot_dimension_numbers<[1], [0], [0], [1], [0, 0, 1, 1], [], []>} : vector<32x32xbf16>, vector<32x64xbf16>, vector<32x64xf32> -> vector<32x64xf32>
    %421 = arith.addf %403, %420 : vector<32x64xf32>
    %422 = vector.extract_strided_slice %359 {offsets = [0, 0], sizes = [32, 64], strides = [1, 1]} : vector<64x64xbf16> to vector<32x64xbf16>
    %cst_203 = arith.constant dense<0.000000e+00> : vector<32x32xf32>
    %423 = tpu.matmul %422, %384, %cst_203 {dimension_numbers = #tpu.dot_dimension_numbers<[1], [1], [0], [0], [0, 0, 1, 0], [], []>} : vector<32x64xbf16>, vector<32x64xbf16>, vector<32x32xf32> -> vector<32x32xf32>
    %424 = vector.broadcast %5 : vector<1x32xf32> to vector<32x32xf32>
    %425 = arith.addf %423, %424 : vector<32x32xf32>
    %cst_204 = arith.constant dense<0xFF800000> : vector<32xf32>
    %426 = vector.multi_reduction <maximumf>, %425, %cst_204 [1] : vector<32x32xf32> to vector<32xf32>
    %427 = vector.shape_cast %426 : vector<32xf32> to vector<32x1xf32>
    %428 = vector.broadcast %427 : vector<32x1xf32> to vector<32x32xf32>
    %429 = arith.subf %425, %428 : vector<32x32xf32>
    %430 = math.exp %429 : vector<32x32xf32>
    %cst_205 = arith.constant dense<0.000000e+00> : vector<32xf32>
    %431 = vector.multi_reduction <add>, %430, %cst_205 [1] : vector<32x32xf32> to vector<32xf32>
    %432 = vector.shape_cast %431 : vector<32xf32> to vector<32x1xf32>
    %433 = tpu.reciprocal %432 {approx = true} : vector<32x1xf32> -> vector<32x1xf32>
    %434 = vector.broadcast %433 : vector<32x1xf32> to vector<32x32xf32>
    %435 = arith.mulf %430, %434 : vector<32x32xf32>
    %436 = arith.truncf %435 : vector<32x32xf32> to vector<32x32xbf16>
    %437 = vector.extract_strided_slice %367 {offsets = [0, 0], sizes = [32, 64], strides = [1, 1]} : vector<64x64xbf16> to vector<32x64xbf16>
    %cst_206 = arith.constant dense<0.000000e+00> : vector<32x64xf32>
    %438 = tpu.matmul %436, %437, %cst_206 {dimension_numbers = #tpu.dot_dimension_numbers<[1], [0], [0], [1], [0, 0, 1, 1], [], []>} : vector<32x32xbf16>, vector<32x64xbf16>, vector<32x64xf32> -> vector<32x64xf32>
    %439 = arith.addf %421, %438 : vector<32x64xf32>
    %440 = vector.extract_strided_slice %375 {offsets = [0, 0], sizes = [32, 64], strides = [1, 1]} : vector<64x64xbf16> to vector<32x64xbf16>
    %cst_207 = arith.constant dense<0.000000e+00> : vector<32x32xf32>
    %441 = tpu.matmul %440, %384, %cst_207 {dimension_numbers = #tpu.dot_dimension_numbers<[1], [1], [0], [0], [0, 0, 1, 0], [], []>} : vector<32x64xbf16>, vector<32x64xbf16>, vector<32x32xf32> -> vector<32x32xf32>
    %442 = vector.broadcast %5 : vector<1x32xf32> to vector<32x32xf32>
    %443 = arith.addf %441, %442 : vector<32x32xf32>
    %cst_208 = arith.constant dense<0xFF800000> : vector<32xf32>
    %444 = vector.multi_reduction <maximumf>, %443, %cst_208 [1] : vector<32x32xf32> to vector<32xf32>
    %445 = vector.shape_cast %444 : vector<32xf32> to vector<32x1xf32>
    %446 = vector.broadcast %445 : vector<32x1xf32> to vector<32x32xf32>
    %447 = arith.subf %443, %446 : vector<32x32xf32>
    %448 = math.exp %447 : vector<32x32xf32>
    %cst_209 = arith.constant dense<0.000000e+00> : vector<32xf32>
    %449 = vector.multi_reduction <add>, %448, %cst_209 [1] : vector<32x32xf32> to vector<32xf32>
    %450 = vector.shape_cast %449 : vector<32xf32> to vector<32x1xf32>
    %451 = tpu.reciprocal %450 {approx = true} : vector<32x1xf32> -> vector<32x1xf32>
    %452 = vector.broadcast %451 : vector<32x1xf32> to vector<32x32xf32>
    %453 = arith.mulf %448, %452 : vector<32x32xf32>
    %454 = arith.truncf %453 : vector<32x32xf32> to vector<32x32xbf16>
    %455 = vector.extract_strided_slice %383 {offsets = [0, 0], sizes = [32, 64], strides = [1, 1]} : vector<64x64xbf16> to vector<32x64xbf16>
    %cst_210 = arith.constant dense<0.000000e+00> : vector<32x64xf32>
    %456 = tpu.matmul %454, %455, %cst_210 {dimension_numbers = #tpu.dot_dimension_numbers<[1], [0], [0], [1], [0, 0, 1, 1], [], []>} : vector<32x32xbf16>, vector<32x64xbf16>, vector<32x64xf32> -> vector<32x64xf32>
    %457 = arith.addf %439, %456 : vector<32x64xf32>
    %458 = vector.extract_strided_slice %319 {offsets = [32, 0], sizes = [32, 64], strides = [1, 1]} : vector<64x64xbf16> to vector<32x64xbf16>
    %cst_211 = arith.constant 0.000000e+00 : f32
    %459 = vector.broadcast %cst_211 : f32 to vector<32x64xf32>
    %460 = vector.extract_strided_slice %327 {offsets = [32, 0], sizes = [32, 64], strides = [1, 1]} : vector<64x64xbf16> to vector<32x64xbf16>
    %cst_212 = arith.constant dense<0.000000e+00> : vector<32x32xf32>
    %461 = tpu.matmul %460, %458, %cst_212 {dimension_numbers = #tpu.dot_dimension_numbers<[1], [1], [0], [0], [0, 0, 1, 0], [], []>} : vector<32x64xbf16>, vector<32x64xbf16>, vector<32x32xf32> -> vector<32x32xf32>
    %462 = vector.broadcast %5 : vector<1x32xf32> to vector<32x32xf32>
    %463 = arith.addf %461, %462 : vector<32x32xf32>
    %cst_213 = arith.constant dense<0xFF800000> : vector<32xf32>
    %464 = vector.multi_reduction <maximumf>, %463, %cst_213 [1] : vector<32x32xf32> to vector<32xf32>
    %465 = vector.shape_cast %464 : vector<32xf32> to vector<32x1xf32>
    %466 = vector.broadcast %465 : vector<32x1xf32> to vector<32x32xf32>
    %467 = arith.subf %463, %466 : vector<32x32xf32>
    %468 = math.exp %467 : vector<32x32xf32>
    %cst_214 = arith.constant dense<0.000000e+00> : vector<32xf32>
    %469 = vector.multi_reduction <add>, %468, %cst_214 [1] : vector<32x32xf32> to vector<32xf32>
    %470 = vector.shape_cast %469 : vector<32xf32> to vector<32x1xf32>
    %471 = tpu.reciprocal %470 {approx = true} : vector<32x1xf32> -> vector<32x1xf32>
    %472 = vector.broadcast %471 : vector<32x1xf32> to vector<32x32xf32>
    %473 = arith.mulf %468, %472 : vector<32x32xf32>
    %474 = arith.truncf %473 : vector<32x32xf32> to vector<32x32xbf16>
    %475 = vector.extract_strided_slice %335 {offsets = [32, 0], sizes = [32, 64], strides = [1, 1]} : vector<64x64xbf16> to vector<32x64xbf16>
    %cst_215 = arith.constant dense<0.000000e+00> : vector<32x64xf32>
    %476 = tpu.matmul %474, %475, %cst_215 {dimension_numbers = #tpu.dot_dimension_numbers<[1], [0], [0], [1], [0, 0, 1, 1], [], []>} : vector<32x32xbf16>, vector<32x64xbf16>, vector<32x64xf32> -> vector<32x64xf32>
    %477 = arith.addf %459, %476 : vector<32x64xf32>
    %478 = vector.extract_strided_slice %343 {offsets = [32, 0], sizes = [32, 64], strides = [1, 1]} : vector<64x64xbf16> to vector<32x64xbf16>
    %cst_216 = arith.constant dense<0.000000e+00> : vector<32x32xf32>
    %479 = tpu.matmul %478, %458, %cst_216 {dimension_numbers = #tpu.dot_dimension_numbers<[1], [1], [0], [0], [0, 0, 1, 0], [], []>} : vector<32x64xbf16>, vector<32x64xbf16>, vector<32x32xf32> -> vector<32x32xf32>
    %480 = vector.broadcast %5 : vector<1x32xf32> to vector<32x32xf32>
    %481 = arith.addf %479, %480 : vector<32x32xf32>
    %cst_217 = arith.constant dense<0xFF800000> : vector<32xf32>
    %482 = vector.multi_reduction <maximumf>, %481, %cst_217 [1] : vector<32x32xf32> to vector<32xf32>
    %483 = vector.shape_cast %482 : vector<32xf32> to vector<32x1xf32>
    %484 = vector.broadcast %483 : vector<32x1xf32> to vector<32x32xf32>
    %485 = arith.subf %481, %484 : vector<32x32xf32>
    %486 = math.exp %485 : vector<32x32xf32>
    %cst_218 = arith.constant dense<0.000000e+00> : vector<32xf32>
    %487 = vector.multi_reduction <add>, %486, %cst_218 [1] : vector<32x32xf32> to vector<32xf32>
    %488 = vector.shape_cast %487 : vector<32xf32> to vector<32x1xf32>
    %489 = tpu.reciprocal %488 {approx = true} : vector<32x1xf32> -> vector<32x1xf32>
    %490 = vector.broadcast %489 : vector<32x1xf32> to vector<32x32xf32>
    %491 = arith.mulf %486, %490 : vector<32x32xf32>
    %492 = arith.truncf %491 : vector<32x32xf32> to vector<32x32xbf16>
    %493 = vector.extract_strided_slice %351 {offsets = [32, 0], sizes = [32, 64], strides = [1, 1]} : vector<64x64xbf16> to vector<32x64xbf16>
    %cst_219 = arith.constant dense<0.000000e+00> : vector<32x64xf32>
    %494 = tpu.matmul %492, %493, %cst_219 {dimension_numbers = #tpu.dot_dimension_numbers<[1], [0], [0], [1], [0, 0, 1, 1], [], []>} : vector<32x32xbf16>, vector<32x64xbf16>, vector<32x64xf32> -> vector<32x64xf32>
    %495 = arith.addf %477, %494 : vector<32x64xf32>
    %496 = vector.extract_strided_slice %359 {offsets = [32, 0], sizes = [32, 64], strides = [1, 1]} : vector<64x64xbf16> to vector<32x64xbf16>
    %cst_220 = arith.constant dense<0.000000e+00> : vector<32x32xf32>
    %497 = tpu.matmul %496, %458, %cst_220 {dimension_numbers = #tpu.dot_dimension_numbers<[1], [1], [0], [0], [0, 0, 1, 0], [], []>} : vector<32x64xbf16>, vector<32x64xbf16>, vector<32x32xf32> -> vector<32x32xf32>
    %498 = vector.broadcast %5 : vector<1x32xf32> to vector<32x32xf32>
    %499 = arith.addf %497, %498 : vector<32x32xf32>
    %cst_221 = arith.constant dense<0xFF800000> : vector<32xf32>
    %500 = vector.multi_reduction <maximumf>, %499, %cst_221 [1] : vector<32x32xf32> to vector<32xf32>
    %501 = vector.shape_cast %500 : vector<32xf32> to vector<32x1xf32>
    %502 = vector.broadcast %501 : vector<32x1xf32> to vector<32x32xf32>
    %503 = arith.subf %499, %502 : vector<32x32xf32>
    %504 = math.exp %503 : vector<32x32xf32>
    %cst_222 = arith.constant dense<0.000000e+00> : vector<32xf32>
    %505 = vector.multi_reduction <add>, %504, %cst_222 [1] : vector<32x32xf32> to vector<32xf32>
    %506 = vector.shape_cast %505 : vector<32xf32> to vector<32x1xf32>
    %507 = tpu.reciprocal %506 {approx = true} : vector<32x1xf32> -> vector<32x1xf32>
    %508 = vector.broadcast %507 : vector<32x1xf32> to vector<32x32xf32>
    %509 = arith.mulf %504, %508 : vector<32x32xf32>
    %510 = arith.truncf %509 : vector<32x32xf32> to vector<32x32xbf16>
    %511 = vector.extract_strided_slice %367 {offsets = [32, 0], sizes = [32, 64], strides = [1, 1]} : vector<64x64xbf16> to vector<32x64xbf16>
    %cst_223 = arith.constant dense<0.000000e+00> : vector<32x64xf32>
    %512 = tpu.matmul %510, %511, %cst_223 {dimension_numbers = #tpu.dot_dimension_numbers<[1], [0], [0], [1], [0, 0, 1, 1], [], []>} : vector<32x32xbf16>, vector<32x64xbf16>, vector<32x64xf32> -> vector<32x64xf32>
    %513 = arith.addf %495, %512 : vector<32x64xf32>
    %514 = vector.extract_strided_slice %375 {offsets = [32, 0], sizes = [32, 64], strides = [1, 1]} : vector<64x64xbf16> to vector<32x64xbf16>
    %cst_224 = arith.constant dense<0.000000e+00> : vector<32x32xf32>
    %515 = tpu.matmul %514, %458, %cst_224 {dimension_numbers = #tpu.dot_dimension_numbers<[1], [1], [0], [0], [0, 0, 1, 0], [], []>} : vector<32x64xbf16>, vector<32x64xbf16>, vector<32x32xf32> -> vector<32x32xf32>
    %516 = vector.broadcast %5 : vector<1x32xf32> to vector<32x32xf32>
    %517 = arith.addf %515, %516 : vector<32x32xf32>
    %cst_225 = arith.constant dense<0xFF800000> : vector<32xf32>
    %518 = vector.multi_reduction <maximumf>, %517, %cst_225 [1] : vector<32x32xf32> to vector<32xf32>
    %519 = vector.shape_cast %518 : vector<32xf32> to vector<32x1xf32>
    %520 = vector.broadcast %519 : vector<32x1xf32> to vector<32x32xf32>
    %521 = arith.subf %517, %520 : vector<32x32xf32>
    %522 = math.exp %521 : vector<32x32xf32>
    %cst_226 = arith.constant dense<0.000000e+00> : vector<32xf32>
    %523 = vector.multi_reduction <add>, %522, %cst_226 [1] : vector<32x32xf32> to vector<32xf32>
    %524 = vector.shape_cast %523 : vector<32xf32> to vector<32x1xf32>
    %525 = tpu.reciprocal %524 {approx = true} : vector<32x1xf32> -> vector<32x1xf32>
    %526 = vector.broadcast %525 : vector<32x1xf32> to vector<32x32xf32>
    %527 = arith.mulf %522, %526 : vector<32x32xf32>
    %528 = arith.truncf %527 : vector<32x32xf32> to vector<32x32xbf16>
    %529 = vector.extract_strided_slice %383 {offsets = [32, 0], sizes = [32, 64], strides = [1, 1]} : vector<64x64xbf16> to vector<32x64xbf16>
    %cst_227 = arith.constant dense<0.000000e+00> : vector<32x64xf32>
    %530 = tpu.matmul %528, %529, %cst_227 {dimension_numbers = #tpu.dot_dimension_numbers<[1], [0], [0], [1], [0, 0, 1, 1], [], []>} : vector<32x32xbf16>, vector<32x64xbf16>, vector<32x64xf32> -> vector<32x64xf32>
    %531 = arith.addf %513, %530 : vector<32x64xf32>
    %532 = tpu.concatenate %457, %531 in 0 : vector<32x64xf32>, vector<32x64xf32> -> vector<64x64xf32>
    %533 = arith.addf %294, %532 : vector<64x64xf32>
    %c1_228 = arith.constant 1 : index
    %c0_229 = arith.constant 0 : index
    %c0_230 = arith.constant 0 : index
    %534 = vector.load %arg11[%c1_228, %c0_229, %c0_230] : memref<2x1x64xf32, #tpu.memory_space<vmem>>, vector<1x1x64xf32>
    %535 = vector.shape_cast %534 : vector<1x1x64xf32> to vector<1x64xf32>
    %536 = vector.broadcast %535 : vector<1x64xf32> to vector<64x64xf32>
    %537 = arith.addf %533, %536 : vector<64x64xf32>
    %cst_231 = arith.constant dense<0.000000e+00> : vector<64xf32>
    %538 = vector.multi_reduction <add>, %537, %cst_231 [1] : vector<64x64xf32> to vector<64xf32>
    %539 = vector.shape_cast %538 : vector<64xf32> to vector<64x1xf32>
    %cst_232 = arith.constant 6.400000e+01 : f32
    %540 = vector.broadcast %cst_232 : f32 to vector<64x1xf32>
    %541 = arith.divf %539, %540 : vector<64x1xf32>
    %542 = vector.broadcast %541 : vector<64x1xf32> to vector<64x64xf32>
    %543 = arith.subf %537, %542 : vector<64x64xf32>
    %544 = arith.mulf %543, %543 : vector<64x64xf32>
    %cst_233 = arith.constant dense<0.000000e+00> : vector<64xf32>
    %545 = vector.multi_reduction <add>, %544, %cst_233 [1] : vector<64x64xf32> to vector<64xf32>
    %546 = vector.shape_cast %545 : vector<64xf32> to vector<64x1xf32>
    %cst_234 = arith.constant 6.400000e+01 : f32
    %547 = vector.broadcast %cst_234 : f32 to vector<64x1xf32>
    %548 = arith.divf %546, %547 : vector<64x1xf32>
    %cst_235 = arith.constant 9.99999997E-7 : f32
    %549 = vector.broadcast %cst_235 : f32 to vector<64x1xf32>
    %550 = arith.addf %548, %549 : vector<64x1xf32>
    %551 = math.rsqrt %550 : vector<64x1xf32>
    %552 = vector.broadcast %551 : vector<64x1xf32> to vector<64x64xf32>
    %553 = arith.mulf %543, %552 : vector<64x64xf32>
    %554 = arith.truncf %553 : vector<64x64xf32> to vector<64x64xbf16>
    %c1_236 = arith.constant 1 : index
    %c0_237 = arith.constant 0 : index
    %c0_238 = arith.constant 0 : index
    %555 = vector.load %arg12[%c1_236, %c0_237, %c0_238] : memref<2x64x256xbf16, #tpu.memory_space<vmem>>, vector<1x64x256xbf16>
    %556 = vector.shape_cast %555 : vector<1x64x256xbf16> to vector<64x256xbf16>
    %cst_239 = arith.constant dense<0.000000e+00> : vector<64x256xf32>
    %557 = tpu.matmul %554, %556, %cst_239 {dimension_numbers = #tpu.dot_dimension_numbers<[1], [0], [0], [1], [0, 0, 1, 1], [], []>} : vector<64x64xbf16>, vector<64x256xbf16>, vector<64x256xf32> -> vector<64x256xf32>
    %c1_240 = arith.constant 1 : index
    %c0_241 = arith.constant 0 : index
    %c0_242 = arith.constant 0 : index
    %558 = vector.load %arg13[%c1_240, %c0_241, %c0_242] : memref<2x1x256xf32, #tpu.memory_space<vmem>>, vector<1x1x256xf32>
    %559 = vector.shape_cast %558 : vector<1x1x256xf32> to vector<1x256xf32>
    %560 = vector.broadcast %559 : vector<1x256xf32> to vector<64x256xf32>
    %561 = arith.addf %557, %560 : vector<64x256xf32>
    %cst_243 = arith.constant 4.471500e-02 : f32
    %562 = vector.broadcast %cst_243 : f32 to vector<64x256xf32>
    %563 = arith.mulf %562, %561 : vector<64x256xf32>
    %564 = arith.mulf %563, %561 : vector<64x256xf32>
    %565 = arith.mulf %564, %561 : vector<64x256xf32>
    %566 = arith.addf %561, %565 : vector<64x256xf32>
    %cst_244 = arith.constant 0.797884583 : f32
    %567 = vector.broadcast %cst_244 : f32 to vector<64x256xf32>
    %568 = arith.mulf %567, %566 : vector<64x256xf32>
    %cst_245 = arith.constant 5.000000e-01 : f32
    %569 = vector.broadcast %cst_245 : f32 to vector<64x256xf32>
    %570 = arith.mulf %569, %561 : vector<64x256xf32>
    %571 = math.tanh %568 : vector<64x256xf32>
    %cst_246 = arith.constant 1.000000e+00 : f32
    %572 = vector.broadcast %cst_246 : f32 to vector<64x256xf32>
    %573 = arith.addf %572, %571 : vector<64x256xf32>
    %574 = arith.mulf %570, %573 : vector<64x256xf32>
    %575 = arith.truncf %574 : vector<64x256xf32> to vector<64x256xbf16>
    %c1_247 = arith.constant 1 : index
    %c0_248 = arith.constant 0 : index
    %c0_249 = arith.constant 0 : index
    %576 = vector.load %arg14[%c1_247, %c0_248, %c0_249] : memref<2x256x64xbf16, #tpu.memory_space<vmem>>, vector<1x256x64xbf16>
    %577 = vector.shape_cast %576 : vector<1x256x64xbf16> to vector<256x64xbf16>
    %cst_250 = arith.constant dense<0.000000e+00> : vector<64x64xf32>
    %578 = tpu.matmul %575, %577, %cst_250 {dimension_numbers = #tpu.dot_dimension_numbers<[1], [0], [0], [1], [0, 0, 1, 1], [], []>} : vector<64x256xbf16>, vector<256x64xbf16>, vector<64x64xf32> -> vector<64x64xf32>
    %c1_251 = arith.constant 1 : index
    %c0_252 = arith.constant 0 : index
    %c0_253 = arith.constant 0 : index
    %579 = vector.load %arg15[%c1_251, %c0_252, %c0_253] : memref<2x1x64xf32, #tpu.memory_space<vmem>>, vector<1x1x64xf32>
    %580 = vector.shape_cast %579 : vector<1x1x64xf32> to vector<1x64xf32>
    %581 = vector.broadcast %580 : vector<1x64xf32> to vector<64x64xf32>
    %582 = arith.addf %578, %581 : vector<64x64xf32>
    %583 = arith.addf %537, %582 : vector<64x64xf32>
    %584 = vector.extract_strided_slice %583 {offsets = [0, 0], sizes = [1, 64], strides = [1, 1]} : vector<64x64xf32> to vector<1x64xf32>
    %585 = vector.extract_strided_slice %583 {offsets = [32, 0], sizes = [1, 64], strides = [1, 1]} : vector<64x64xf32> to vector<1x64xf32>
    %586 = tpu.concatenate %584, %585 in 0 : vector<1x64xf32>, vector<1x64xf32> -> vector<2x64xf32>
    %cst_254 = arith.constant dense<0.000000e+00> : vector<2xf32>
    %587 = vector.multi_reduction <add>, %586, %cst_254 [1] : vector<2x64xf32> to vector<2xf32>
    %588 = vector.shape_cast %587 : vector<2xf32> to vector<2x1xf32>
    %cst_255 = arith.constant 6.400000e+01 : f32
    %589 = vector.broadcast %cst_255 : f32 to vector<2x1xf32>
    %590 = arith.divf %588, %589 : vector<2x1xf32>
    %591 = vector.broadcast %590 : vector<2x1xf32> to vector<2x64xf32>
    %592 = arith.subf %586, %591 : vector<2x64xf32>
    %593 = arith.mulf %592, %592 : vector<2x64xf32>
    %cst_256 = arith.constant dense<0.000000e+00> : vector<2xf32>
    %594 = vector.multi_reduction <add>, %593, %cst_256 [1] : vector<2x64xf32> to vector<2xf32>
    %595 = vector.shape_cast %594 : vector<2xf32> to vector<2x1xf32>
    %cst_257 = arith.constant 6.400000e+01 : f32
    %596 = vector.broadcast %cst_257 : f32 to vector<2x1xf32>
    %597 = arith.divf %595, %596 : vector<2x1xf32>
    %cst_258 = arith.constant 9.99999997E-7 : f32
    %598 = vector.broadcast %cst_258 : f32 to vector<2x1xf32>
    %599 = arith.addf %597, %598 : vector<2x1xf32>
    %600 = math.rsqrt %599 : vector<2x1xf32>
    %601 = vector.broadcast %600 : vector<2x1xf32> to vector<2x64xf32>
    %602 = arith.mulf %592, %601 : vector<2x64xf32>
    %603 = arith.truncf %602 : vector<2x64xf32> to vector<2x64xbf16>
    %c0_259 = arith.constant 0 : index
    %c0_260 = arith.constant 0 : index
    %604 = vector.load %arg16[%c0_259, %c0_260] : memref<64x128xbf16, #tpu.memory_space<vmem>>, vector<64x128xbf16>
    %cst_261 = arith.constant dense<0.000000e+00> : vector<2x128xf32>
    %605 = tpu.matmul %603, %604, %cst_261 {dimension_numbers = #tpu.dot_dimension_numbers<[1], [0], [0], [1], [0, 0, 1, 1], [], []>} : vector<2x64xbf16>, vector<64x128xbf16>, vector<2x128xf32> -> vector<2x128xf32>
    %c0_262 = arith.constant 0 : index
    %c0_263 = arith.constant 0 : index
    %606 = vector.load %arg17[%c0_262, %c0_263] : memref<1x128xf32, #tpu.memory_space<vmem>>, vector<1x128xf32>
    %607 = vector.broadcast %606 : vector<1x128xf32> to vector<2x128xf32>
    %608 = arith.addf %605, %607 : vector<2x128xf32>
    %c0_264 = arith.constant 0 : index
    %c0_265 = arith.constant 0 : index
    %c0_266 = arith.constant 0 : index
    %609 = vector.load %arg18[%c0_264, %c0_265, %c0_266] : memref<1x2x128xf32, #tpu.memory_space<vmem>>, vector<1x2x128xf32>
    %610 = vector.shape_cast %609 : vector<1x2x128xf32> to vector<2x128xf32>
    %611 = vector.shape_cast %608 : vector<2x128xf32> to vector<1x2x128xf32>
    tpu.vector_store %arg18[%c0_264, %c0_265, %c0_266], %611 {strides = array<i32>} : memref<1x2x128xf32, #tpu.memory_space<vmem>>, vector<1x2x128xf32>,
    return
  }
  func.func @transform_0(%arg0: i32) -> (i32, i32) {
    %c0_i32 = arith.constant 0 : i32
    %c0_i32_0 = arith.constant 0 : i32
    return %arg0, %c0_i32 : i32, i32
  }
  func.func @transform_1(%arg0: i32) -> (i32, i32) {
    %c0_i32 = arith.constant 0 : i32
    %c0_i32_0 = arith.constant 0 : i32
    %c0_i32_1 = arith.constant 0 : i32
    return %c0_i32, %c0_i32_0 : i32, i32
  }
  func.func @transform_2(%arg0: i32) -> (i32, i32) {
    %c0_i32 = arith.constant 0 : i32
    %c0_i32_0 = arith.constant 0 : i32
    %c0_i32_1 = arith.constant 0 : i32
    return %c0_i32, %c0_i32_0 : i32, i32
  }
  func.func @transform_3(%arg0: i32) -> (i32, i32) {
    %c0_i32 = arith.constant 0 : i32
    %c0_i32_0 = arith.constant 0 : i32
    %c0_i32_1 = arith.constant 0 : i32
    return %c0_i32, %c0_i32_0 : i32, i32
  }
  func.func @transform_4(%arg0: i32) -> (i32, i32, i32) {
    %c0_i32 = arith.constant 0 : i32
    %c0_i32_0 = arith.constant 0 : i32
    %c0_i32_1 = arith.constant 0 : i32
    %c0_i32_2 = arith.constant 0 : i32
    return %c0_i32, %c0_i32_0, %c0_i32_1 : i32, i32, i32
  }
  func.func @transform_5(%arg0: i32) -> (i32, i32, i32) {
    %c0_i32 = arith.constant 0 : i32
    %c0_i32_0 = arith.constant 0 : i32
    %c0_i32_1 = arith.constant 0 : i32
    %c0_i32_2 = arith.constant 0 : i32
    return %c0_i32, %c0_i32_0, %c0_i32_1 : i32, i32, i32
  }
  func.func @transform_6(%arg0: i32) -> (i32, i32, i32) {
    %c0_i32 = arith.constant 0 : i32
    %c0_i32_0 = arith.constant 0 : i32
    %c0_i32_1 = arith.constant 0 : i32
    %c0_i32_2 = arith.constant 0 : i32
    return %c0_i32, %c0_i32_0, %c0_i32_1 : i32, i32, i32
  }
  func.func @transform_7(%arg0: i32) -> (i32, i32, i32) {
    %c0_i32 = arith.constant 0 : i32
    %c0_i32_0 = arith.constant 0 : i32
    %c0_i32_1 = arith.constant 0 : i32
    %c0_i32_2 = arith.constant 0 : i32
    return %c0_i32, %c0_i32_0, %c0_i32_1 : i32, i32, i32
  }
  func.func @transform_8(%arg0: i32) -> (i32, i32, i32) {
    %c0_i32 = arith.constant 0 : i32
    %c0_i32_0 = arith.constant 0 : i32
    %c0_i32_1 = arith.constant 0 : i32
    %c0_i32_2 = arith.constant 0 : i32
    return %c0_i32, %c0_i32_0, %c0_i32_1 : i32, i32, i32
  }
  func.func @transform_9(%arg0: i32) -> (i32, i32, i32) {
    %c0_i32 = arith.constant 0 : i32
    %c0_i32_0 = arith.constant 0 : i32
    %c0_i32_1 = arith.constant 0 : i32
    %c0_i32_2 = arith.constant 0 : i32
    return %c0_i32, %c0_i32_0, %c0_i32_1 : i32, i32, i32
  }
  func.func @transform_10(%arg0: i32) -> (i32, i32, i32) {
    %c0_i32 = arith.constant 0 : i32
    %c0_i32_0 = arith.constant 0 : i32
    %c0_i32_1 = arith.constant 0 : i32
    %c0_i32_2 = arith.constant 0 : i32
    return %c0_i32, %c0_i32_0, %c0_i32_1 : i32, i32, i32
  }
  func.func @transform_11(%arg0: i32) -> (i32, i32, i32) {
    %c0_i32 = arith.constant 0 : i32
    %c0_i32_0 = arith.constant 0 : i32
    %c0_i32_1 = arith.constant 0 : i32
    %c0_i32_2 = arith.constant 0 : i32
    return %c0_i32, %c0_i32_0, %c0_i32_1 : i32, i32, i32
  }
  func.func @transform_12(%arg0: i32) -> (i32, i32, i32) {
    %c0_i32 = arith.constant 0 : i32
    %c0_i32_0 = arith.constant 0 : i32
    %c0_i32_1 = arith.constant 0 : i32
    %c0_i32_2 = arith.constant 0 : i32
    return %c0_i32, %c0_i32_0, %c0_i32_1 : i32, i32, i32
  }
  func.func @transform_13(%arg0: i32) -> (i32, i32, i32) {
    %c0_i32 = arith.constant 0 : i32
    %c0_i32_0 = arith.constant 0 : i32
    %c0_i32_1 = arith.constant 0 : i32
    %c0_i32_2 = arith.constant 0 : i32
    return %c0_i32, %c0_i32_0, %c0_i32_1 : i32, i32, i32
  }
  func.func @transform_14(%arg0: i32) -> (i32, i32, i32) {
    %c0_i32 = arith.constant 0 : i32
    %c0_i32_0 = arith.constant 0 : i32
    %c0_i32_1 = arith.constant 0 : i32
    %c0_i32_2 = arith.constant 0 : i32
    return %c0_i32, %c0_i32_0, %c0_i32_1 : i32, i32, i32
  }
  func.func @transform_15(%arg0: i32) -> (i32, i32) {
    %c0_i32 = arith.constant 0 : i32
    %c0_i32_0 = arith.constant 0 : i32
    %c0_i32_1 = arith.constant 0 : i32
    return %c0_i32, %c0_i32_0 : i32, i32
  }
  func.func @transform_16(%arg0: i32) -> (i32, i32) {
    %c0_i32 = arith.constant 0 : i32
    %c0_i32_0 = arith.constant 0 : i32
    %c0_i32_1 = arith.constant 0 : i32
    return %c0_i32, %c0_i32_0 : i32, i32
  }
  func.func @transform_17(%arg0: i32) -> (i32, i32, i32) {
    %c0_i32 = arith.constant 0 : i32
    %c0_i32_0 = arith.constant 0 : i32
    %c0_i32_1 = arith.constant 0 : i32
    return %arg0, %c0_i32, %c0_i32_0 : i32, i32, i32
  }
}

</mosaic_0001>

<llo_original>
// kernel: vit_forward.1
$region0: #{vit_forward.1}
  #allocation0 [shape = 'u32[]', space=smem, size = 0x4, offset = 0x4, fixed_abs, tag = 'smem constant byte address 0x4 - core index']
  #allocation1 [shape = 'u32[144,128]{1,0:T(1,128)}', space=vmem, size = 0x12000, scoped, tag = 'internal scratch']
  %s0 = inlined_call_operand.vmem [shape: bf16[64,192], index: 0, kind: input, shape index: {}]
  %s1 = inlined_call_operand.vmem [shape: f32[1,32], index: 1, kind: input, shape index: {}]
  %s2 = inlined_call_operand.vmem [shape: bf16[192,64], index: 2, kind: input, shape index: {}]
  %s3 = inlined_call_operand.vmem [shape: f32[64,64], index: 3, kind: input, shape index: {}]
  %s4 = inlined_call_operand.vmem [shape: f32[2,1,64], index: 4, kind: input, shape index: {}]
  %s5 = inlined_call_operand.vmem [shape: f32[2,1,64], index: 5, kind: input, shape index: {}]
  %s6 = inlined_call_operand.vmem [shape: bf16[8,64,64], index: 6, kind: input, shape index: {}]
  %s7 = inlined_call_operand.vmem [shape: f32[8,1,64], index: 7, kind: input, shape index: {}]
  %s8 = inlined_call_operand.vmem [shape: bf16[8,64,64], index: 8, kind: input, shape index: {}]
  %s9 = inlined_call_operand.vmem [shape: f32[8,1,64], index: 9, kind: input, shape index: {}]
  %s10 = inlined_call_operand.vmem [shape: f32[2,1,64], index: 10, kind: input, shape index: {}]
  %s11 = inlined_call_operand.vmem [shape: bf16[2,64,256], index: 11, kind: input, shape index: {}]
  %s12 = inlined_call_operand.vmem [shape: f32[2,1,256], index: 12, kind: input, shape index: {}]
  %s13 = inlined_call_operand.vmem [shape: bf16[2,256,64], index: 13, kind: input, shape index: {}]
  %s14 = inlined_call_operand.vmem [shape: f32[2,1,64], index: 14, kind: input, shape index: {}]
  %s15 = inlined_call_operand.vmem [shape: bf16[64,128], index: 15, kind: input, shape index: {}]
  %s16 = inlined_call_operand.vmem [shape: f32[1,128], index: 16, kind: input, shape index: {}]
  %s17 = inlined_call_operand.hbm [shape: f32[1,2,128], index: 17, kind: output, shape index: {}]
  %s18 = sld [smem:[#allocation0]]
  $region78: #{vit_forward.1} parent=0
    _
  %s20 = ssub.s32 1, %s18
  %s21 = scalar_select 0, %s20, %s18
  $region1: #{vit_forward.1} parent=0
    #allocation2 [shape = 'u8[1024]{0}', space=vmem, size = 0x400, scoped, tag = 'output window, operand 0, single buffered']
    #allocation3 [shape = 's32[1]{0}', space=sflag, size = 0x4, scoped, tag = 'scoped memory for vit_forward.1']
    %22 = vsyncpa [#allocation3], 0
    // Predicated region
    $region2: #{vit_forward.1} parent=1 // pred_check
      _
    $region3: #{vit_forward.1} parent=1 // pred_check_branch
      %24 = sbr.rel (0) target = $region5
    $region4: #{vit_forward.1} parent=1 // pred_region
      _
    $region5: #{vit_forward.1} parent=1 // pred_fallthru
      _
    // Predicated region
    $region6: #{vit_forward.1} parent=1 // pred_check
      _
    $region7: #{vit_forward.1} parent=1 // pred_check_branch
      %26 = sbr.rel (0) target = $region9
    $region8: #{vit_forward.1} parent=1 // pred_region
      _
    $region9: #{vit_forward.1} parent=1 // pred_fallthru
      _
    // Predicated region
    $region10: #{vit_forward.1} parent=1 // pred_check
      _
    $region11: #{vit_forward.1} parent=1 // pred_check_branch
      %28 = sbr.rel (0) target = $region13
    $region12: #{vit_forward.1} parent=1 // pred_region
      _
    $region13: #{vit_forward.1} parent=1 // pred_fallthru
      _
    // Predicated region
    $region14: #{vit_forward.1} parent=1 // pred_check
      _
    $region15: #{vit_forward.1} parent=1 // pred_check_branch
      %30 = sbr.rel (0) target = $region17
    $region16: #{vit_forward.1} parent=1 // pred_region
      _
    $region17: #{vit_forward.1} parent=1 // pred_fallthru
      _
    // Predicated region
    $region18: #{vit_forward.1} parent=1 // pred_check
      _
    $region19: #{vit_forward.1} parent=1 // pred_check_branch
      %32 = sbr.rel (0) target = $region21
    $region20: #{vit_forward.1} parent=1 // pred_region
      _
    $region21: #{vit_forward.1} parent=1 // pred_fallthru
      _
    // Predicated region
    $region22: #{vit_forward.1} parent=1 // pred_check
      _
    $region23: #{vit_forward.1} parent=1 // pred_check_branch
      %34 = sbr.rel (0) target = $region25
    $region24: #{vit_forward.1} parent=1 // pred_region
      _
    $region25: #{vit_forward.1} parent=1 // pred_fallthru
      _
    // Predicated region
    $region26: #{vit_forward.1} parent=1 // pred_check
      _
    $region27: #{vit_forward.1} parent=1 // pred_check_branch
      %36 = sbr.rel (0) target = $region29
    $region28: #{vit_forward.1} parent=1 // pred_region
      _
    $region29: #{vit_forward.1} parent=1 // pred_fallthru
      _
    // Predicated region
    $region30: #{vit_forward.1} parent=1 // pred_check
      _
    $region31: #{vit_forward.1} parent=1 // pred_check_branch
      %38 = sbr.rel (0) target = $region33
    $region32: #{vit_forward.1} parent=1 // pred_region
      _
    $region33: #{vit_forward.1} parent=1 // pred_fallthru
      _
    // Predicated region
    $region34: #{vit_forward.1} parent=1 // pred_check
      _
    $region35: #{vit_forward.1} parent=1 // pred_check_branch
      %40 = sbr.rel (0) target = $region37
    $region36: #{vit_forward.1} parent=1 // pred_region
      _
    $region37: #{vit_forward.1} parent=1 // pred_fallthru
      _
    // Predicated region
    $region38: #{vit_forward.1} parent=1 // pred_check
      _
    $region39: #{vit_forward.1} parent=1 // pred_check_branch
      %42 = sbr.rel (0) target = $region41
    $region40: #{vit_forward.1} parent=1 // pred_region
      _
    $region41: #{vit_forward.1} parent=1 // pred_fallthru
      _
    // Predicated region
    $region42: #{vit_forward.1} parent=1 // pred_check
      _
    $region43: #{vit_forward.1} parent=1 // pred_check_branch
      %44 = sbr.rel (0) target = $region45
    $region44: #{vit_forward.1} parent=1 // pred_region
      _
    $region45: #{vit_forward.1} parent=1 // pred_fallthru
      _
    // Predicated region
    $region46: #{vit_forward.1} parent=1 // pred_check
      _
    $region47: #{vit_forward.1} parent=1 // pred_check_branch
      %46 = sbr.rel (0) target = $region49
    $region48: #{vit_forward.1} parent=1 // pred_region
      _
    $region49: #{vit_forward.1} parent=1 // pred_fallthru
      _
    // Predicated region
    $region50: #{vit_forward.1} parent=1 // pred_check
      _
    $region51: #{vit_forward.1} parent=1 // pred_check_branch
      %48 = sbr.rel (0) target = $region53
    $region52: #{vit_forward.1} parent=1 // pred_region
      _
    $region53: #{vit_forward.1} parent=1 // pred_fallthru
      _
    // Predicated region
    $region54: #{vit_forward.1} parent=1 // pred_check
      _
    $region55: #{vit_forward.1} parent=1 // pred_check_branch
      %50 = sbr.rel (0) target = $region57
    $region56: #{vit_forward.1} parent=1 // pred_region
      _
    $region57: #{vit_forward.1} parent=1 // pred_fallthru
      _
    // Predicated region
    $region58: #{vit_forward.1} parent=1 // pred_check
      _
    $region59: #{vit_forward.1} parent=1 // pred_check_branch
      %52 = sbr.rel (0) target = $region61
    $region60: #{vit_forward.1} parent=1 // pred_region
      _
    $region61: #{vit_forward.1} parent=1 // pred_fallthru
      _
    // Predicated region
    $region62: #{vit_forward.1} parent=1 // pred_check
      _
    $region63: #{vit_forward.1} parent=1 // pred_check_branch
      %54 = sbr.rel (0) target = $region65
    $region64: #{vit_forward.1} parent=1 // pred_region
      _
    $region65: #{vit_forward.1} parent=1 // pred_fallthru
      _
    // Predicated region
    $region66: #{vit_forward.1} parent=1 // pred_check
      _
    $region67: #{vit_forward.1} parent=1 // pred_check_branch
      %56 = sbr.rel (0) target = $region69
    $region68: #{vit_forward.1} parent=1 // pred_region
      _
    $region69: #{vit_forward.1} parent=1 // pred_fallthru
      _
    %v58 = vld [vmem:[%s0] sm:$0xff]
    %v59 = vld [vmem:[%s0 + $0x8] sm:$0xff]
    %v60 = vld [vmem:[%s0 + $0x10] sm:$0xff]
    %v61 = vld [vmem:[%s0 + $0x18] sm:$0xff]
    %v62 = vld [vmem:[%s0 + $0x20] sm:$0xff]
    %v63 = vld [vmem:[%s0 + $0x28] sm:$0xff]
    %v64 = vld [vmem:[%s0 + $0x30] sm:$0xff]
    %v65 = vld [vmem:[%s0 + $0x38] sm:$0xff]
    %v66 = vld [vmem:[%s2] sm:$0xf]
    %v67 = vld [vmem:[%s2 + $0x4] sm:$0xf]
    %v68 = vld [vmem:[%s2 + $0x8] sm:$0xf]
    %v69 = vld [vmem:[%s2 + $0xc] sm:$0xf]
    %v70 = vld [vmem:[%s2 + $0x10] sm:$0xf]
    %v71 = vld [vmem:[%s2 + $0x14] sm:$0xf]
    %v72 = vld [vmem:[%s2 + $0x18] sm:$0xf]
    %v73 = vld [vmem:[%s2 + $0x1c] sm:$0xf]
    %v74 = vld [vmem:[%s2 + $0x20] sm:$0xf]
    %v75 = vld [vmem:[%s2 + $0x24] sm:$0xf]
    %v76 = vld [vmem:[%s2 + $0x28] sm:$0xf]
    %v77 = vld [vmem:[%s2 + $0x2c] sm:$0xf]
    %v78 = vld [vmem:[%s2 + $0x30] sm:$0xf]
    %v79 = vld [vmem:[%s2 + $0x34] sm:$0xf]
    %v80 = vld [vmem:[%s2 + $0x38] sm:$0xf]
    %v81 = vld [vmem:[%s2 + $0x3c] sm:$0xf]
    %v82 = vld [vmem:[%s2 + $0x40] sm:$0xf]
    %v83 = vld [vmem:[%s2 + $0x44] sm:$0xf]
    %v84 = vld [vmem:[%s2 + $0x48] sm:$0xf]
    %v85 = vld [vmem:[%s2 + $0x4c] sm:$0xf]
    %v86 = vld [vmem:[%s2 + $0x50] sm:$0xf]
    %v87 = vld [vmem:[%s2 + $0x54] sm:$0xf]
    %v88 = vld [vmem:[%s2 + $0x58] sm:$0xf]
    %v89 = vld [vmem:[%s2 + $0x5c] sm:$0xf]
    %v90 = vld [vmem:[%s3] sm:$0xff]
    %v91 = vld [vmem:[%s3 + $0x8] sm:$0xff]
    %v92 = vld [vmem:[%s3 + $0x10] sm:$0xff]
    %v93 = vld [vmem:[%s3 + $0x18] sm:$0xff]
    %v94 = vld [vmem:[%s3 + $0x20] sm:$0xff]
    %v95 = vld [vmem:[%s3 + $0x28] sm:$0xff]
    %v96 = vld [vmem:[%s3 + $0x30] sm:$0xff]
    %v97 = vld [vmem:[%s3 + $0x38] sm:$0xff]
    %v106 = vunpack.c.l.b16 %v58
    %v107 = vunpack.c.h.b16 %v58
    %v108 = vunpack.c.l.b16 %v59
    %v109 = vunpack.c.h.b16 %v59
    %v110 = vunpack.c.l.b16 %v60
    %v111 = vunpack.c.h.b16 %v60
    %v112 = vunpack.c.l.b16 %v61
    %v113 = vunpack.c.h.b16 %v61
    %v114 = vunpack.c.l.b16 %v62
    %v115 = vunpack.c.h.b16 %v62
    %v116 = vunpack.c.l.b16 %v63
    %v117 = vunpack.c.h.b16 %v63
    %v118 = vunpack.c.l.b16 %v64
    %v119 = vunpack.c.h.b16 %v64
    %v120 = vunpack.c.l.b16 %v65
    %v121 = vunpack.c.h.b16 %v65
    %v122 = vpack.c.b16 %v108, %v106
    %v123 = vpack.c.b16 %v109, %v107
    %v124 = vpack.c.b16 %v112, %v110
    %v125 = vpack.c.b16 %v113, %v111
    %v126 = vpack.c.b16 %v116, %v114
    %v127 = vpack.c.b16 %v117, %v115
    %v128 = vpack.c.b16 %v120, %v118
    %v129 = vpack.c.b16 %v121, %v119
    %v158 = vunpack.c.l.b16 %v66
    %v159 = vunpack.c.l.b16 %v67
    %v160 = vunpack.c.l.b16 %v68
    %v161 = vunpack.c.l.b16 %v69
    %v162 = vunpack.c.l.b16 %v70
    %v163 = vunpack.c.l.b16 %v71
    %v164 = vunpack.c.l.b16 %v72
    %v165 = vunpack.c.l.b16 %v73
    %v166 = vunpack.c.l.b16 %v74
    %v167 = vunpack.c.l.b16 %v75
    %v168 = vunpack.c.l.b16 %v76
    %v169 = vunpack.c.l.b16 %v77
    %v170 = vunpack.c.l.b16 %v78
    %v171 = vunpack.c.l.b16 %v79
    %v172 = vunpack.c.l.b16 %v80
    %v173 = vunpack.c.l.b16 %v81
    %v174 = vunpack.c.l.b16 %v82
    %v175 = vunpack.c.l.b16 %v83
    %v176 = vunpack.c.l.b16 %v84
    %v177 = vunpack.c.l.b16 %v85
    %v178 = vunpack.c.l.b16 %v86
    %v179 = vunpack.c.l.b16 %v87
    %v180 = vunpack.c.l.b16 %v88
    %v181 = vunpack.c.l.b16 %v89
    %v182 = vpack.c.b16 %v159, %v158
    %v183 = vpack.c.b16 %v161, %v160
    %v184 = vpack.c.b16 %v163, %v162
    %v185 = vpack.c.b16 %v165, %v164
    %v186 = vpack.c.b16 %v167, %v166
    %v187 = vpack.c.b16 %v169, %v168
    %v188 = vpack.c.b16 %v171, %v170
    %v189 = vpack.c.b16 %v173, %v172
    %v190 = vpack.c.b16 %v175, %v174
    %v191 = vpack.c.b16 %v177, %v176
    %v192 = vpack.c.b16 %v179, %v178
    %v193 = vpack.c.b16 %v181, %v180
    %vm206 = vcmask 523264
    %v208 = vsel %vm206, %v123, 0
    %v211 = vsel %vm206, %v125, 0
    %v214 = vsel %vm206, %v127, 0
    %v217 = vsel %vm206, %v129, 0
    %219 = vmatprep.subr.bf16.mxu0 0
    %220 = vmatpush1.bf16.msra.mxu0 %v182
    %221 = vmatprep.subr.bf16.mxu0 0
    %222 = vmatpush1.bf16.msra.mxu0 %v183
    %223 = vmatprep.subr.bf16.mxu0 0
    %224 = vmatpush1.bf16.msra.mxu0 %v184
    %225 = vmatprep.subr.bf16.mxu0 0
    %226 = vmatpush1.bf16.msra.mxu0 %v185
    %227 = vmatprep.subr.bf16.mxu0 0
    %228 = vmatpush1.bf16.msra.mxu0 %v186
    %229 = vmatprep.subr.bf16.mxu0 0
    %230 = vmatpush1.bf16.msra.mxu0 %v187
    %231 = vmatprep.subr.bf16.mxu0 0
    %232 = vmatpush1.bf16.msra.mxu0 %v188
    %233 = vmatprep.subr.bf16.mxu0 0
    %234 = vmatpush1.bf16.msra.mxu0 %v189
    %235 = vmatprep.subr.bf16.mxu0 0
    %236 = vmatpush1.bf16.msra.mxu0 %v190
    %237 = vmatprep.subr.bf16.mxu0 0
    %238 = vmatpush1.bf16.msra.mxu0 %v191
    %239 = vmatprep.subr.bf16.mxu0 0
    %240 = vmatpush1.bf16.msra.mxu0 %v192
    %241 = vmatprep.subr.bf16.mxu0 0
    %242 = vmatpush1.bf16.msra.mxu0 %v193
    %243 = vmatprep.subr.bf16.mxu0 0
    %244 = vmatpush1.bf16.msra.mxu0 0
    %245 = vmatprep.subr.bf16.mxu0 0
    %246 = vmatpush1.bf16.msra.mxu0 0
    %247 = vmatprep.subr.bf16.mxu0 0
    %248 = vmatpush1.bf16.msra.mxu0 0
    %249 = vmatprep.subr.bf16.mxu0 0
    %250 = vmatpush1.bf16.msra.mxu0 0
    %251 = vmatprep.mubr.bf16.mxu0 %v208
    %252 = vmatmul.mubr.bf16.gmra.mrb[0].mxu0 %v122
    %v253 = vpop.f32.mrb[0].mxu0
    %v254 = vadd.f32 %v90, %v253
    %v255 = vpop.f32.mrb[0].mxu0
    %v256 = vpop.f32.mrb[0].mxu0
    %v257 = vadd.f32 %v91, %v256
    %v258 = vpop.f32.mrb[0].mxu0
    %259 = vmatprep.mubr.bf16.mxu0 %v211
    %260 = vmatmul.mubr.bf16.gmra.mrb[0].mxu0 %v124
    %v261 = vpop.f32.mrb[0].mxu0
    %v262 = vadd.f32 %v92, %v261
    %v263 = vpop.f32.mrb[0].mxu0
    %v264 = vpop.f32.mrb[0].mxu0
    %v265 = vadd.f32 %v93, %v264
    %v266 = vpop.f32.mrb[0].mxu0
    %267 = vmatprep.mubr.bf16.mxu0 %v214
    %268 = vmatmul.mubr.bf16.gmra.mrb[0].mxu0 %v126
    %v269 = vpop.f32.mrb[0].mxu0
    %v270 = vadd.f32 %v94, %v269
    %v271 = vpop.f32.mrb[0].mxu0
    %v272 = vpop.f32.mrb[0].mxu0
    %v273 = vadd.f32 %v95, %v272
    %v274 = vpop.f32.mrb[0].mxu0
    %275 = vmatprep.mubr.bf16.mxu0 %v217
    %276 = vmatmul.mubr.bf16.gmra.mrb[0].mxu0 %v128
    %v277 = vpop.f32.mrb[0].mxu0
    %v278 = vadd.f32 %v96, %v277
    %v279 = vpop.f32.mrb[0].mxu0
    %v280 = vpop.f32.mrb[0].mxu0
    %v281 = vadd.f32 %v97, %v280
    %v282 = vpop.f32.mrb[0].mxu0
    %283 = vdwg.mxu0
    %v284 = vld [vmem:[%s1] sm:$0x1]
    %v285 = vld [vmem:[%s4] sm:$0x1]
    %v286 = vld [vmem:[%s5] sm:$0x1]
    %v287 = vsel %vm206, %v254, 0.0
    %288 = vadd.xlane.f32.xlu0 %v287
    %v289 = vpop.xlane.xlu0 %288
    %v290 = vsel %vm206, %v257, 0.0
    %291 = vadd.xlane.f32.xlu0 %v290
    %v292 = vpop.xlane.xlu0 %291
    %v293 = vsel %vm206, %v262, 0.0
    %294 = vadd.xlane.f32.xlu0 %v293
    %v295 = vpop.xlane.xlu0 %294
    %v296 = vsel %vm206, %v265, 0.0
    %297 = vadd.xlane.f32.xlu0 %v296
    %v298 = vpop.xlane.xlu0 %297
    %v299 = vsel %vm206, %v270, 0.0
    %300 = vadd.xlane.f32.xlu0 %v299
    %v301 = vpop.xlane.xlu0 %300
    %v302 = vsel %vm206, %v273, 0.0
    %303 = vadd.xlane.f32.xlu0 %v302
    %v304 = vpop.xlane.xlu0 %303
    %v305 = vsel %vm206, %v278, 0.0
    %306 = vadd.xlane.f32.xlu0 %v305
    %v307 = vpop.xlane.xlu0 %306
    %v308 = vsel %vm206, %v281, 0.0
    %309 = vadd.xlane.f32.xlu0 %v308
    %v310 = vpop.xlane.xlu0 %309
    %v311 = vrcp.pop 64.0
    %v312 = vmul.f32 %v289, %v311
    %v313 = vmul.f32 %v292, %v311
    %v314 = vmul.f32 %v295, %v311
    %v315 = vmul.f32 %v298, %v311
    %v316 = vmul.f32 %v301, %v311
    %v317 = vmul.f32 %v304, %v311
    %v318 = vmul.f32 %v307, %v311
    %v319 = vmul.f32 %v310, %v311
    %v320 = vsub.f32 %v254, %v312
    %v321 = vsub.f32 %v257, %v313
    %v322 = vsub.f32 %v262, %v314
    %v323 = vsub.f32 %v265, %v315
    %v324 = vsub.f32 %v270, %v316
    %v325 = vsub.f32 %v273, %v317
    %v326 = vsub.f32 %v278, %v318
    %v327 = vsub.f32 %v281, %v319
    %v328 = vmul.f32 %v320, %v320
    %v329 = vmul.f32 %v321, %v321
    %v330 = vmul.f32 %v322, %v322
    %v331 = vmul.f32 %v323, %v323
    %v332 = vmul.f32 %v324, %v324
    %v333 = vmul.f32 %v325, %v325
    %v334 = vmul.f32 %v326, %v326
    %v335 = vmul.f32 %v327, %v327
    %v336 = vsel %vm206, %v328, 0.0
    %337 = vadd.xlane.f32.xlu0 %v336
    %v338 = vpop.xlane.xlu0 %337
    %v339 = vsel %vm206, %v329, 0.0
    %340 = vadd.xlane.f32.xlu0 %v339
    %v341 = vpop.xlane.xlu0 %340
    %v342 = vsel %vm206, %v330, 0.0
    %343 = vadd.xlane.f32.xlu0 %v342
    %v344 = vpop.xlane.xlu0 %343
    %v345 = vsel %vm206, %v331, 0.0
    %346 = vadd.xlane.f32.xlu0 %v345
    %v347 = vpop.xlane.xlu0 %346
    %v348 = vsel %vm206, %v332, 0.0
    %349 = vadd.xlane.f32.xlu0 %v348
    %v350 = vpop.xlane.xlu0 %349
    %v351 = vsel %vm206, %v333, 0.0
    %352 = vadd.xlane.f32.xlu0 %v351
    %v353 = vpop.xlane.xlu0 %352
    %v354 = vsel %vm206, %v334, 0.0
    %355 = vadd.xlane.f32.xlu0 %v354
    %v356 = vpop.xlane.xlu0 %355
    %v357 = vsel %vm206, %v335, 0.0
    %358 = vadd.xlane.f32.xlu0 %v357
    %v359 = vpop.xlane.xlu0 %358
    %v360 = vmul.f32 %v338, %v311
    %v361 = vmul.f32 %v341, %v311
    %v362 = vmul.f32 %v344, %v311
    %v363 = vmul.f32 %v347, %v311
    %v364 = vmul.f32 %v350, %v311
    %v365 = vmul.f32 %v353, %v311
    %v366 = vmul.f32 %v356, %v311
    %v367 = vmul.f32 %v359, %v311
    %v368 = vadd.f32 %v360, 1e-06
    %v369 = vadd.f32 %v361, 1e-06
    %v370 = vadd.f32 %v362, 1e-06
    %v371 = vadd.f32 %v363, 1e-06
    %v372 = vadd.f32 %v364, 1e-06
    %v373 = vadd.f32 %v365, 1e-06
    %v374 = vadd.f32 %v366, 1e-06
    %v375 = vadd.f32 %v367, 1e-06
    %v376 = vrsqrt.pop %v368
    %v377 = vrsqrt.pop %v369
    %v378 = vrsqrt.pop %v370
    %v379 = vrsqrt.pop %v371
    %v380 = vrsqrt.pop %v372
    %v381 = vrsqrt.pop %v373
    %v382 = vrsqrt.pop %v374
    %v383 = vrsqrt.pop %v375
    %v384 = vmul.f32 %v320, %v376
    %v385 = vmul.f32 %v321, %v377
    %v386 = vmul.f32 %v322, %v378
    %v387 = vmul.f32 %v323, %v379
    %v388 = vmul.f32 %v324, %v380
    %v389 = vmul.f32 %v325, %v381
    %v390 = vmul.f32 %v326, %v382
    %v391 = vmul.f32 %v327, %v383
    %v393 = vlaneseq
    %v394 = vshrl.u32 %v393, 7
    %v395 = vsub.s32 0, %v394
    %v396 = vrot.slane %v285, %v395
    %v398 = vmul.f32 %v384, %v396
    %v399 = vmul.f32 %v385, %v396
    %v400 = vmul.f32 %v386, %v396
    %v401 = vmul.f32 %v387, %v396
    %v402 = vmul.f32 %v388, %v396
    %v403 = vmul.f32 %v389, %v396
    %v404 = vmul.f32 %v390, %v396
    %v405 = vmul.f32 %v391, %v396
    %v407 = vlaneseq
    %v408 = vshrl.u32 %v407, 7
    %v409 = vsub.s32 0, %v408
    %v410 = vrot.slane %v286, %v409
    %v412 = vadd.f32 %v398, %v410
    %v413 = vadd.f32 %v399, %v410
    %v414 = vadd.f32 %v400, %v410
    %v415 = vadd.f32 %v401, %v410
    %v416 = vadd.f32 %v402, %v410
    %v417 = vadd.f32 %v403, %v410
    %v418 = vadd.f32 %v404, %v410
    %v419 = vadd.f32 %v405, %v410
    %v420 = vpack.c.bf16 %v413, %v412
    %v421 = vpack.c.bf16 %v415, %v414
    %v422 = vpack.c.bf16 %v417, %v416
    %v423 = vpack.c.bf16 %v419, %v418
    %v424 = vld [vmem:[%s6] sm:$0xf]
    %v425 = vld [vmem:[%s6 + $0x4] sm:$0xf]
    %v426 = vld [vmem:[%s6 + $0x8] sm:$0xf]
    %v427 = vld [vmem:[%s6 + $0xc] sm:$0xf]
    %v428 = vld [vmem:[%s6 + $0x10] sm:$0xf]
    %v429 = vld [vmem:[%s6 + $0x14] sm:$0xf]
    %v430 = vld [vmem:[%s6 + $0x18] sm:$0xf]
    %v431 = vld [vmem:[%s6 + $0x1c] sm:$0xf]
    %v432 = vld [vmem:[%s7] sm:$0x1]
    %v434 = vlaneseq
    %v435 = vshrl.u32 %v434, 7
    %v436 = vsub.s32 0, %v435
    %v437 = vrot.slane %v432, %v436
    %v447 = vunpack.c.l.b16 %v424
    %v448 = vunpack.c.l.b16 %v425
    %v449 = vunpack.c.l.b16 %v426
    %v450 = vunpack.c.l.b16 %v427
    %v451 = vunpack.c.l.b16 %v428
    %v452 = vunpack.c.l.b16 %v429
    %v453 = vunpack.c.l.b16 %v430
    %v454 = vunpack.c.l.b16 %v431
    %v455 = vpack.c.b16 %v448, %v447
    %v456 = vpack.c.b16 %v450, %v449
    %v457 = vpack.c.b16 %v452, %v451
    %v458 = vpack.c.b16 %v454, %v453
    %v464 = vsel %vm206, %v420, 0
    %v467 = vsel %vm206, %v421, 0
    %v470 = vsel %vm206, %v422, 0
    %v473 = vsel %vm206, %v423, 0
    %475 = vmatprep.subr.bf16.mxu0 0
    %476 = vmatpush1.bf16.msra.mxu0 %v455
    %477 = vmatprep.subr.bf16.mxu0 0
    %478 = vmatpush1.bf16.msra.mxu0 %v456
    %479 = vmatprep.subr.bf16.mxu0 0
    %480 = vmatpush1.bf16.msra.mxu0 %v457
    %481 = vmatprep.subr.bf16.mxu0 0
    %482 = vmatpush1.bf16.msra.mxu0 %v458
    %483 = vmatprep.subr.bf16.mxu0 0
    %484 = vmatpush1.bf16.msra.mxu0 0
    %485 = vmatprep.subr.bf16.mxu0 0
    %486 = vmatpush1.bf16.msra.mxu0 0
    %487 = vmatprep.subr.bf16.mxu0 0
    %488 = vmatpush1.bf16.msra.mxu0 0
    %489 = vmatprep.subr.bf16.mxu0 0
    %490 = vmatpush1.bf16.msra.mxu0 0
    %491 = vmatprep.subr.bf16.mxu0 0
    %492 = vmatpush1.bf16.msra.mxu0 0
    %493 = vmatprep.subr.bf16.mxu0 0
    %494 = vmatpush1.bf16.msra.mxu0 0
    %495 = vmatprep.subr.bf16.mxu0 0
    %496 = vmatpush1.bf16.msra.mxu0 0
    %497 = vmatprep.subr.bf16.mxu0 0
    %498 = vmatpush1.bf16.msra.mxu0 0
    %499 = vmatprep.subr.bf16.mxu0 0
    %500 = vmatpush1.bf16.msra.mxu0 0
    %501 = vmatprep.subr.bf16.mxu0 0
    %502 = vmatpush1.bf16.msra.mxu0 0
    %503 = vmatprep.subr.bf16.mxu0 0
    %504 = vmatpush1.bf16.msra.mxu0 0
    %505 = vmatprep.subr.bf16.mxu0 0
    %506 = vmatpush1.bf16.msra.mxu0 0
    %507 = vmatprep.mubr.bf16.mxu0 0
    %508 = vmatmul.mubr.bf16.gmra.mrb[0].mxu0 %v464
    %v509 = vpop.f32.mrb[0].mxu0
    %v510 = vadd.f32 %v437, %v509
    %v511 = vpop.f32.mrb[0].mxu0
    %v512 = vpop.f32.mrb[0].mxu0
    %v513 = vadd.f32 %v437, %v512
    %v514 = vpop.f32.mrb[0].mxu0
    %515 = vmatprep.mubr.bf16.mxu0 0
    %516 = vmatmul.mubr.bf16.gmra.mrb[0].mxu0 %v467
    %v517 = vpop.f32.mrb[0].mxu0
    %v518 = vadd.f32 %v437, %v517
    %v519 = vpop.f32.mrb[0].mxu0
    %v520 = vpop.f32.mrb[0].mxu0
    %v521 = vadd.f32 %v437, %v520
    %v522 = vpop.f32.mrb[0].mxu0
    %523 = vmatprep.mubr.bf16.mxu0 0
    %524 = vmatmul.mubr.bf16.gmra.mrb[0].mxu0 %v470
    %v525 = vpop.f32.mrb[0].mxu0
    %v526 = vadd.f32 %v437, %v525
    %v527 = vpop.f32.mrb[0].mxu0
    %v528 = vpop.f32.mrb[0].mxu0
    %v529 = vadd.f32 %v437, %v528
    %v530 = vpop.f32.mrb[0].mxu0
    %531 = vmatprep.mubr.bf16.mxu0 0
    %532 = vmatmul.mubr.bf16.gmra.mrb[0].mxu0 %v473
    %v533 = vpop.f32.mrb[0].mxu0
    %v534 = vadd.f32 %v437, %v533
    %v535 = vpop.f32.mrb[0].mxu0
    %v536 = vpop.f32.mrb[0].mxu0
    %v537 = vadd.f32 %v437, %v536
    %v538 = vpop.f32.mrb[0].mxu0
    %539 = vdwg.mxu0
    %v540 = vpack.c.bf16 %v513, %v510
    %v541 = vpack.c.bf16 %v521, %v518
    %v542 = vpack.c.bf16 %v529, %v526
    %v543 = vpack.c.bf16 %v537, %v534
    %v544 = vld [vmem:[%s8] sm:$0xf]
    %v545 = vld [vmem:[%s8 + $0x4] sm:$0xf]
    %v546 = vld [vmem:[%s8 + $0x8] sm:$0xf]
    %v547 = vld [vmem:[%s8 + $0xc] sm:$0xf]
    %v548 = vld [vmem:[%s8 + $0x10] sm:$0xf]
    %v549 = vld [vmem:[%s8 + $0x14] sm:$0xf]
    %v550 = vld [vmem:[%s8 + $0x18] sm:$0xf]
    %v551 = vld [vmem:[%s8 + $0x1c] sm:$0xf]
    %v552 = vld [vmem:[%s9] sm:$0x1]
    %v554 = vlaneseq
    %v555 = vshrl.u32 %v554, 7
    %v556 = vsub.s32 0, %v555
    %v557 = vrot.slane %v552, %v556
    %v567 = vunpack.c.l.b16 %v544
    %v568 = vunpack.c.l.b16 %v545
    %v569 = vunpack.c.l.b16 %v546
    %v570 = vunpack.c.l.b16 %v547
    %v571 = vunpack.c.l.b16 %v548
    %v572 = vunpack.c.l.b16 %v549
    %v573 = vunpack.c.l.b16 %v550
    %v574 = vunpack.c.l.b16 %v551
    %v575 = vpack.c.b16 %v568, %v567
    %v576 = vpack.c.b16 %v570, %v569
    %v577 = vpack.c.b16 %v572, %v571
    %v578 = vpack.c.b16 %v574, %v573
    %583 = vmatprep.subr.bf16.mxu0 0
    %584 = vmatpush1.bf16.msra.mxu0 %v575
    %585 = vmatprep.subr.bf16.mxu0 0
    %586 = vmatpush1.bf16.msra.mxu0 %v576
    %587 = vmatprep.subr.bf16.mxu0 0
    %588 = vmatpush1.bf16.msra.mxu0 %v577
    %589 = vmatprep.subr.bf16.mxu0 0
    %590 = vmatpush1.bf16.msra.mxu0 %v578
    %591 = vmatprep.subr.bf16.mxu0 0
    %592 = vmatpush1.bf16.msra.mxu0 0
    %593 = vmatprep.subr.bf16.mxu0 0
    %594 = vmatpush1.bf16.msra.mxu0 0
    %595 = vmatprep.subr.bf16.mxu0 0
    %596 = vmatpush1.bf16.msra.mxu0 0
    %597 = vmatprep.subr.bf16.mxu0 0
    %598 = vmatpush1.bf16.msra.mxu0 0
    %599 = vmatprep.subr.bf16.mxu0 0
    %600 = vmatpush1.bf16.msra.mxu0 0
    %601 = vmatprep.subr.bf16.mxu0 0
    %602 = vmatpush1.bf16.msra.mxu0 0
    %603 = vmatprep.subr.bf16.mxu0 0
    %604 = vmatpush1.bf16.msra.mxu0 0
    %605 = vmatprep.subr.bf16.mxu0 0
    %606 = vmatpush1.bf16.msra.mxu0 0
    %607 = vmatprep.subr.bf16.mxu0 0
    %608 = vmatpush1.bf16.msra.mxu0 0
    %609 = vmatprep.subr.bf16.mxu0 0
    %610 = vmatpush1.bf16.msra.mxu0 0
    %611 = vmatprep.subr.bf16.mxu0 0
    %612 = vmatpush1.bf16.msra.mxu0 0
    %613 = vmatprep.subr.bf16.mxu0 0
    %614 = vmatpush1.bf16.msra.mxu0 0
    %615 = vmatprep.mubr.bf16.mxu0 0
    %616 = vmatmul.mubr.bf16.gmra.mrb[0].mxu0 %v464
    %v617 = vpop.f32.mrb[0].mxu0
    %v618 = vadd.f32 %v557, %v617
    %v619 = vpop.f32.mrb[0].mxu0
    %v620 = vpop.f32.mrb[0].mxu0
    %v621 = vadd.f32 %v557, %v620
    %v622 = vpop.f32.mrb[0].mxu0
    %623 = vmatprep.mubr.bf16.mxu0 0
    %624 = vmatmul.mubr.bf16.gmra.mrb[0].mxu0 %v467
    %v625 = vpop.f32.mrb[0].mxu0
    %v626 = vadd.f32 %v557, %v625
    %v627 = vpop.f32.mrb[0].mxu0
    %v628 = vpop.f32.mrb[0].mxu0
    %v629 = vadd.f32 %v557, %v628
    %v630 = vpop.f32.mrb[0].mxu0
    %631 = vmatprep.mubr.bf16.mxu0 0
    %632 = vmatmul.mubr.bf16.gmra.mrb[0].mxu0 %v470
    %v633 = vpop.f32.mrb[0].mxu0
    %v634 = vadd.f32 %v557, %v633
    %v635 = vpop.f32.mrb[0].mxu0
    %v636 = vpop.f32.mrb[0].mxu0
    %v637 = vadd.f32 %v557, %v636
    %v638 = vpop.f32.mrb[0].mxu0
    %639 = vmatprep.mubr.bf16.mxu0 0
    %640 = vmatmul.mubr.bf16.gmra.mrb[0].mxu0 %v473
    %v641 = vpop.f32.mrb[0].mxu0
    %v642 = vadd.f32 %v557, %v641
    %v643 = vpop.f32.mrb[0].mxu0
    %v644 = vpop.f32.mrb[0].mxu0
    %v645 = vadd.f32 %v557, %v644
    %v646 = vpop.f32.mrb[0].mxu0
    %647 = vdwg.mxu0
    %v648 = vpack.c.bf16 %v621, %v618
    %v649 = vpack.c.bf16 %v629, %v626
    %v650 = vpack.c.bf16 %v637, %v634
    %v651 = vpack.c.bf16 %v645, %v642
    %s652 = scalar_lea.vmem %s6, 32
    %v653 = vld [vmem:[%s652] sm:$0xf]
    %v654 = vld [vmem:[%s652 + $0x4] sm:$0xf]
    %v655 = vld [vmem:[%s652 + $0x8] sm:$0xf]
    %v656 = vld [vmem:[%s652 + $0xc] sm:$0xf]
    %v657 = vld [vmem:[%s652 + $0x10] sm:$0xf]
    %v658 = vld [vmem:[%s652 + $0x14] sm:$0xf]
    %v659 = vld [vmem:[%s652 + $0x18] sm:$0xf]
    %v660 = vld [vmem:[%s652 + $0x1c] sm:$0xf]
    %s661 = scalar_lea.vmem %s7, 1
    %v662 = vld [vmem:[%s661] sm:$0x1]
    %v664 = vlaneseq
    %v665 = vshrl.u32 %v664, 7
    %v666 = vsub.s32 0, %v665
    %v667 = vrot.slane %v662, %v666
    %v677 = vunpack.c.l.b16 %v653
    %v678 = vunpack.c.l.b16 %v654
    %v679 = vunpack.c.l.b16 %v655
    %v680 = vunpack.c.l.b16 %v656
    %v681 = vunpack.c.l.b16 %v657
    %v682 = vunpack.c.l.b16 %v658
    %v683 = vunpack.c.l.b16 %v659
    %v684 = vunpack.c.l.b16 %v660
    %v685 = vpack.c.b16 %v678, %v677
    %v686 = vpack.c.b16 %v680, %v679
    %v687 = vpack.c.b16 %v682, %v681
    %v688 = vpack.c.b16 %v684, %v683
    %693 = vmatprep.subr.bf16.mxu0 0
    %694 = vmatpush1.bf16.msra.mxu0 %v685
    %695 = vmatprep.subr.bf16.mxu0 0
    %696 = vmatpush1.bf16.msra.mxu0 %v686
    %697 = vmatprep.subr.bf16.mxu0 0
    %698 = vmatpush1.bf16.msra.mxu0 %v687
    %699 = vmatprep.subr.bf16.mxu0 0
    %700 = vmatpush1.bf16.msra.mxu0 %v688
    %701 = vmatprep.subr.bf16.mxu0 0
    %702 = vmatpush1.bf16.msra.mxu0 0
    %703 = vmatprep.subr.bf16.mxu0 0
    %704 = vmatpush1.bf16.msra.mxu0 0
    %705 = vmatprep.subr.bf16.mxu0 0
    %706 = vmatpush1.bf16.msra.mxu0 0
    %707 = vmatprep.subr.bf16.mxu0 0
    %708 = vmatpush1.bf16.msra.mxu0 0
    %709 = vmatprep.subr.bf16.mxu0 0
    %710 = vmatpush1.bf16.msra.mxu0 0
    %711 = vmatprep.subr.bf16.mxu0 0
    %712 = vmatpush1.bf16.msra.mxu0 0
    %713 = vmatprep.subr.bf16.mxu0 0
    %714 = vmatpush1.bf16.msra.mxu0 0
    %715 = vmatprep.subr.bf16.mxu0 0
    %716 = vmatpush1.bf16.msra.mxu0 0
    %717 = vmatprep.subr.bf16.mxu0 0
    %718 = vmatpush1.bf16.msra.mxu0 0
    %719 = vmatprep.subr.bf16.mxu0 0
    %720 = vmatpush1.bf16.msra.mxu0 0
    %721 = vmatprep.subr.bf16.mxu0 0
    %722 = vmatpush1.bf16.msra.mxu0 0
    %723 = vmatprep.subr.bf16.mxu0 0
    %724 = vmatpush1.bf16.msra.mxu0 0
    %725 = vmatprep.mubr.bf16.mxu0 0
    %726 = vmatmul.mubr.bf16.gmra.mrb[0].mxu0 %v464
    %v727 = vpop.f32.mrb[0].mxu0
    %v728 = vadd.f32 %v667, %v727
    %v729 = vpop.f32.mrb[0].mxu0
    %v730 = vpop.f32.mrb[0].mxu0
    %v731 = vadd.f32 %v667, %v730
    %v732 = vpop.f32.mrb[0].mxu0
    %733 = vmatprep.mubr.bf16.mxu0 0
    %734 = vmatmul.mubr.bf16.gmra.mrb[0].mxu0 %v467
    %v735 = vpop.f32.mrb[0].mxu0
    %v736 = vadd.f32 %v667, %v735
    %v737 = vpop.f32.mrb[0].mxu0
    %v738 = vpop.f32.mrb[0].mxu0
    %v739 = vadd.f32 %v667, %v738
    %v740 = vpop.f32.mrb[0].mxu0
    %741 = vmatprep.mubr.bf16.mxu0 0
    %742 = vmatmul.mubr.bf16.gmra.mrb[0].mxu0 %v470
    %v743 = vpop.f32.mrb[0].mxu0
    %v744 = vadd.f32 %v667, %v743
    %v745 = vpop.f32.mrb[0].mxu0
    %v746 = vpop.f32.mrb[0].mxu0
    %v747 = vadd.f32 %v667, %v746
    %v748 = vpop.f32.mrb[0].mxu0
    %749 = vmatprep.mubr.bf16.mxu0 0
    %750 = vmatmul.mubr.bf16.gmra.mrb[0].mxu0 %v473
    %v751 = vpop.f32.mrb[0].mxu0
    %v752 = vadd.f32 %v667, %v751
    %v753 = vpop.f32.mrb[0].mxu0
    %v754 = vpop.f32.mrb[0].mxu0
    %v755 = vadd.f32 %v667, %v754
    %v756 = vpop.f32.mrb[0].mxu0
    %757 = vdwg.mxu0
    %v758 = vpack.c.bf16 %v731, %v728
    %v759 = vpack.c.bf16 %v739, %v736
    %v760 = vpack.c.bf16 %v747, %v744
    %v761 = vpack.c.bf16 %v755, %v752
    %s762 = scalar_lea.vmem %s8, 32
    %v763 = vld [vmem:[%s762] sm:$0xf]
    %v764 = vld [vmem:[%s762 + $0x4] sm:$0xf]
    %v765 = vld [vmem:[%s762 + $0x8] sm:$0xf]
    %v766 = vld [vmem:[%s762 + $0xc] sm:$0xf]
    %v767 = vld [vmem:[%s762 + $0x10] sm:$0xf]
    %v768 = vld [vmem:[%s762 + $0x14] sm:$0xf]
    %v769 = vld [vmem:[%s762 + $0x18] sm:$0xf]
    %v770 = vld [vmem:[%s762 + $0x1c] sm:$0xf]
    %s771 = scalar_lea.vmem %s9, 1
    %v772 = vld [vmem:[%s771] sm:$0x1]
    %v774 = vlaneseq
    %v775 = vshrl.u32 %v774, 7
    %v776 = vsub.s32 0, %v775
    %v777 = vrot.slane %v772, %v776
    %v787 = vunpack.c.l.b16 %v763
    %v788 = vunpack.c.l.b16 %v764
    %v789 = vunpack.c.l.b16 %v765
    %v790 = vunpack.c.l.b16 %v766
    %v791 = vunpack.c.l.b16 %v767
    %v792 = vunpack.c.l.b16 %v768
    %v793 = vunpack.c.l.b16 %v769
    %v794 = vunpack.c.l.b16 %v770
    %v795 = vpack.c.b16 %v788, %v787
    %v796 = vpack.c.b16 %v790, %v789
    %v797 = vpack.c.b16 %v792, %v791
    %v798 = vpack.c.b16 %v794, %v793
    %803 = vmatprep.subr.bf16.mxu0 0
    %804 = vmatpush1.bf16.msra.mxu0 %v795
    %805 = vmatprep.subr.bf16.mxu0 0
    %806 = vmatpush1.bf16.msra.mxu0 %v796
    %807 = vmatprep.subr.bf16.mxu0 0
    %808 = vmatpush1.bf16.msra.mxu0 %v797
    %809 = vmatprep.subr.bf16.mxu0 0
    %810 = vmatpush1.bf16.msra.mxu0 %v798
    %811 = vmatprep.subr.bf16.mxu0 0
    %812 = vmatpush1.bf16.msra.mxu0 0
    %813 = vmatprep.subr.bf16.mxu0 0
    %814 = vmatpush1.bf16.msra.mxu0 0
    %815 = vmatprep.subr.bf16.mxu0 0
    %816 = vmatpush1.bf16.msra.mxu0 0
    %817 = vmatprep.subr.bf16.mxu0 0
    %818 = vmatpush1.bf16.msra.mxu0 0
    %819 = vmatprep.subr.bf16.mxu0 0
    %820 = vmatpush1.bf16.msra.mxu0 0
    %821 = vmatprep.subr.bf16.mxu0 0
    %822 = vmatpush1.bf16.msra.mxu0 0
    %823 = vmatprep.subr.bf16.mxu0 0
    %824 = vmatpush1.bf16.msra.mxu0 0
    %825 = vmatprep.subr.bf16.mxu0 0
    %826 = vmatpush1.bf16.msra.mxu0 0
    %827 = vmatprep.subr.bf16.mxu0 0
    %828 = vmatpush1.bf16.msra.mxu0 0
    %829 = vmatprep.subr.bf16.mxu0 0
    %830 = vmatpush1.bf16.msra.mxu0 0
    %831 = vmatprep.subr.bf16.mxu0 0
    %832 = vmatpush1.bf16.msra.mxu0 0
    %833 = vmatprep.subr.bf16.mxu0 0
    %834 = vmatpush1.bf16.msra.mxu0 0
    %835 = vmatprep.mubr.bf16.mxu0 0
    %836 = vmatmul.mubr.bf16.gmra.mrb[0].mxu0 %v464
    %v837 = vpop.f32.mrb[0].mxu0
    %v838 = vadd.f32 %v777, %v837
    %v839 = vpop.f32.mrb[0].mxu0
    %v840 = vpop.f32.mrb[0].mxu0
    %v841 = vadd.f32 %v777, %v840
    %v842 = vpop.f32.mrb[0].mxu0
    %843 = vmatprep.mubr.bf16.mxu0 0
    %844 = vmatmul.mubr.bf16.gmra.mrb[0].mxu0 %v467
    %v845 = vpop.f32.mrb[0].mxu0
    %v846 = vadd.f32 %v777, %v845
    %v847 = vpop.f32.mrb[0].mxu0
    %v848 = vpop.f32.mrb[0].mxu0
    %v849 = vadd.f32 %v777, %v848
    %v850 = vpop.f32.mrb[0].mxu0
    %851 = vmatprep.mubr.bf16.mxu0 0
    %852 = vmatmul.mubr.bf16.gmra.mrb[0].mxu0 %v470
    %v853 = vpop.f32.mrb[0].mxu0
    %v854 = vadd.f32 %v777, %v853
    %v855 = vpop.f32.mrb[0].mxu0
    %v856 = vpop.f32.mrb[0].mxu0
    %v857 = vadd.f32 %v777, %v856
    %v858 = vpop.f32.mrb[0].mxu0
    %859 = vmatprep.mubr.bf16.mxu0 0
    %860 = vmatmul.mubr.bf16.gmra.mrb[0].mxu0 %v473
    %v861 = vpop.f32.mrb[0].mxu0
    %v862 = vadd.f32 %v777, %v861
    %v863 = vpop.f32.mrb[0].mxu0
    %v864 = vpop.f32.mrb[0].mxu0
    %v865 = vadd.f32 %v777, %v864
    %v866 = vpop.f32.mrb[0].mxu0
    %867 = vdwg.mxu0
    %v868 = vpack.c.bf16 %v841, %v838
    %v869 = vpack.c.bf16 %v849, %v846
    %v870 = vpack.c.bf16 %v857, %v854
    %v871 = vpack.c.bf16 %v865, %v862
    %s872 = scalar_lea.vmem %s6, 64
    %v873 = vld [vmem:[%s872] sm:$0xf]
    %v874 = vld [vmem:[%s872 + $0x4] sm:$0xf]
    %v875 = vld [vmem:[%s872 + $0x8] sm:$0xf]
    %v876 = vld [vmem:[%s872 + $0xc] sm:$0xf]
    %v877 = vld [vmem:[%s872 + $0x10] sm:$0xf]
    %v878 = vld [vmem:[%s872 + $0x14] sm:$0xf]
    %v879 = vld [vmem:[%s872 + $0x18] sm:$0xf]
    %v880 = vld [vmem:[%s872 + $0x1c] sm:$0xf]
    %s881 = scalar_lea.vmem %s7, 2
    %v882 = vld [vmem:[%s881] sm:$0x1]
    %v884 = vlaneseq
    %v885 = vshrl.u32 %v884, 7
    %v886 = vsub.s32 0, %v885
    %v887 = vrot.slane %v882, %v886
    %v897 = vunpack.c.l.b16 %v873
    %v898 = vunpack.c.l.b16 %v874
    %v899 = vunpack.c.l.b16 %v875
    %v900 = vunpack.c.l.b16 %v876
    %v901 = vunpack.c.l.b16 %v877
    %v902 = vunpack.c.l.b16 %v878
    %v903 = vunpack.c.l.b16 %v879
    %v904 = vunpack.c.l.b16 %v880
    %v905 = vpack.c.b16 %v898, %v897
    %v906 = vpack.c.b16 %v900, %v899
    %v907 = vpack.c.b16 %v902, %v901
    %v908 = vpack.c.b16 %v904, %v903
    %913 = vmatprep.subr.bf16.mxu0 0
    %914 = vmatpush1.bf16.msra.mxu0 %v905
    %915 = vmatprep.subr.bf16.mxu0 0
    %916 = vmatpush1.bf16.msra.mxu0 %v906
    %917 = vmatprep.subr.bf16.mxu0 0
    %918 = vmatpush1.bf16.msra.mxu0 %v907
    %919 = vmatprep.subr.bf16.mxu0 0
    %920 = vmatpush1.bf16.msra.mxu0 %v908
    %921 = vmatprep.subr.bf16.mxu0 0
    %922 = vmatpush1.bf16.msra.mxu0 0
    %923 = vmatprep.subr.bf16.mxu0 0
    %924 = vmatpush1.bf16.msra.mxu0 0
    %925 = vmatprep.subr.bf16.mxu0 0
    %926 = vmatpush1.bf16.msra.mxu0 0
    %927 = vmatprep.subr.bf16.mxu0 0
    %928 = vmatpush1.bf16.msra.mxu0 0
    %929 = vmatprep.subr.bf16.mxu0 0
    %930 = vmatpush1.bf16.msra.mxu0 0
    %931 = vmatprep.subr.bf16.mxu0 0
    %932 = vmatpush1.bf16.msra.mxu0 0
    %933 = vmatprep.subr.bf16.mxu0 0
    %934 = vmatpush1.bf16.msra.mxu0 0
    %935 = vmatprep.subr.bf16.mxu0 0
    %936 = vmatpush1.bf16.msra.mxu0 0
    %937 = vmatprep.subr.bf16.mxu0 0
    %938 = vmatpush1.bf16.msra.mxu0 0
    %939 = vmatprep.subr.bf16.mxu0 0
    %940 = vmatpush1.bf16.msra.mxu0 0
    %941 = vmatprep.subr.bf16.mxu0 0
    %942 = vmatpush1.bf16.msra.mxu0 0
    %943 = vmatprep.subr.bf16.mxu0 0
    %944 = vmatpush1.bf16.msra.mxu0 0
    %945 = vmatprep.mubr.bf16.mxu0 0
    %946 = vmatmul.mubr.bf16.gmra.mrb[0].mxu0 %v464
    %v947 = vpop.f32.mrb[0].mxu0
    %v948 = vadd.f32 %v887, %v947
    %v949 = vpop.f32.mrb[0].mxu0
    %v950 = vpop.f32.mrb[0].mxu0
    %v951 = vadd.f32 %v887, %v950
    %v952 = vpop.f32.mrb[0].mxu0
    %953 = vmatprep.mubr.bf16.mxu0 0
    %954 = vmatmul.mubr.bf16.gmra.mrb[0].mxu0 %v467
    %v955 = vpop.f32.mrb[0].mxu0
    %v956 = vadd.f32 %v887, %v955
    %v957 = vpop.f32.mrb[0].mxu0
    %v958 = vpop.f32.mrb[0].mxu0
    %v959 = vadd.f32 %v887, %v958
    %v960 = vpop.f32.mrb[0].mxu0
    %961 = vmatprep.mubr.bf16.mxu0 0
    %962 = vmatmul.mubr.bf16.gmra.mrb[0].mxu0 %v470
    %v963 = vpop.f32.mrb[0].mxu0
    %v964 = vadd.f32 %v887, %v963
    %v965 = vpop.f32.mrb[0].mxu0
    %v966 = vpop.f32.mrb[0].mxu0
    %v967 = vadd.f32 %v887, %v966
    %v968 = vpop.f32.mrb[0].mxu0
    %969 = vmatprep.mubr.bf16.mxu0 0
    %970 = vmatmul.mubr.bf16.gmra.mrb[0].mxu0 %v473
    %v971 = vpop.f32.mrb[0].mxu0
    %v972 = vadd.f32 %v887, %v971
    %v973 = vpop.f32.mrb[0].mxu0
    %v974 = vpop.f32.mrb[0].mxu0
    %v975 = vadd.f32 %v887, %v974
    %v976 = vpop.f32.mrb[0].mxu0
    %977 = vdwg.mxu0
    %v978 = vpack.c.bf16 %v951, %v948
    %v979 = vpack.c.bf16 %v959, %v956
    %v980 = vpack.c.bf16 %v967, %v964
    %v981 = vpack.c.bf16 %v975, %v972
    %s982 = scalar_lea.vmem %s8, 64
    %v983 = vld [vmem:[%s982] sm:$0xf]
    %v984 = vld [vmem:[%s982 + $0x4] sm:$0xf]
    %v985 = vld [vmem:[%s982 + $0x8] sm:$0xf]
    %v986 = vld [vmem:[%s982 + $0xc] sm:$0xf]
    %v987 = vld [vmem:[%s982 + $0x10] sm:$0xf]
    %v988 = vld [vmem:[%s982 + $0x14] sm:$0xf]
    %v989 = vld [vmem:[%s982 + $0x18] sm:$0xf]
    %v990 = vld [vmem:[%s982 + $0x1c] sm:$0xf]
    %s991 = scalar_lea.vmem %s9, 2
    %v992 = vld [vmem:[%s991] sm:$0x1]
    %v994 = vlaneseq
    %v995 = vshrl.u32 %v994, 7
    %v996 = vsub.s32 0, %v995
    %v997 = vrot.slane %v992, %v996
    %v1007 = vunpack.c.l.b16 %v983
    %v1008 = vunpack.c.l.b16 %v984
    %v1009 = vunpack.c.l.b16 %v985
    %v1010 = vunpack.c.l.b16 %v986
    %v1011 = vunpack.c.l.b16 %v987
    %v1012 = vunpack.c.l.b16 %v988
    %v1013 = vunpack.c.l.b16 %v989
    %v1014 = vunpack.c.l.b16 %v990
    %v1015 = vpack.c.b16 %v1008, %v1007
    %v1016 = vpack.c.b16 %v1010, %v1009
    %v1017 = vpack.c.b16 %v1012, %v1011
    %v1018 = vpack.c.b16 %v1014, %v1013
    %1023 = vmatprep.subr.bf16.mxu0 0
    %1024 = vmatpush1.bf16.msra.mxu0 %v1015
    %1025 = vmatprep.subr.bf16.mxu0 0
    %1026 = vmatpush1.bf16.msra.mxu0 %v1016
    %1027 = vmatprep.subr.bf16.mxu0 0
    %1028 = vmatpush1.bf16.msra.mxu0 %v1017
    %1029 = vmatprep.subr.bf16.mxu0 0
    %1030 = vmatpush1.bf16.msra.mxu0 %v1018
    %1031 = vmatprep.subr.bf16.mxu0 0
    %1032 = vmatpush1.bf16.msra.mxu0 0
    %1033 = vmatprep.subr.bf16.mxu0 0
    %1034 = vmatpush1.bf16.msra.mxu0 0
    %1035 = vmatprep.subr.bf16.mxu0 0
    %1036 = vmatpush1.bf16.msra.mxu0 0
    %1037 = vmatprep.subr.bf16.mxu0 0
    %1038 = vmatpush1.bf16.msra.mxu0 0
    %1039 = vmatprep.subr.bf16.mxu0 0
    %1040 = vmatpush1.bf16.msra.mxu0 0
    %1041 = vmatprep.subr.bf16.mxu0 0
    %1042 = vmatpush1.bf16.msra.mxu0 0
    %1043 = vmatprep.subr.bf16.mxu0 0
    %1044 = vmatpush1.bf16.msra.mxu0 0
    %1045 = vmatprep.subr.bf16.mxu0 0
    %1046 = vmatpush1.bf16.msra.mxu0 0
    %1047 = vmatprep.subr.bf16.mxu0 0
    %1048 = vmatpush1.bf16.msra.mxu0 0
    %1049 = vmatprep.subr.bf16.mxu0 0
    %1050 = vmatpush1.bf16.msra.mxu0 0
    %1051 = vmatprep.subr.bf16.mxu0 0
    %1052 = vmatpush1.bf16.msra.mxu0 0
    %1053 = vmatprep.subr.bf16.mxu0 0
    %1054 = vmatpush1.bf16.msra.mxu0 0
    %1055 = vmatprep.mubr.bf16.mxu0 0
    %1056 = vmatmul.mubr.bf16.gmra.mrb[0].mxu0 %v464
    %v1057 = vpop.f32.mrb[0].mxu0
    %v1058 = vadd.f32 %v997, %v1057
    %v1059 = vpop.f32.mrb[0].mxu0
    %v1060 = vpop.f32.mrb[0].mxu0
    %v1061 = vadd.f32 %v997, %v1060
    %v1062 = vpop.f32.mrb[0].mxu0
    %1063 = vmatprep.mubr.bf16.mxu0 0
    %1064 = vmatmul.mubr.bf16.gmra.mrb[0].mxu0 %v467
    %v1065 = vpop.f32.mrb[0].mxu0
    %v1066 = vadd.f32 %v997, %v1065
    %v1067 = vpop.f32.mrb[0].mxu0
    %v1068 = vpop.f32.mrb[0].mxu0
    %v1069 = vadd.f32 %v997, %v1068
    %v1070 = vpop.f32.mrb[0].mxu0
    %1071 = vmatprep.mubr.bf16.mxu0 0
    %1072 = vmatmul.mubr.bf16.gmra.mrb[0].mxu0 %v470
    %v1073 = vpop.f32.mrb[0].mxu0
    %v1074 = vadd.f32 %v997, %v1073
    %v1075 = vpop.f32.mrb[0].mxu0
    %v1076 = vpop.f32.mrb[0].mxu0
    %v1077 = vadd.f32 %v997, %v1076
    %v1078 = vpop.f32.mrb[0].mxu0
    %1079 = vmatprep.mubr.bf16.mxu0 0
    %1080 = vmatmul.mubr.bf16.gmra.mrb[0].mxu0 %v473
    %v1081 = vpop.f32.mrb[0].mxu0
    %v1082 = vadd.f32 %v997, %v1081
    %v1083 = vpop.f32.mrb[0].mxu0
    %v1084 = vpop.f32.mrb[0].mxu0
    %v1085 = vadd.f32 %v997, %v1084
    %v1086 = vpop.f32.mrb[0].mxu0
    %1087 = vdwg.mxu0
    %v1088 = vpack.c.bf16 %v1061, %v1058
    %v1089 = vpack.c.bf16 %v1069, %v1066
    %v1090 = vpack.c.bf16 %v1077, %v1074
    %v1091 = vpack.c.bf16 %v1085, %v1082
    %s1092 = scalar_lea.vmem %s6, 96
    %v1093 = vld [vmem:[%s1092] sm:$0xf]
    %v1094 = vld [vmem:[%s1092 + $0x4] sm:$0xf]
    %v1095 = vld [vmem:[%s1092 + $0x8] sm:$0xf]
    %v1096 = vld [vmem:[%s1092 + $0xc] sm:$0xf]
    %v1097 = vld [vmem:[%s1092 + $0x10] sm:$0xf]
    %v1098 = vld [vmem:[%s1092 + $0x14] sm:$0xf]
    %v1099 = vld [vmem:[%s1092 + $0x18] sm:$0xf]
    %v1100 = vld [vmem:[%s1092 + $0x1c] sm:$0xf]
    %s1101 = scalar_lea.vmem %s7, 3
    %v1102 = vld [vmem:[%s1101] sm:$0x1]
    %v1104 = vlaneseq
    %v1105 = vshrl.u32 %v1104, 7
    %v1106 = vsub.s32 0, %v1105
    %v1107 = vrot.slane %v1102, %v1106
    %v1117 = vunpack.c.l.b16 %v1093
    %v1118 = vunpack.c.l.b16 %v1094
    %v1119 = vunpack.c.l.b16 %v1095
    %v1120 = vunpack.c.l.b16 %v1096
    %v1121 = vunpack.c.l.b16 %v1097
    %v1122 = vunpack.c.l.b16 %v1098
    %v1123 = vunpack.c.l.b16 %v1099
    %v1124 = vunpack.c.l.b16 %v1100
    %v1125 = vpack.c.b16 %v1118, %v1117
    %v1126 = vpack.c.b16 %v1120, %v1119
    %v1127 = vpack.c.b16 %v1122, %v1121
    %v1128 = vpack.c.b16 %v1124, %v1123
    %1133 = vmatprep.subr.bf16.mxu0 0
    %1134 = vmatpush1.bf16.msra.mxu0 %v1125
    %1135 = vmatprep.subr.bf16.mxu0 0
    %1136 = vmatpush1.bf16.msra.mxu0 %v1126
    %1137 = vmatprep.subr.bf16.mxu0 0
    %1138 = vmatpush1.bf16.msra.mxu0 %v1127
    %1139 = vmatprep.subr.bf16.mxu0 0
    %1140 = vmatpush1.bf16.msra.mxu0 %v1128
    %1141 = vmatprep.subr.bf16.mxu0 0
    %1142 = vmatpush1.bf16.msra.mxu0 0
    %1143 = vmatprep.subr.bf16.mxu0 0
    %1144 = vmatpush1.bf16.msra.mxu0 0
    %1145 = vmatprep.subr.bf16.mxu0 0
    %1146 = vmatpush1.bf16.msra.mxu0 0
    %1147 = vmatprep.subr.bf16.mxu0 0
    %1148 = vmatpush1.bf16.msra.mxu0 0
    %1149 = vmatprep.subr.bf16.mxu0 0
    %1150 = vmatpush1.bf16.msra.mxu0 0
    %1151 = vmatprep.subr.bf16.mxu0 0
    %1152 = vmatpush1.bf16.msra.mxu0 0
    %1153 = vmatprep.subr.bf16.mxu0 0
    %1154 = vmatpush1.bf16.msra.mxu0 0
    %1155 = vmatprep.subr.bf16.mxu0 0
    %1156 = vmatpush1.bf16.msra.mxu0 0
    %1157 = vmatprep.subr.bf16.mxu0 0
    %1158 = vmatpush1.bf16.msra.mxu0 0
    %1159 = vmatprep.subr.bf16.mxu0 0
    %1160 = vmatpush1.bf16.msra.mxu0 0
    %1161 = vmatprep.subr.bf16.mxu0 0
    %1162 = vmatpush1.bf16.msra.mxu0 0
    %1163 = vmatprep.subr.bf16.mxu0 0
    %1164 = vmatpush1.bf16.msra.mxu0 0
    %1165 = vmatprep.mubr.bf16.mxu0 0
    %1166 = vmatmul.mubr.bf16.gmra.mrb[0].mxu0 %v464
    %v1167 = vpop.f32.mrb[0].mxu0
    %v1168 = vadd.f32 %v1107, %v1167
    %v1169 = vpop.f32.mrb[0].mxu0
    %v1170 = vpop.f32.mrb[0].mxu0
    %v1171 = vadd.f32 %v1107, %v1170
    %v1172 = vpop.f32.mrb[0].mxu0
    %1173 = vmatprep.mubr.bf16.mxu0 0
    %1174 = vmatmul.mubr.bf16.gmra.mrb[0].mxu0 %v467
    %v1175 = vpop.f32.mrb[0].mxu0
    %v1176 = vadd.f32 %v1107, %v1175
    %v1177 = vpop.f32.mrb[0].mxu0
    %v1178 = vpop.f32.mrb[0].mxu0
    %v1179 = vadd.f32 %v1107, %v1178
    %v1180 = vpop.f32.mrb[0].mxu0
    %1181 = vmatprep.mubr.bf16.mxu0 0
    %1182 = vmatmul.mubr.bf16.gmra.mrb[0].mxu0 %v470
    %v1183 = vpop.f32.mrb[0].mxu0
    %v1184 = vadd.f32 %v1107, %v1183
    %v1185 = vpop.f32.mrb[0].mxu0
    %v1186 = vpop.f32.mrb[0].mxu0
    %v1187 = vadd.f32 %v1107, %v1186
    %v1188 = vpop.f32.mrb[0].mxu0
    %1189 = vmatprep.mubr.bf16.mxu0 0
    %1190 = vmatmul.mubr.bf16.gmra.mrb[0].mxu0 %v473
    %v1191 = vpop.f32.mrb[0].mxu0
    %v1192 = vadd.f32 %v1107, %v1191
    %v1193 = vpop.f32.mrb[0].mxu0
    %v1194 = vpop.f32.mrb[0].mxu0
    %v1195 = vadd.f32 %v1107, %v1194
    %v1196 = vpop.f32.mrb[0].mxu0
    %1197 = vdwg.mxu0
    %v1198 = vpack.c.bf16 %v1171, %v1168
    %v1199 = vpack.c.bf16 %v1179, %v1176
    %v1200 = vpack.c.bf16 %v1187, %v1184
    %v1201 = vpack.c.bf16 %v1195, %v1192
    %s1202 = scalar_lea.vmem %s8, 96
    %v1203 = vld [vmem:[%s1202] sm:$0xf]
    %v1204 = vld [vmem:[%s1202 + $0x4] sm:$0xf]
    %v1205 = vld [vmem:[%s1202 + $0x8] sm:$0xf]
    %v1206 = vld [vmem:[%s1202 + $0xc] sm:$0xf]
    %v1207 = vld [vmem:[%s1202 + $0x10] sm:$0xf]
    %v1208 = vld [vmem:[%s1202 + $0x14] sm:$0xf]
    %v1209 = vld [vmem:[%s1202 + $0x18] sm:$0xf]
    %v1210 = vld [vmem:[%s1202 + $0x1c] sm:$0xf]
    %s1211 = scalar_lea.vmem %s9, 3
    %v1212 = vld [vmem:[%s1211] sm:$0x1]
    %v1214 = vlaneseq
    %v1215 = vshrl.u32 %v1214, 7
    %v1216 = vsub.s32 0, %v1215
    %v1217 = vrot.slane %v1212, %v1216
    %v1227 = vunpack.c.l.b16 %v1203
    %v1228 = vunpack.c.l.b16 %v1204
    %v1229 = vunpack.c.l.b16 %v1205
    %v1230 = vunpack.c.l.b16 %v1206
    %v1231 = vunpack.c.l.b16 %v1207
    %v1232 = vunpack.c.l.b16 %v1208
    %v1233 = vunpack.c.l.b16 %v1209
    %v1234 = vunpack.c.l.b16 %v1210
    %v1235 = vpack.c.b16 %v1228, %v1227
    %v1236 = vpack.c.b16 %v1230, %v1229
    %v1237 = vpack.c.b16 %v1232, %v1231
    %v1238 = vpack.c.b16 %v1234, %v1233
    %1243 = vmatprep.subr.bf16.mxu0 0
    %1244 = vmatpush1.bf16.msra.mxu0 %v1235
    %1245 = vmatprep.subr.bf16.mxu0 0
    %1246 = vmatpush1.bf16.msra.mxu0 %v1236
    %1247 = vmatprep.subr.bf16.mxu0 0
    %1248 = vmatpush1.bf16.msra.mxu0 %v1237
    %1249 = vmatprep.subr.bf16.mxu0 0
    %1250 = vmatpush1.bf16.msra.mxu0 %v1238
    %1251 = vmatprep.subr.bf16.mxu0 0
    %1252 = vmatpush1.bf16.msra.mxu0 0
    %1253 = vmatprep.subr.bf16.mxu0 0
    %1254 = vmatpush1.bf16.msra.mxu0 0
    %1255 = vmatprep.subr.bf16.mxu0 0
    %1256 = vmatpush1.bf16.msra.mxu0 0
    %1257 = vmatprep.subr.bf16.mxu0 0
    %1258 = vmatpush1.bf16.msra.mxu0 0
    %1259 = vmatprep.subr.bf16.mxu0 0
    %1260 = vmatpush1.bf16.msra.mxu0 0
    %1261 = vmatprep.subr.bf16.mxu0 0
    %1262 = vmatpush1.bf16.msra.mxu0 0
    %1263 = vmatprep.subr.bf16.mxu0 0
    %1264 = vmatpush1.bf16.msra.mxu0 0
    %1265 = vmatprep.subr.bf16.mxu0 0
    %1266 = vmatpush1.bf16.msra.mxu0 0
    %1267 = vmatprep.subr.bf16.mxu0 0
    %1268 = vmatpush1.bf16.msra.mxu0 0
    %1269 = vmatprep.subr.bf16.mxu0 0
    %1270 = vmatpush1.bf16.msra.mxu0 0
    %1271 = vmatprep.subr.bf16.mxu0 0
    %1272 = vmatpush1.bf16.msra.mxu0 0
    %1273 = vmatprep.subr.bf16.mxu0 0
    %1274 = vmatpush1.bf16.msra.mxu0 0
    %1275 = vmatprep.mubr.bf16.mxu0 0
    %1276 = vmatmul.mubr.bf16.gmra.mrb[0].mxu0 %v464
    %v1277 = vpop.f32.mrb[0].mxu0
    %v1278 = vadd.f32 %v1217, %v1277
    %v1279 = vpop.f32.mrb[0].mxu0
    %v1280 = vpop.f32.mrb[0].mxu0
    %v1281 = vadd.f32 %v1217, %v1280
    %v1282 = vpop.f32.mrb[0].mxu0
    %1283 = vmatprep.mubr.bf16.mxu0 0
    %1284 = vmatmul.mubr.bf16.gmra.mrb[0].mxu0 %v467
    %v1285 = vpop.f32.mrb[0].mxu0
    %v1286 = vadd.f32 %v1217, %v1285
    %v1287 = vpop.f32.mrb[0].mxu0
    %v1288 = vpop.f32.mrb[0].mxu0
    %v1289 = vadd.f32 %v1217, %v1288
    %v1290 = vpop.f32.mrb[0].mxu0
    %1291 = vmatprep.mubr.bf16.mxu0 0
    %1292 = vmatmul.mubr.bf16.gmra.mrb[0].mxu0 %v470
    %v1293 = vpop.f32.mrb[0].mxu0
    %v1294 = vadd.f32 %v1217, %v1293
    %v1295 = vpop.f32.mrb[0].mxu0
    %v1296 = vpop.f32.mrb[0].mxu0
    %v1297 = vadd.f32 %v1217, %v1296
    %v1298 = vpop.f32.mrb[0].mxu0
    %1299 = vmatprep.mubr.bf16.mxu0 0
    %1300 = vmatmul.mubr.bf16.gmra.mrb[0].mxu0 %v473
    %v1301 = vpop.f32.mrb[0].mxu0
    %v1302 = vadd.f32 %v1217, %v1301
    %v1303 = vpop.f32.mrb[0].mxu0
    %v1304 = vpop.f32.mrb[0].mxu0
    %v1305 = vadd.f32 %v1217, %v1304
    %v1306 = vpop.f32.mrb[0].mxu0
    %1307 = vdwg.mxu0
    %v1308 = vpack.c.bf16 %v1281, %v1278
    %v1309 = vpack.c.bf16 %v1289, %v1286
    %v1310 = vpack.c.bf16 %v1297, %v1294
    %v1311 = vpack.c.bf16 %v1305, %v1302
    %v1313 = vlaneseq
    %v1314 = vshrl.u32 %v1313, 7
    %v1315 = vsub.s32 0, %v1314
    %v1316 = vrot.slane %v284, %v1315
    %v1319 = vsel %vm206, %v540, 0
    %v1322 = vsel %vm206, %v541, 0
    %1324 = vmatprep.subr.bf16.mxu0 0
    %1325 = vmatpush1.bf16.xpose.msra.mxu0 %v464
    %1326 = vmatprep.subr.bf16.mxu0 0
    %1327 = vmatpush1.bf16.xpose.msra.mxu0 %v467
    %1328 = vmatprep.subr.bf16.mxu0 0
    %1329 = vmatpush1.bf16.xpose.msra.mxu0 0
    %1330 = vmatprep.subr.bf16.mxu0 0
    %1331 = vmatpush1.bf16.xpose.msra.mxu0 0
    %1332 = vmatprep.subr.bf16.mxu0 0
    %1333 = vmatpush1.bf16.xpose.msra.mxu0 0
    %1334 = vmatprep.subr.bf16.mxu0 0
    %1335 = vmatpush1.bf16.xpose.msra.mxu0 0
    %1336 = vmatprep.subr.bf16.mxu0 0
    %1337 = vmatpush1.bf16.xpose.msra.mxu0 0
    %1338 = vmatprep.subr.bf16.mxu0 0
    %1339 = vmatpush1.bf16.xpose.msra.mxu0 0
    %1340 = vmatprep.subr.bf16.mxu0 0
    %1341 = vmatpush1.bf16.xpose.msra.mxu0 0
    %1342 = vmatprep.subr.bf16.mxu0 0
    %1343 = vmatpush1.bf16.xpose.msra.mxu0 0
    %1344 = vmatprep.subr.bf16.mxu0 0
    %1345 = vmatpush1.bf16.xpose.msra.mxu0 0
    %1346 = vmatprep.subr.bf16.mxu0 0
    %1347 = vmatpush1.bf16.xpose.msra.mxu0 0
    %1348 = vmatprep.subr.bf16.mxu0 0
    %1349 = vmatpush1.bf16.xpose.msra.mxu0 0
    %1350 = vmatprep.subr.bf16.mxu0 0
    %1351 = vmatpush1.bf16.xpose.msra.mxu0 0
    %1352 = vmatprep.subr.bf16.mxu0 0
    %1353 = vmatpush1.bf16.xpose.msra.mxu0 0
    %1354 = vmatprep.subr.bf16.mxu0 0
    %1355 = vmatpush1.bf16.xpose.msra.mxu0 0
    %1356 = vmatprep.mubr.bf16.mxu0 0
    %1357 = vmatmul.mubr.bf16.gmra.mrb[0].mxu0 %v1319
    %v1358 = vpop.f32.mrb[0].mxu0
    %v1359 = vadd.f32 %v1316, %v1358
    %v1360 = vpop.f32.mrb[0].mxu0
    %v1361 = vpop.f32.mrb[0].mxu0
    %v1362 = vadd.f32 %v1316, %v1361
    %v1363 = vpop.f32.mrb[0].mxu0
    %1364 = vmatprep.mubr.bf16.mxu0 0
    %1365 = vmatmul.mubr.bf16.gmra.mrb[0].mxu0 %v1322
    %v1366 = vpop.f32.mrb[0].mxu0
    %v1367 = vadd.f32 %v1316, %v1366
    %v1368 = vpop.f32.mrb[0].mxu0
    %v1369 = vpop.f32.mrb[0].mxu0
    %v1370 = vadd.f32 %v1316, %v1369
    %v1371 = vpop.f32.mrb[0].mxu0
    %1372 = vdwg.mxu0
    %vm1373 = vcmask 261120
    %v1374 = vsel %vm1373, %v1359, -inf
    %1375 = vmax.xlane.f32.xlu0 %v1374
    %v1376 = vpop.xlane.xlu0 %1375
    %v1377 = vsel %vm1373, %v1362, -inf
    %1378 = vmax.xlane.f32.xlu0 %v1377
    %v1379 = vpop.xlane.xlu0 %1378
    %v1380 = vsel %vm1373, %v1367, -inf
    %1381 = vmax.xlane.f32.xlu0 %v1380
    %v1382 = vpop.xlane.xlu0 %1381
    %v1383 = vsel %vm1373, %v1370, -inf
    %1384 = vmax.xlane.f32.xlu0 %v1383
    %v1385 = vpop.xlane.xlu0 %1384
    %v1386 = vsub.f32 %v1359, %v1376
    %v1387 = vsub.f32 %v1362, %v1379
    %v1388 = vsub.f32 %v1367, %v1382
    %v1389 = vsub.f32 %v1370, %v1385
    %v1390 = vmul.f32 %v1386, 1.442695
    %v1391 = vpow.pop %v1390
    %v1392 = vmul.f32 %v1387, 1.442695
    %v1393 = vpow.pop %v1392
    %v1394 = vmul.f32 %v1388, 1.442695
    %v1395 = vpow.pop %v1394
    %v1396 = vmul.f32 %v1389, 1.442695
    %v1397 = vpow.pop %v1396
    %v1398 = vsel %vm1373, %v1391, 0.0
    %1399 = vadd.xlane.f32.xlu0 %v1398
    %v1400 = vpop.xlane.xlu0 %1399
    %v1401 = vsel %vm1373, %v1393, 0.0
    %1402 = vadd.xlane.f32.xlu0 %v1401
    %v1403 = vpop.xlane.xlu0 %1402
    %v1404 = vsel %vm1373, %v1395, 0.0
    %1405 = vadd.xlane.f32.xlu0 %v1404
    %v1406 = vpop.xlane.xlu0 %1405
    %v1407 = vsel %vm1373, %v1397, 0.0
    %1408 = vadd.xlane.f32.xlu0 %v1407
    %v1409 = vpop.xlane.xlu0 %1408
    %v1410 = vrcp.pop %v1400
    %v1411 = vrcp.pop %v1403
    %v1412 = vrcp.pop %v1406
    %v1413 = vrcp.pop %v1409
    %v1414 = vmul.f32 %v1391, %v1410
    %v1415 = vmul.f32 %v1393, %v1411
    %v1416 = vmul.f32 %v1395, %v1412
    %v1417 = vmul.f32 %v1397, %v1413
    %v1418 = vpack.c.bf16 %v1415, %v1414
    %v1419 = vpack.c.bf16 %v1417, %v1416
    %v1421 = vsel %vm206, %v758, 0
    %v1424 = vsel %vm206, %v759, 0
    %1426 = vmatprep.subr.bf16.mxu0 0
    %1427 = vmatpush1.bf16.xpose.msra.mxu0 %v464
    %1428 = vmatprep.subr.bf16.mxu0 0
    %1429 = vmatpush1.bf16.xpose.msra.mxu0 %v467
    %1430 = vmatprep.subr.bf16.mxu0 0
    %1431 = vmatpush1.bf16.xpose.msra.mxu0 0
    %1432 = vmatprep.subr.bf16.mxu0 0
    %1433 = vmatpush1.bf16.xpose.msra.mxu0 0
    %1434 = vmatprep.subr.bf16.mxu0 0
    %1435 = vmatpush1.bf16.xpose.msra.mxu0 0
    %1436 = vmatprep.subr.bf16.mxu0 0
    %1437 = vmatpush1.bf16.xpose.msra.mxu0 0
    %1438 = vmatprep.subr.bf16.mxu0 0
    %1439 = vmatpush1.bf16.xpose.msra.mxu0 0
    %1440 = vmatprep.subr.bf16.mxu0 0
    %1441 = vmatpush1.bf16.xpose.msra.mxu0 0
    %1442 = vmatprep.subr.bf16.mxu0 0
    %1443 = vmatpush1.bf16.xpose.msra.mxu0 0
    %1444 = vmatprep.subr.bf16.mxu0 0
    %1445 = vmatpush1.bf16.xpose.msra.mxu0 0
    %1446 = vmatprep.subr.bf16.mxu0 0
    %1447 = vmatpush1.bf16.xpose.msra.mxu0 0
    %1448 = vmatprep.subr.bf16.mxu0 0
    %1449 = vmatpush1.bf16.xpose.msra.mxu0 0
    %1450 = vmatprep.subr.bf16.mxu0 0
    %1451 = vmatpush1.bf16.xpose.msra.mxu0 0
    %1452 = vmatprep.subr.bf16.mxu0 0
    %1453 = vmatpush1.bf16.xpose.msra.mxu0 0
    %1454 = vmatprep.subr.bf16.mxu0 0
    %1455 = vmatpush1.bf16.xpose.msra.mxu0 0
    %1456 = vmatprep.subr.bf16.mxu0 0
    %1457 = vmatpush1.bf16.xpose.msra.mxu0 0
    %1458 = vmatprep.mubr.bf16.mxu0 0
    %1459 = vmatmul.mubr.bf16.gmra.mrb[0].mxu0 %v1421
    %v1460 = vpop.f32.mrb[0].mxu0
    %v1461 = vadd.f32 %v1316, %v1460
    %v1462 = vpop.f32.mrb[0].mxu0
    %v1463 = vpop.f32.mrb[0].mxu0
    %v1464 = vadd.f32 %v1316, %v1463
    %v1465 = vpop.f32.mrb[0].mxu0
    %1466 = vmatprep.mubr.bf16.mxu0 0
    %1467 = vmatmul.mubr.bf16.gmra.mrb[0].mxu0 %v1424
    %v1468 = vpop.f32.mrb[0].mxu0
    %v1469 = vadd.f32 %v1316, %v1468
    %v1470 = vpop.f32.mrb[0].mxu0
    %v1471 = vpop.f32.mrb[0].mxu0
    %v1472 = vadd.f32 %v1316, %v1471
    %v1473 = vpop.f32.mrb[0].mxu0
    %1474 = vdwg.mxu0
    %v1475 = vsel %vm1373, %v1461, -inf
    %1476 = vmax.xlane.f32.xlu0 %v1475
    %v1477 = vpop.xlane.xlu0 %1476
    %v1478 = vsel %vm1373, %v1464, -inf
    %1479 = vmax.xlane.f32.xlu0 %v1478
    %v1480 = vpop.xlane.xlu0 %1479
    %v1481 = vsel %vm1373, %v1469, -inf
    %1482 = vmax.xlane.f32.xlu0 %v1481
    %v1483 = vpop.xlane.xlu0 %1482
    %v1484 = vsel %vm1373, %v1472, -inf
    %1485 = vmax.xlane.f32.xlu0 %v1484
    %v1486 = vpop.xlane.xlu0 %1485
    %v1487 = vsub.f32 %v1461, %v1477
    %v1488 = vsub.f32 %v1464, %v1480
    %v1489 = vsub.f32 %v1469, %v1483
    %v1490 = vsub.f32 %v1472, %v1486
    %v1491 = vmul.f32 %v1487, 1.442695
    %v1492 = vpow.pop %v1491
    %v1493 = vmul.f32 %v1488, 1.442695
    %v1494 = vpow.pop %v1493
    %v1495 = vmul.f32 %v1489, 1.442695
    %v1496 = vpow.pop %v1495
    %v1497 = vmul.f32 %v1490, 1.442695
    %v1498 = vpow.pop %v1497
    %v1499 = vsel %vm1373, %v1492, 0.0
    %1500 = vadd.xlane.f32.xlu0 %v1499
    %v1501 = vpop.xlane.xlu0 %1500
    %v1502 = vsel %vm1373, %v1494, 0.0
    %1503 = vadd.xlane.f32.xlu0 %v1502
    %v1504 = vpop.xlane.xlu0 %1503
    %v1505 = vsel %vm1373, %v1496, 0.0
    %1506 = vadd.xlane.f32.xlu0 %v1505
    %v1507 = vpop.xlane.xlu0 %1506
    %v1508 = vsel %vm1373, %v1498, 0.0
    %1509 = vadd.xlane.f32.xlu0 %v1508
    %v1510 = vpop.xlane.xlu0 %1509
    %v1511 = vrcp.pop %v1501
    %v1512 = vrcp.pop %v1504
    %v1513 = vrcp.pop %v1507
    %v1514 = vrcp.pop %v1510
    %v1515 = vmul.f32 %v1492, %v1511
    %v1516 = vmul.f32 %v1494, %v1512
    %v1517 = vmul.f32 %v1496, %v1513
    %v1518 = vmul.f32 %v1498, %v1514
    %v1519 = vpack.c.bf16 %v1516, %v1515
    %v1520 = vpack.c.bf16 %v1518, %v1517
    %v1522 = vsel %vm1373, %v1519, 0
    %v1525 = vsel %vm1373, %v1520, 0
    %1527 = vmatprep.subr.bf16.mxu0 0
    %1528 = vmatpush1.bf16.msra.mxu0 %v868
    %1529 = vmatprep.subr.bf16.mxu0 0
    %1530 = vmatpush1.bf16.msra.mxu0 %v869
    %1531 = vmatprep.subr.bf16.mxu0 0
    %1532 = vmatpush1.bf16.msra.mxu0 0
    %1533 = vmatprep.subr.bf16.mxu0 0
    %1534 = vmatpush1.bf16.msra.mxu0 0
    %1535 = vmatprep.subr.bf16.mxu0 0
    %1536 = vmatpush1.bf16.msra.mxu0 0
    %1537 = vmatprep.subr.bf16.mxu0 0
    %1538 = vmatpush1.bf16.msra.mxu0 0
    %1539 = vmatprep.subr.bf16.mxu0 0
    %1540 = vmatpush1.bf16.msra.mxu0 0
    %1541 = vmatprep.subr.bf16.mxu0 0
    %1542 = vmatpush1.bf16.msra.mxu0 0
    %1543 = vmatprep.subr.bf16.mxu0 0
    %1544 = vmatpush1.bf16.msra.mxu0 0
    %1545 = vmatprep.subr.bf16.mxu0 0
    %1546 = vmatpush1.bf16.msra.mxu0 0
    %1547 = vmatprep.subr.bf16.mxu0 0
    %1548 = vmatpush1.bf16.msra.mxu0 0
    %1549 = vmatprep.subr.bf16.mxu0 0
    %1550 = vmatpush1.bf16.msra.mxu0 0
    %1551 = vmatprep.subr.bf16.mxu0 0
    %1552 = vmatpush1.bf16.msra.mxu0 0
    %1553 = vmatprep.subr.bf16.mxu0 0
    %1554 = vmatpush1.bf16.msra.mxu0 0
    %1555 = vmatprep.subr.bf16.mxu0 0
    %1556 = vmatpush1.bf16.msra.mxu0 0
    %1557 = vmatprep.subr.bf16.mxu0 0
    %1558 = vmatpush1.bf16.msra.mxu0 0
    %1559 = vmatprep.mubr.bf16.mxu0 0
    %1560 = vmatmul.mubr.bf16.gmra.mrb[0].mxu0 %v1522
    %v1561 = vpop.f32.mrb[0].mxu0
    %v1562 = vadd.f32 0.0, %v1561
    %v1563 = vpop.f32.mrb[0].mxu0
    %v1564 = vpop.f32.mrb[0].mxu0
    %v1565 = vadd.f32 0.0, %v1564
    %v1566 = vpop.f32.mrb[0].mxu0
    %1567 = vmatprep.mubr.bf16.mxu0 0
    %1568 = vmatmul.mubr.bf16.gmra.mrb[0].mxu0 %v1525
    %v1569 = vpop.f32.mrb[0].mxu0
    %v1570 = vadd.f32 0.0, %v1569
    %v1571 = vpop.f32.mrb[0].mxu0
    %v1572 = vpop.f32.mrb[0].mxu0
    %v1573 = vadd.f32 0.0, %v1572
    %v1574 = vpop.f32.mrb[0].mxu0
    %1575 = vdwg.mxu0
    %v1577 = vsel %vm1373, %v1418, 0
    %v1580 = vsel %vm1373, %v1419, 0
    %1582 = vmatprep.subr.bf16.mxu0 0
    %1583 = vmatpush1.bf16.msra.mxu0 %v648
    %1584 = vmatprep.subr.bf16.mxu0 0
    %1585 = vmatpush1.bf16.msra.mxu0 %v649
    %1586 = vmatprep.subr.bf16.mxu0 0
    %1587 = vmatpush1.bf16.msra.mxu0 0
    %1588 = vmatprep.subr.bf16.mxu0 0
    %1589 = vmatpush1.bf16.msra.mxu0 0
    %1590 = vmatprep.subr.bf16.mxu0 0
    %1591 = vmatpush1.bf16.msra.mxu0 0
    %1592 = vmatprep.subr.bf16.mxu0 0
    %1593 = vmatpush1.bf16.msra.mxu0 0
    %1594 = vmatprep.subr.bf16.mxu0 0
    %1595 = vmatpush1.bf16.msra.mxu0 0
    %1596 = vmatprep.subr.bf16.mxu0 0
    %1597 = vmatpush1.bf16.msra.mxu0 0
    %1598 = vmatprep.subr.bf16.mxu0 0
    %1599 = vmatpush1.bf16.msra.mxu0 0
    %1600 = vmatprep.subr.bf16.mxu0 0
    %1601 = vmatpush1.bf16.msra.mxu0 0
    %1602 = vmatprep.subr.bf16.mxu0 0
    %1603 = vmatpush1.bf16.msra.mxu0 0
    %1604 = vmatprep.subr.bf16.mxu0 0
    %1605 = vmatpush1.bf16.msra.mxu0 0
    %1606 = vmatprep.subr.bf16.mxu0 0
    %1607 = vmatpush1.bf16.msra.mxu0 0
    %1608 = vmatprep.subr.bf16.mxu0 0
    %1609 = vmatpush1.bf16.msra.mxu0 0
    %1610 = vmatprep.subr.bf16.mxu0 0
    %1611 = vmatpush1.bf16.msra.mxu0 0
    %1612 = vmatprep.subr.bf16.mxu0 0
    %1613 = vmatpush1.bf16.msra.mxu0 0
    %1614 = vmatprep.mubr.bf16.mxu0 0
    %1615 = vmatmul.mubr.bf16.gmra.mrb[0].mxu0 %v1577
    %v1616 = vpop.f32.mrb[0].mxu0
    %v1617 = vadd.f32 %v1562, %v1616
    %v1618 = vpop.f32.mrb[0].mxu0
    %v1619 = vpop.f32.mrb[0].mxu0
    %v1620 = vadd.f32 %v1565, %v1619
    %v1621 = vpop.f32.mrb[0].mxu0
    %1622 = vmatprep.mubr.bf16.mxu0 0
    %1623 = vmatmul.mubr.bf16.gmra.mrb[0].mxu0 %v1580
    %v1624 = vpop.f32.mrb[0].mxu0
    %v1625 = vadd.f32 %v1570, %v1624
    %v1626 = vpop.f32.mrb[0].mxu0
    %v1627 = vpop.f32.mrb[0].mxu0
    %v1628 = vadd.f32 %v1573, %v1627
    %v1629 = vpop.f32.mrb[0].mxu0
    %1630 = vdwg.mxu0
    %v1632 = vsel %vm206, %v978, 0
    %v1635 = vsel %vm206, %v979, 0
    %1637 = vmatprep.subr.bf16.mxu0 0
    %1638 = vmatpush1.bf16.xpose.msra.mxu0 %v464
    %1639 = vmatprep.subr.bf16.mxu0 0
    %1640 = vmatpush1.bf16.xpose.msra.mxu0 %v467
    %1641 = vmatprep.subr.bf16.mxu0 0
    %1642 = vmatpush1.bf16.xpose.msra.mxu0 0
    %1643 = vmatprep.subr.bf16.mxu0 0
    %1644 = vmatpush1.bf16.xpose.msra.mxu0 0
    %1645 = vmatprep.subr.bf16.mxu0 0
    %1646 = vmatpush1.bf16.xpose.msra.mxu0 0
    %1647 = vmatprep.subr.bf16.mxu0 0
    %1648 = vmatpush1.bf16.xpose.msra.mxu0 0
    %1649 = vmatprep.subr.bf16.mxu0 0
    %1650 = vmatpush1.bf16.xpose.msra.mxu0 0
    %1651 = vmatprep.subr.bf16.mxu0 0
    %1652 = vmatpush1.bf16.xpose.msra.mxu0 0
    %1653 = vmatprep.subr.bf16.mxu0 0
    %1654 = vmatpush1.bf16.xpose.msra.mxu0 0
    %1655 = vmatprep.subr.bf16.mxu0 0
    %1656 = vmatpush1.bf16.xpose.msra.mxu0 0
    %1657 = vmatprep.subr.bf16.mxu0 0
    %1658 = vmatpush1.bf16.xpose.msra.mxu0 0
    %1659 = vmatprep.subr.bf16.mxu0 0
    %1660 = vmatpush1.bf16.xpose.msra.mxu0 0
    %1661 = vmatprep.subr.bf16.mxu0 0
    %1662 = vmatpush1.bf16.xpose.msra.mxu0 0
    %1663 = vmatprep.subr.bf16.mxu0 0
    %1664 = vmatpush1.bf16.xpose.msra.mxu0 0
    %1665 = vmatprep.subr.bf16.mxu0 0
    %1666 = vmatpush1.bf16.xpose.msra.mxu0 0
    %1667 = vmatprep.subr.bf16.mxu0 0
    %1668 = vmatpush1.bf16.xpose.msra.mxu0 0
    %1669 = vmatprep.mubr.bf16.mxu0 0
    %1670 = vmatmul.mubr.bf16.gmra.mrb[0].mxu0 %v1632
    %v1671 = vpop.f32.mrb[0].mxu0
    %v1672 = vadd.f32 %v1316, %v1671
    %v1673 = vpop.f32.mrb[0].mxu0
    %v1674 = vpop.f32.mrb[0].mxu0
    %v1675 = vadd.f32 %v1316, %v1674
    %v1676 = vpop.f32.mrb[0].mxu0
    %1677 = vmatprep.mubr.bf16.mxu0 0
    %1678 = vmatmul.mubr.bf16.gmra.mrb[0].mxu0 %v1635
    %v1679 = vpop.f32.mrb[0].mxu0
    %v1680 = vadd.f32 %v1316, %v1679
    %v1681 = vpop.f32.mrb[0].mxu0
    %v1682 = vpop.f32.mrb[0].mxu0
    %v1683 = vadd.f32 %v1316, %v1682
    %v1684 = vpop.f32.mrb[0].mxu0
    %1685 = vdwg.mxu0
    %v1686 = vsel %vm1373, %v1672, -inf
    %1687 = vmax.xlane.f32.xlu0 %v1686
    %v1688 = vpop.xlane.xlu0 %1687
    %v1689 = vsel %vm1373, %v1675, -inf
    %1690 = vmax.xlane.f32.xlu0 %v1689
    %v1691 = vpop.xlane.xlu0 %1690
    %v1692 = vsel %vm1373, %v1680, -inf
    %1693 = vmax.xlane.f32.xlu0 %v1692
    %v1694 = vpop.xlane.xlu0 %1693
    %v1695 = vsel %vm1373, %v1683, -inf
    %1696 = vmax.xlane.f32.xlu0 %v1695
    %v1697 = vpop.xlane.xlu0 %1696
    %v1698 = vsub.f32 %v1672, %v1688
    %v1699 = vsub.f32 %v1675, %v1691
    %v1700 = vsub.f32 %v1680, %v1694
    %v1701 = vsub.f32 %v1683, %v1697
    %v1702 = vmul.f32 %v1698, 1.442695
    %v1703 = vpow.pop %v1702
    %v1704 = vmul.f32 %v1699, 1.442695
    %v1705 = vpow.pop %v1704
    %v1706 = vmul.f32 %v1700, 1.442695
    %v1707 = vpow.pop %v1706
    %v1708 = vmul.f32 %v1701, 1.442695
    %v1709 = vpow.pop %v1708
    %v1710 = vsel %vm1373, %v1703, 0.0
    %1711 = vadd.xlane.f32.xlu0 %v1710
    %v1712 = vpop.xlane.xlu0 %1711
    %v1713 = vsel %vm1373, %v1705, 0.0
    %1714 = vadd.xlane.f32.xlu0 %v1713
    %v1715 = vpop.xlane.xlu0 %1714
    %v1716 = vsel %vm1373, %v1707, 0.0
    %1717 = vadd.xlane.f32.xlu0 %v1716
    %v1718 = vpop.xlane.xlu0 %1717
    %v1719 = vsel %vm1373, %v1709, 0.0
    %1720 = vadd.xlane.f32.xlu0 %v1719
    %v1721 = vpop.xlane.xlu0 %1720
    %v1722 = vrcp.pop %v1712
    %v1723 = vrcp.pop %v1715
    %v1724 = vrcp.pop %v1718
    %v1725 = vrcp.pop %v1721
    %v1726 = vmul.f32 %v1703, %v1722
    %v1727 = vmul.f32 %v1705, %v1723
    %v1728 = vmul.f32 %v1707, %v1724
    %v1729 = vmul.f32 %v1709, %v1725
    %v1730 = vpack.c.bf16 %v1727, %v1726
    %v1731 = vpack.c.bf16 %v1729, %v1728
    %v1733 = vsel %vm1373, %v1730, 0
    %v1736 = vsel %vm1373, %v1731, 0
    %1738 = vmatprep.subr.bf16.mxu0 0
    %1739 = vmatpush1.bf16.msra.mxu0 %v1088
    %1740 = vmatprep.subr.bf16.mxu0 0
    %1741 = vmatpush1.bf16.msra.mxu0 %v1089
    %1742 = vmatprep.subr.bf16.mxu0 0
    %1743 = vmatpush1.bf16.msra.mxu0 0
    %1744 = vmatprep.subr.bf16.mxu0 0
    %1745 = vmatpush1.bf16.msra.mxu0 0
    %1746 = vmatprep.subr.bf16.mxu0 0
    %1747 = vmatpush1.bf16.msra.mxu0 0
    %1748 = vmatprep.subr.bf16.mxu0 0
    %1749 = vmatpush1.bf16.msra.mxu0 0
    %1750 = vmatprep.subr.bf16.mxu0 0
    %1751 = vmatpush1.bf16.msra.mxu0 0
    %1752 = vmatprep.subr.bf16.mxu0 0
    %1753 = vmatpush1.bf16.msra.mxu0 0
    %1754 = vmatprep.subr.bf16.mxu0 0
    %1755 = vmatpush1.bf16.msra.mxu0 0
    %1756 = vmatprep.subr.bf16.mxu0 0
    %1757 = vmatpush1.bf16.msra.mxu0 0
    %1758 = vmatprep.subr.bf16.mxu0 0
    %1759 = vmatpush1.bf16.msra.mxu0 0
    %1760 = vmatprep.subr.bf16.mxu0 0
    %1761 = vmatpush1.bf16.msra.mxu0 0
    %1762 = vmatprep.subr.bf16.mxu0 0
    %1763 = vmatpush1.bf16.msra.mxu0 0
    %1764 = vmatprep.subr.bf16.mxu0 0
    %1765 = vmatpush1.bf16.msra.mxu0 0
    %1766 = vmatprep.subr.bf16.mxu0 0
    %1767 = vmatpush1.bf16.msra.mxu0 0
    %1768 = vmatprep.subr.bf16.mxu0 0
    %1769 = vmatpush1.bf16.msra.mxu0 0
    %1770 = vmatprep.mubr.bf16.mxu0 0
    %1771 = vmatmul.mubr.bf16.gmra.mrb[0].mxu0 %v1733
    %v1772 = vpop.f32.mrb[0].mxu0
    %v1773 = vadd.f32 0.0, %v1772
    %v1774 = vpop.f32.mrb[0].mxu0
    %v1775 = vpop.f32.mrb[0].mxu0
    %v1776 = vadd.f32 0.0, %v1775
    %v1777 = vpop.f32.mrb[0].mxu0
    %1778 = vmatprep.mubr.bf16.mxu0 0
    %1779 = vmatmul.mubr.bf16.gmra.mrb[0].mxu0 %v1736
    %v1780 = vpop.f32.mrb[0].mxu0
    %v1781 = vadd.f32 0.0, %v1780
    %v1782 = vpop.f32.mrb[0].mxu0
    %v1783 = vpop.f32.mrb[0].mxu0
    %v1784 = vadd.f32 0.0, %v1783
    %v1785 = vpop.f32.mrb[0].mxu0
    %1786 = vdwg.mxu0
    %v1787 = vadd.f32 %v1617, %v1773
    %v1788 = vadd.f32 %v1620, %v1776
    %v1789 = vadd.f32 %v1625, %v1781
    %v1790 = vadd.f32 %v1628, %v1784
    %v1792 = vsel %vm206, %v1198, 0
    %v1795 = vsel %vm206, %v1199, 0
    %1797 = vmatprep.subr.bf16.mxu0 0
    %1798 = vmatpush1.bf16.xpose.msra.mxu0 %v464
    %1799 = vmatprep.subr.bf16.mxu0 0
    %1800 = vmatpush1.bf16.xpose.msra.mxu0 %v467
    %1801 = vmatprep.subr.bf16.mxu0 0
    %1802 = vmatpush1.bf16.xpose.msra.mxu0 0
    %1803 = vmatprep.subr.bf16.mxu0 0
    %1804 = vmatpush1.bf16.xpose.msra.mxu0 0
    %1805 = vmatprep.subr.bf16.mxu0 0
    %1806 = vmatpush1.bf16.xpose.msra.mxu0 0
    %1807 = vmatprep.subr.bf16.mxu0 0
    %1808 = vmatpush1.bf16.xpose.msra.mxu0 0
    %1809 = vmatprep.subr.bf16.mxu0 0
    %1810 = vmatpush1.bf16.xpose.msra.mxu0 0
    %1811 = vmatprep.subr.bf16.mxu0 0
    %1812 = vmatpush1.bf16.xpose.msra.mxu0 0
    %1813 = vmatprep.subr.bf16.mxu0 0
    %1814 = vmatpush1.bf16.xpose.msra.mxu0 0
    %1815 = vmatprep.subr.bf16.mxu0 0
    %1816 = vmatpush1.bf16.xpose.msra.mxu0 0
    %1817 = vmatprep.subr.bf16.mxu0 0
    %1818 = vmatpush1.bf16.xpose.msra.mxu0 0
    %1819 = vmatprep.subr.bf16.mxu0 0
    %1820 = vmatpush1.bf16.xpose.msra.mxu0 0
    %1821 = vmatprep.subr.bf16.mxu0 0
    %1822 = vmatpush1.bf16.xpose.msra.mxu0 0
    %1823 = vmatprep.subr.bf16.mxu0 0
    %1824 = vmatpush1.bf16.xpose.msra.mxu0 0
    %1825 = vmatprep.subr.bf16.mxu0 0
    %1826 = vmatpush1.bf16.xpose.msra.mxu0 0
    %1827 = vmatprep.subr.bf16.mxu0 0
    %1828 = vmatpush1.bf16.xpose.msra.mxu0 0
    %1829 = vmatprep.mubr.bf16.mxu0 0
    %1830 = vmatmul.mubr.bf16.gmra.mrb[0].mxu0 %v1792
    %v1831 = vpop.f32.mrb[0].mxu0
    %v1832 = vadd.f32 %v1316, %v1831
    %v1833 = vpop.f32.mrb[0].mxu0
    %v1834 = vpop.f32.mrb[0].mxu0
    %v1835 = vadd.f32 %v1316, %v1834
    %v1836 = vpop.f32.mrb[0].mxu0
    %1837 = vmatprep.mubr.bf16.mxu0 0
    %1838 = vmatmul.mubr.bf16.gmra.mrb[0].mxu0 %v1795
    %v1839 = vpop.f32.mrb[0].mxu0
    %v1840 = vadd.f32 %v1316, %v1839
    %v1841 = vpop.f32.mrb[0].mxu0
    %v1842 = vpop.f32.mrb[0].mxu0
    %v1843 = vadd.f32 %v1316, %v1842
    %v1844 = vpop.f32.mrb[0].mxu0
    %1845 = vdwg.mxu0
    %v1846 = vsel %vm1373, %v1832, -inf
    %1847 = vmax.xlane.f32.xlu0 %v1846
    %v1848 = vpop.xlane.xlu0 %1847
    %v1849 = vsel %vm1373, %v1835, -inf
    %1850 = vmax.xlane.f32.xlu0 %v1849
    %v1851 = vpop.xlane.xlu0 %1850
    %v1852 = vsel %vm1373, %v1840, -inf
    %1853 = vmax.xlane.f32.xlu0 %v1852
    %v1854 = vpop.xlane.xlu0 %1853
    %v1855 = vsel %vm1373, %v1843, -inf
    %1856 = vmax.xlane.f32.xlu0 %v1855
    %v1857 = vpop.xlane.xlu0 %1856
    %v1858 = vsub.f32 %v1832, %v1848
    %v1859 = vsub.f32 %v1835, %v1851
    %v1860 = vsub.f32 %v1840, %v1854
    %v1861 = vsub.f32 %v1843, %v1857
    %v1862 = vmul.f32 %v1858, 1.442695
    %v1863 = vpow.pop %v1862
    %v1864 = vmul.f32 %v1859, 1.442695
    %v1865 = vpow.pop %v1864
    %v1866 = vmul.f32 %v1860, 1.442695
    %v1867 = vpow.pop %v1866
    %v1868 = vmul.f32 %v1861, 1.442695
    %v1869 = vpow.pop %v1868
    %v1870 = vsel %vm1373, %v1863, 0.0
    %1871 = vadd.xlane.f32.xlu0 %v1870
    %v1872 = vpop.xlane.xlu0 %1871
    %v1873 = vsel %vm1373, %v1865, 0.0
    %1874 = vadd.xlane.f32.xlu0 %v1873
    %v1875 = vpop.xlane.xlu0 %1874
    %v1876 = vsel %vm1373, %v1867, 0.0
    %1877 = vadd.xlane.f32.xlu0 %v1876
    %v1878 = vpop.xlane.xlu0 %1877
    %v1879 = vsel %vm1373, %v1869, 0.0
    %1880 = vadd.xlane.f32.xlu0 %v1879
    %v1881 = vpop.xlane.xlu0 %1880
    %v1882 = vrcp.pop %v1872
    %v1883 = vrcp.pop %v1875
    %v1884 = vrcp.pop %v1878
    %v1885 = vrcp.pop %v1881
    %v1886 = vmul.f32 %v1863, %v1882
    %v1887 = vmul.f32 %v1865, %v1883
    %v1888 = vmul.f32 %v1867, %v1884
    %v1889 = vmul.f32 %v1869, %v1885
    %v1890 = vpack.c.bf16 %v1887, %v1886
    %v1891 = vpack.c.bf16 %v1889, %v1888
    %v1893 = vsel %vm1373, %v1890, 0
    %v1896 = vsel %vm1373, %v1891, 0
    %1898 = vmatprep.subr.bf16.mxu0 0
    %1899 = vmatpush1.bf16.msra.mxu0 %v1308
    %1900 = vmatprep.subr.bf16.mxu0 0
    %1901 = vmatpush1.bf16.msra.mxu0 %v1309
    %1902 = vmatprep.subr.bf16.mxu0 0
    %1903 = vmatpush1.bf16.msra.mxu0 0
    %1904 = vmatprep.subr.bf16.mxu0 0
    %1905 = vmatpush1.bf16.msra.mxu0 0
    %1906 = vmatprep.subr.bf16.mxu0 0
    %1907 = vmatpush1.bf16.msra.mxu0 0
    %1908 = vmatprep.subr.bf16.mxu0 0
    %1909 = vmatpush1.bf16.msra.mxu0 0
    %1910 = vmatprep.subr.bf16.mxu0 0
    %1911 = vmatpush1.bf16.msra.mxu0 0
    %1912 = vmatprep.subr.bf16.mxu0 0
    %1913 = vmatpush1.bf16.msra.mxu0 0
    %1914 = vmatprep.subr.bf16.mxu0 0
    %1915 = vmatpush1.bf16.msra.mxu0 0
    %1916 = vmatprep.subr.bf16.mxu0 0
    %1917 = vmatpush1.bf16.msra.mxu0 0
    %1918 = vmatprep.subr.bf16.mxu0 0
    %1919 = vmatpush1.bf16.msra.mxu0 0
    %1920 = vmatprep.subr.bf16.mxu0 0
    %1921 = vmatpush1.bf16.msra.mxu0 0
    %1922 = vmatprep.subr.bf16.mxu0 0
    %1923 = vmatpush1.bf16.msra.mxu0 0
    %1924 = vmatprep.subr.bf16.mxu0 0
    %1925 = vmatpush1.bf16.msra.mxu0 0
    %1926 = vmatprep.subr.bf16.mxu0 0
    %1927 = vmatpush1.bf16.msra.mxu0 0
    %1928 = vmatprep.subr.bf16.mxu0 0
    %1929 = vmatpush1.bf16.msra.mxu0 0
    %1930 = vmatprep.mubr.bf16.mxu0 0
    %1931 = vmatmul.mubr.bf16.gmra.mrb[0].mxu0 %v1893
    %v1932 = vpop.f32.mrb[0].mxu0
    %v1933 = vadd.f32 0.0, %v1932
    %v1934 = vpop.f32.mrb[0].mxu0
    %v1935 = vpop.f32.mrb[0].mxu0
    %v1936 = vadd.f32 0.0, %v1935
    %v1937 = vpop.f32.mrb[0].mxu0
    %1938 = vmatprep.mubr.bf16.mxu0 0
    %1939 = vmatmul.mubr.bf16.gmra.mrb[0].mxu0 %v1896
    %v1940 = vpop.f32.mrb[0].mxu0
    %v1941 = vadd.f32 0.0, %v1940
    %v1942 = vpop.f32.mrb[0].mxu0
    %v1943 = vpop.f32.mrb[0].mxu0
    %v1944 = vadd.f32 0.0, %v1943
    %v1945 = vpop.f32.mrb[0].mxu0
    %1946 = vdwg.mxu0
    %v1947 = vadd.f32 %v1787, %v1933
    %v1948 = vadd.f32 %v1788, %v1936
    %v1949 = vadd.f32 %v1789, %v1941
    %v1950 = vadd.f32 %v1790, %v1944
    %v1952 = vsel %vm206, %v542, 0
    %v1955 = vsel %vm206, %v543, 0
    %1957 = vmatprep.subr.bf16.mxu0 0
    %1958 = vmatpush1.bf16.xpose.msra.mxu0 %v470
    %1959 = vmatprep.subr.bf16.mxu0 0
    %1960 = vmatpush1.bf16.xpose.msra.mxu0 %v473
    %1961 = vmatprep.subr.bf16.mxu0 0
    %1962 = vmatpush1.bf16.xpose.msra.mxu0 0
    %1963 = vmatprep.subr.bf16.mxu0 0
    %1964 = vmatpush1.bf16.xpose.msra.mxu0 0
    %1965 = vmatprep.subr.bf16.mxu0 0
    %1966 = vmatpush1.bf16.xpose.msra.mxu0 0
    %1967 = vmatprep.subr.bf16.mxu0 0
    %1968 = vmatpush1.bf16.xpose.msra.mxu0 0
    %1969 = vmatprep.subr.bf16.mxu0 0
    %1970 = vmatpush1.bf16.xpose.msra.mxu0 0
    %1971 = vmatprep.subr.bf16.mxu0 0
    %1972 = vmatpush1.bf16.xpose.msra.mxu0 0
    %1973 = vmatprep.subr.bf16.mxu0 0
    %1974 = vmatpush1.bf16.xpose.msra.mxu0 0
    %1975 = vmatprep.subr.bf16.mxu0 0
    %1976 = vmatpush1.bf16.xpose.msra.mxu0 0
    %1977 = vmatprep.subr.bf16.mxu0 0
    %1978 = vmatpush1.bf16.xpose.msra.mxu0 0
    %1979 = vmatprep.subr.bf16.mxu0 0
    %1980 = vmatpush1.bf16.xpose.msra.mxu0 0
    %1981 = vmatprep.subr.bf16.mxu0 0
    %1982 = vmatpush1.bf16.xpose.msra.mxu0 0
    %1983 = vmatprep.subr.bf16.mxu0 0
    %1984 = vmatpush1.bf16.xpose.msra.mxu0 0
    %1985 = vmatprep.subr.bf16.mxu0 0
    %1986 = vmatpush1.bf16.xpose.msra.mxu0 0
    %1987 = vmatprep.subr.bf16.mxu0 0
    %1988 = vmatpush1.bf16.xpose.msra.mxu0 0
    %1989 = vmatprep.mubr.bf16.mxu0 0
    %1990 = vmatmul.mubr.bf16.gmra.mrb[0].mxu0 %v1952
    %v1991 = vpop.f32.mrb[0].mxu0
    %v1992 = vadd.f32 %v1316, %v1991
    %v1993 = vpop.f32.mrb[0].mxu0
    %v1994 = vpop.f32.mrb[0].mxu0
    %v1995 = vadd.f32 %v1316, %v1994
    %v1996 = vpop.f32.mrb[0].mxu0
    %1997 = vmatprep.mubr.bf16.mxu0 0
    %1998 = vmatmul.mubr.bf16.gmra.mrb[0].mxu0 %v1955
    %v1999 = vpop.f32.mrb[0].mxu0
    %v2000 = vadd.f32 %v1316, %v1999
    %v2001 = vpop.f32.mrb[0].mxu0
    %v2002 = vpop.f32.mrb[0].mxu0
    %v2003 = vadd.f32 %v1316, %v2002
    %v2004 = vpop.f32.mrb[0].mxu0
    %2005 = vdwg.mxu0
    %v2006 = vsel %vm1373, %v1992, -inf
    %2007 = vmax.xlane.f32.xlu0 %v2006
    %v2008 = vpop.xlane.xlu0 %2007
    %v2009 = vsel %vm1373, %v1995, -inf
    %2010 = vmax.xlane.f32.xlu0 %v2009
    %v2011 = vpop.xlane.xlu0 %2010
    %v2012 = vsel %vm1373, %v2000, -inf
    %2013 = vmax.xlane.f32.xlu0 %v2012
    %v2014 = vpop.xlane.xlu0 %2013
    %v2015 = vsel %vm1373, %v2003, -inf
    %2016 = vmax.xlane.f32.xlu0 %v2015
    %v2017 = vpop.xlane.xlu0 %2016
    %v2018 = vsub.f32 %v1992, %v2008
    %v2019 = vsub.f32 %v1995, %v2011
    %v2020 = vsub.f32 %v2000, %v2014
    %v2021 = vsub.f32 %v2003, %v2017
    %v2022 = vmul.f32 %v2018, 1.442695
    %v2023 = vpow.pop %v2022
    %v2024 = vmul.f32 %v2019, 1.442695
    %v2025 = vpow.pop %v2024
    %v2026 = vmul.f32 %v2020, 1.442695
    %v2027 = vpow.pop %v2026
    %v2028 = vmul.f32 %v2021, 1.442695
    %v2029 = vpow.pop %v2028
    %v2030 = vsel %vm1373, %v2023, 0.0
    %2031 = vadd.xlane.f32.xlu0 %v2030
    %v2032 = vpop.xlane.xlu0 %2031
    %v2033 = vsel %vm1373, %v2025, 0.0
    %2034 = vadd.xlane.f32.xlu0 %v2033
    %v2035 = vpop.xlane.xlu0 %2034
    %v2036 = vsel %vm1373, %v2027, 0.0
    %2037 = vadd.xlane.f32.xlu0 %v2036
    %v2038 = vpop.xlane.xlu0 %2037
    %v2039 = vsel %vm1373, %v2029, 0.0
    %2040 = vadd.xlane.f32.xlu0 %v2039
    %v2041 = vpop.xlane.xlu0 %2040
    %v2042 = vrcp.pop %v2032
    %v2043 = vrcp.pop %v2035
    %v2044 = vrcp.pop %v2038
    %v2045 = vrcp.pop %v2041
    %v2046 = vmul.f32 %v2023, %v2042
    %v2047 = vmul.f32 %v2025, %v2043
    %v2048 = vmul.f32 %v2027, %v2044
    %v2049 = vmul.f32 %v2029, %v2045
    %v2050 = vpack.c.bf16 %v2047, %v2046
    %v2051 = vpack.c.bf16 %v2049, %v2048
    %v2053 = vsel %vm206, %v760, 0
    %v2056 = vsel %vm206, %v761, 0
    %2058 = vmatprep.subr.bf16.mxu0 0
    %2059 = vmatpush1.bf16.xpose.msra.mxu0 %v470
    %2060 = vmatprep.subr.bf16.mxu0 0
    %2061 = vmatpush1.bf16.xpose.msra.mxu0 %v473
    %2062 = vmatprep.subr.bf16.mxu0 0
    %2063 = vmatpush1.bf16.xpose.msra.mxu0 0
    %2064 = vmatprep.subr.bf16.mxu0 0
    %2065 = vmatpush1.bf16.xpose.msra.mxu0 0
    %2066 = vmatprep.subr.bf16.mxu0 0
    %2067 = vmatpush1.bf16.xpose.msra.mxu0 0
    %2068 = vmatprep.subr.bf16.mxu0 0
    %2069 = vmatpush1.bf16.xpose.msra.mxu0 0
    %2070 = vmatprep.subr.bf16.mxu0 0
    %2071 = vmatpush1.bf16.xpose.msra.mxu0 0
    %2072 = vmatprep.subr.bf16.mxu0 0
    %2073 = vmatpush1.bf16.xpose.msra.mxu0 0
    %2074 = vmatprep.subr.bf16.mxu0 0
    %2075 = vmatpush1.bf16.xpose.msra.mxu0 0
    %2076 = vmatprep.subr.bf16.mxu0 0
    %2077 = vmatpush1.bf16.xpose.msra.mxu0 0
    %2078 = vmatprep.subr.bf16.mxu0 0
    %2079 = vmatpush1.bf16.xpose.msra.mxu0 0
    %2080 = vmatprep.subr.bf16.mxu0 0
    %2081 = vmatpush1.bf16.xpose.msra.mxu0 0
    %2082 = vmatprep.subr.bf16.mxu0 0
    %2083 = vmatpush1.bf16.xpose.msra.mxu0 0
    %2084 = vmatprep.subr.bf16.mxu0 0
    %2085 = vmatpush1.bf16.xpose.msra.mxu0 0
    %2086 = vmatprep.subr.bf16.mxu0 0
    %2087 = vmatpush1.bf16.xpose.msra.mxu0 0
    %2088 = vmatprep.subr.bf16.mxu0 0
    %2089 = vmatpush1.bf16.xpose.msra.mxu0 0
    %2090 = vmatprep.mubr.bf16.mxu0 0
    %2091 = vmatmul.mubr.bf16.gmra.mrb[0].mxu0 %v2053
    %v2092 = vpop.f32.mrb[0].mxu0
    %v2093 = vadd.f32 %v1316, %v2092
    %v2094 = vpop.f32.mrb[0].mxu0
    %v2095 = vpop.f32.mrb[0].mxu0
    %v2096 = vadd.f32 %v1316, %v2095
    %v2097 = vpop.f32.mrb[0].mxu0
    %2098 = vmatprep.mubr.bf16.mxu0 0
    %2099 = vmatmul.mubr.bf16.gmra.mrb[0].mxu0 %v2056
    %v2100 = vpop.f32.mrb[0].mxu0
    %v2101 = vadd.f32 %v1316, %v2100
    %v2102 = vpop.f32.mrb[0].mxu0
    %v2103 = vpop.f32.mrb[0].mxu0
    %v2104 = vadd.f32 %v1316, %v2103
    %v2105 = vpop.f32.mrb[0].mxu0
    %2106 = vdwg.mxu0
    %v2107 = vsel %vm1373, %v2093, -inf
    %2108 = vmax.xlane.f32.xlu0 %v2107
    %v2109 = vpop.xlane.xlu0 %2108
    %v2110 = vsel %vm1373, %v2096, -inf
    %2111 = vmax.xlane.f32.xlu0 %v2110
    %v2112 = vpop.xlane.xlu0 %2111
    %v2113 = vsel %vm1373, %v2101, -inf
    %2114 = vmax.xlane.f32.xlu0 %v2113
    %v2115 = vpop.xlane.xlu0 %2114
    %v2116 = vsel %vm1373, %v2104, -inf
    %2117 = vmax.xlane.f32.xlu0 %v2116
    %v2118 = vpop.xlane.xlu0 %2117
    %v2119 = vsub.f32 %v2093, %v2109
    %v2120 = vsub.f32 %v2096, %v2112
    %v2121 = vsub.f32 %v2101, %v2115
    %v2122 = vsub.f32 %v2104, %v2118
    %v2123 = vmul.f32 %v2119, 1.442695
    %v2124 = vpow.pop %v2123
    %v2125 = vmul.f32 %v2120, 1.442695
    %v2126 = vpow.pop %v2125
    %v2127 = vmul.f32 %v2121, 1.442695
    %v2128 = vpow.pop %v2127
    %v2129 = vmul.f32 %v2122, 1.442695
    %v2130 = vpow.pop %v2129
    %v2131 = vsel %vm1373, %v2124, 0.0
    %2132 = vadd.xlane.f32.xlu0 %v2131
    %v2133 = vpop.xlane.xlu0 %2132
    %v2134 = vsel %vm1373, %v2126, 0.0
    %2135 = vadd.xlane.f32.xlu0 %v2134
    %v2136 = vpop.xlane.xlu0 %2135
    %v2137 = vsel %vm1373, %v2128, 0.0
    %2138 = vadd.xlane.f32.xlu0 %v2137
    %v2139 = vpop.xlane.xlu0 %2138
    %v2140 = vsel %vm1373, %v2130, 0.0
    %2141 = vadd.xlane.f32.xlu0 %v2140
    %v2142 = vpop.xlane.xlu0 %2141
    %v2143 = vrcp.pop %v2133
    %v2144 = vrcp.pop %v2136
    %v2145 = vrcp.pop %v2139
    %v2146 = vrcp.pop %v2142
    %v2147 = vmul.f32 %v2124, %v2143
    %v2148 = vmul.f32 %v2126, %v2144
    %v2149 = vmul.f32 %v2128, %v2145
    %v2150 = vmul.f32 %v2130, %v2146
    %v2151 = vpack.c.bf16 %v2148, %v2147
    %v2152 = vpack.c.bf16 %v2150, %v2149
    %v2154 = vsel %vm1373, %v2151, 0
    %v2157 = vsel %vm1373, %v2152, 0
    %2159 = vmatprep.subr.bf16.mxu0 0
    %2160 = vmatpush1.bf16.msra.mxu0 %v870
    %2161 = vmatprep.subr.bf16.mxu0 0
    %2162 = vmatpush1.bf16.msra.mxu0 %v871
    %2163 = vmatprep.subr.bf16.mxu0 0
    %2164 = vmatpush1.bf16.msra.mxu0 0
    %2165 = vmatprep.subr.bf16.mxu0 0
    %2166 = vmatpush1.bf16.msra.mxu0 0
    %2167 = vmatprep.subr.bf16.mxu0 0
    %2168 = vmatpush1.bf16.msra.mxu0 0
    %2169 = vmatprep.subr.bf16.mxu0 0
    %2170 = vmatpush1.bf16.msra.mxu0 0
    %2171 = vmatprep.subr.bf16.mxu0 0
    %2172 = vmatpush1.bf16.msra.mxu0 0
    %2173 = vmatprep.subr.bf16.mxu0 0
    %2174 = vmatpush1.bf16.msra.mxu0 0
    %2175 = vmatprep.subr.bf16.mxu0 0
    %2176 = vmatpush1.bf16.msra.mxu0 0
    %2177 = vmatprep.subr.bf16.mxu0 0
    %2178 = vmatpush1.bf16.msra.mxu0 0
    %2179 = vmatprep.subr.bf16.mxu0 0
    %2180 = vmatpush1.bf16.msra.mxu0 0
    %2181 = vmatprep.subr.bf16.mxu0 0
    %2182 = vmatpush1.bf16.msra.mxu0 0
    %2183 = vmatprep.subr.bf16.mxu0 0
    %2184 = vmatpush1.bf16.msra.mxu0 0
    %2185 = vmatprep.subr.bf16.mxu0 0
    %2186 = vmatpush1.bf16.msra.mxu0 0
    %2187 = vmatprep.subr.bf16.mxu0 0
    %2188 = vmatpush1.bf16.msra.mxu0 0
    %2189 = vmatprep.subr.bf16.mxu0 0
    %2190 = vmatpush1.bf16.msra.mxu0 0
    %2191 = vmatprep.mubr.bf16.mxu0 0
    %2192 = vmatmul.mubr.bf16.gmra.mrb[0].mxu0 %v2154
    %v2193 = vpop.f32.mrb[0].mxu0
    %v2194 = vadd.f32 0.0, %v2193
    %v2195 = vpop.f32.mrb[0].mxu0
    %v2196 = vpop.f32.mrb[0].mxu0
    %v2197 = vadd.f32 0.0, %v2196
    %v2198 = vpop.f32.mrb[0].mxu0
    %2199 = vmatprep.mubr.bf16.mxu0 0
    %2200 = vmatmul.mubr.bf16.gmra.mrb[0].mxu0 %v2157
    %v2201 = vpop.f32.mrb[0].mxu0
    %v2202 = vadd.f32 0.0, %v2201
    %v2203 = vpop.f32.mrb[0].mxu0
    %v2204 = vpop.f32.mrb[0].mxu0
    %v2205 = vadd.f32 0.0, %v2204
    %v2206 = vpop.f32.mrb[0].mxu0
    %2207 = vdwg.mxu0
    %v2209 = vsel %vm1373, %v2050, 0
    %v2212 = vsel %vm1373, %v2051, 0
    %2214 = vmatprep.subr.bf16.mxu0 0
    %2215 = vmatpush1.bf16.msra.mxu0 %v650
    %2216 = vmatprep.subr.bf16.mxu0 0
    %2217 = vmatpush1.bf16.msra.mxu0 %v651
    %2218 = vmatprep.subr.bf16.mxu0 0
    %2219 = vmatpush1.bf16.msra.mxu0 0
    %2220 = vmatprep.subr.bf16.mxu0 0
    %2221 = vmatpush1.bf16.msra.mxu0 0
    %2222 = vmatprep.subr.bf16.mxu0 0
    %2223 = vmatpush1.bf16.msra.mxu0 0
    %2224 = vmatprep.subr.bf16.mxu0 0
    %2225 = vmatpush1.bf16.msra.mxu0 0
    %2226 = vmatprep.subr.bf16.mxu0 0
    %2227 = vmatpush1.bf16.msra.mxu0 0
    %2228 = vmatprep.subr.bf16.mxu0 0
    %2229 = vmatpush1.bf16.msra.mxu0 0
    %2230 = vmatprep.subr.bf16.mxu0 0
    %2231 = vmatpush1.bf16.msra.mxu0 0
    %2232 = vmatprep.subr.bf16.mxu0 0
    %2233 = vmatpush1.bf16.msra.mxu0 0
    %2234 = vmatprep.subr.bf16.mxu0 0
    %2235 = vmatpush1.bf16.msra.mxu0 0
    %2236 = vmatprep.subr.bf16.mxu0 0
    %2237 = vmatpush1.bf16.msra.mxu0 0
    %2238 = vmatprep.subr.bf16.mxu0 0
    %2239 = vmatpush1.bf16.msra.mxu0 0
    %2240 = vmatprep.subr.bf16.mxu0 0
    %2241 = vmatpush1.bf16.msra.mxu0 0
    %2242 = vmatprep.subr.bf16.mxu0 0
    %2243 = vmatpush1.bf16.msra.mxu0 0
    %2244 = vmatprep.subr.bf16.mxu0 0
    %2245 = vmatpush1.bf16.msra.mxu0 0
    %2246 = vmatprep.mubr.bf16.mxu0 0
    %2247 = vmatmul.mubr.bf16.gmra.mrb[0].mxu0 %v2209
    %v2248 = vpop.f32.mrb[0].mxu0
    %v2249 = vadd.f32 %v2194, %v2248
    %v2250 = vpop.f32.mrb[0].mxu0
    %v2251 = vpop.f32.mrb[0].mxu0
    %v2252 = vadd.f32 %v2197, %v2251
    %v2253 = vpop.f32.mrb[0].mxu0
    %2254 = vmatprep.mubr.bf16.mxu0 0
    %2255 = vmatmul.mubr.bf16.gmra.mrb[0].mxu0 %v2212
    %v2256 = vpop.f32.mrb[0].mxu0
    %v2257 = vadd.f32 %v2202, %v2256
    %v2258 = vpop.f32.mrb[0].mxu0
    %v2259 = vpop.f32.mrb[0].mxu0
    %v2260 = vadd.f32 %v2205, %v2259
    %v2261 = vpop.f32.mrb[0].mxu0
    %2262 = vdwg.mxu0
    %v2264 = vsel %vm206, %v980, 0
    %v2267 = vsel %vm206, %v981, 0
    %2269 = vmatprep.subr.bf16.mxu0 0
    %2270 = vmatpush1.bf16.xpose.msra.mxu0 %v470
    %2271 = vmatprep.subr.bf16.mxu0 0
    %2272 = vmatpush1.bf16.xpose.msra.mxu0 %v473
    %2273 = vmatprep.subr.bf16.mxu0 0
    %2274 = vmatpush1.bf16.xpose.msra.mxu0 0
    %2275 = vmatprep.subr.bf16.mxu0 0
    %2276 = vmatpush1.bf16.xpose.msra.mxu0 0
    %2277 = vmatprep.subr.bf16.mxu0 0
    %2278 = vmatpush1.bf16.xpose.msra.mxu0 0
    %2279 = vmatprep.subr.bf16.mxu0 0
    %2280 = vmatpush1.bf16.xpose.msra.mxu0 0
    %2281 = vmatprep.subr.bf16.mxu0 0
    %2282 = vmatpush1.bf16.xpose.msra.mxu0 0
    %2283 = vmatprep.subr.bf16.mxu0 0
    %2284 = vmatpush1.bf16.xpose.msra.mxu0 0
    %2285 = vmatprep.subr.bf16.mxu0 0
    %2286 = vmatpush1.bf16.xpose.msra.mxu0 0
    %2287 = vmatprep.subr.bf16.mxu0 0
    %2288 = vmatpush1.bf16.xpose.msra.mxu0 0
    %2289 = vmatprep.subr.bf16.mxu0 0
    %2290 = vmatpush1.bf16.xpose.msra.mxu0 0
    %2291 = vmatprep.subr.bf16.mxu0 0
    %2292 = vmatpush1.bf16.xpose.msra.mxu0 0
    %2293 = vmatprep.subr.bf16.mxu0 0
    %2294 = vmatpush1.bf16.xpose.msra.mxu0 0
    %2295 = vmatprep.subr.bf16.mxu0 0
    %2296 = vmatpush1.bf16.xpose.msra.mxu0 0
    %2297 = vmatprep.subr.bf16.mxu0 0
    %2298 = vmatpush1.bf16.xpose.msra.mxu0 0
    %2299 = vmatprep.subr.bf16.mxu0 0
    %2300 = vmatpush1.bf16.xpose.msra.mxu0 0
    %2301 = vmatprep.mubr.bf16.mxu0 0
    %2302 = vmatmul.mubr.bf16.gmra.mrb[0].mxu0 %v2264
    %v2303 = vpop.f32.mrb[0].mxu0
    %v2304 = vadd.f32 %v1316, %v2303
    %v2305 = vpop.f32.mrb[0].mxu0
    %v2306 = vpop.f32.mrb[0].mxu0
    %v2307 = vadd.f32 %v1316, %v2306
    %v2308 = vpop.f32.mrb[0].mxu0
    %2309 = vmatprep.mubr.bf16.mxu0 0
    %2310 = vmatmul.mubr.bf16.gmra.mrb[0].mxu0 %v2267
    %v2311 = vpop.f32.mrb[0].mxu0
    %v2312 = vadd.f32 %v1316, %v2311
    %v2313 = vpop.f32.mrb[0].mxu0
    %v2314 = vpop.f32.mrb[0].mxu0
    %v2315 = vadd.f32 %v1316, %v2314
    %v2316 = vpop.f32.mrb[0].mxu0
    %2317 = vdwg.mxu0
    %v2318 = vsel %vm1373, %v2304, -inf
    %2319 = vmax.xlane.f32.xlu0 %v2318
    %v2320 = vpop.xlane.xlu0 %2319
    %v2321 = vsel %vm1373, %v2307, -inf
    %2322 = vmax.xlane.f32.xlu0 %v2321
    %v2323 = vpop.xlane.xlu0 %2322
    %v2324 = vsel %vm1373, %v2312, -inf
    %2325 = vmax.xlane.f32.xlu0 %v2324
    %v2326 = vpop.xlane.xlu0 %2325
    %v2327 = vsel %vm1373, %v2315, -inf
    %2328 = vmax.xlane.f32.xlu0 %v2327
    %v2329 = vpop.xlane.xlu0 %2328
    %v2330 = vsub.f32 %v2304, %v2320
    %v2331 = vsub.f32 %v2307, %v2323
    %v2332 = vsub.f32 %v2312, %v2326
    %v2333 = vsub.f32 %v2315, %v2329
    %v2334 = vmul.f32 %v2330, 1.442695
    %v2335 = vpow.pop %v2334
    %v2336 = vmul.f32 %v2331, 1.442695
    %v2337 = vpow.pop %v2336
    %v2338 = vmul.f32 %v2332, 1.442695
    %v2339 = vpow.pop %v2338
    %v2340 = vmul.f32 %v2333, 1.442695
    %v2341 = vpow.pop %v2340
    %v2342 = vsel %vm1373, %v2335, 0.0
    %2343 = vadd.xlane.f32.xlu0 %v2342
    %v2344 = vpop.xlane.xlu0 %2343
    %v2345 = vsel %vm1373, %v2337, 0.0
    %2346 = vadd.xlane.f32.xlu0 %v2345
    %v2347 = vpop.xlane.xlu0 %2346
    %v2348 = vsel %vm1373, %v2339, 0.0
    %2349 = vadd.xlane.f32.xlu0 %v2348
    %v2350 = vpop.xlane.xlu0 %2349
    %v2351 = vsel %vm1373, %v2341, 0.0
    %2352 = vadd.xlane.f32.xlu0 %v2351
    %v2353 = vpop.xlane.xlu0 %2352
    %v2354 = vrcp.pop %v2344
    %v2355 = vrcp.pop %v2347
    %v2356 = vrcp.pop %v2350
    %v2357 = vrcp.pop %v2353
    %v2358 = vmul.f32 %v2335, %v2354
    %v2359 = vmul.f32 %v2337, %v2355
    %v2360 = vmul.f32 %v2339, %v2356
    %v2361 = vmul.f32 %v2341, %v2357
    %v2362 = vpack.c.bf16 %v2359, %v2358
    %v2363 = vpack.c.bf16 %v2361, %v2360
    %v2365 = vsel %vm1373, %v2362, 0
    %v2368 = vsel %vm1373, %v2363, 0
    %2370 = vmatprep.subr.bf16.mxu0 0
    %2371 = vmatpush1.bf16.msra.mxu0 %v1090
    %2372 = vmatprep.subr.bf16.mxu0 0
    %2373 = vmatpush1.bf16.msra.mxu0 %v1091
    %2374 = vmatprep.subr.bf16.mxu0 0
    %2375 = vmatpush1.bf16.msra.mxu0 0
    %2376 = vmatprep.subr.bf16.mxu0 0
    %2377 = vmatpush1.bf16.msra.mxu0 0
    %2378 = vmatprep.subr.bf16.mxu0 0
    %2379 = vmatpush1.bf16.msra.mxu0 0
    %2380 = vmatprep.subr.bf16.mxu0 0
    %2381 = vmatpush1.bf16.msra.mxu0 0
    %2382 = vmatprep.subr.bf16.mxu0 0
    %2383 = vmatpush1.bf16.msra.mxu0 0
    %2384 = vmatprep.subr.bf16.mxu0 0
    %2385 = vmatpush1.bf16.msra.mxu0 0
    %2386 = vmatprep.subr.bf16.mxu0 0
    %2387 = vmatpush1.bf16.msra.mxu0 0
    %2388 = vmatprep.subr.bf16.mxu0 0
    %2389 = vmatpush1.bf16.msra.mxu0 0
    %2390 = vmatprep.subr.bf16.mxu0 0
    %2391 = vmatpush1.bf16.msra.mxu0 0
    %2392 = vmatprep.subr.bf16.mxu0 0
    %2393 = vmatpush1.bf16.msra.mxu0 0
    %2394 = vmatprep.subr.bf16.mxu0 0
    %2395 = vmatpush1.bf16.msra.mxu0 0
    %2396 = vmatprep.subr.bf16.mxu0 0
    %2397 = vmatpush1.bf16.msra.mxu0 0
    %2398 = vmatprep.subr.bf16.mxu0 0
    %2399 = vmatpush1.bf16.msra.mxu0 0
    %2400 = vmatprep.subr.bf16.mxu0 0
    %2401 = vmatpush1.bf16.msra.mxu0 0
    %2402 = vmatprep.mubr.bf16.mxu0 0
    %2403 = vmatmul.mubr.bf16.gmra.mrb[0].mxu0 %v2365
    %v2404 = vpop.f32.mrb[0].mxu0
    %v2405 = vadd.f32 0.0, %v2404
    %v2406 = vpop.f32.mrb[0].mxu0
    %v2407 = vpop.f32.mrb[0].mxu0
    %v2408 = vadd.f32 0.0, %v2407
    %v2409 = vpop.f32.mrb[0].mxu0
    %2410 = vmatprep.mubr.bf16.mxu0 0
    %2411 = vmatmul.mubr.bf16.gmra.mrb[0].mxu0 %v2368
    %v2412 = vpop.f32.mrb[0].mxu0
    %v2413 = vadd.f32 0.0, %v2412
    %v2414 = vpop.f32.mrb[0].mxu0
    %v2415 = vpop.f32.mrb[0].mxu0
    %v2416 = vadd.f32 0.0, %v2415
    %v2417 = vpop.f32.mrb[0].mxu0
    %2418 = vdwg.mxu0
    %v2419 = vadd.f32 %v2249, %v2405
    %v2420 = vadd.f32 %v2252, %v2408
    %v2421 = vadd.f32 %v2257, %v2413
    %v2422 = vadd.f32 %v2260, %v2416
    %v2424 = vsel %vm206, %v1200, 0
    %v2427 = vsel %vm206, %v1201, 0
    %2429 = vmatprep.subr.bf16.mxu0 0
    %2430 = vmatpush1.bf16.xpose.msra.mxu0 %v470
    %2431 = vmatprep.subr.bf16.mxu0 0
    %2432 = vmatpush1.bf16.xpose.msra.mxu0 %v473
    %2433 = vmatprep.subr.bf16.mxu0 0
    %2434 = vmatpush1.bf16.xpose.msra.mxu0 0
    %2435 = vmatprep.subr.bf16.mxu0 0
    %2436 = vmatpush1.bf16.xpose.msra.mxu0 0
    %2437 = vmatprep.subr.bf16.mxu0 0
    %2438 = vmatpush1.bf16.xpose.msra.mxu0 0
    %2439 = vmatprep.subr.bf16.mxu0 0
    %2440 = vmatpush1.bf16.xpose.msra.mxu0 0
    %2441 = vmatprep.subr.bf16.mxu0 0
    %2442 = vmatpush1.bf16.xpose.msra.mxu0 0
    %2443 = vmatprep.subr.bf16.mxu0 0
    %2444 = vmatpush1.bf16.xpose.msra.mxu0 0
    %2445 = vmatprep.subr.bf16.mxu0 0
    %2446 = vmatpush1.bf16.xpose.msra.mxu0 0
    %2447 = vmatprep.subr.bf16.mxu0 0
    %2448 = vmatpush1.bf16.xpose.msra.mxu0 0
    %2449 = vmatprep.subr.bf16.mxu0 0
    %2450 = vmatpush1.bf16.xpose.msra.mxu0 0
    %2451 = vmatprep.subr.bf16.mxu0 0
    %2452 = vmatpush1.bf16.xpose.msra.mxu0 0
    %2453 = vmatprep.subr.bf16.mxu0 0
    %2454 = vmatpush1.bf16.xpose.msra.mxu0 0
    %2455 = vmatprep.subr.bf16.mxu0 0
    %2456 = vmatpush1.bf16.xpose.msra.mxu0 0
    %2457 = vmatprep.subr.bf16.mxu0 0
    %2458 = vmatpush1.bf16.xpose.msra.mxu0 0
    %2459 = vmatprep.subr.bf16.mxu0 0
    %2460 = vmatpush1.bf16.xpose.msra.mxu0 0
    %2461 = vmatprep.mubr.bf16.mxu0 0
    %2462 = vmatmul.mubr.bf16.gmra.mrb[0].mxu0 %v2424
    %v2463 = vpop.f32.mrb[0].mxu0
    %v2464 = vadd.f32 %v1316, %v2463
    %v2465 = vpop.f32.mrb[0].mxu0
    %v2466 = vpop.f32.mrb[0].mxu0
    %v2467 = vadd.f32 %v1316, %v2466
    %v2468 = vpop.f32.mrb[0].mxu0
    %2469 = vmatprep.mubr.bf16.mxu0 0
    %2470 = vmatmul.mubr.bf16.gmra.mrb[0].mxu0 %v2427
    %v2471 = vpop.f32.mrb[0].mxu0
    %v2472 = vadd.f32 %v1316, %v2471
    %v2473 = vpop.f32.mrb[0].mxu0
    %v2474 = vpop.f32.mrb[0].mxu0
    %v2475 = vadd.f32 %v1316, %v2474
    %v2476 = vpop.f32.mrb[0].mxu0
    %2477 = vdwg.mxu0
    %v2478 = vsel %vm1373, %v2464, -inf
    %2479 = vmax.xlane.f32.xlu0 %v2478
    %v2480 = vpop.xlane.xlu0 %2479
    %v2481 = vsel %vm1373, %v2467, -inf
    %2482 = vmax.xlane.f32.xlu0 %v2481
    %v2483 = vpop.xlane.xlu0 %2482
    %v2484 = vsel %vm1373, %v2472, -inf
    %2485 = vmax.xlane.f32.xlu0 %v2484
    %v2486 = vpop.xlane.xlu0 %2485
    %v2487 = vsel %vm1373, %v2475, -inf
    %2488 = vmax.xlane.f32.xlu0 %v2487
    %v2489 = vpop.xlane.xlu0 %2488
    %v2490 = vsub.f32 %v2464, %v2480
    %v2491 = vsub.f32 %v2467, %v2483
    %v2492 = vsub.f32 %v2472, %v2486
    %v2493 = vsub.f32 %v2475, %v2489
    %v2494 = vmul.f32 %v2490, 1.442695
    %v2495 = vpow.pop %v2494
    %v2496 = vmul.f32 %v2491, 1.442695
    %v2497 = vpow.pop %v2496
    %v2498 = vmul.f32 %v2492, 1.442695
    %v2499 = vpow.pop %v2498
    %v2500 = vmul.f32 %v2493, 1.442695
    %v2501 = vpow.pop %v2500
    %v2502 = vsel %vm1373, %v2495, 0.0
    %2503 = vadd.xlane.f32.xlu0 %v2502
    %v2504 = vpop.xlane.xlu0 %2503
    %v2505 = vsel %vm1373, %v2497, 0.0
    %2506 = vadd.xlane.f32.xlu0 %v2505
    %v2507 = vpop.xlane.xlu0 %2506
    %v2508 = vsel %vm1373, %v2499, 0.0
    %2509 = vadd.xlane.f32.xlu0 %v2508
    %v2510 = vpop.xlane.xlu0 %2509
    %v2511 = vsel %vm1373, %v2501, 0.0
    %2512 = vadd.xlane.f32.xlu0 %v2511
    %v2513 = vpop.xlane.xlu0 %2512
    %v2514 = vrcp.pop %v2504
    %v2515 = vrcp.pop %v2507
    %v2516 = vrcp.pop %v2510
    %v2517 = vrcp.pop %v2513
    %v2518 = vmul.f32 %v2495, %v2514
    %v2519 = vmul.f32 %v2497, %v2515
    %v2520 = vmul.f32 %v2499, %v2516
    %v2521 = vmul.f32 %v2501, %v2517
    %v2522 = vpack.c.bf16 %v2519, %v2518
    %v2523 = vpack.c.bf16 %v2521, %v2520
    %v2525 = vsel %vm1373, %v2522, 0
    %v2528 = vsel %vm1373, %v2523, 0
    %2530 = vmatprep.subr.bf16.mxu0 0
    %2531 = vmatpush1.bf16.msra.mxu0 %v1310
    %2532 = vmatprep.subr.bf16.mxu0 0
    %2533 = vmatpush1.bf16.msra.mxu0 %v1311
    %2534 = vmatprep.subr.bf16.mxu0 0
    %2535 = vmatpush1.bf16.msra.mxu0 0
    %2536 = vmatprep.subr.bf16.mxu0 0
    %2537 = vmatpush1.bf16.msra.mxu0 0
    %2538 = vmatprep.subr.bf16.mxu0 0
    %2539 = vmatpush1.bf16.msra.mxu0 0
    %2540 = vmatprep.subr.bf16.mxu0 0
    %2541 = vmatpush1.bf16.msra.mxu0 0
    %2542 = vmatprep.subr.bf16.mxu0 0
    %2543 = vmatpush1.bf16.msra.mxu0 0
    %2544 = vmatprep.subr.bf16.mxu0 0
    %2545 = vmatpush1.bf16.msra.mxu0 0
    %2546 = vmatprep.subr.bf16.mxu0 0
    %2547 = vmatpush1.bf16.msra.mxu0 0
    %2548 = vmatprep.subr.bf16.mxu0 0
    %2549 = vmatpush1.bf16.msra.mxu0 0
    %2550 = vmatprep.subr.bf16.mxu0 0
    %2551 = vmatpush1.bf16.msra.mxu0 0
    %2552 = vmatprep.subr.bf16.mxu0 0
    %2553 = vmatpush1.bf16.msra.mxu0 0
    %2554 = vmatprep.subr.bf16.mxu0 0
    %2555 = vmatpush1.bf16.msra.mxu0 0
    %2556 = vmatprep.subr.bf16.mxu0 0
    %2557 = vmatpush1.bf16.msra.mxu0 0
    %2558 = vmatprep.subr.bf16.mxu0 0
    %2559 = vmatpush1.bf16.msra.mxu0 0
    %2560 = vmatprep.subr.bf16.mxu0 0
    %2561 = vmatpush1.bf16.msra.mxu0 0
    %2562 = vmatprep.mubr.bf16.mxu0 0
    %2563 = vmatmul.mubr.bf16.gmra.mrb[0].mxu0 %v2525
    %v2564 = vpop.f32.mrb[0].mxu0
    %v2565 = vadd.f32 0.0, %v2564
    %v2566 = vpop.f32.mrb[0].mxu0
    %v2567 = vpop.f32.mrb[0].mxu0
    %v2568 = vadd.f32 0.0, %v2567
    %v2569 = vpop.f32.mrb[0].mxu0
    %2570 = vmatprep.mubr.bf16.mxu0 0
    %2571 = vmatmul.mubr.bf16.gmra.mrb[0].mxu0 %v2528
    %v2572 = vpop.f32.mrb[0].mxu0
    %v2573 = vadd.f32 0.0, %v2572
    %v2574 = vpop.f32.mrb[0].mxu0
    %v2575 = vpop.f32.mrb[0].mxu0
    %v2576 = vadd.f32 0.0, %v2575
    %v2577 = vpop.f32.mrb[0].mxu0
    %2578 = vdwg.mxu0
    %v2579 = vadd.f32 %v2419, %v2565
    %v2580 = vadd.f32 %v2420, %v2568
    %v2581 = vadd.f32 %v2421, %v2573
    %v2582 = vadd.f32 %v2422, %v2576
    %v2583 = vadd.f32 %v254, %v1947
    %v2584 = vadd.f32 %v257, %v1948
    %v2585 = vadd.f32 %v262, %v1949
    %v2586 = vadd.f32 %v265, %v1950
    %v2587 = vadd.f32 %v270, %v2579
    %v2588 = vadd.f32 %v273, %v2580
    %v2589 = vadd.f32 %v278, %v2581
    %v2590 = vadd.f32 %v281, %v2582
    %v2591 = vld [vmem:[%s10] sm:$0x1]
    %v2593 = vlaneseq
    %v2594 = vshrl.u32 %v2593, 7
    %v2595 = vsub.s32 0, %v2594
    %v2596 = vrot.slane %v2591, %v2595
    %v2598 = vadd.f32 %v2583, %v2596
    %v2599 = vadd.f32 %v2584, %v2596
    %v2600 = vadd.f32 %v2585, %v2596
    %v2601 = vadd.f32 %v2586, %v2596
    %v2602 = vadd.f32 %v2587, %v2596
    %v2603 = vadd.f32 %v2588, %v2596
    %v2604 = vadd.f32 %v2589, %v2596
    %v2605 = vadd.f32 %v2590, %v2596
    %v2606 = vsel %vm206, %v2598, 0.0
    %2607 = vadd.xlane.f32.xlu0 %v2606
    %v2608 = vpop.xlane.xlu0 %2607
    %v2609 = vsel %vm206, %v2599, 0.0
    %2610 = vadd.xlane.f32.xlu0 %v2609
    %v2611 = vpop.xlane.xlu0 %2610
    %v2612 = vsel %vm206, %v2600, 0.0
    %2613 = vadd.xlane.f32.xlu0 %v2612
    %v2614 = vpop.xlane.xlu0 %2613
    %v2615 = vsel %vm206, %v2601, 0.0
    %2616 = vadd.xlane.f32.xlu0 %v2615
    %v2617 = vpop.xlane.xlu0 %2616
    %v2618 = vsel %vm206, %v2602, 0.0
    %2619 = vadd.xlane.f32.xlu0 %v2618
    %v2620 = vpop.xlane.xlu0 %2619
    %v2621 = vsel %vm206, %v2603, 0.0
    %2622 = vadd.xlane.f32.xlu0 %v2621
    %v2623 = vpop.xlane.xlu0 %2622
    %v2624 = vsel %vm206, %v2604, 0.0
    %2625 = vadd.xlane.f32.xlu0 %v2624
    %v2626 = vpop.xlane.xlu0 %2625
    %v2627 = vsel %vm206, %v2605, 0.0
    %2628 = vadd.xlane.f32.xlu0 %v2627
    %v2629 = vpop.xlane.xlu0 %2628
    %v2630 = vmul.f32 %v2608, %v311
    %v2631 = vmul.f32 %v2611, %v311
    %v2632 = vmul.f32 %v2614, %v311
    %v2633 = vmul.f32 %v2617, %v311
    %v2634 = vmul.f32 %v2620, %v311
    %v2635 = vmul.f32 %v2623, %v311
    %v2636 = vmul.f32 %v2626, %v311
    %v2637 = vmul.f32 %v2629, %v311
    %v2638 = vsub.f32 %v2598, %v2630
    %v2639 = vsub.f32 %v2599, %v2631
    %v2640 = vsub.f32 %v2600, %v2632
    %v2641 = vsub.f32 %v2601, %v2633
    %v2642 = vsub.f32 %v2602, %v2634
    %v2643 = vsub.f32 %v2603, %v2635
    %v2644 = vsub.f32 %v2604, %v2636
    %v2645 = vsub.f32 %v2605, %v2637
    %v2646 = vmul.f32 %v2638, %v2638
    %v2647 = vmul.f32 %v2639, %v2639
    %v2648 = vmul.f32 %v2640, %v2640
    %v2649 = vmul.f32 %v2641, %v2641
    %v2650 = vmul.f32 %v2642, %v2642
    %v2651 = vmul.f32 %v2643, %v2643
    %v2652 = vmul.f32 %v2644, %v2644
    %v2653 = vmul.f32 %v2645, %v2645
    %v2654 = vsel %vm206, %v2646, 0.0
    %2655 = vadd.xlane.f32.xlu0 %v2654
    %v2656 = vpop.xlane.xlu0 %2655
    %v2657 = vsel %vm206, %v2647, 0.0
    %2658 = vadd.xlane.f32.xlu0 %v2657
    %v2659 = vpop.xlane.xlu0 %2658
    %v2660 = vsel %vm206, %v2648, 0.0
    %2661 = vadd.xlane.f32.xlu0 %v2660
    %v2662 = vpop.xlane.xlu0 %2661
    %v2663 = vsel %vm206, %v2649, 0.0
    %2664 = vadd.xlane.f32.xlu0 %v2663
    %v2665 = vpop.xlane.xlu0 %2664
    %v2666 = vsel %vm206, %v2650, 0.0
    %2667 = vadd.xlane.f32.xlu0 %v2666
    %v2668 = vpop.xlane.xlu0 %2667
    %v2669 = vsel %vm206, %v2651, 0.0
    %2670 = vadd.xlane.f32.xlu0 %v2669
    %v2671 = vpop.xlane.xlu0 %2670
    %v2672 = vsel %vm206, %v2652, 0.0
    %2673 = vadd.xlane.f32.xlu0 %v2672
    %v2674 = vpop.xlane.xlu0 %2673
    %v2675 = vsel %vm206, %v2653, 0.0
    %2676 = vadd.xlane.f32.xlu0 %v2675
    %v2677 = vpop.xlane.xlu0 %2676
    %v2678 = vmul.f32 %v2656, %v311
    %v2679 = vmul.f32 %v2659, %v311
    %v2680 = vmul.f32 %v2662, %v311
    %v2681 = vmul.f32 %v2665, %v311
    %v2682 = vmul.f32 %v2668, %v311
    %v2683 = vmul.f32 %v2671, %v311
    %v2684 = vmul.f32 %v2674, %v311
    %v2685 = vmul.f32 %v2677, %v311
    %v2686 = vadd.f32 %v2678, 1e-06
    %v2687 = vadd.f32 %v2679, 1e-06
    %v2688 = vadd.f32 %v2680, 1e-06
    %v2689 = vadd.f32 %v2681, 1e-06
    %v2690 = vadd.f32 %v2682, 1e-06
    %v2691 = vadd.f32 %v2683, 1e-06
    %v2692 = vadd.f32 %v2684, 1e-06
    %v2693 = vadd.f32 %v2685, 1e-06
    %v2694 = vrsqrt.pop %v2686
    %v2695 = vrsqrt.pop %v2687
    %v2696 = vrsqrt.pop %v2688
    %v2697 = vrsqrt.pop %v2689
    %v2698 = vrsqrt.pop %v2690
    %v2699 = vrsqrt.pop %v2691
    %v2700 = vrsqrt.pop %v2692
    %v2701 = vrsqrt.pop %v2693
    %v2702 = vmul.f32 %v2638, %v2694
    %v2703 = vmul.f32 %v2639, %v2695
    %v2704 = vmul.f32 %v2640, %v2696
    %v2705 = vmul.f32 %v2641, %v2697
    %v2706 = vmul.f32 %v2642, %v2698
    %v2707 = vmul.f32 %v2643, %v2699
    %v2708 = vmul.f32 %v2644, %v2700
    %v2709 = vmul.f32 %v2645, %v2701
    %v2710 = vpack.c.bf16 %v2703, %v2702
    %v2711 = vpack.c.bf16 %v2705, %v2704
    %v2712 = vpack.c.bf16 %v2707, %v2706
    %v2713 = vpack.c.bf16 %v2709, %v2708
    %v2714 = vld [vmem:[%s11] sm:$0xff]
    %v2715 = vld [vmem:[%s11 + $0x8] sm:$0xff]
    %v2716 = vld [vmem:[%s11 + $0x10] sm:$0xff]
    %v2717 = vld [vmem:[%s11 + $0x18] sm:$0xff]
    %v2718 = vld [vmem:[%s11 + $0x20] sm:$0xff]
    %v2719 = vld [vmem:[%s11 + $0x28] sm:$0xff]
    %v2720 = vld [vmem:[%s11 + $0x30] sm:$0xff]
    %v2721 = vld [vmem:[%s11 + $0x38] sm:$0xff]
    %v2722 = vld [vmem:[%s12] sm:$0x3]
    %v2724 = vlaneseq
    %v2725 = vshrl.u32 %v2724, 7
    %v2726 = vsub.s32 0, %v2725
    %v2727 = vrot.slane %v2722, %v2726
    %v2728 = vlaneseq
    %v2729 = vshrl.u32 %v2728, 7
    %v2730 = vsub.s32 1, %v2729
    %v2731 = vrot.slane %v2722, %v2730
    %v2742 = vunpack.c.l.b16 %v2714
    %v2743 = vunpack.c.h.b16 %v2714
    %v2744 = vunpack.c.l.b16 %v2715
    %v2745 = vunpack.c.h.b16 %v2715
    %v2746 = vunpack.c.l.b16 %v2716
    %v2747 = vunpack.c.h.b16 %v2716
    %v2748 = vunpack.c.l.b16 %v2717
    %v2749 = vunpack.c.h.b16 %v2717
    %v2750 = vunpack.c.l.b16 %v2718
    %v2751 = vunpack.c.h.b16 %v2718
    %v2752 = vunpack.c.l.b16 %v2719
    %v2753 = vunpack.c.h.b16 %v2719
    %v2754 = vunpack.c.l.b16 %v2720
    %v2755 = vunpack.c.h.b16 %v2720
    %v2756 = vunpack.c.l.b16 %v2721
    %v2757 = vunpack.c.h.b16 %v2721
    %v2758 = vpack.c.b16 %v2744, %v2742
    %v2759 = vpack.c.b16 %v2745, %v2743
    %v2760 = vpack.c.b16 %v2748, %v2746
    %v2761 = vpack.c.b16 %v2749, %v2747
    %v2762 = vpack.c.b16 %v2752, %v2750
    %v2763 = vpack.c.b16 %v2753, %v2751
    %v2764 = vpack.c.b16 %v2756, %v2754
    %v2765 = vpack.c.b16 %v2757, %v2755
    %v2775 = vsel %vm206, %v2710, 0
    %v2778 = vsel %vm206, %v2711, 0
    %v2781 = vsel %vm206, %v2712, 0
    %v2784 = vsel %vm206, %v2713, 0
    %2786 = vmatprep.subr.bf16.mxu0 %v2759
    %2787 = vmatpush1.bf16.msra.mxu0 %v2758
    %2788 = vmatprep.subr.bf16.mxu0 %v2761
    %2789 = vmatpush1.bf16.msra.mxu0 %v2760
    %2790 = vmatprep.subr.bf16.mxu0 %v2763
    %2791 = vmatpush1.bf16.msra.mxu0 %v2762
    %2792 = vmatprep.subr.bf16.mxu0 %v2765
    %2793 = vmatpush1.bf16.msra.mxu0 %v2764
    %2794 = vmatprep.subr.bf16.mxu0 0
    %2795 = vmatpush1.bf16.msra.mxu0 0
    %2796 = vmatprep.subr.bf16.mxu0 0
    %2797 = vmatpush1.bf16.msra.mxu0 0
    %2798 = vmatprep.subr.bf16.mxu0 0
    %2799 = vmatpush1.bf16.msra.mxu0 0
    %2800 = vmatprep.subr.bf16.mxu0 0
    %2801 = vmatpush1.bf16.msra.mxu0 0
    %2802 = vmatprep.subr.bf16.mxu0 0
    %2803 = vmatpush1.bf16.msra.mxu0 0
    %2804 = vmatprep.subr.bf16.mxu0 0
    %2805 = vmatpush1.bf16.msra.mxu0 0
    %2806 = vmatprep.subr.bf16.mxu0 0
    %2807 = vmatpush1.bf16.msra.mxu0 0
    %2808 = vmatprep.subr.bf16.mxu0 0
    %2809 = vmatpush1.bf16.msra.mxu0 0
    %2810 = vmatprep.subr.bf16.mxu0 0
    %2811 = vmatpush1.bf16.msra.mxu0 0
    %2812 = vmatprep.subr.bf16.mxu0 0
    %2813 = vmatpush1.bf16.msra.mxu0 0
    %2814 = vmatprep.subr.bf16.mxu0 0
    %2815 = vmatpush1.bf16.msra.mxu0 0
    %2816 = vmatprep.subr.bf16.mxu0 0
    %2817 = vmatpush1.bf16.msra.mxu0 0
    %2818 = vmatprep.mubr.bf16.mxu0 0
    %2819 = vmatmul.mubr.bf16.gmra.mrb[0].mxu0 %v2775
    %v2820 = vpop.f32.mrb[0].mxu0
    %v2821 = vadd.f32 %v2727, %v2820
    %v2822 = vpop.f32.mrb[0].mxu0
    %v2823 = vadd.f32 %v2731, %v2822
    %v2824 = vpop.f32.mrb[0].mxu0
    %v2825 = vadd.f32 %v2727, %v2824
    %v2826 = vpop.f32.mrb[0].mxu0
    %v2827 = vadd.f32 %v2731, %v2826
    %2828 = vmatprep.mubr.bf16.mxu0 0
    %2829 = vmatmul.mubr.bf16.gmra.mrb[0].mxu0 %v2778
    %v2830 = vpop.f32.mrb[0].mxu0
    %v2831 = vadd.f32 %v2727, %v2830
    %v2832 = vpop.f32.mrb[0].mxu0
    %v2833 = vadd.f32 %v2731, %v2832
    %v2834 = vpop.f32.mrb[0].mxu0
    %v2835 = vadd.f32 %v2727, %v2834
    %v2836 = vpop.f32.mrb[0].mxu0
    %v2837 = vadd.f32 %v2731, %v2836
    %2838 = vmatprep.mubr.bf16.mxu0 0
    %2839 = vmatmul.mubr.bf16.gmra.mrb[0].mxu0 %v2781
    %v2840 = vpop.f32.mrb[0].mxu0
    %v2841 = vadd.f32 %v2727, %v2840
    %v2842 = vpop.f32.mrb[0].mxu0
    %v2843 = vadd.f32 %v2731, %v2842
    %v2844 = vpop.f32.mrb[0].mxu0
    %v2845 = vadd.f32 %v2727, %v2844
    %v2846 = vpop.f32.mrb[0].mxu0
    %v2847 = vadd.f32 %v2731, %v2846
    %2848 = vmatprep.mubr.bf16.mxu0 0
    %2849 = vmatmul.mubr.bf16.gmra.mrb[0].mxu0 %v2784
    %v2850 = vpop.f32.mrb[0].mxu0
    %v2851 = vadd.f32 %v2727, %v2850
    %v2852 = vpop.f32.mrb[0].mxu0
    %v2853 = vadd.f32 %v2731, %v2852
    %v2854 = vpop.f32.mrb[0].mxu0
    %v2855 = vadd.f32 %v2727, %v2854
    %v2856 = vpop.f32.mrb[0].mxu0
    %v2857 = vadd.f32 %v2731, %v2856
    %2858 = vdwg.mxu0
    %v2859 = vmul.f32 %v2821, 0.044715
    %v2860 = vmul.f32 %v2823, 0.044715
    %v2861 = vmul.f32 %v2825, 0.044715
    %v2862 = vmul.f32 %v2827, 0.044715
    %v2863 = vmul.f32 %v2831, 0.044715
    %v2864 = vmul.f32 %v2833, 0.044715
    %v2865 = vmul.f32 %v2835, 0.044715
    %v2866 = vmul.f32 %v2837, 0.044715
    %v2867 = vmul.f32 %v2841, 0.044715
    %v2868 = vmul.f32 %v2843, 0.044715
    %v2869 = vmul.f32 %v2845, 0.044715
    %v2870 = vmul.f32 %v2847, 0.044715
    %v2871 = vmul.f32 %v2851, 0.044715
    %v2872 = vmul.f32 %v2853, 0.044715
    %v2873 = vmul.f32 %v2855, 0.044715
    %v2874 = vmul.f32 %v2857, 0.044715
    %v2875 = vmul.f32 %v2859, %v2821
    %v2876 = vmul.f32 %v2860, %v2823
    %v2877 = vmul.f32 %v2861, %v2825
    %v2878 = vmul.f32 %v2862, %v2827
    %v2879 = vmul.f32 %v2863, %v2831
    %v2880 = vmul.f32 %v2864, %v2833
    %v2881 = vmul.f32 %v2865, %v2835
    %v2882 = vmul.f32 %v2866, %v2837
    %v2883 = vmul.f32 %v2867, %v2841
    %v2884 = vmul.f32 %v2868, %v2843
    %v2885 = vmul.f32 %v2869, %v2845
    %v2886 = vmul.f32 %v2870, %v2847
    %v2887 = vmul.f32 %v2871, %v2851
    %v2888 = vmul.f32 %v2872, %v2853
    %v2889 = vmul.f32 %v2873, %v2855
    %v2890 = vmul.f32 %v2874, %v2857
    %v2891 = vmul.f32 %v2875, %v2821
    %v2892 = vmul.f32 %v2876, %v2823
    %v2893 = vmul.f32 %v2877, %v2825
    %v2894 = vmul.f32 %v2878, %v2827
    %v2895 = vmul.f32 %v2879, %v2831
    %v2896 = vmul.f32 %v2880, %v2833
    %v2897 = vmul.f32 %v2881, %v2835
    %v2898 = vmul.f32 %v2882, %v2837
    %v2899 = vmul.f32 %v2883, %v2841
    %v2900 = vmul.f32 %v2884, %v2843
    %v2901 = vmul.f32 %v2885, %v2845
    %v2902 = vmul.f32 %v2886, %v2847
    %v2903 = vmul.f32 %v2887, %v2851
    %v2904 = vmul.f32 %v2888, %v2853
    %v2905 = vmul.f32 %v2889, %v2855
    %v2906 = vmul.f32 %v2890, %v2857
    %v2907 = vadd.f32 %v2821, %v2891
    %v2908 = vadd.f32 %v2823, %v2892
    %v2909 = vadd.f32 %v2825, %v2893
    %v2910 = vadd.f32 %v2827, %v2894
    %v2911 = vadd.f32 %v2831, %v2895
    %v2912 = vadd.f32 %v2833, %v2896
    %v2913 = vadd.f32 %v2835, %v2897
    %v2914 = vadd.f32 %v2837, %v2898
    %v2915 = vadd.f32 %v2841, %v2899
    %v2916 = vadd.f32 %v2843, %v2900
    %v2917 = vadd.f32 %v2845, %v2901
    %v2918 = vadd.f32 %v2847, %v2902
    %v2919 = vadd.f32 %v2851, %v2903
    %v2920 = vadd.f32 %v2853, %v2904
    %v2921 = vadd.f32 %v2855, %v2905
    %v2922 = vadd.f32 %v2857, %v2906
    %v2923 = vmul.f32 %v2907, 0.7978846
    %v2924 = vmul.f32 %v2908, 0.7978846
    %v2925 = vmul.f32 %v2909, 0.7978846
    %v2926 = vmul.f32 %v2910, 0.7978846
    %v2927 = vmul.f32 %v2911, 0.7978846
    %v2928 = vmul.f32 %v2912, 0.7978846
    %v2929 = vmul.f32 %v2913, 0.7978846
    %v2930 = vmul.f32 %v2914, 0.7978846
    %v2931 = vmul.f32 %v2915, 0.7978846
    %v2932 = vmul.f32 %v2916, 0.7978846
    %v2933 = vmul.f32 %v2917, 0.7978846
    %v2934 = vmul.f32 %v2918, 0.7978846
    %v2935 = vmul.f32 %v2919, 0.7978846
    %v2936 = vmul.f32 %v2920, 0.7978846
    %v2937 = vmul.f32 %v2921, 0.7978846
    %v2938 = vmul.f32 %v2922, 0.7978846
    %v2939 = vmul.f32 %v2821, 0.5
    %v2940 = vmul.f32 %v2823, 0.5
    %v2941 = vmul.f32 %v2825, 0.5
    %v2942 = vmul.f32 %v2827, 0.5
    %v2943 = vmul.f32 %v2831, 0.5
    %v2944 = vmul.f32 %v2833, 0.5
    %v2945 = vmul.f32 %v2835, 0.5
    %v2946 = vmul.f32 %v2837, 0.5
    %v2947 = vmul.f32 %v2841, 0.5
    %v2948 = vmul.f32 %v2843, 0.5
    %v2949 = vmul.f32 %v2845, 0.5
    %v2950 = vmul.f32 %v2847, 0.5
    %v2951 = vmul.f32 %v2851, 0.5
    %v2952 = vmul.f32 %v2853, 0.5
    %v2953 = vmul.f32 %v2855, 0.5
    %v2954 = vmul.f32 %v2857, 0.5
    %v2955 = vtanh.pop %v2923
    %v2956 = vtanh.pop %v2924
    %v2957 = vtanh.pop %v2925
    %v2958 = vtanh.pop %v2926
    %v2959 = vtanh.pop %v2927
    %v2960 = vtanh.pop %v2928
    %v2961 = vtanh.pop %v2929
    %v2962 = vtanh.pop %v2930
    %v2963 = vtanh.pop %v2931
    %v2964 = vtanh.pop %v2932
    %v2965 = vtanh.pop %v2933
    %v2966 = vtanh.pop %v2934
    %v2967 = vtanh.pop %v2935
    %v2968 = vtanh.pop %v2936
    %v2969 = vtanh.pop %v2937
    %v2970 = vtanh.pop %v2938
    %v2971 = vadd.f32 %v2955, 1.0
    %v2972 = vadd.f32 %v2956, 1.0
    %v2973 = vadd.f32 %v2957, 1.0
    %v2974 = vadd.f32 %v2958, 1.0
    %v2975 = vadd.f32 %v2959, 1.0
    %v2976 = vadd.f32 %v2960, 1.0
    %v2977 = vadd.f32 %v2961, 1.0
    %v2978 = vadd.f32 %v2962, 1.0
    %v2979 = vadd.f32 %v2963, 1.0
    %v2980 = vadd.f32 %v2964, 1.0
    %v2981 = vadd.f32 %v2965, 1.0
    %v2982 = vadd.f32 %v2966, 1.0
    %v2983 = vadd.f32 %v2967, 1.0
    %v2984 = vadd.f32 %v2968, 1.0
    %v2985 = vadd.f32 %v2969, 1.0
    %v2986 = vadd.f32 %v2970, 1.0
    %v2987 = vmul.f32 %v2939, %v2971
    %v2988 = vmul.f32 %v2940, %v2972
    %v2989 = vmul.f32 %v2941, %v2973
    %v2990 = vmul.f32 %v2942, %v2974
    %v2991 = vmul.f32 %v2943, %v2975
    %v2992 = vmul.f32 %v2944, %v2976
    %v2993 = vmul.f32 %v2945, %v2977
    %v2994 = vmul.f32 %v2946, %v2978
    %v2995 = vmul.f32 %v2947, %v2979
    %v2996 = vmul.f32 %v2948, %v2980
    %v2997 = vmul.f32 %v2949, %v2981
    %v2998 = vmul.f32 %v2950, %v2982
    %v2999 = vmul.f32 %v2951, %v2983
    %v3000 = vmul.f32 %v2952, %v2984
    %v3001 = vmul.f32 %v2953, %v2985
    %v3002 = vmul.f32 %v2954, %v2986
    %v3003 = vpack.c.bf16 %v2989, %v2987
    %v3004 = vpack.c.bf16 %v2990, %v2988
    %v3005 = vpack.c.bf16 %v2993, %v2991
    %v3006 = vpack.c.bf16 %v2994, %v2992
    %v3007 = vpack.c.bf16 %v2997, %v2995
    %v3008 = vpack.c.bf16 %v2998, %v2996
    %v3009 = vpack.c.bf16 %v3001, %v2999
    %v3010 = vpack.c.bf16 %v3002, %v3000
    %v3011 = vld [vmem:[%s13] sm:$0xf]
    %v3012 = vld [vmem:[%s13 + $0x4] sm:$0xf]
    %v3013 = vld [vmem:[%s13 + $0x8] sm:$0xf]
    %v3014 = vld [vmem:[%s13 + $0xc] sm:$0xf]
    %v3015 = vld [vmem:[%s13 + $0x10] sm:$0xf]
    %v3016 = vld [vmem:[%s13 + $0x14] sm:$0xf]
    %v3017 = vld [vmem:[%s13 + $0x18] sm:$0xf]
    %v3018 = vld [vmem:[%s13 + $0x1c] sm:$0xf]
    %v3019 = vld [vmem:[%s13 + $0x20] sm:$0xf]
    %v3020 = vld [vmem:[%s13 + $0x24] sm:$0xf]
    %v3021 = vld [vmem:[%s13 + $0x28] sm:$0xf]
    %v3022 = vld [vmem:[%s13 + $0x2c] sm:$0xf]
    %v3023 = vld [vmem:[%s13 + $0x30] sm:$0xf]
    %v3024 = vld [vmem:[%s13 + $0x34] sm:$0xf]
    %v3025 = vld [vmem:[%s13 + $0x38] sm:$0xf]
    %v3026 = vld [vmem:[%s13 + $0x3c] sm:$0xf]
    %v3027 = vld [vmem:[%s13 + $0x40] sm:$0xf]
    %v3028 = vld [vmem:[%s13 + $0x44] sm:$0xf]
    %v3029 = vld [vmem:[%s13 + $0x48] sm:$0xf]
    %v3030 = vld [vmem:[%s13 + $0x4c] sm:$0xf]
    %v3031 = vld [vmem:[%s13 + $0x50] sm:$0xf]
    %v3032 = vld [vmem:[%s13 + $0x54] sm:$0xf]
    %v3033 = vld [vmem:[%s13 + $0x58] sm:$0xf]
    %v3034 = vld [vmem:[%s13 + $0x5c] sm:$0xf]
    %v3035 = vld [vmem:[%s13 + $0x60] sm:$0xf]
    %v3036 = vld [vmem:[%s13 + $0x64] sm:$0xf]
    %v3037 = vld [vmem:[%s13 + $0x68] sm:$0xf]
    %v3038 = vld [vmem:[%s13 + $0x6c] sm:$0xf]
    %v3039 = vld [vmem:[%s13 + $0x70] sm:$0xf]
    %v3040 = vld [vmem:[%s13 + $0x74] sm:$0xf]
    %v3041 = vld [vmem:[%s13 + $0x78] sm:$0xf]
    %v3042 = vld [vmem:[%s13 + $0x7c] sm:$0xf]
    %v3043 = vld [vmem:[%s14] sm:$0x1]
    %v3045 = vlaneseq
    %v3046 = vshrl.u32 %v3045, 7
    %v3047 = vsub.s32 0, %v3046
    %v3048 = vrot.slane %v3043, %v3047
    %v3082 = vunpack.c.l.b16 %v3011
    %v3083 = vunpack.c.l.b16 %v3012
    %v3084 = vunpack.c.l.b16 %v3013
    %v3085 = vunpack.c.l.b16 %v3014
    %v3086 = vunpack.c.l.b16 %v3015
    %v3087 = vunpack.c.l.b16 %v3016
    %v3088 = vunpack.c.l.b16 %v3017
    %v3089 = vunpack.c.l.b16 %v3018
    %v3090 = vunpack.c.l.b16 %v3019
    %v3091 = vunpack.c.l.b16 %v3020
    %v3092 = vunpack.c.l.b16 %v3021
    %v3093 = vunpack.c.l.b16 %v3022
    %v3094 = vunpack.c.l.b16 %v3023
    %v3095 = vunpack.c.l.b16 %v3024
    %v3096 = vunpack.c.l.b16 %v3025
    %v3097 = vunpack.c.l.b16 %v3026
    %v3098 = vunpack.c.l.b16 %v3027
    %v3099 = vunpack.c.l.b16 %v3028
    %v3100 = vunpack.c.l.b16 %v3029
    %v3101 = vunpack.c.l.b16 %v3030
    %v3102 = vunpack.c.l.b16 %v3031
    %v3103 = vunpack.c.l.b16 %v3032
    %v3104 = vunpack.c.l.b16 %v3033
    %v3105 = vunpack.c.l.b16 %v3034
    %v3106 = vunpack.c.l.b16 %v3035
    %v3107 = vunpack.c.l.b16 %v3036
    %v3108 = vunpack.c.l.b16 %v3037
    %v3109 = vunpack.c.l.b16 %v3038
    %v3110 = vunpack.c.l.b16 %v3039
    %v3111 = vunpack.c.l.b16 %v3040
    %v3112 = vunpack.c.l.b16 %v3041
    %v3113 = vunpack.c.l.b16 %v3042
    %v3114 = vpack.c.b16 %v3083, %v3082
    %v3115 = vpack.c.b16 %v3085, %v3084
    %v3116 = vpack.c.b16 %v3087, %v3086
    %v3117 = vpack.c.b16 %v3089, %v3088
    %v3118 = vpack.c.b16 %v3091, %v3090
    %v3119 = vpack.c.b16 %v3093, %v3092
    %v3120 = vpack.c.b16 %v3095, %v3094
    %v3121 = vpack.c.b16 %v3097, %v3096
    %v3122 = vpack.c.b16 %v3099, %v3098
    %v3123 = vpack.c.b16 %v3101, %v3100
    %v3124 = vpack.c.b16 %v3103, %v3102
    %v3125 = vpack.c.b16 %v3105, %v3104
    %v3126 = vpack.c.b16 %v3107, %v3106
    %v3127 = vpack.c.b16 %v3109, %v3108
    %v3128 = vpack.c.b16 %v3111, %v3110
    %v3129 = vpack.c.b16 %v3113, %v3112
    %3146 = vmatprep.subr.bf16.mxu0 0
    %3147 = vmatpush1.bf16.msra.mxu0 %v3114
    %3148 = vmatprep.subr.bf16.mxu0 0
    %3149 = vmatpush1.bf16.msra.mxu0 %v3115
    %3150 = vmatprep.subr.bf16.mxu0 0
    %3151 = vmatpush1.bf16.msra.mxu0 %v3116
    %3152 = vmatprep.subr.bf16.mxu0 0
    %3153 = vmatpush1.bf16.msra.mxu0 %v3117
    %3154 = vmatprep.subr.bf16.mxu0 0
    %3155 = vmatpush1.bf16.msra.mxu0 %v3118
    %3156 = vmatprep.subr.bf16.mxu0 0
    %3157 = vmatpush1.bf16.msra.mxu0 %v3119
    %3158 = vmatprep.subr.bf16.mxu0 0
    %3159 = vmatpush1.bf16.msra.mxu0 %v3120
    %3160 = vmatprep.subr.bf16.mxu0 0
    %3161 = vmatpush1.bf16.msra.mxu0 %v3121
    %3162 = vmatprep.subr.bf16.mxu0 0
    %3163 = vmatpush1.bf16.msra.mxu0 %v3122
    %3164 = vmatprep.subr.bf16.mxu0 0
    %3165 = vmatpush1.bf16.msra.mxu0 %v3123
    %3166 = vmatprep.subr.bf16.mxu0 0
    %3167 = vmatpush1.bf16.msra.mxu0 %v3124
    %3168 = vmatprep.subr.bf16.mxu0 0
    %3169 = vmatpush1.bf16.msra.mxu0 %v3125
    %3170 = vmatprep.subr.bf16.mxu0 0
    %3171 = vmatpush1.bf16.msra.mxu0 %v3126
    %3172 = vmatprep.subr.bf16.mxu0 0
    %3173 = vmatpush1.bf16.msra.mxu0 %v3127
    %3174 = vmatprep.subr.bf16.mxu0 0
    %3175 = vmatpush1.bf16.msra.mxu0 %v3128
    %3176 = vmatprep.subr.bf16.mxu0 0
    %3177 = vmatpush1.bf16.msra.mxu0 %v3129
    %3178 = vmatprep.mubr.bf16.mxu0 %v3004
    %3179 = vmatmul.mubr.bf16.gmra.mrb[0].mxu0 %v3003
    %v3180 = vpop.f32.mrb[0].mxu0
    %v3181 = vadd.f32 %v3048, %v3180
    %v3182 = vpop.f32.mrb[0].mxu0
    %v3183 = vpop.f32.mrb[0].mxu0
    %v3184 = vadd.f32 %v3048, %v3183
    %v3185 = vpop.f32.mrb[0].mxu0
    %3186 = vmatprep.mubr.bf16.mxu0 %v3006
    %3187 = vmatmul.mubr.bf16.gmra.mrb[0].mxu0 %v3005
    %v3188 = vpop.f32.mrb[0].mxu0
    %v3189 = vadd.f32 %v3048, %v3188
    %v3190 = vpop.f32.mrb[0].mxu0
    %v3191 = vpop.f32.mrb[0].mxu0
    %v3192 = vadd.f32 %v3048, %v3191
    %v3193 = vpop.f32.mrb[0].mxu0
    %3194 = vmatprep.mubr.bf16.mxu0 %v3008
    %3195 = vmatmul.mubr.bf16.gmra.mrb[0].mxu0 %v3007
    %v3196 = vpop.f32.mrb[0].mxu0
    %v3197 = vadd.f32 %v3048, %v3196
    %v3198 = vpop.f32.mrb[0].mxu0
    %v3199 = vpop.f32.mrb[0].mxu0
    %v3200 = vadd.f32 %v3048, %v3199
    %v3201 = vpop.f32.mrb[0].mxu0
    %3202 = vmatprep.mubr.bf16.mxu0 %v3010
    %3203 = vmatmul.mubr.bf16.gmra.mrb[0].mxu0 %v3009
    %v3204 = vpop.f32.mrb[0].mxu0
    %v3205 = vadd.f32 %v3048, %v3204
    %v3206 = vpop.f32.mrb[0].mxu0
    %v3207 = vpop.f32.mrb[0].mxu0
    %v3208 = vadd.f32 %v3048, %v3207
    %v3209 = vpop.f32.mrb[0].mxu0
    %3210 = vdwg.mxu0
    %v3211 = vadd.f32 %v2598, %v3181
    %v3212 = vadd.f32 %v2599, %v3184
    %v3213 = vadd.f32 %v2600, %v3189
    %v3214 = vadd.f32 %v2601, %v3192
    %v3215 = vadd.f32 %v2602, %v3197
    %v3216 = vadd.f32 %v2603, %v3200
    %v3217 = vadd.f32 %v2604, %v3205
    %v3218 = vadd.f32 %v2605, %v3208
    %s3219 = scalar_lea.vmem %s4, 1
    %v3220 = vld [vmem:[%s3219] sm:$0x1]
    %s3221 = scalar_lea.vmem %s5, 1
    %v3222 = vld [vmem:[%s3221] sm:$0x1]
    %v3223 = vsel %vm206, %v3211, 0.0
    %3224 = vadd.xlane.f32.xlu0 %v3223
    %v3225 = vpop.xlane.xlu0 %3224
    %v3226 = vsel %vm206, %v3212, 0.0
    %3227 = vadd.xlane.f32.xlu0 %v3226
    %v3228 = vpop.xlane.xlu0 %3227
    %v3229 = vsel %vm206, %v3213, 0.0
    %3230 = vadd.xlane.f32.xlu0 %v3229
    %v3231 = vpop.xlane.xlu0 %3230
    %v3232 = vsel %vm206, %v3214, 0.0
    %3233 = vadd.xlane.f32.xlu0 %v3232
    %v3234 = vpop.xlane.xlu0 %3233
    %v3235 = vsel %vm206, %v3215, 0.0
    %3236 = vadd.xlane.f32.xlu0 %v3235
    %v3237 = vpop.xlane.xlu0 %3236
    %v3238 = vsel %vm206, %v3216, 0.0
    %3239 = vadd.xlane.f32.xlu0 %v3238
    %v3240 = vpop.xlane.xlu0 %3239
    %v3241 = vsel %vm206, %v3217, 0.0
    %3242 = vadd.xlane.f32.xlu0 %v3241
    %v3243 = vpop.xlane.xlu0 %3242
    %v3244 = vsel %vm206, %v3218, 0.0
    %3245 = vadd.xlane.f32.xlu0 %v3244
    %v3246 = vpop.xlane.xlu0 %3245
    %v3247 = vmul.f32 %v3225, %v311
    %v3248 = vmul.f32 %v3228, %v311
    %v3249 = vmul.f32 %v3231, %v311
    %v3250 = vmul.f32 %v3234, %v311
    %v3251 = vmul.f32 %v3237, %v311
    %v3252 = vmul.f32 %v3240, %v311
    %v3253 = vmul.f32 %v3243, %v311
    %v3254 = vmul.f32 %v3246, %v311
    %v3255 = vsub.f32 %v3211, %v3247
    %v3256 = vsub.f32 %v3212, %v3248
    %v3257 = vsub.f32 %v3213, %v3249
    %v3258 = vsub.f32 %v3214, %v3250
    %v3259 = vsub.f32 %v3215, %v3251
    %v3260 = vsub.f32 %v3216, %v3252
    %v3261 = vsub.f32 %v3217, %v3253
    %v3262 = vsub.f32 %v3218, %v3254
    %v3263 = vmul.f32 %v3255, %v3255
    %v3264 = vmul.f32 %v3256, %v3256
    %v3265 = vmul.f32 %v3257, %v3257
    %v3266 = vmul.f32 %v3258, %v3258
    %v3267 = vmul.f32 %v3259, %v3259
    %v3268 = vmul.f32 %v3260, %v3260
    %v3269 = vmul.f32 %v3261, %v3261
    %v3270 = vmul.f32 %v3262, %v3262
    %v3271 = vsel %vm206, %v3263, 0.0
    %3272 = vadd.xlane.f32.xlu0 %v3271
    %v3273 = vpop.xlane.xlu0 %3272
    %v3274 = vsel %vm206, %v3264, 0.0
    %3275 = vadd.xlane.f32.xlu0 %v3274
    %v3276 = vpop.xlane.xlu0 %3275
    %v3277 = vsel %vm206, %v3265, 0.0
    %3278 = vadd.xlane.f32.xlu0 %v3277
    %v3279 = vpop.xlane.xlu0 %3278
    %v3280 = vsel %vm206, %v3266, 0.0
    %3281 = vadd.xlane.f32.xlu0 %v3280
    %v3282 = vpop.xlane.xlu0 %3281
    %v3283 = vsel %vm206, %v3267, 0.0
    %3284 = vadd.xlane.f32.xlu0 %v3283
    %v3285 = vpop.xlane.xlu0 %3284
    %v3286 = vsel %vm206, %v3268, 0.0
    %3287 = vadd.xlane.f32.xlu0 %v3286
    %v3288 = vpop.xlane.xlu0 %3287
    %v3289 = vsel %vm206, %v3269, 0.0
    %3290 = vadd.xlane.f32.xlu0 %v3289
    %v3291 = vpop.xlane.xlu0 %3290
    %v3292 = vsel %vm206, %v3270, 0.0
    %3293 = vadd.xlane.f32.xlu0 %v3292
    %v3294 = vpop.xlane.xlu0 %3293
    %v3295 = vmul.f32 %v3273, %v311
    %v3296 = vmul.f32 %v3276, %v311
    %v3297 = vmul.f32 %v3279, %v311
    %v3298 = vmul.f32 %v3282, %v311
    %v3299 = vmul.f32 %v3285, %v311
    %v3300 = vmul.f32 %v3288, %v311
    %v3301 = vmul.f32 %v3291, %v311
    %v3302 = vmul.f32 %v3294, %v311
    %v3303 = vadd.f32 %v3295, 1e-06
    %v3304 = vadd.f32 %v3296, 1e-06
    %v3305 = vadd.f32 %v3297, 1e-06
    %v3306 = vadd.f32 %v3298, 1e-06
    %v3307 = vadd.f32 %v3299, 1e-06
    %v3308 = vadd.f32 %v3300, 1e-06
    %v3309 = vadd.f32 %v3301, 1e-06
    %v3310 = vadd.f32 %v3302, 1e-06
    %v3311 = vrsqrt.pop %v3303
    %v3312 = vrsqrt.pop %v3304
    %v3313 = vrsqrt.pop %v3305
    %v3314 = vrsqrt.pop %v3306
    %v3315 = vrsqrt.pop %v3307
    %v3316 = vrsqrt.pop %v3308
    %v3317 = vrsqrt.pop %v3309
    %v3318 = vrsqrt.pop %v3310
    %v3319 = vmul.f32 %v3255, %v3311
    %v3320 = vmul.f32 %v3256, %v3312
    %v3321 = vmul.f32 %v3257, %v3313
    %v3322 = vmul.f32 %v3258, %v3314
    %v3323 = vmul.f32 %v3259, %v3315
    %v3324 = vmul.f32 %v3260, %v3316
    %v3325 = vmul.f32 %v3261, %v3317
    %v3326 = vmul.f32 %v3262, %v3318
    %v3328 = vlaneseq
    %v3329 = vshrl.u32 %v3328, 7
    %v3330 = vsub.s32 0, %v3329
    %v3331 = vrot.slane %v3220, %v3330
    %v3333 = vmul.f32 %v3319, %v3331
    %v3334 = vmul.f32 %v3320, %v3331
    %v3335 = vmul.f32 %v3321, %v3331
    %v3336 = vmul.f32 %v3322, %v3331
    %v3337 = vmul.f32 %v3323, %v3331
    %v3338 = vmul.f32 %v3324, %v3331
    %v3339 = vmul.f32 %v3325, %v3331
    %v3340 = vmul.f32 %v3326, %v3331
    %v3342 = vlaneseq
    %v3343 = vshrl.u32 %v3342, 7
    %v3344 = vsub.s32 0, %v3343
    %v3345 = vrot.slane %v3222, %v3344
    %v3347 = vadd.f32 %v3333, %v3345
    %v3348 = vadd.f32 %v3334, %v3345
    %v3349 = vadd.f32 %v3335, %v3345
    %v3350 = vadd.f32 %v3336, %v3345
    %v3351 = vadd.f32 %v3337, %v3345
    %v3352 = vadd.f32 %v3338, %v3345
    %v3353 = vadd.f32 %v3339, %v3345
    %v3354 = vadd.f32 %v3340, %v3345
    %v3355 = vpack.c.bf16 %v3348, %v3347
    %v3356 = vpack.c.bf16 %v3350, %v3349
    %v3357 = vpack.c.bf16 %v3352, %v3351
    %v3358 = vpack.c.bf16 %v3354, %v3353
    %s3359 = scalar_lea.vmem %s6, 128
    %v3360 = vld [vmem:[%s3359] sm:$0xf]
    %v3361 = vld [vmem:[%s3359 + $0x4] sm:$0xf]
    %v3362 = vld [vmem:[%s3359 + $0x8] sm:$0xf]
    %v3363 = vld [vmem:[%s3359 + $0xc] sm:$0xf]
    %v3364 = vld [vmem:[%s3359 + $0x10] sm:$0xf]
    %v3365 = vld [vmem:[%s3359 + $0x14] sm:$0xf]
    %v3366 = vld [vmem:[%s3359 + $0x18] sm:$0xf]
    %v3367 = vld [vmem:[%s3359 + $0x1c] sm:$0xf]
    %s3368 = scalar_lea.vmem %s7, 4
    %v3369 = vld [vmem:[%s3368] sm:$0x1]
    %v3371 = vlaneseq
    %v3372 = vshrl.u32 %v3371, 7
    %v3373 = vsub.s32 0, %v3372
    %v3374 = vrot.slane %v3369, %v3373
    %v3384 = vunpack.c.l.b16 %v3360
    %v3385 = vunpack.c.l.b16 %v3361
    %v3386 = vunpack.c.l.b16 %v3362
    %v3387 = vunpack.c.l.b16 %v3363
    %v3388 = vunpack.c.l.b16 %v3364
    %v3389 = vunpack.c.l.b16 %v3365
    %v3390 = vunpack.c.l.b16 %v3366
    %v3391 = vunpack.c.l.b16 %v3367
    %v3392 = vpack.c.b16 %v3385, %v3384
    %v3393 = vpack.c.b16 %v3387, %v3386
    %v3394 = vpack.c.b16 %v3389, %v3388
    %v3395 = vpack.c.b16 %v3391, %v3390
    %v3401 = vsel %vm206, %v3355, 0
    %v3404 = vsel %vm206, %v3356, 0
    %v3407 = vsel %vm206, %v3357, 0
    %v3410 = vsel %vm206, %v3358, 0
    %3412 = vmatprep.subr.bf16.mxu0 0
    %3413 = vmatpush1.bf16.msra.mxu0 %v3392
    %3414 = vmatprep.subr.bf16.mxu0 0
    %3415 = vmatpush1.bf16.msra.mxu0 %v3393
    %3416 = vmatprep.subr.bf16.mxu0 0
    %3417 = vmatpush1.bf16.msra.mxu0 %v3394
    %3418 = vmatprep.subr.bf16.mxu0 0
    %3419 = vmatpush1.bf16.msra.mxu0 %v3395
    %3420 = vmatprep.subr.bf16.mxu0 0
    %3421 = vmatpush1.bf16.msra.mxu0 0
    %3422 = vmatprep.subr.bf16.mxu0 0
    %3423 = vmatpush1.bf16.msra.mxu0 0
    %3424 = vmatprep.subr.bf16.mxu0 0
    %3425 = vmatpush1.bf16.msra.mxu0 0
    %3426 = vmatprep.subr.bf16.mxu0 0
    %3427 = vmatpush1.bf16.msra.mxu0 0
    %3428 = vmatprep.subr.bf16.mxu0 0
    %3429 = vmatpush1.bf16.msra.mxu0 0
    %3430 = vmatprep.subr.bf16.mxu0 0
    %3431 = vmatpush1.bf16.msra.mxu0 0
    %3432 = vmatprep.subr.bf16.mxu0 0
    %3433 = vmatpush1.bf16.msra.mxu0 0
    %3434 = vmatprep.subr.bf16.mxu0 0
    %3435 = vmatpush1.bf16.msra.mxu0 0
    %3436 = vmatprep.subr.bf16.mxu0 0
    %3437 = vmatpush1.bf16.msra.mxu0 0
    %3438 = vmatprep.subr.bf16.mxu0 0
    %3439 = vmatpush1.bf16.msra.mxu0 0
    %3440 = vmatprep.subr.bf16.mxu0 0
    %3441 = vmatpush1.bf16.msra.mxu0 0
    %3442 = vmatprep.subr.bf16.mxu0 0
    %3443 = vmatpush1.bf16.msra.mxu0 0
    %3444 = vmatprep.mubr.bf16.mxu0 0
    %3445 = vmatmul.mubr.bf16.gmra.mrb[0].mxu0 %v3401
    %v3446 = vpop.f32.mrb[0].mxu0
    %v3447 = vadd.f32 %v3374, %v3446
    %v3448 = vpop.f32.mrb[0].mxu0
    %v3449 = vpop.f32.mrb[0].mxu0
    %v3450 = vadd.f32 %v3374, %v3449
    %v3451 = vpop.f32.mrb[0].mxu0
    %3452 = vmatprep.mubr.bf16.mxu0 0
    %3453 = vmatmul.mubr.bf16.gmra.mrb[0].mxu0 %v3404
    %v3454 = vpop.f32.mrb[0].mxu0
    %v3455 = vadd.f32 %v3374, %v3454
    %v3456 = vpop.f32.mrb[0].mxu0
    %v3457 = vpop.f32.mrb[0].mxu0
    %v3458 = vadd.f32 %v3374, %v3457
    %v3459 = vpop.f32.mrb[0].mxu0
    %3460 = vmatprep.mubr.bf16.mxu0 0
    %3461 = vmatmul.mubr.bf16.gmra.mrb[0].mxu0 %v3407
    %v3462 = vpop.f32.mrb[0].mxu0
    %v3463 = vadd.f32 %v3374, %v3462
    %v3464 = vpop.f32.mrb[0].mxu0
    %v3465 = vpop.f32.mrb[0].mxu0
    %v3466 = vadd.f32 %v3374, %v3465
    %v3467 = vpop.f32.mrb[0].mxu0
    %3468 = vmatprep.mubr.bf16.mxu0 0
    %3469 = vmatmul.mubr.bf16.gmra.mrb[0].mxu0 %v3410
    %v3470 = vpop.f32.mrb[0].mxu0
    %v3471 = vadd.f32 %v3374, %v3470
    %v3472 = vpop.f32.mrb[0].mxu0
    %v3473 = vpop.f32.mrb[0].mxu0
    %v3474 = vadd.f32 %v3374, %v3473
    %v3475 = vpop.f32.mrb[0].mxu0
    %3476 = vdwg.mxu0
    %v3477 = vpack.c.bf16 %v3450, %v3447
    %v3478 = vpack.c.bf16 %v3458, %v3455
    %v3479 = vpack.c.bf16 %v3466, %v3463
    %v3480 = vpack.c.bf16 %v3474, %v3471
    %s3481 = scalar_lea.vmem %s8, 128
    %v3482 = vld [vmem:[%s3481] sm:$0xf]
    %v3483 = vld [vmem:[%s3481 + $0x4] sm:$0xf]
    %v3484 = vld [vmem:[%s3481 + $0x8] sm:$0xf]
    %v3485 = vld [vmem:[%s3481 + $0xc] sm:$0xf]
    %v3486 = vld [vmem:[%s3481 + $0x10] sm:$0xf]
    %v3487 = vld [vmem:[%s3481 + $0x14] sm:$0xf]
    %v3488 = vld [vmem:[%s3481 + $0x18] sm:$0xf]
    %v3489 = vld [vmem:[%s3481 + $0x1c] sm:$0xf]
    %s3490 = scalar_lea.vmem %s9, 4
    %v3491 = vld [vmem:[%s3490] sm:$0x1]
    %v3493 = vlaneseq
    %v3494 = vshrl.u32 %v3493, 7
    %v3495 = vsub.s32 0, %v3494
    %v3496 = vrot.slane %v3491, %v3495
    %v3506 = vunpack.c.l.b16 %v3482
    %v3507 = vunpack.c.l.b16 %v3483
    %v3508 = vunpack.c.l.b16 %v3484
    %v3509 = vunpack.c.l.b16 %v3485
    %v3510 = vunpack.c.l.b16 %v3486
    %v3511 = vunpack.c.l.b16 %v3487
    %v3512 = vunpack.c.l.b16 %v3488
    %v3513 = vunpack.c.l.b16 %v3489
    %v3514 = vpack.c.b16 %v3507, %v3506
    %v3515 = vpack.c.b16 %v3509, %v3508
    %v3516 = vpack.c.b16 %v3511, %v3510
    %v3517 = vpack.c.b16 %v3513, %v3512
    %3522 = vmatprep.subr.bf16.mxu0 0
    %3523 = vmatpush1.bf16.msra.mxu0 %v3514
    %3524 = vmatprep.subr.bf16.mxu0 0
    %3525 = vmatpush1.bf16.msra.mxu0 %v3515
    %3526 = vmatprep.subr.bf16.mxu0 0
    %3527 = vmatpush1.bf16.msra.mxu0 %v3516
    %3528 = vmatprep.subr.bf16.mxu0 0
    %3529 = vmatpush1.bf16.msra.mxu0 %v3517
    %3530 = vmatprep.subr.bf16.mxu0 0
    %3531 = vmatpush1.bf16.msra.mxu0 0
    %3532 = vmatprep.subr.bf16.mxu0 0
    %3533 = vmatpush1.bf16.msra.mxu0 0
    %3534 = vmatprep.subr.bf16.mxu0 0
    %3535 = vmatpush1.bf16.msra.mxu0 0
    %3536 = vmatprep.subr.bf16.mxu0 0
    %3537 = vmatpush1.bf16.msra.mxu0 0
    %3538 = vmatprep.subr.bf16.mxu0 0
    %3539 = vmatpush1.bf16.msra.mxu0 0
    %3540 = vmatprep.subr.bf16.mxu0 0
    %3541 = vmatpush1.bf16.msra.mxu0 0
    %3542 = vmatprep.subr.bf16.mxu0 0
    %3543 = vmatpush1.bf16.msra.mxu0 0
    %3544 = vmatprep.subr.bf16.mxu0 0
    %3545 = vmatpush1.bf16.msra.mxu0 0
    %3546 = vmatprep.subr.bf16.mxu0 0
    %3547 = vmatpush1.bf16.msra.mxu0 0
    %3548 = vmatprep.subr.bf16.mxu0 0
    %3549 = vmatpush1.bf16.msra.mxu0 0
    %3550 = vmatprep.subr.bf16.mxu0 0
    %3551 = vmatpush1.bf16.msra.mxu0 0
    %3552 = vmatprep.subr.bf16.mxu0 0
    %3553 = vmatpush1.bf16.msra.mxu0 0
    %3554 = vmatprep.mubr.bf16.mxu0 0
    %3555 = vmatmul.mubr.bf16.gmra.mrb[0].mxu0 %v3401
    %v3556 = vpop.f32.mrb[0].mxu0
    %v3557 = vadd.f32 %v3496, %v3556
    %v3558 = vpop.f32.mrb[0].mxu0
    %v3559 = vpop.f32.mrb[0].mxu0
    %v3560 = vadd.f32 %v3496, %v3559
    %v3561 = vpop.f32.mrb[0].mxu0
    %3562 = vmatprep.mubr.bf16.mxu0 0
    %3563 = vmatmul.mubr.bf16.gmra.mrb[0].mxu0 %v3404
    %v3564 = vpop.f32.mrb[0].mxu0
    %v3565 = vadd.f32 %v3496, %v3564
    %v3566 = vpop.f32.mrb[0].mxu0
    %v3567 = vpop.f32.mrb[0].mxu0
    %v3568 = vadd.f32 %v3496, %v3567
    %v3569 = vpop.f32.mrb[0].mxu0
    %3570 = vmatprep.mubr.bf16.mxu0 0
    %3571 = vmatmul.mubr.bf16.gmra.mrb[0].mxu0 %v3407
    %v3572 = vpop.f32.mrb[0].mxu0
    %v3573 = vadd.f32 %v3496, %v3572
    %v3574 = vpop.f32.mrb[0].mxu0
    %v3575 = vpop.f32.mrb[0].mxu0
    %v3576 = vadd.f32 %v3496, %v3575
    %v3577 = vpop.f32.mrb[0].mxu0
    %3578 = vmatprep.mubr.bf16.mxu0 0
    %3579 = vmatmul.mubr.bf16.gmra.mrb[0].mxu0 %v3410
    %v3580 = vpop.f32.mrb[0].mxu0
    %v3581 = vadd.f32 %v3496, %v3580
    %v3582 = vpop.f32.mrb[0].mxu0
    %v3583 = vpop.f32.mrb[0].mxu0
    %v3584 = vadd.f32 %v3496, %v3583
    %v3585 = vpop.f32.mrb[0].mxu0
    %3586 = vdwg.mxu0
    %v3587 = vpack.c.bf16 %v3560, %v3557
    %v3588 = vpack.c.bf16 %v3568, %v3565
    %v3589 = vpack.c.bf16 %v3576, %v3573
    %v3590 = vpack.c.bf16 %v3584, %v3581
    %s3591 = scalar_lea.vmem %s6, 160
    %v3592 = vld [vmem:[%s3591] sm:$0xf]
    %v3593 = vld [vmem:[%s3591 + $0x4] sm:$0xf]
    %v3594 = vld [vmem:[%s3591 + $0x8] sm:$0xf]
    %v3595 = vld [vmem:[%s3591 + $0xc] sm:$0xf]
    %v3596 = vld [vmem:[%s3591 + $0x10] sm:$0xf]
    %v3597 = vld [vmem:[%s3591 + $0x14] sm:$0xf]
    %v3598 = vld [vmem:[%s3591 + $0x18] sm:$0xf]
    %v3599 = vld [vmem:[%s3591 + $0x1c] sm:$0xf]
    %s3600 = scalar_lea.vmem %s7, 5
    %v3601 = vld [vmem:[%s3600] sm:$0x1]
    %v3603 = vlaneseq
    %v3604 = vshrl.u32 %v3603, 7
    %v3605 = vsub.s32 0, %v3604
    %v3606 = vrot.slane %v3601, %v3605
    %v3616 = vunpack.c.l.b16 %v3592
    %v3617 = vunpack.c.l.b16 %v3593
    %v3618 = vunpack.c.l.b16 %v3594
    %v3619 = vunpack.c.l.b16 %v3595
    %v3620 = vunpack.c.l.b16 %v3596
    %v3621 = vunpack.c.l.b16 %v3597
    %v3622 = vunpack.c.l.b16 %v3598
    %v3623 = vunpack.c.l.b16 %v3599
    %v3624 = vpack.c.b16 %v3617, %v3616
    %v3625 = vpack.c.b16 %v3619, %v3618
    %v3626 = vpack.c.b16 %v3621, %v3620
    %v3627 = vpack.c.b16 %v3623, %v3622
    %3632 = vmatprep.subr.bf16.mxu0 0
    %3633 = vmatpush1.bf16.msra.mxu0 %v3624
    %3634 = vmatprep.subr.bf16.mxu0 0
    %3635 = vmatpush1.bf16.msra.mxu0 %v3625
    %3636 = vmatprep.subr.bf16.mxu0 0
    %3637 = vmatpush1.bf16.msra.mxu0 %v3626
    %3638 = vmatprep.subr.bf16.mxu0 0
    %3639 = vmatpush1.bf16.msra.mxu0 %v3627
    %3640 = vmatprep.subr.bf16.mxu0 0
    %3641 = vmatpush1.bf16.msra.mxu0 0
    %3642 = vmatprep.subr.bf16.mxu0 0
    %3643 = vmatpush1.bf16.msra.mxu0 0
    %3644 = vmatprep.subr.bf16.mxu0 0
    %3645 = vmatpush1.bf16.msra.mxu0 0
    %3646 = vmatprep.subr.bf16.mxu0 0
    %3647 = vmatpush1.bf16.msra.mxu0 0
    %3648 = vmatprep.subr.bf16.mxu0 0
    %3649 = vmatpush1.bf16.msra.mxu0 0
    %3650 = vmatprep.subr.bf16.mxu0 0
    %3651 = vmatpush1.bf16.msra.mxu0 0
    %3652 = vmatprep.subr.bf16.mxu0 0
    %3653 = vmatpush1.bf16.msra.mxu0 0
    %3654 = vmatprep.subr.bf16.mxu0 0
    %3655 = vmatpush1.bf16.msra.mxu0 0
    %3656 = vmatprep.subr.bf16.mxu0 0
    %3657 = vmatpush1.bf16.msra.mxu0 0
    %3658 = vmatprep.subr.bf16.mxu0 0
    %3659 = vmatpush1.bf16.msra.mxu0 0
    %3660 = vmatprep.subr.bf16.mxu0 0
    %3661 = vmatpush1.bf16.msra.mxu0 0
    %3662 = vmatprep.subr.bf16.mxu0 0
    %3663 = vmatpush1.bf16.msra.mxu0 0
    %3664 = vmatprep.mubr.bf16.mxu0 0
    %3665 = vmatmul.mubr.bf16.gmra.mrb[0].mxu0 %v3401
    %v3666 = vpop.f32.mrb[0].mxu0
    %v3667 = vadd.f32 %v3606, %v3666
    %v3668 = vpop.f32.mrb[0].mxu0
    %v3669 = vpop.f32.mrb[0].mxu0
    %v3670 = vadd.f32 %v3606, %v3669
    %v3671 = vpop.f32.mrb[0].mxu0
    %3672 = vmatprep.mubr.bf16.mxu0 0
    %3673 = vmatmul.mubr.bf16.gmra.mrb[0].mxu0 %v3404
    %v3674 = vpop.f32.mrb[0].mxu0
    %v3675 = vadd.f32 %v3606, %v3674
    %v3676 = vpop.f32.mrb[0].mxu0
    %v3677 = vpop.f32.mrb[0].mxu0
    %v3678 = vadd.f32 %v3606, %v3677
    %v3679 = vpop.f32.mrb[0].mxu0
    %3680 = vmatprep.mubr.bf16.mxu0 0
    %3681 = vmatmul.mubr.bf16.gmra.mrb[0].mxu0 %v3407
    %v3682 = vpop.f32.mrb[0].mxu0
    %v3683 = vadd.f32 %v3606, %v3682
    %v3684 = vpop.f32.mrb[0].mxu0
    %v3685 = vpop.f32.mrb[0].mxu0
    %v3686 = vadd.f32 %v3606, %v3685
    %v3687 = vpop.f32.mrb[0].mxu0
    %3688 = vmatprep.mubr.bf16.mxu0 0
    %3689 = vmatmul.mubr.bf16.gmra.mrb[0].mxu0 %v3410
    %v3690 = vpop.f32.mrb[0].mxu0
    %v3691 = vadd.f32 %v3606, %v3690
    %v3692 = vpop.f32.mrb[0].mxu0
    %v3693 = vpop.f32.mrb[0].mxu0
    %v3694 = vadd.f32 %v3606, %v3693
    %v3695 = vpop.f32.mrb[0].mxu0
    %3696 = vdwg.mxu0
    %v3697 = vpack.c.bf16 %v3670, %v3667
    %v3698 = vpack.c.bf16 %v3678, %v3675
    %v3699 = vpack.c.bf16 %v3686, %v3683
    %v3700 = vpack.c.bf16 %v3694, %v3691
    %s3701 = scalar_lea.vmem %s8, 160
    %v3702 = vld [vmem:[%s3701] sm:$0xf]
    %v3703 = vld [vmem:[%s3701 + $0x4] sm:$0xf]
    %v3704 = vld [vmem:[%s3701 + $0x8] sm:$0xf]
    %v3705 = vld [vmem:[%s3701 + $0xc] sm:$0xf]
    %v3706 = vld [vmem:[%s3701 + $0x10] sm:$0xf]
    %v3707 = vld [vmem:[%s3701 + $0x14] sm:$0xf]
    %v3708 = vld [vmem:[%s3701 + $0x18] sm:$0xf]
    %v3709 = vld [vmem:[%s3701 + $0x1c] sm:$0xf]
    %s3710 = scalar_lea.vmem %s9, 5
    %v3711 = vld [vmem:[%s3710] sm:$0x1]
    %v3713 = vlaneseq
    %v3714 = vshrl.u32 %v3713, 7
    %v3715 = vsub.s32 0, %v3714
    %v3716 = vrot.slane %v3711, %v3715
    %v3726 = vunpack.c.l.b16 %v3702
    %v3727 = vunpack.c.l.b16 %v3703
    %v3728 = vunpack.c.l.b16 %v3704
    %v3729 = vunpack.c.l.b16 %v3705
    %v3730 = vunpack.c.l.b16 %v3706
    %v3731 = vunpack.c.l.b16 %v3707
    %v3732 = vunpack.c.l.b16 %v3708
    %v3733 = vunpack.c.l.b16 %v3709
    %v3734 = vpack.c.b16 %v3727, %v3726
    %v3735 = vpack.c.b16 %v3729, %v3728
    %v3736 = vpack.c.b16 %v3731, %v3730
    %v3737 = vpack.c.b16 %v3733, %v3732
    %3742 = vmatprep.subr.bf16.mxu0 0
    %3743 = vmatpush1.bf16.msra.mxu0 %v3734
    %3744 = vmatprep.subr.bf16.mxu0 0
    %3745 = vmatpush1.bf16.msra.mxu0 %v3735
    %3746 = vmatprep.subr.bf16.mxu0 0
    %3747 = vmatpush1.bf16.msra.mxu0 %v3736
    %3748 = vmatprep.subr.bf16.mxu0 0
    %3749 = vmatpush1.bf16.msra.mxu0 %v3737
    %3750 = vmatprep.subr.bf16.mxu0 0
    %3751 = vmatpush1.bf16.msra.mxu0 0
    %3752 = vmatprep.subr.bf16.mxu0 0
    %3753 = vmatpush1.bf16.msra.mxu0 0
    %3754 = vmatprep.subr.bf16.mxu0 0
    %3755 = vmatpush1.bf16.msra.mxu0 0
    %3756 = vmatprep.subr.bf16.mxu0 0
    %3757 = vmatpush1.bf16.msra.mxu0 0
    %3758 = vmatprep.subr.bf16.mxu0 0
    %3759 = vmatpush1.bf16.msra.mxu0 0
    %3760 = vmatprep.subr.bf16.mxu0 0
    %3761 = vmatpush1.bf16.msra.mxu0 0
    %3762 = vmatprep.subr.bf16.mxu0 0
    %3763 = vmatpush1.bf16.msra.mxu0 0
    %3764 = vmatprep.subr.bf16.mxu0 0
    %3765 = vmatpush1.bf16.msra.mxu0 0
    %3766 = vmatprep.subr.bf16.mxu0 0
    %3767 = vmatpush1.bf16.msra.mxu0 0
    %3768 = vmatprep.subr.bf16.mxu0 0
    %3769 = vmatpush1.bf16.msra.mxu0 0
    %3770 = vmatprep.subr.bf16.mxu0 0
    %3771 = vmatpush1.bf16.msra.mxu0 0
    %3772 = vmatprep.subr.bf16.mxu0 0
    %3773 = vmatpush1.bf16.msra.mxu0 0
    %3774 = vmatprep.mubr.bf16.mxu0 0
    %3775 = vmatmul.mubr.bf16.gmra.mrb[0].mxu0 %v3401
    %v3776 = vpop.f32.mrb[0].mxu0
    %v3777 = vadd.f32 %v3716, %v3776
    %v3778 = vpop.f32.mrb[0].mxu0
    %v3779 = vpop.f32.mrb[0].mxu0
    %v3780 = vadd.f32 %v3716, %v3779
    %v3781 = vpop.f32.mrb[0].mxu0
    %3782 = vmatprep.mubr.bf16.mxu0 0
    %3783 = vmatmul.mubr.bf16.gmra.mrb[0].mxu0 %v3404
    %v3784 = vpop.f32.mrb[0].mxu0
    %v3785 = vadd.f32 %v3716, %v3784
    %v3786 = vpop.f32.mrb[0].mxu0
    %v3787 = vpop.f32.mrb[0].mxu0
    %v3788 = vadd.f32 %v3716, %v3787
    %v3789 = vpop.f32.mrb[0].mxu0
    %3790 = vmatprep.mubr.bf16.mxu0 0
    %3791 = vmatmul.mubr.bf16.gmra.mrb[0].mxu0 %v3407
    %v3792 = vpop.f32.mrb[0].mxu0
    %v3793 = vadd.f32 %v3716, %v3792
    %v3794 = vpop.f32.mrb[0].mxu0
    %v3795 = vpop.f32.mrb[0].mxu0
    %v3796 = vadd.f32 %v3716, %v3795
    %v3797 = vpop.f32.mrb[0].mxu0
    %3798 = vmatprep.mubr.bf16.mxu0 0
    %3799 = vmatmul.mubr.bf16.gmra.mrb[0].mxu0 %v3410
    %v3800 = vpop.f32.mrb[0].mxu0
    %v3801 = vadd.f32 %v3716, %v3800
    %v3802 = vpop.f32.mrb[0].mxu0
    %v3803 = vpop.f32.mrb[0].mxu0
    %v3804 = vadd.f32 %v3716, %v3803
    %v3805 = vpop.f32.mrb[0].mxu0
    %3806 = vdwg.mxu0
    %v3807 = vpack.c.bf16 %v3780, %v3777
    %v3808 = vpack.c.bf16 %v3788, %v3785
    %v3809 = vpack.c.bf16 %v3796, %v3793
    %v3810 = vpack.c.bf16 %v3804, %v3801
    %s3811 = scalar_lea.vmem %s6, 192
    %v3812 = vld [vmem:[%s3811] sm:$0xf]
    %v3813 = vld [vmem:[%s3811 + $0x4] sm:$0xf]
    %v3814 = vld [vmem:[%s3811 + $0x8] sm:$0xf]
    %v3815 = vld [vmem:[%s3811 + $0xc] sm:$0xf]
    %v3816 = vld [vmem:[%s3811 + $0x10] sm:$0xf]
    %v3817 = vld [vmem:[%s3811 + $0x14] sm:$0xf]
    %v3818 = vld [vmem:[%s3811 + $0x18] sm:$0xf]
    %v3819 = vld [vmem:[%s3811 + $0x1c] sm:$0xf]
    %s3820 = scalar_lea.vmem %s7, 6
    %v3821 = vld [vmem:[%s3820] sm:$0x1]
    %v3823 = vlaneseq
    %v3824 = vshrl.u32 %v3823, 7
    %v3825 = vsub.s32 0, %v3824
    %v3826 = vrot.slane %v3821, %v3825
    %v3836 = vunpack.c.l.b16 %v3812
    %v3837 = vunpack.c.l.b16 %v3813
    %v3838 = vunpack.c.l.b16 %v3814
    %v3839 = vunpack.c.l.b16 %v3815
    %v3840 = vunpack.c.l.b16 %v3816
    %v3841 = vunpack.c.l.b16 %v3817
    %v3842 = vunpack.c.l.b16 %v3818
    %v3843 = vunpack.c.l.b16 %v3819
    %v3844 = vpack.c.b16 %v3837, %v3836
    %v3845 = vpack.c.b16 %v3839, %v3838
    %v3846 = vpack.c.b16 %v3841, %v3840
    %v3847 = vpack.c.b16 %v3843, %v3842
    %3852 = vmatprep.subr.bf16.mxu0 0
    %3853 = vmatpush1.bf16.msra.mxu0 %v3844
    %3854 = vmatprep.subr.bf16.mxu0 0
    %3855 = vmatpush1.bf16.msra.mxu0 %v3845
    %3856 = vmatprep.subr.bf16.mxu0 0
    %3857 = vmatpush1.bf16.msra.mxu0 %v3846
    %3858 = vmatprep.subr.bf16.mxu0 0
    %3859 = vmatpush1.bf16.msra.mxu0 %v3847
    %3860 = vmatprep.subr.bf16.mxu0 0
    %3861 = vmatpush1.bf16.msra.mxu0 0
    %3862 = vmatprep.subr.bf16.mxu0 0
    %3863 = vmatpush1.bf16.msra.mxu0 0
    %3864 = vmatprep.subr.bf16.mxu0 0
    %3865 = vmatpush1.bf16.msra.mxu0 0
    %3866 = vmatprep.subr.bf16.mxu0 0
    %3867 = vmatpush1.bf16.msra.mxu0 0
    %3868 = vmatprep.subr.bf16.mxu0 0
    %3869 = vmatpush1.bf16.msra.mxu0 0
    %3870 = vmatprep.subr.bf16.mxu0 0
    %3871 = vmatpush1.bf16.msra.mxu0 0
    %3872 = vmatprep.subr.bf16.mxu0 0
    %3873 = vmatpush1.bf16.msra.mxu0 0
    %3874 = vmatprep.subr.bf16.mxu0 0
    %3875 = vmatpush1.bf16.msra.mxu0 0
    %3876 = vmatprep.subr.bf16.mxu0 0
    %3877 = vmatpush1.bf16.msra.mxu0 0
    %3878 = vmatprep.subr.bf16.mxu0 0
    %3879 = vmatpush1.bf16.msra.mxu0 0
    %3880 = vmatprep.subr.bf16.mxu0 0
    %3881 = vmatpush1.bf16.msra.mxu0 0
    %3882 = vmatprep.subr.bf16.mxu0 0
    %3883 = vmatpush1.bf16.msra.mxu0 0
    %3884 = vmatprep.mubr.bf16.mxu0 0
    %3885 = vmatmul.mubr.bf16.gmra.mrb[0].mxu0 %v3401
    %v3886 = vpop.f32.mrb[0].mxu0
    %v3887 = vadd.f32 %v3826, %v3886
    %v3888 = vpop.f32.mrb[0].mxu0
    %v3889 = vpop.f32.mrb[0].mxu0
    %v3890 = vadd.f32 %v3826, %v3889
    %v3891 = vpop.f32.mrb[0].mxu0
    %3892 = vmatprep.mubr.bf16.mxu0 0
    %3893 = vmatmul.mubr.bf16.gmra.mrb[0].mxu0 %v3404
    %v3894 = vpop.f32.mrb[0].mxu0
    %v3895 = vadd.f32 %v3826, %v3894
    %v3896 = vpop.f32.mrb[0].mxu0
    %v3897 = vpop.f32.mrb[0].mxu0
    %v3898 = vadd.f32 %v3826, %v3897
    %v3899 = vpop.f32.mrb[0].mxu0
    %3900 = vmatprep.mubr.bf16.mxu0 0
    %3901 = vmatmul.mubr.bf16.gmra.mrb[0].mxu0 %v3407
    %v3902 = vpop.f32.mrb[0].mxu0
    %v3903 = vadd.f32 %v3826, %v3902
    %v3904 = vpop.f32.mrb[0].mxu0
    %v3905 = vpop.f32.mrb[0].mxu0
    %v3906 = vadd.f32 %v3826, %v3905
    %v3907 = vpop.f32.mrb[0].mxu0
    %3908 = vmatprep.mubr.bf16.mxu0 0
    %3909 = vmatmul.mubr.bf16.gmra.mrb[0].mxu0 %v3410
    %v3910 = vpop.f32.mrb[0].mxu0
    %v3911 = vadd.f32 %v3826, %v3910
    %v3912 = vpop.f32.mrb[0].mxu0
    %v3913 = vpop.f32.mrb[0].mxu0
    %v3914 = vadd.f32 %v3826, %v3913
    %v3915 = vpop.f32.mrb[0].mxu0
    %3916 = vdwg.mxu0
    %v3917 = vpack.c.bf16 %v3890, %v3887
    %v3918 = vpack.c.bf16 %v3898, %v3895
    %v3919 = vpack.c.bf16 %v3906, %v3903
    %v3920 = vpack.c.bf16 %v3914, %v3911
    %s3921 = scalar_lea.vmem %s8, 192
    %v3922 = vld [vmem:[%s3921] sm:$0xf]
    %v3923 = vld [vmem:[%s3921 + $0x4] sm:$0xf]
    %v3924 = vld [vmem:[%s3921 + $0x8] sm:$0xf]
    %v3925 = vld [vmem:[%s3921 + $0xc] sm:$0xf]
    %v3926 = vld [vmem:[%s3921 + $0x10] sm:$0xf]
    %v3927 = vld [vmem:[%s3921 + $0x14] sm:$0xf]
    %v3928 = vld [vmem:[%s3921 + $0x18] sm:$0xf]
    %v3929 = vld [vmem:[%s3921 + $0x1c] sm:$0xf]
    %s3930 = scalar_lea.vmem %s9, 6
    %v3931 = vld [vmem:[%s3930] sm:$0x1]
    %v3933 = vlaneseq
    %v3934 = vshrl.u32 %v3933, 7
    %v3935 = vsub.s32 0, %v3934
    %v3936 = vrot.slane %v3931, %v3935
    %v3946 = vunpack.c.l.b16 %v3922
    %v3947 = vunpack.c.l.b16 %v3923
    %v3948 = vunpack.c.l.b16 %v3924
    %v3949 = vunpack.c.l.b16 %v3925
    %v3950 = vunpack.c.l.b16 %v3926
    %v3951 = vunpack.c.l.b16 %v3927
    %v3952 = vunpack.c.l.b16 %v3928
    %v3953 = vunpack.c.l.b16 %v3929
    %v3954 = vpack.c.b16 %v3947, %v3946
    %v3955 = vpack.c.b16 %v3949, %v3948
    %v3956 = vpack.c.b16 %v3951, %v3950
    %v3957 = vpack.c.b16 %v3953, %v3952
    %3962 = vmatprep.subr.bf16.mxu0 0
    %3963 = vmatpush1.bf16.msra.mxu0 %v3954
    %3964 = vmatprep.subr.bf16.mxu0 0
    %3965 = vmatpush1.bf16.msra.mxu0 %v3955
    %3966 = vmatprep.subr.bf16.mxu0 0
    %3967 = vmatpush1.bf16.msra.mxu0 %v3956
    %3968 = vmatprep.subr.bf16.mxu0 0
    %3969 = vmatpush1.bf16.msra.mxu0 %v3957
    %3970 = vmatprep.subr.bf16.mxu0 0
    %3971 = vmatpush1.bf16.msra.mxu0 0
    %3972 = vmatprep.subr.bf16.mxu0 0
    %3973 = vmatpush1.bf16.msra.mxu0 0
    %3974 = vmatprep.subr.bf16.mxu0 0
    %3975 = vmatpush1.bf16.msra.mxu0 0
    %3976 = vmatprep.subr.bf16.mxu0 0
    %3977 = vmatpush1.bf16.msra.mxu0 0
    %3978 = vmatprep.subr.bf16.mxu0 0
    %3979 = vmatpush1.bf16.msra.mxu0 0
    %3980 = vmatprep.subr.bf16.mxu0 0
    %3981 = vmatpush1.bf16.msra.mxu0 0
    %3982 = vmatprep.subr.bf16.mxu0 0
    %3983 = vmatpush1.bf16.msra.mxu0 0
    %3984 = vmatprep.subr.bf16.mxu0 0
    %3985 = vmatpush1.bf16.msra.mxu0 0
    %3986 = vmatprep.subr.bf16.mxu0 0
    %3987 = vmatpush1.bf16.msra.mxu0 0
    %3988 = vmatprep.subr.bf16.mxu0 0
    %3989 = vmatpush1.bf16.msra.mxu0 0
    %3990 = vmatprep.subr.bf16.mxu0 0
    %3991 = vmatpush1.bf16.msra.mxu0 0
    %3992 = vmatprep.subr.bf16.mxu0 0
    %3993 = vmatpush1.bf16.msra.mxu0 0
    %3994 = vmatprep.mubr.bf16.mxu0 0
    %3995 = vmatmul.mubr.bf16.gmra.mrb[0].mxu0 %v3401
    %v3996 = vpop.f32.mrb[0].mxu0
    %v3997 = vadd.f32 %v3936, %v3996
    %v3998 = vpop.f32.mrb[0].mxu0
    %v3999 = vpop.f32.mrb[0].mxu0
    %v4000 = vadd.f32 %v3936, %v3999
    %v4001 = vpop.f32.mrb[0].mxu0
    %4002 = vmatprep.mubr.bf16.mxu0 0
    %4003 = vmatmul.mubr.bf16.gmra.mrb[0].mxu0 %v3404
    %v4004 = vpop.f32.mrb[0].mxu0
    %v4005 = vadd.f32 %v3936, %v4004
    %v4006 = vpop.f32.mrb[0].mxu0
    %v4007 = vpop.f32.mrb[0].mxu0
    %v4008 = vadd.f32 %v3936, %v4007
    %v4009 = vpop.f32.mrb[0].mxu0
    %4010 = vmatprep.mubr.bf16.mxu0 0
    %4011 = vmatmul.mubr.bf16.gmra.mrb[0].mxu0 %v3407
    %v4012 = vpop.f32.mrb[0].mxu0
    %v4013 = vadd.f32 %v3936, %v4012
    %v4014 = vpop.f32.mrb[0].mxu0
    %v4015 = vpop.f32.mrb[0].mxu0
    %v4016 = vadd.f32 %v3936, %v4015
    %v4017 = vpop.f32.mrb[0].mxu0
    %4018 = vmatprep.mubr.bf16.mxu0 0
    %4019 = vmatmul.mubr.bf16.gmra.mrb[0].mxu0 %v3410
    %v4020 = vpop.f32.mrb[0].mxu0
    %v4021 = vadd.f32 %v3936, %v4020
    %v4022 = vpop.f32.mrb[0].mxu0
    %v4023 = vpop.f32.mrb[0].mxu0
    %v4024 = vadd.f32 %v3936, %v4023
    %v4025 = vpop.f32.mrb[0].mxu0
    %4026 = vdwg.mxu0
    %v4027 = vpack.c.bf16 %v4000, %v3997
    %v4028 = vpack.c.bf16 %v4008, %v4005
    %v4029 = vpack.c.bf16 %v4016, %v4013
    %v4030 = vpack.c.bf16 %v4024, %v4021
    %s4031 = scalar_lea.vmem %s6, 224
    %v4032 = vld [vmem:[%s4031] sm:$0xf]
    %v4033 = vld [vmem:[%s4031 + $0x4] sm:$0xf]
    %v4034 = vld [vmem:[%s4031 + $0x8] sm:$0xf]
    %v4035 = vld [vmem:[%s4031 + $0xc] sm:$0xf]
    %v4036 = vld [vmem:[%s4031 + $0x10] sm:$0xf]
    %v4037 = vld [vmem:[%s4031 + $0x14] sm:$0xf]
    %v4038 = vld [vmem:[%s4031 + $0x18] sm:$0xf]
    %v4039 = vld [vmem:[%s4031 + $0x1c] sm:$0xf]
    %s4040 = scalar_lea.vmem %s7, 7
    %v4041 = vld [vmem:[%s4040] sm:$0x1]
    %v4043 = vlaneseq
    %v4044 = vshrl.u32 %v4043, 7
    %v4045 = vsub.s32 0, %v4044
    %v4046 = vrot.slane %v4041, %v4045
    %v4056 = vunpack.c.l.b16 %v4032
    %v4057 = vunpack.c.l.b16 %v4033
    %v4058 = vunpack.c.l.b16 %v4034
    %v4059 = vunpack.c.l.b16 %v4035
    %v4060 = vunpack.c.l.b16 %v4036
    %v4061 = vunpack.c.l.b16 %v4037
    %v4062 = vunpack.c.l.b16 %v4038
    %v4063 = vunpack.c.l.b16 %v4039
    %v4064 = vpack.c.b16 %v4057, %v4056
    %v4065 = vpack.c.b16 %v4059, %v4058
    %v4066 = vpack.c.b16 %v4061, %v4060
    %v4067 = vpack.c.b16 %v4063, %v4062
    %4072 = vmatprep.subr.bf16.mxu0 0
    %4073 = vmatpush1.bf16.msra.mxu0 %v4064
    %4074 = vmatprep.subr.bf16.mxu0 0
    %4075 = vmatpush1.bf16.msra.mxu0 %v4065
    %4076 = vmatprep.subr.bf16.mxu0 0
    %4077 = vmatpush1.bf16.msra.mxu0 %v4066
    %4078 = vmatprep.subr.bf16.mxu0 0
    %4079 = vmatpush1.bf16.msra.mxu0 %v4067
    %4080 = vmatprep.subr.bf16.mxu0 0
    %4081 = vmatpush1.bf16.msra.mxu0 0
    %4082 = vmatprep.subr.bf16.mxu0 0
    %4083 = vmatpush1.bf16.msra.mxu0 0
    %4084 = vmatprep.subr.bf16.mxu0 0
    %4085 = vmatpush1.bf16.msra.mxu0 0
    %4086 = vmatprep.subr.bf16.mxu0 0
    %4087 = vmatpush1.bf16.msra.mxu0 0
    %4088 = vmatprep.subr.bf16.mxu0 0
    %4089 = vmatpush1.bf16.msra.mxu0 0
    %4090 = vmatprep.subr.bf16.mxu0 0
    %4091 = vmatpush1.bf16.msra.mxu0 0
    %4092 = vmatprep.subr.bf16.mxu0 0
    %4093 = vmatpush1.bf16.msra.mxu0 0
    %4094 = vmatprep.subr.bf16.mxu0 0
    %4095 = vmatpush1.bf16.msra.mxu0 0
    %4096 = vmatprep.subr.bf16.mxu0 0
    %4097 = vmatpush1.bf16.msra.mxu0 0
    %4098 = vmatprep.subr.bf16.mxu0 0
    %4099 = vmatpush1.bf16.msra.mxu0 0
    %4100 = vmatprep.subr.bf16.mxu0 0
    %4101 = vmatpush1.bf16.msra.mxu0 0
    %4102 = vmatprep.subr.bf16.mxu0 0
    %4103 = vmatpush1.bf16.msra.mxu0 0
    %4104 = vmatprep.mubr.bf16.mxu0 0
    %4105 = vmatmul.mubr.bf16.gmra.mrb[0].mxu0 %v3401
    %v4106 = vpop.f32.mrb[0].mxu0
    %v4107 = vadd.f32 %v4046, %v4106
    %v4108 = vpop.f32.mrb[0].mxu0
    %v4109 = vpop.f32.mrb[0].mxu0
    %v4110 = vadd.f32 %v4046, %v4109
    %v4111 = vpop.f32.mrb[0].mxu0
    %4112 = vmatprep.mubr.bf16.mxu0 0
    %4113 = vmatmul.mubr.bf16.gmra.mrb[0].mxu0 %v3404
    %v4114 = vpop.f32.mrb[0].mxu0
    %v4115 = vadd.f32 %v4046, %v4114
    %v4116 = vpop.f32.mrb[0].mxu0
    %v4117 = vpop.f32.mrb[0].mxu0
    %v4118 = vadd.f32 %v4046, %v4117
    %v4119 = vpop.f32.mrb[0].mxu0
    %4120 = vmatprep.mubr.bf16.mxu0 0
    %4121 = vmatmul.mubr.bf16.gmra.mrb[0].mxu0 %v3407
    %v4122 = vpop.f32.mrb[0].mxu0
    %v4123 = vadd.f32 %v4046, %v4122
    %v4124 = vpop.f32.mrb[0].mxu0
    %v4125 = vpop.f32.mrb[0].mxu0
    %v4126 = vadd.f32 %v4046, %v4125
    %v4127 = vpop.f32.mrb[0].mxu0
    %4128 = vmatprep.mubr.bf16.mxu0 0
    %4129 = vmatmul.mubr.bf16.gmra.mrb[0].mxu0 %v3410
    %v4130 = vpop.f32.mrb[0].mxu0
    %v4131 = vadd.f32 %v4046, %v4130
    %v4132 = vpop.f32.mrb[0].mxu0
    %v4133 = vpop.f32.mrb[0].mxu0
    %v4134 = vadd.f32 %v4046, %v4133
    %v4135 = vpop.f32.mrb[0].mxu0
    %4136 = vdwg.mxu0
    %v4137 = vpack.c.bf16 %v4110, %v4107
    %v4138 = vpack.c.bf16 %v4118, %v4115
    %v4139 = vpack.c.bf16 %v4126, %v4123
    %v4140 = vpack.c.bf16 %v4134, %v4131
    %s4141 = scalar_lea.vmem %s8, 224
    %v4142 = vld [vmem:[%s4141] sm:$0xf]
    %v4143 = vld [vmem:[%s4141 + $0x4] sm:$0xf]
    %v4144 = vld [vmem:[%s4141 + $0x8] sm:$0xf]
    %v4145 = vld [vmem:[%s4141 + $0xc] sm:$0xf]
    %v4146 = vld [vmem:[%s4141 + $0x10] sm:$0xf]
    %v4147 = vld [vmem:[%s4141 + $0x14] sm:$0xf]
    %v4148 = vld [vmem:[%s4141 + $0x18] sm:$0xf]
    %v4149 = vld [vmem:[%s4141 + $0x1c] sm:$0xf]
    %s4150 = scalar_lea.vmem %s9, 7
    %v4151 = vld [vmem:[%s4150] sm:$0x1]
    %v4153 = vlaneseq
    %v4154 = vshrl.u32 %v4153, 7
    %v4155 = vsub.s32 0, %v4154
    %v4156 = vrot.slane %v4151, %v4155
    %v4166 = vunpack.c.l.b16 %v4142
    %v4167 = vunpack.c.l.b16 %v4143
    %v4168 = vunpack.c.l.b16 %v4144
    %v4169 = vunpack.c.l.b16 %v4145
    %v4170 = vunpack.c.l.b16 %v4146
    %v4171 = vunpack.c.l.b16 %v4147
    %v4172 = vunpack.c.l.b16 %v4148
    %v4173 = vunpack.c.l.b16 %v4149
    %v4174 = vpack.c.b16 %v4167, %v4166
    %v4175 = vpack.c.b16 %v4169, %v4168
    %v4176 = vpack.c.b16 %v4171, %v4170
    %v4177 = vpack.c.b16 %v4173, %v4172
    %4182 = vmatprep.subr.bf16.mxu0 0
    %4183 = vmatpush1.bf16.msra.mxu0 %v4174
    %4184 = vmatprep.subr.bf16.mxu0 0
    %4185 = vmatpush1.bf16.msra.mxu0 %v4175
    %4186 = vmatprep.subr.bf16.mxu0 0
    %4187 = vmatpush1.bf16.msra.mxu0 %v4176
    %4188 = vmatprep.subr.bf16.mxu0 0
    %4189 = vmatpush1.bf16.msra.mxu0 %v4177
    %4190 = vmatprep.subr.bf16.mxu0 0
    %4191 = vmatpush1.bf16.msra.mxu0 0
    %4192 = vmatprep.subr.bf16.mxu0 0
    %4193 = vmatpush1.bf16.msra.mxu0 0
    %4194 = vmatprep.subr.bf16.mxu0 0
    %4195 = vmatpush1.bf16.msra.mxu0 0
    %4196 = vmatprep.subr.bf16.mxu0 0
    %4197 = vmatpush1.bf16.msra.mxu0 0
    %4198 = vmatprep.subr.bf16.mxu0 0
    %4199 = vmatpush1.bf16.msra.mxu0 0
    %4200 = vmatprep.subr.bf16.mxu0 0
    %4201 = vmatpush1.bf16.msra.mxu0 0
    %4202 = vmatprep.subr.bf16.mxu0 0
    %4203 = vmatpush1.bf16.msra.mxu0 0
    %4204 = vmatprep.subr.bf16.mxu0 0
    %4205 = vmatpush1.bf16.msra.mxu0 0
    %4206 = vmatprep.subr.bf16.mxu0 0
    %4207 = vmatpush1.bf16.msra.mxu0 0
    %4208 = vmatprep.subr.bf16.mxu0 0
    %4209 = vmatpush1.bf16.msra.mxu0 0
    %4210 = vmatprep.subr.bf16.mxu0 0
    %4211 = vmatpush1.bf16.msra.mxu0 0
    %4212 = vmatprep.subr.bf16.mxu0 0
    %4213 = vmatpush1.bf16.msra.mxu0 0
    %4214 = vmatprep.mubr.bf16.mxu0 0
    %4215 = vmatmul.mubr.bf16.gmra.mrb[0].mxu0 %v3401
    %v4216 = vpop.f32.mrb[0].mxu0
    %v4217 = vadd.f32 %v4156, %v4216
    %v4218 = vpop.f32.mrb[0].mxu0
    %v4219 = vpop.f32.mrb[0].mxu0
    %v4220 = vadd.f32 %v4156, %v4219
    %v4221 = vpop.f32.mrb[0].mxu0
    %4222 = vmatprep.mubr.bf16.mxu0 0
    %4223 = vmatmul.mubr.bf16.gmra.mrb[0].mxu0 %v3404
    %v4224 = vpop.f32.mrb[0].mxu0
    %v4225 = vadd.f32 %v4156, %v4224
    %v4226 = vpop.f32.mrb[0].mxu0
    %v4227 = vpop.f32.mrb[0].mxu0
    %v4228 = vadd.f32 %v4156, %v4227
    %v4229 = vpop.f32.mrb[0].mxu0
    %4230 = vmatprep.mubr.bf16.mxu0 0
    %4231 = vmatmul.mubr.bf16.gmra.mrb[0].mxu0 %v3407
    %v4232 = vpop.f32.mrb[0].mxu0
    %v4233 = vadd.f32 %v4156, %v4232
    %v4234 = vpop.f32.mrb[0].mxu0
    %v4235 = vpop.f32.mrb[0].mxu0
    %v4236 = vadd.f32 %v4156, %v4235
    %v4237 = vpop.f32.mrb[0].mxu0
    %4238 = vmatprep.mubr.bf16.mxu0 0
    %4239 = vmatmul.mubr.bf16.gmra.mrb[0].mxu0 %v3410
    %v4240 = vpop.f32.mrb[0].mxu0
    %v4241 = vadd.f32 %v4156, %v4240
    %v4242 = vpop.f32.mrb[0].mxu0
    %v4243 = vpop.f32.mrb[0].mxu0
    %v4244 = vadd.f32 %v4156, %v4243
    %v4245 = vpop.f32.mrb[0].mxu0
    %4246 = vdwg.mxu0
    %v4247 = vpack.c.bf16 %v4220, %v4217
    %v4248 = vpack.c.bf16 %v4228, %v4225
    %v4249 = vpack.c.bf16 %v4236, %v4233
    %v4250 = vpack.c.bf16 %v4244, %v4241
    %v4252 = vsel %vm206, %v3477, 0
    %v4255 = vsel %vm206, %v3478, 0
    %4257 = vmatprep.subr.bf16.mxu0 0
    %4258 = vmatpush1.bf16.xpose.msra.mxu0 %v3401
    %4259 = vmatprep.subr.bf16.mxu0 0
    %4260 = vmatpush1.bf16.xpose.msra.mxu0 %v3404
    %4261 = vmatprep.subr.bf16.mxu0 0
    %4262 = vmatpush1.bf16.xpose.msra.mxu0 0
    %4263 = vmatprep.subr.bf16.mxu0 0
    %4264 = vmatpush1.bf16.xpose.msra.mxu0 0
    %4265 = vmatprep.subr.bf16.mxu0 0
    %4266 = vmatpush1.bf16.xpose.msra.mxu0 0
    %4267 = vmatprep.subr.bf16.mxu0 0
    %4268 = vmatpush1.bf16.xpose.msra.mxu0 0
    %4269 = vmatprep.subr.bf16.mxu0 0
    %4270 = vmatpush1.bf16.xpose.msra.mxu0 0
    %4271 = vmatprep.subr.bf16.mxu0 0
    %4272 = vmatpush1.bf16.xpose.msra.mxu0 0
    %4273 = vmatprep.subr.bf16.mxu0 0
    %4274 = vmatpush1.bf16.xpose.msra.mxu0 0
    %4275 = vmatprep.subr.bf16.mxu0 0
    %4276 = vmatpush1.bf16.xpose.msra.mxu0 0
    %4277 = vmatprep.subr.bf16.mxu0 0
    %4278 = vmatpush1.bf16.xpose.msra.mxu0 0
    %4279 = vmatprep.subr.bf16.mxu0 0
    %4280 = vmatpush1.bf16.xpose.msra.mxu0 0
    %4281 = vmatprep.subr.bf16.mxu0 0
    %4282 = vmatpush1.bf16.xpose.msra.mxu0 0
    %4283 = vmatprep.subr.bf16.mxu0 0
    %4284 = vmatpush1.bf16.xpose.msra.mxu0 0
    %4285 = vmatprep.subr.bf16.mxu0 0
    %4286 = vmatpush1.bf16.xpose.msra.mxu0 0
    %4287 = vmatprep.subr.bf16.mxu0 0
    %4288 = vmatpush1.bf16.xpose.msra.mxu0 0
    %4289 = vmatprep.mubr.bf16.mxu0 0
    %4290 = vmatmul.mubr.bf16.gmra.mrb[0].mxu0 %v4252
    %v4291 = vpop.f32.mrb[0].mxu0
    %v4292 = vadd.f32 %v1316, %v4291
    %v4293 = vpop.f32.mrb[0].mxu0
    %v4294 = vpop.f32.mrb[0].mxu0
    %v4295 = vadd.f32 %v1316, %v4294
    %v4296 = vpop.f32.mrb[0].mxu0
    %4297 = vmatprep.mubr.bf16.mxu0 0
    %4298 = vmatmul.mubr.bf16.gmra.mrb[0].mxu0 %v4255
    %v4299 = vpop.f32.mrb[0].mxu0
    %v4300 = vadd.f32 %v1316, %v4299
    %v4301 = vpop.f32.mrb[0].mxu0
    %v4302 = vpop.f32.mrb[0].mxu0
    %v4303 = vadd.f32 %v1316, %v4302
    %v4304 = vpop.f32.mrb[0].mxu0
    %4305 = vdwg.mxu0
    %v4306 = vsel %vm1373, %v4292, -inf
    %4307 = vmax.xlane.f32.xlu0 %v4306
    %v4308 = vpop.xlane.xlu0 %4307
    %v4309 = vsel %vm1373, %v4295, -inf
    %4310 = vmax.xlane.f32.xlu0 %v4309
    %v4311 = vpop.xlane.xlu0 %4310
    %v4312 = vsel %vm1373, %v4300, -inf
    %4313 = vmax.xlane.f32.xlu0 %v4312
    %v4314 = vpop.xlane.xlu0 %4313
    %v4315 = vsel %vm1373, %v4303, -inf
    %4316 = vmax.xlane.f32.xlu0 %v4315
    %v4317 = vpop.xlane.xlu0 %4316
    %v4318 = vsub.f32 %v4292, %v4308
    %v4319 = vsub.f32 %v4295, %v4311
    %v4320 = vsub.f32 %v4300, %v4314
    %v4321 = vsub.f32 %v4303, %v4317
    %v4322 = vmul.f32 %v4318, 1.442695
    %v4323 = vpow.pop %v4322
    %v4324 = vmul.f32 %v4319, 1.442695
    %v4325 = vpow.pop %v4324
    %v4326 = vmul.f32 %v4320, 1.442695
    %v4327 = vpow.pop %v4326
    %v4328 = vmul.f32 %v4321, 1.442695
    %v4329 = vpow.pop %v4328
    %v4330 = vsel %vm1373, %v4323, 0.0
    %4331 = vadd.xlane.f32.xlu0 %v4330
    %v4332 = vpop.xlane.xlu0 %4331
    %v4333 = vsel %vm1373, %v4325, 0.0
    %4334 = vadd.xlane.f32.xlu0 %v4333
    %v4335 = vpop.xlane.xlu0 %4334
    %v4336 = vsel %vm1373, %v4327, 0.0
    %4337 = vadd.xlane.f32.xlu0 %v4336
    %v4338 = vpop.xlane.xlu0 %4337
    %v4339 = vsel %vm1373, %v4329, 0.0
    %4340 = vadd.xlane.f32.xlu0 %v4339
    %v4341 = vpop.xlane.xlu0 %4340
    %v4342 = vrcp.pop %v4332
    %v4343 = vrcp.pop %v4335
    %v4344 = vrcp.pop %v4338
    %v4345 = vrcp.pop %v4341
    %v4346 = vmul.f32 %v4323, %v4342
    %v4347 = vmul.f32 %v4325, %v4343
    %v4348 = vmul.f32 %v4327, %v4344
    %v4349 = vmul.f32 %v4329, %v4345
    %v4350 = vpack.c.bf16 %v4347, %v4346
    %v4351 = vpack.c.bf16 %v4349, %v4348
    %v4353 = vsel %vm206, %v3697, 0
    %v4356 = vsel %vm206, %v3698, 0
    %4358 = vmatprep.subr.bf16.mxu0 0
    %4359 = vmatpush1.bf16.xpose.msra.mxu0 %v3401
    %4360 = vmatprep.subr.bf16.mxu0 0
    %4361 = vmatpush1.bf16.xpose.msra.mxu0 %v3404
    %4362 = vmatprep.subr.bf16.mxu0 0
    %4363 = vmatpush1.bf16.xpose.msra.mxu0 0
    %4364 = vmatprep.subr.bf16.mxu0 0
    %4365 = vmatpush1.bf16.xpose.msra.mxu0 0
    %4366 = vmatprep.subr.bf16.mxu0 0
    %4367 = vmatpush1.bf16.xpose.msra.mxu0 0
    %4368 = vmatprep.subr.bf16.mxu0 0
    %4369 = vmatpush1.bf16.xpose.msra.mxu0 0
    %4370 = vmatprep.subr.bf16.mxu0 0
    %4371 = vmatpush1.bf16.xpose.msra.mxu0 0
    %4372 = vmatprep.subr.bf16.mxu0 0
    %4373 = vmatpush1.bf16.xpose.msra.mxu0 0
    %4374 = vmatprep.subr.bf16.mxu0 0
    %4375 = vmatpush1.bf16.xpose.msra.mxu0 0
    %4376 = vmatprep.subr.bf16.mxu0 0
    %4377 = vmatpush1.bf16.xpose.msra.mxu0 0
    %4378 = vmatprep.subr.bf16.mxu0 0
    %4379 = vmatpush1.bf16.xpose.msra.mxu0 0
    %4380 = vmatprep.subr.bf16.mxu0 0
    %4381 = vmatpush1.bf16.xpose.msra.mxu0 0
    %4382 = vmatprep.subr.bf16.mxu0 0
    %4383 = vmatpush1.bf16.xpose.msra.mxu0 0
    %4384 = vmatprep.subr.bf16.mxu0 0
    %4385 = vmatpush1.bf16.xpose.msra.mxu0 0
    %4386 = vmatprep.subr.bf16.mxu0 0
    %4387 = vmatpush1.bf16.xpose.msra.mxu0 0
    %4388 = vmatprep.subr.bf16.mxu0 0
    %4389 = vmatpush1.bf16.xpose.msra.mxu0 0
    %4390 = vmatprep.mubr.bf16.mxu0 0
    %4391 = vmatmul.mubr.bf16.gmra.mrb[0].mxu0 %v4353
    %v4392 = vpop.f32.mrb[0].mxu0
    %v4393 = vadd.f32 %v1316, %v4392
    %v4394 = vpop.f32.mrb[0].mxu0
    %v4395 = vpop.f32.mrb[0].mxu0
    %v4396 = vadd.f32 %v1316, %v4395
    %v4397 = vpop.f32.mrb[0].mxu0
    %4398 = vmatprep.mubr.bf16.mxu0 0
    %4399 = vmatmul.mubr.bf16.gmra.mrb[0].mxu0 %v4356
    %v4400 = vpop.f32.mrb[0].mxu0
    %v4401 = vadd.f32 %v1316, %v4400
    %v4402 = vpop.f32.mrb[0].mxu0
    %v4403 = vpop.f32.mrb[0].mxu0
    %v4404 = vadd.f32 %v1316, %v4403
    %v4405 = vpop.f32.mrb[0].mxu0
    %4406 = vdwg.mxu0
    %v4407 = vsel %vm1373, %v4393, -inf
    %4408 = vmax.xlane.f32.xlu0 %v4407
    %v4409 = vpop.xlane.xlu0 %4408
    %v4410 = vsel %vm1373, %v4396, -inf
    %4411 = vmax.xlane.f32.xlu0 %v4410
    %v4412 = vpop.xlane.xlu0 %4411
    %v4413 = vsel %vm1373, %v4401, -inf
    %4414 = vmax.xlane.f32.xlu0 %v4413
    %v4415 = vpop.xlane.xlu0 %4414
    %v4416 = vsel %vm1373, %v4404, -inf
    %4417 = vmax.xlane.f32.xlu0 %v4416
    %v4418 = vpop.xlane.xlu0 %4417
    %v4419 = vsub.f32 %v4393, %v4409
    %v4420 = vsub.f32 %v4396, %v4412
    %v4421 = vsub.f32 %v4401, %v4415
    %v4422 = vsub.f32 %v4404, %v4418
    %v4423 = vmul.f32 %v4419, 1.442695
    %v4424 = vpow.pop %v4423
    %v4425 = vmul.f32 %v4420, 1.442695
    %v4426 = vpow.pop %v4425
    %v4427 = vmul.f32 %v4421, 1.442695
    %v4428 = vpow.pop %v4427
    %v4429 = vmul.f32 %v4422, 1.442695
    %v4430 = vpow.pop %v4429
    %v4431 = vsel %vm1373, %v4424, 0.0
    %4432 = vadd.xlane.f32.xlu0 %v4431
    %v4433 = vpop.xlane.xlu0 %4432
    %v4434 = vsel %vm1373, %v4426, 0.0
    %4435 = vadd.xlane.f32.xlu0 %v4434
    %v4436 = vpop.xlane.xlu0 %4435
    %v4437 = vsel %vm1373, %v4428, 0.0
    %4438 = vadd.xlane.f32.xlu0 %v4437
    %v4439 = vpop.xlane.xlu0 %4438
    %v4440 = vsel %vm1373, %v4430, 0.0
    %4441 = vadd.xlane.f32.xlu0 %v4440
    %v4442 = vpop.xlane.xlu0 %4441
    %v4443 = vrcp.pop %v4433
    %v4444 = vrcp.pop %v4436
    %v4445 = vrcp.pop %v4439
    %v4446 = vrcp.pop %v4442
    %v4447 = vmul.f32 %v4424, %v4443
    %v4448 = vmul.f32 %v4426, %v4444
    %v4449 = vmul.f32 %v4428, %v4445
    %v4450 = vmul.f32 %v4430, %v4446
    %v4451 = vpack.c.bf16 %v4448, %v4447
    %v4452 = vpack.c.bf16 %v4450, %v4449
    %v4454 = vsel %vm1373, %v4451, 0
    %v4457 = vsel %vm1373, %v4452, 0
    %4459 = vmatprep.subr.bf16.mxu0 0
    %4460 = vmatpush1.bf16.msra.mxu0 %v3807
    %4461 = vmatprep.subr.bf16.mxu0 0
    %4462 = vmatpush1.bf16.msra.mxu0 %v3808
    %4463 = vmatprep.subr.bf16.mxu0 0
    %4464 = vmatpush1.bf16.msra.mxu0 0
    %4465 = vmatprep.subr.bf16.mxu0 0
    %4466 = vmatpush1.bf16.msra.mxu0 0
    %4467 = vmatprep.subr.bf16.mxu0 0
    %4468 = vmatpush1.bf16.msra.mxu0 0
    %4469 = vmatprep.subr.bf16.mxu0 0
    %4470 = vmatpush1.bf16.msra.mxu0 0
    %4471 = vmatprep.subr.bf16.mxu0 0
    %4472 = vmatpush1.bf16.msra.mxu0 0
    %4473 = vmatprep.subr.bf16.mxu0 0
    %4474 = vmatpush1.bf16.msra.mxu0 0
    %4475 = vmatprep.subr.bf16.mxu0 0
    %4476 = vmatpush1.bf16.msra.mxu0 0
    %4477 = vmatprep.subr.bf16.mxu0 0
    %4478 = vmatpush1.bf16.msra.mxu0 0
    %4479 = vmatprep.subr.bf16.mxu0 0
    %4480 = vmatpush1.bf16.msra.mxu0 0
    %4481 = vmatprep.subr.bf16.mxu0 0
    %4482 = vmatpush1.bf16.msra.mxu0 0
    %4483 = vmatprep.subr.bf16.mxu0 0
    %4484 = vmatpush1.bf16.msra.mxu0 0
    %4485 = vmatprep.subr.bf16.mxu0 0
    %4486 = vmatpush1.bf16.msra.mxu0 0
    %4487 = vmatprep.subr.bf16.mxu0 0
    %4488 = vmatpush1.bf16.msra.mxu0 0
    %4489 = vmatprep.subr.bf16.mxu0 0
    %4490 = vmatpush1.bf16.msra.mxu0 0
    %4491 = vmatprep.mubr.bf16.mxu0 0
    %4492 = vmatmul.mubr.bf16.gmra.mrb[0].mxu0 %v4454
    %v4493 = vpop.f32.mrb[0].mxu0
    %v4494 = vadd.f32 0.0, %v4493
    %v4495 = vpop.f32.mrb[0].mxu0
    %v4496 = vpop.f32.mrb[0].mxu0
    %v4497 = vadd.f32 0.0, %v4496
    %v4498 = vpop.f32.mrb[0].mxu0
    %4499 = vmatprep.mubr.bf16.mxu0 0
    %4500 = vmatmul.mubr.bf16.gmra.mrb[0].mxu0 %v4457
    %v4501 = vpop.f32.mrb[0].mxu0
    %v4502 = vadd.f32 0.0, %v4501
    %v4503 = vpop.f32.mrb[0].mxu0
    %v4504 = vpop.f32.mrb[0].mxu0
    %v4505 = vadd.f32 0.0, %v4504
    %v4506 = vpop.f32.mrb[0].mxu0
    %4507 = vdwg.mxu0
    %v4509 = vsel %vm1373, %v4350, 0
    %v4512 = vsel %vm1373, %v4351, 0
    %4514 = vmatprep.subr.bf16.mxu0 0
    %4515 = vmatpush1.bf16.msra.mxu0 %v3587
    %4516 = vmatprep.subr.bf16.mxu0 0
    %4517 = vmatpush1.bf16.msra.mxu0 %v3588
    %4518 = vmatprep.subr.bf16.mxu0 0
    %4519 = vmatpush1.bf16.msra.mxu0 0
    %4520 = vmatprep.subr.bf16.mxu0 0
    %4521 = vmatpush1.bf16.msra.mxu0 0
    %4522 = vmatprep.subr.bf16.mxu0 0
    %4523 = vmatpush1.bf16.msra.mxu0 0
    %4524 = vmatprep.subr.bf16.mxu0 0
    %4525 = vmatpush1.bf16.msra.mxu0 0
    %4526 = vmatprep.subr.bf16.mxu0 0
    %4527 = vmatpush1.bf16.msra.mxu0 0
    %4528 = vmatprep.subr.bf16.mxu0 0
    %4529 = vmatpush1.bf16.msra.mxu0 0
    %4530 = vmatprep.subr.bf16.mxu0 0
    %4531 = vmatpush1.bf16.msra.mxu0 0
    %4532 = vmatprep.subr.bf16.mxu0 0
    %4533 = vmatpush1.bf16.msra.mxu0 0
    %4534 = vmatprep.subr.bf16.mxu0 0
    %4535 = vmatpush1.bf16.msra.mxu0 0
    %4536 = vmatprep.subr.bf16.mxu0 0
    %4537 = vmatpush1.bf16.msra.mxu0 0
    %4538 = vmatprep.subr.bf16.mxu0 0
    %4539 = vmatpush1.bf16.msra.mxu0 0
    %4540 = vmatprep.subr.bf16.mxu0 0
    %4541 = vmatpush1.bf16.msra.mxu0 0
    %4542 = vmatprep.subr.bf16.mxu0 0
    %4543 = vmatpush1.bf16.msra.mxu0 0
    %4544 = vmatprep.subr.bf16.mxu0 0
    %4545 = vmatpush1.bf16.msra.mxu0 0
    %4546 = vmatprep.mubr.bf16.mxu0 0
    %4547 = vmatmul.mubr.bf16.gmra.mrb[0].mxu0 %v4509
    %v4548 = vpop.f32.mrb[0].mxu0
    %v4549 = vadd.f32 %v4494, %v4548
    %v4550 = vpop.f32.mrb[0].mxu0
    %v4551 = vpop.f32.mrb[0].mxu0
    %v4552 = vadd.f32 %v4497, %v4551
    %v4553 = vpop.f32.mrb[0].mxu0
    %4554 = vmatprep.mubr.bf16.mxu0 0
    %4555 = vmatmul.mubr.bf16.gmra.mrb[0].mxu0 %v4512
    %v4556 = vpop.f32.mrb[0].mxu0
    %v4557 = vadd.f32 %v4502, %v4556
    %v4558 = vpop.f32.mrb[0].mxu0
    %v4559 = vpop.f32.mrb[0].mxu0
    %v4560 = vadd.f32 %v4505, %v4559
    %v4561 = vpop.f32.mrb[0].mxu0
    %4562 = vdwg.mxu0
    %v4564 = vsel %vm206, %v3917, 0
    %v4567 = vsel %vm206, %v3918, 0
    %4569 = vmatprep.subr.bf16.mxu0 0
    %4570 = vmatpush1.bf16.xpose.msra.mxu0 %v3401
    %4571 = vmatprep.subr.bf16.mxu0 0
    %4572 = vmatpush1.bf16.xpose.msra.mxu0 %v3404
    %4573 = vmatprep.subr.bf16.mxu0 0
    %4574 = vmatpush1.bf16.xpose.msra.mxu0 0
    %4575 = vmatprep.subr.bf16.mxu0 0
    %4576 = vmatpush1.bf16.xpose.msra.mxu0 0
    %4577 = vmatprep.subr.bf16.mxu0 0
    %4578 = vmatpush1.bf16.xpose.msra.mxu0 0
    %4579 = vmatprep.subr.bf16.mxu0 0
    %4580 = vmatpush1.bf16.xpose.msra.mxu0 0
    %4581 = vmatprep.subr.bf16.mxu0 0
    %4582 = vmatpush1.bf16.xpose.msra.mxu0 0
    %4583 = vmatprep.subr.bf16.mxu0 0
    %4584 = vmatpush1.bf16.xpose.msra.mxu0 0
    %4585 = vmatprep.subr.bf16.mxu0 0
    %4586 = vmatpush1.bf16.xpose.msra.mxu0 0
    %4587 = vmatprep.subr.bf16.mxu0 0
    %4588 = vmatpush1.bf16.xpose.msra.mxu0 0
    %4589 = vmatprep.subr.bf16.mxu0 0
    %4590 = vmatpush1.bf16.xpose.msra.mxu0 0
    %4591 = vmatprep.subr.bf16.mxu0 0
    %4592 = vmatpush1.bf16.xpose.msra.mxu0 0
    %4593 = vmatprep.subr.bf16.mxu0 0
    %4594 = vmatpush1.bf16.xpose.msra.mxu0 0
    %4595 = vmatprep.subr.bf16.mxu0 0
    %4596 = vmatpush1.bf16.xpose.msra.mxu0 0
    %4597 = vmatprep.subr.bf16.mxu0 0
    %4598 = vmatpush1.bf16.xpose.msra.mxu0 0
    %4599 = vmatprep.subr.bf16.mxu0 0
    %4600 = vmatpush1.bf16.xpose.msra.mxu0 0
    %4601 = vmatprep.mubr.bf16.mxu0 0
    %4602 = vmatmul.mubr.bf16.gmra.mrb[0].mxu0 %v4564
    %v4603 = vpop.f32.mrb[0].mxu0
    %v4604 = vadd.f32 %v1316, %v4603
    %v4605 = vpop.f32.mrb[0].mxu0
    %v4606 = vpop.f32.mrb[0].mxu0
    %v4607 = vadd.f32 %v1316, %v4606
    %v4608 = vpop.f32.mrb[0].mxu0
    %4609 = vmatprep.mubr.bf16.mxu0 0
    %4610 = vmatmul.mubr.bf16.gmra.mrb[0].mxu0 %v4567
    %v4611 = vpop.f32.mrb[0].mxu0
    %v4612 = vadd.f32 %v1316, %v4611
    %v4613 = vpop.f32.mrb[0].mxu0
    %v4614 = vpop.f32.mrb[0].mxu0
    %v4615 = vadd.f32 %v1316, %v4614
    %v4616 = vpop.f32.mrb[0].mxu0
    %4617 = vdwg.mxu0
    %v4618 = vsel %vm1373, %v4604, -inf
    %4619 = vmax.xlane.f32.xlu0 %v4618
    %v4620 = vpop.xlane.xlu0 %4619
    %v4621 = vsel %vm1373, %v4607, -inf
    %4622 = vmax.xlane.f32.xlu0 %v4621
    %v4623 = vpop.xlane.xlu0 %4622
    %v4624 = vsel %vm1373, %v4612, -inf
    %4625 = vmax.xlane.f32.xlu0 %v4624
    %v4626 = vpop.xlane.xlu0 %4625
    %v4627 = vsel %vm1373, %v4615, -inf
    %4628 = vmax.xlane.f32.xlu0 %v4627
    %v4629 = vpop.xlane.xlu0 %4628
    %v4630 = vsub.f32 %v4604, %v4620
    %v4631 = vsub.f32 %v4607, %v4623
    %v4632 = vsub.f32 %v4612, %v4626
    %v4633 = vsub.f32 %v4615, %v4629
    %v4634 = vmul.f32 %v4630, 1.442695
    %v4635 = vpow.pop %v4634
    %v4636 = vmul.f32 %v4631, 1.442695
    %v4637 = vpow.pop %v4636
    %v4638 = vmul.f32 %v4632, 1.442695
    %v4639 = vpow.pop %v4638
    %v4640 = vmul.f32 %v4633, 1.442695
    %v4641 = vpow.pop %v4640
    %v4642 = vsel %vm1373, %v4635, 0.0
    %4643 = vadd.xlane.f32.xlu0 %v4642
    %v4644 = vpop.xlane.xlu0 %4643
    %v4645 = vsel %vm1373, %v4637, 0.0
    %4646 = vadd.xlane.f32.xlu0 %v4645
    %v4647 = vpop.xlane.xlu0 %4646
    %v4648 = vsel %vm1373, %v4639, 0.0
    %4649 = vadd.xlane.f32.xlu0 %v4648
    %v4650 = vpop.xlane.xlu0 %4649
    %v4651 = vsel %vm1373, %v4641, 0.0
    %4652 = vadd.xlane.f32.xlu0 %v4651
    %v4653 = vpop.xlane.xlu0 %4652
    %v4654 = vrcp.pop %v4644
    %v4655 = vrcp.pop %v4647
    %v4656 = vrcp.pop %v4650
    %v4657 = vrcp.pop %v4653
    %v4658 = vmul.f32 %v4635, %v4654
    %v4659 = vmul.f32 %v4637, %v4655
    %v4660 = vmul.f32 %v4639, %v4656
    %v4661 = vmul.f32 %v4641, %v4657
    %v4662 = vpack.c.bf16 %v4659, %v4658
    %v4663 = vpack.c.bf16 %v4661, %v4660
    %v4665 = vsel %vm1373, %v4662, 0
    %v4668 = vsel %vm1373, %v4663, 0
    %4670 = vmatprep.subr.bf16.mxu0 0
    %4671 = vmatpush1.bf16.msra.mxu0 %v4027
    %4672 = vmatprep.subr.bf16.mxu0 0
    %4673 = vmatpush1.bf16.msra.mxu0 %v4028
    %4674 = vmatprep.subr.bf16.mxu0 0
    %4675 = vmatpush1.bf16.msra.mxu0 0
    %4676 = vmatprep.subr.bf16.mxu0 0
    %4677 = vmatpush1.bf16.msra.mxu0 0
    %4678 = vmatprep.subr.bf16.mxu0 0
    %4679 = vmatpush1.bf16.msra.mxu0 0
    %4680 = vmatprep.subr.bf16.mxu0 0
    %4681 = vmatpush1.bf16.msra.mxu0 0
    %4682 = vmatprep.subr.bf16.mxu0 0
    %4683 = vmatpush1.bf16.msra.mxu0 0
    %4684 = vmatprep.subr.bf16.mxu0 0
    %4685 = vmatpush1.bf16.msra.mxu0 0
    %4686 = vmatprep.subr.bf16.mxu0 0
    %4687 = vmatpush1.bf16.msra.mxu0 0
    %4688 = vmatprep.subr.bf16.mxu0 0
    %4689 = vmatpush1.bf16.msra.mxu0 0
    %4690 = vmatprep.subr.bf16.mxu0 0
    %4691 = vmatpush1.bf16.msra.mxu0 0
    %4692 = vmatprep.subr.bf16.mxu0 0
    %4693 = vmatpush1.bf16.msra.mxu0 0
    %4694 = vmatprep.subr.bf16.mxu0 0
    %4695 = vmatpush1.bf16.msra.mxu0 0
    %4696 = vmatprep.subr.bf16.mxu0 0
    %4697 = vmatpush1.bf16.msra.mxu0 0
    %4698 = vmatprep.subr.bf16.mxu0 0
    %4699 = vmatpush1.bf16.msra.mxu0 0
    %4700 = vmatprep.subr.bf16.mxu0 0
    %4701 = vmatpush1.bf16.msra.mxu0 0
    %4702 = vmatprep.mubr.bf16.mxu0 0
    %4703 = vmatmul.mubr.bf16.gmra.mrb[0].mxu0 %v4665
    %v4704 = vpop.f32.mrb[0].mxu0
    %v4705 = vadd.f32 0.0, %v4704
    %v4706 = vpop.f32.mrb[0].mxu0
    %v4707 = vpop.f32.mrb[0].mxu0
    %v4708 = vadd.f32 0.0, %v4707
    %v4709 = vpop.f32.mrb[0].mxu0
    %4710 = vmatprep.mubr.bf16.mxu0 0
    %4711 = vmatmul.mubr.bf16.gmra.mrb[0].mxu0 %v4668
    %v4712 = vpop.f32.mrb[0].mxu0
    %v4713 = vadd.f32 0.0, %v4712
    %v4714 = vpop.f32.mrb[0].mxu0
    %v4715 = vpop.f32.mrb[0].mxu0
    %v4716 = vadd.f32 0.0, %v4715
    %v4717 = vpop.f32.mrb[0].mxu0
    %4718 = vdwg.mxu0
    %v4719 = vadd.f32 %v4549, %v4705
    %v4720 = vadd.f32 %v4552, %v4708
    %v4721 = vadd.f32 %v4557, %v4713
    %v4722 = vadd.f32 %v4560, %v4716
    %v4724 = vsel %vm206, %v4137, 0
    %v4727 = vsel %vm206, %v4138, 0
    %4729 = vmatprep.subr.bf16.mxu0 0
    %4730 = vmatpush1.bf16.xpose.msra.mxu0 %v3401
    %4731 = vmatprep.subr.bf16.mxu0 0
    %4732 = vmatpush1.bf16.xpose.msra.mxu0 %v3404
    %4733 = vmatprep.subr.bf16.mxu0 0
    %4734 = vmatpush1.bf16.xpose.msra.mxu0 0
    %4735 = vmatprep.subr.bf16.mxu0 0
    %4736 = vmatpush1.bf16.xpose.msra.mxu0 0
    %4737 = vmatprep.subr.bf16.mxu0 0
    %4738 = vmatpush1.bf16.xpose.msra.mxu0 0
    %4739 = vmatprep.subr.bf16.mxu0 0
    %4740 = vmatpush1.bf16.xpose.msra.mxu0 0
    %4741 = vmatprep.subr.bf16.mxu0 0
    %4742 = vmatpush1.bf16.xpose.msra.mxu0 0
    %4743 = vmatprep.subr.bf16.mxu0 0
    %4744 = vmatpush1.bf16.xpose.msra.mxu0 0
    %4745 = vmatprep.subr.bf16.mxu0 0
    %4746 = vmatpush1.bf16.xpose.msra.mxu0 0
    %4747 = vmatprep.subr.bf16.mxu0 0
    %4748 = vmatpush1.bf16.xpose.msra.mxu0 0
    %4749 = vmatprep.subr.bf16.mxu0 0
    %4750 = vmatpush1.bf16.xpose.msra.mxu0 0
    %4751 = vmatprep.subr.bf16.mxu0 0
    %4752 = vmatpush1.bf16.xpose.msra.mxu0 0
    %4753 = vmatprep.subr.bf16.mxu0 0
    %4754 = vmatpush1.bf16.xpose.msra.mxu0 0
    %4755 = vmatprep.subr.bf16.mxu0 0
    %4756 = vmatpush1.bf16.xpose.msra.mxu0 0
    %4757 = vmatprep.subr.bf16.mxu0 0
    %4758 = vmatpush1.bf16.xpose.msra.mxu0 0
    %4759 = vmatprep.subr.bf16.mxu0 0
    %4760 = vmatpush1.bf16.xpose.msra.mxu0 0
    %4761 = vmatprep.mubr.bf16.mxu0 0
    %4762 = vmatmul.mubr.bf16.gmra.mrb[0].mxu0 %v4724
    %v4763 = vpop.f32.mrb[0].mxu0
    %v4764 = vadd.f32 %v1316, %v4763
    %v4765 = vpop.f32.mrb[0].mxu0
    %v4766 = vpop.f32.mrb[0].mxu0
    %v4767 = vadd.f32 %v1316, %v4766
    %v4768 = vpop.f32.mrb[0].mxu0
    %4769 = vmatprep.mubr.bf16.mxu0 0
    %4770 = vmatmul.mubr.bf16.gmra.mrb[0].mxu0 %v4727
    %v4771 = vpop.f32.mrb[0].mxu0
    %v4772 = vadd.f32 %v1316, %v4771
    %v4773 = vpop.f32.mrb[0].mxu0
    %v4774 = vpop.f32.mrb[0].mxu0
    %v4775 = vadd.f32 %v1316, %v4774
    %v4776 = vpop.f32.mrb[0].mxu0
    %4777 = vdwg.mxu0
    %v4778 = vsel %vm1373, %v4764, -inf
    %4779 = vmax.xlane.f32.xlu0 %v4778
    %v4780 = vpop.xlane.xlu0 %4779
    %v4781 = vsel %vm1373, %v4767, -inf
    %4782 = vmax.xlane.f32.xlu0 %v4781
    %v4783 = vpop.xlane.xlu0 %4782
    %v4784 = vsel %vm1373, %v4772, -inf
    %4785 = vmax.xlane.f32.xlu0 %v4784
    %v4786 = vpop.xlane.xlu0 %4785
    %v4787 = vsel %vm1373, %v4775, -inf
    %4788 = vmax.xlane.f32.xlu0 %v4787
    %v4789 = vpop.xlane.xlu0 %4788
    %v4790 = vsub.f32 %v4764, %v4780
    %v4791 = vsub.f32 %v4767, %v4783
    %v4792 = vsub.f32 %v4772, %v4786
    %v4793 = vsub.f32 %v4775, %v4789
    %v4794 = vmul.f32 %v4790, 1.442695
    %v4795 = vpow.pop %v4794
    %v4796 = vmul.f32 %v4791, 1.442695
    %v4797 = vpow.pop %v4796
    %v4798 = vmul.f32 %v4792, 1.442695
    %v4799 = vpow.pop %v4798
    %v4800 = vmul.f32 %v4793, 1.442695
    %v4801 = vpow.pop %v4800
    %v4802 = vsel %vm1373, %v4795, 0.0
    %4803 = vadd.xlane.f32.xlu0 %v4802
    %v4804 = vpop.xlane.xlu0 %4803
    %v4805 = vsel %vm1373, %v4797, 0.0
    %4806 = vadd.xlane.f32.xlu0 %v4805
    %v4807 = vpop.xlane.xlu0 %4806
    %v4808 = vsel %vm1373, %v4799, 0.0
    %4809 = vadd.xlane.f32.xlu0 %v4808
    %v4810 = vpop.xlane.xlu0 %4809
    %v4811 = vsel %vm1373, %v4801, 0.0
    %4812 = vadd.xlane.f32.xlu0 %v4811
    %v4813 = vpop.xlane.xlu0 %4812
    %v4814 = vrcp.pop %v4804
    %v4815 = vrcp.pop %v4807
    %v4816 = vrcp.pop %v4810
    %v4817 = vrcp.pop %v4813
    %v4818 = vmul.f32 %v4795, %v4814
    %v4819 = vmul.f32 %v4797, %v4815
    %v4820 = vmul.f32 %v4799, %v4816
    %v4821 = vmul.f32 %v4801, %v4817
    %v4822 = vpack.c.bf16 %v4819, %v4818
    %v4823 = vpack.c.bf16 %v4821, %v4820
    %v4825 = vsel %vm1373, %v4822, 0
    %v4828 = vsel %vm1373, %v4823, 0
    %4830 = vmatprep.subr.bf16.mxu0 0
    %4831 = vmatpush1.bf16.msra.mxu0 %v4247
    %4832 = vmatprep.subr.bf16.mxu0 0
    %4833 = vmatpush1.bf16.msra.mxu0 %v4248
    %4834 = vmatprep.subr.bf16.mxu0 0
    %4835 = vmatpush1.bf16.msra.mxu0 0
    %4836 = vmatprep.subr.bf16.mxu0 0
    %4837 = vmatpush1.bf16.msra.mxu0 0
    %4838 = vmatprep.subr.bf16.mxu0 0
    %4839 = vmatpush1.bf16.msra.mxu0 0
    %4840 = vmatprep.subr.bf16.mxu0 0
    %4841 = vmatpush1.bf16.msra.mxu0 0
    %4842 = vmatprep.subr.bf16.mxu0 0
    %4843 = vmatpush1.bf16.msra.mxu0 0
    %4844 = vmatprep.subr.bf16.mxu0 0
    %4845 = vmatpush1.bf16.msra.mxu0 0
    %4846 = vmatprep.subr.bf16.mxu0 0
    %4847 = vmatpush1.bf16.msra.mxu0 0
    %4848 = vmatprep.subr.bf16.mxu0 0
    %4849 = vmatpush1.bf16.msra.mxu0 0
    %4850 = vmatprep.subr.bf16.mxu0 0
    %4851 = vmatpush1.bf16.msra.mxu0 0
    %4852 = vmatprep.subr.bf16.mxu0 0
    %4853 = vmatpush1.bf16.msra.mxu0 0
    %4854 = vmatprep.subr.bf16.mxu0 0
    %4855 = vmatpush1.bf16.msra.mxu0 0
    %4856 = vmatprep.subr.bf16.mxu0 0
    %4857 = vmatpush1.bf16.msra.mxu0 0
    %4858 = vmatprep.subr.bf16.mxu0 0
    %4859 = vmatpush1.bf16.msra.mxu0 0
    %4860 = vmatprep.subr.bf16.mxu0 0
    %4861 = vmatpush1.bf16.msra.mxu0 0
    %4862 = vmatprep.mubr.bf16.mxu0 0
    %4863 = vmatmul.mubr.bf16.gmra.mrb[0].mxu0 %v4825
    %v4864 = vpop.f32.mrb[0].mxu0
    %v4865 = vadd.f32 0.0, %v4864
    %v4866 = vpop.f32.mrb[0].mxu0
    %v4867 = vpop.f32.mrb[0].mxu0
    %v4868 = vadd.f32 0.0, %v4867
    %v4869 = vpop.f32.mrb[0].mxu0
    %4870 = vmatprep.mubr.bf16.mxu0 0
    %4871 = vmatmul.mubr.bf16.gmra.mrb[0].mxu0 %v4828
    %v4872 = vpop.f32.mrb[0].mxu0
    %v4873 = vadd.f32 0.0, %v4872
    %v4874 = vpop.f32.mrb[0].mxu0
    %v4875 = vpop.f32.mrb[0].mxu0
    %v4876 = vadd.f32 0.0, %v4875
    %v4877 = vpop.f32.mrb[0].mxu0
    %4878 = vdwg.mxu0
    %v4879 = vadd.f32 %v4719, %v4865
    %v4880 = vadd.f32 %v4720, %v4868
    %v4881 = vadd.f32 %v4721, %v4873
    %v4882 = vadd.f32 %v4722, %v4876
    %v4884 = vsel %vm206, %v3479, 0
    %v4887 = vsel %vm206, %v3480, 0
    %4889 = vmatprep.subr.bf16.mxu0 0
    %4890 = vmatpush1.bf16.xpose.msra.mxu0 %v3407
    %4891 = vmatprep.subr.bf16.mxu0 0
    %4892 = vmatpush1.bf16.xpose.msra.mxu0 %v3410
    %4893 = vmatprep.subr.bf16.mxu0 0
    %4894 = vmatpush1.bf16.xpose.msra.mxu0 0
    %4895 = vmatprep.subr.bf16.mxu0 0
    %4896 = vmatpush1.bf16.xpose.msra.mxu0 0
    %4897 = vmatprep.subr.bf16.mxu0 0
    %4898 = vmatpush1.bf16.xpose.msra.mxu0 0
    %4899 = vmatprep.subr.bf16.mxu0 0
    %4900 = vmatpush1.bf16.xpose.msra.mxu0 0
    %4901 = vmatprep.subr.bf16.mxu0 0
    %4902 = vmatpush1.bf16.xpose.msra.mxu0 0
    %4903 = vmatprep.subr.bf16.mxu0 0
    %4904 = vmatpush1.bf16.xpose.msra.mxu0 0
    %4905 = vmatprep.subr.bf16.mxu0 0
    %4906 = vmatpush1.bf16.xpose.msra.mxu0 0
    %4907 = vmatprep.subr.bf16.mxu0 0
    %4908 = vmatpush1.bf16.xpose.msra.mxu0 0
    %4909 = vmatprep.subr.bf16.mxu0 0
    %4910 = vmatpush1.bf16.xpose.msra.mxu0 0
    %4911 = vmatprep.subr.bf16.mxu0 0
    %4912 = vmatpush1.bf16.xpose.msra.mxu0 0
    %4913 = vmatprep.subr.bf16.mxu0 0
    %4914 = vmatpush1.bf16.xpose.msra.mxu0 0
    %4915 = vmatprep.subr.bf16.mxu0 0
    %4916 = vmatpush1.bf16.xpose.msra.mxu0 0
    %4917 = vmatprep.subr.bf16.mxu0 0
    %4918 = vmatpush1.bf16.xpose.msra.mxu0 0
    %4919 = vmatprep.subr.bf16.mxu0 0
    %4920 = vmatpush1.bf16.xpose.msra.mxu0 0
    %4921 = vmatprep.mubr.bf16.mxu0 0
    %4922 = vmatmul.mubr.bf16.gmra.mrb[0].mxu0 %v4884
    %v4923 = vpop.f32.mrb[0].mxu0
    %v4924 = vadd.f32 %v1316, %v4923
    %v4925 = vpop.f32.mrb[0].mxu0
    %v4926 = vpop.f32.mrb[0].mxu0
    %v4927 = vadd.f32 %v1316, %v4926
    %v4928 = vpop.f32.mrb[0].mxu0
    %4929 = vmatprep.mubr.bf16.mxu0 0
    %4930 = vmatmul.mubr.bf16.gmra.mrb[0].mxu0 %v4887
    %v4931 = vpop.f32.mrb[0].mxu0
    %v4932 = vadd.f32 %v1316, %v4931
    %v4933 = vpop.f32.mrb[0].mxu0
    %v4934 = vpop.f32.mrb[0].mxu0
    %v4935 = vadd.f32 %v1316, %v4934
    %v4936 = vpop.f32.mrb[0].mxu0
    %4937 = vdwg.mxu0
    %v4938 = vsel %vm1373, %v4924, -inf
    %4939 = vmax.xlane.f32.xlu0 %v4938
    %v4940 = vpop.xlane.xlu0 %4939
    %v4941 = vsel %vm1373, %v4927, -inf
    %4942 = vmax.xlane.f32.xlu0 %v4941
    %v4943 = vpop.xlane.xlu0 %4942
    %v4944 = vsel %vm1373, %v4932, -inf
    %4945 = vmax.xlane.f32.xlu0 %v4944
    %v4946 = vpop.xlane.xlu0 %4945
    %v4947 = vsel %vm1373, %v4935, -inf
    %4948 = vmax.xlane.f32.xlu0 %v4947
    %v4949 = vpop.xlane.xlu0 %4948
    %v4950 = vsub.f32 %v4924, %v4940
    %v4951 = vsub.f32 %v4927, %v4943
    %v4952 = vsub.f32 %v4932, %v4946
    %v4953 = vsub.f32 %v4935, %v4949
    %v4954 = vmul.f32 %v4950, 1.442695
    %v4955 = vpow.pop %v4954
    %v4956 = vmul.f32 %v4951, 1.442695
    %v4957 = vpow.pop %v4956
    %v4958 = vmul.f32 %v4952, 1.442695
    %v4959 = vpow.pop %v4958
    %v4960 = vmul.f32 %v4953, 1.442695
    %v4961 = vpow.pop %v4960
    %v4962 = vsel %vm1373, %v4955, 0.0
    %4963 = vadd.xlane.f32.xlu0 %v4962
    %v4964 = vpop.xlane.xlu0 %4963
    %v4965 = vsel %vm1373, %v4957, 0.0
    %4966 = vadd.xlane.f32.xlu0 %v4965
    %v4967 = vpop.xlane.xlu0 %4966
    %v4968 = vsel %vm1373, %v4959, 0.0
    %4969 = vadd.xlane.f32.xlu0 %v4968
    %v4970 = vpop.xlane.xlu0 %4969
    %v4971 = vsel %vm1373, %v4961, 0.0
    %4972 = vadd.xlane.f32.xlu0 %v4971
    %v4973 = vpop.xlane.xlu0 %4972
    %v4974 = vrcp.pop %v4964
    %v4975 = vrcp.pop %v4967
    %v4976 = vrcp.pop %v4970
    %v4977 = vrcp.pop %v4973
    %v4978 = vmul.f32 %v4955, %v4974
    %v4979 = vmul.f32 %v4957, %v4975
    %v4980 = vmul.f32 %v4959, %v4976
    %v4981 = vmul.f32 %v4961, %v4977
    %v4982 = vpack.c.bf16 %v4979, %v4978
    %v4983 = vpack.c.bf16 %v4981, %v4980
    %v4985 = vsel %vm206, %v3699, 0
    %v4988 = vsel %vm206, %v3700, 0
    %4990 = vmatprep.subr.bf16.mxu0 0
    %4991 = vmatpush1.bf16.xpose.msra.mxu0 %v3407
    %4992 = vmatprep.subr.bf16.mxu0 0
    %4993 = vmatpush1.bf16.xpose.msra.mxu0 %v3410
    %4994 = vmatprep.subr.bf16.mxu0 0
    %4995 = vmatpush1.bf16.xpose.msra.mxu0 0
    %4996 = vmatprep.subr.bf16.mxu0 0
    %4997 = vmatpush1.bf16.xpose.msra.mxu0 0
    %4998 = vmatprep.subr.bf16.mxu0 0
    %4999 = vmatpush1.bf16.xpose.msra.mxu0 0
    %5000 = vmatprep.subr.bf16.mxu0 0
    %5001 = vmatpush1.bf16.xpose.msra.mxu0 0
    %5002 = vmatprep.subr.bf16.mxu0 0
    %5003 = vmatpush1.bf16.xpose.msra.mxu0 0
    %5004 = vmatprep.subr.bf16.mxu0 0
    %5005 = vmatpush1.bf16.xpose.msra.mxu0 0
    %5006 = vmatprep.subr.bf16.mxu0 0
    %5007 = vmatpush1.bf16.xpose.msra.mxu0 0
    %5008 = vmatprep.subr.bf16.mxu0 0
    %5009 = vmatpush1.bf16.xpose.msra.mxu0 0
    %5010 = vmatprep.subr.bf16.mxu0 0
    %5011 = vmatpush1.bf16.xpose.msra.mxu0 0
    %5012 = vmatprep.subr.bf16.mxu0 0
    %5013 = vmatpush1.bf16.xpose.msra.mxu0 0
    %5014 = vmatprep.subr.bf16.mxu0 0
    %5015 = vmatpush1.bf16.xpose.msra.mxu0 0
    %5016 = vmatprep.subr.bf16.mxu0 0
    %5017 = vmatpush1.bf16.xpose.msra.mxu0 0
    %5018 = vmatprep.subr.bf16.mxu0 0
    %5019 = vmatpush1.bf16.xpose.msra.mxu0 0
    %5020 = vmatprep.subr.bf16.mxu0 0
    %5021 = vmatpush1.bf16.xpose.msra.mxu0 0
    %5022 = vmatprep.mubr.bf16.mxu0 0
    %5023 = vmatmul.mubr.bf16.gmra.mrb[0].mxu0 %v4985
    %v5024 = vpop.f32.mrb[0].mxu0
    %v5025 = vadd.f32 %v1316, %v5024
    %v5026 = vpop.f32.mrb[0].mxu0
    %v5027 = vpop.f32.mrb[0].mxu0
    %v5028 = vadd.f32 %v1316, %v5027
    %v5029 = vpop.f32.mrb[0].mxu0
    %5030 = vmatprep.mubr.bf16.mxu0 0
    %5031 = vmatmul.mubr.bf16.gmra.mrb[0].mxu0 %v4988
    %v5032 = vpop.f32.mrb[0].mxu0
    %v5033 = vadd.f32 %v1316, %v5032
    %v5034 = vpop.f32.mrb[0].mxu0
    %v5035 = vpop.f32.mrb[0].mxu0
    %v5036 = vadd.f32 %v1316, %v5035
    %v5037 = vpop.f32.mrb[0].mxu0
    %5038 = vdwg.mxu0
    %v5039 = vsel %vm1373, %v5025, -inf
    %5040 = vmax.xlane.f32.xlu0 %v5039
    %v5041 = vpop.xlane.xlu0 %5040
    %v5042 = vsel %vm1373, %v5028, -inf
    %5043 = vmax.xlane.f32.xlu0 %v5042
    %v5044 = vpop.xlane.xlu0 %5043
    %v5045 = vsel %vm1373, %v5033, -inf
    %5046 = vmax.xlane.f32.xlu0 %v5045
    %v5047 = vpop.xlane.xlu0 %5046
    %v5048 = vsel %vm1373, %v5036, -inf
    %5049 = vmax.xlane.f32.xlu0 %v5048
    %v5050 = vpop.xlane.xlu0 %5049
    %v5051 = vsub.f32 %v5025, %v5041
    %v5052 = vsub.f32 %v5028, %v5044
    %v5053 = vsub.f32 %v5033, %v5047
    %v5054 = vsub.f32 %v5036, %v5050
    %v5055 = vmul.f32 %v5051, 1.442695
    %v5056 = vpow.pop %v5055
    %v5057 = vmul.f32 %v5052, 1.442695
    %v5058 = vpow.pop %v5057
    %v5059 = vmul.f32 %v5053, 1.442695
    %v5060 = vpow.pop %v5059
    %v5061 = vmul.f32 %v5054, 1.442695
    %v5062 = vpow.pop %v5061
    %v5063 = vsel %vm1373, %v5056, 0.0
    %5064 = vadd.xlane.f32.xlu0 %v5063
    %v5065 = vpop.xlane.xlu0 %5064
    %v5066 = vsel %vm1373, %v5058, 0.0
    %5067 = vadd.xlane.f32.xlu0 %v5066
    %v5068 = vpop.xlane.xlu0 %5067
    %v5069 = vsel %vm1373, %v5060, 0.0
    %5070 = vadd.xlane.f32.xlu0 %v5069
    %v5071 = vpop.xlane.xlu0 %5070
    %v5072 = vsel %vm1373, %v5062, 0.0
    %5073 = vadd.xlane.f32.xlu0 %v5072
    %v5074 = vpop.xlane.xlu0 %5073
    %v5075 = vrcp.pop %v5065
    %v5076 = vrcp.pop %v5068
    %v5077 = vrcp.pop %v5071
    %v5078 = vrcp.pop %v5074
    %v5079 = vmul.f32 %v5056, %v5075
    %v5080 = vmul.f32 %v5058, %v5076
    %v5081 = vmul.f32 %v5060, %v5077
    %v5082 = vmul.f32 %v5062, %v5078
    %v5083 = vpack.c.bf16 %v5080, %v5079
    %v5084 = vpack.c.bf16 %v5082, %v5081
    %v5086 = vsel %vm1373, %v5083, 0
    %v5089 = vsel %vm1373, %v5084, 0
    %5091 = vmatprep.subr.bf16.mxu0 0
    %5092 = vmatpush1.bf16.msra.mxu0 %v3809
    %5093 = vmatprep.subr.bf16.mxu0 0
    %5094 = vmatpush1.bf16.msra.mxu0 %v3810
    %5095 = vmatprep.subr.bf16.mxu0 0
    %5096 = vmatpush1.bf16.msra.mxu0 0
    %5097 = vmatprep.subr.bf16.mxu0 0
    %5098 = vmatpush1.bf16.msra.mxu0 0
    %5099 = vmatprep.subr.bf16.mxu0 0
    %5100 = vmatpush1.bf16.msra.mxu0 0
    %5101 = vmatprep.subr.bf16.mxu0 0
    %5102 = vmatpush1.bf16.msra.mxu0 0
    %5103 = vmatprep.subr.bf16.mxu0 0
    %5104 = vmatpush1.bf16.msra.mxu0 0
    %5105 = vmatprep.subr.bf16.mxu0 0
    %5106 = vmatpush1.bf16.msra.mxu0 0
    %5107 = vmatprep.subr.bf16.mxu0 0
    %5108 = vmatpush1.bf16.msra.mxu0 0
    %5109 = vmatprep.subr.bf16.mxu0 0
    %5110 = vmatpush1.bf16.msra.mxu0 0
    %5111 = vmatprep.subr.bf16.mxu0 0
    %5112 = vmatpush1.bf16.msra.mxu0 0
    %5113 = vmatprep.subr.bf16.mxu0 0
    %5114 = vmatpush1.bf16.msra.mxu0 0
    %5115 = vmatprep.subr.bf16.mxu0 0
    %5116 = vmatpush1.bf16.msra.mxu0 0
    %5117 = vmatprep.subr.bf16.mxu0 0
    %5118 = vmatpush1.bf16.msra.mxu0 0
    %5119 = vmatprep.subr.bf16.mxu0 0
    %5120 = vmatpush1.bf16.msra.mxu0 0
    %5121 = vmatprep.subr.bf16.mxu0 0
    %5122 = vmatpush1.bf16.msra.mxu0 0
    %5123 = vmatprep.mubr.bf16.mxu0 0
    %5124 = vmatmul.mubr.bf16.gmra.mrb[0].mxu0 %v5086
    %v5125 = vpop.f32.mrb[0].mxu0
    %v5126 = vadd.f32 0.0, %v5125
    %v5127 = vpop.f32.mrb[0].mxu0
    %v5128 = vpop.f32.mrb[0].mxu0
    %v5129 = vadd.f32 0.0, %v5128
    %v5130 = vpop.f32.mrb[0].mxu0
    %5131 = vmatprep.mubr.bf16.mxu0 0
    %5132 = vmatmul.mubr.bf16.gmra.mrb[0].mxu0 %v5089
    %v5133 = vpop.f32.mrb[0].mxu0
    %v5134 = vadd.f32 0.0, %v5133
    %v5135 = vpop.f32.mrb[0].mxu0
    %v5136 = vpop.f32.mrb[0].mxu0
    %v5137 = vadd.f32 0.0, %v5136
    %v5138 = vpop.f32.mrb[0].mxu0
    %5139 = vdwg.mxu0
    %v5141 = vsel %vm1373, %v4982, 0
    %v5144 = vsel %vm1373, %v4983, 0
    %5146 = vmatprep.subr.bf16.mxu0 0
    %5147 = vmatpush1.bf16.msra.mxu0 %v3589
    %5148 = vmatprep.subr.bf16.mxu0 0
    %5149 = vmatpush1.bf16.msra.mxu0 %v3590
    %5150 = vmatprep.subr.bf16.mxu0 0
    %5151 = vmatpush1.bf16.msra.mxu0 0
    %5152 = vmatprep.subr.bf16.mxu0 0
    %5153 = vmatpush1.bf16.msra.mxu0 0
    %5154 = vmatprep.subr.bf16.mxu0 0
    %5155 = vmatpush1.bf16.msra.mxu0 0
    %5156 = vmatprep.subr.bf16.mxu0 0
    %5157 = vmatpush1.bf16.msra.mxu0 0
    %5158 = vmatprep.subr.bf16.mxu0 0
    %5159 = vmatpush1.bf16.msra.mxu0 0
    %5160 = vmatprep.subr.bf16.mxu0 0
    %5161 = vmatpush1.bf16.msra.mxu0 0
    %5162 = vmatprep.subr.bf16.mxu0 0
    %5163 = vmatpush1.bf16.msra.mxu0 0
    %5164 = vmatprep.subr.bf16.mxu0 0
    %5165 = vmatpush1.bf16.msra.mxu0 0
    %5166 = vmatprep.subr.bf16.mxu0 0
    %5167 = vmatpush1.bf16.msra.mxu0 0
    %5168 = vmatprep.subr.bf16.mxu0 0
    %5169 = vmatpush1.bf16.msra.mxu0 0
    %5170 = vmatprep.subr.bf16.mxu0 0
    %5171 = vmatpush1.bf16.msra.mxu0 0
    %5172 = vmatprep.subr.bf16.mxu0 0
    %5173 = vmatpush1.bf16.msra.mxu0 0
    %5174 = vmatprep.subr.bf16.mxu0 0
    %5175 = vmatpush1.bf16.msra.mxu0 0
    %5176 = vmatprep.subr.bf16.mxu0 0
    %5177 = vmatpush1.bf16.msra.mxu0 0
    %5178 = vmatprep.mubr.bf16.mxu0 0
    %5179 = vmatmul.mubr.bf16.gmra.mrb[0].mxu0 %v5141
    %v5180 = vpop.f32.mrb[0].mxu0
    %v5181 = vadd.f32 %v5126, %v5180
    %v5182 = vpop.f32.mrb[0].mxu0
    %v5183 = vpop.f32.mrb[0].mxu0
    %v5184 = vadd.f32 %v5129, %v5183
    %v5185 = vpop.f32.mrb[0].mxu0
    %5186 = vmatprep.mubr.bf16.mxu0 0
    %5187 = vmatmul.mubr.bf16.gmra.mrb[0].mxu0 %v5144
    %v5188 = vpop.f32.mrb[0].mxu0
    %v5189 = vadd.f32 %v5134, %v5188
    %v5190 = vpop.f32.mrb[0].mxu0
    %v5191 = vpop.f32.mrb[0].mxu0
    %v5192 = vadd.f32 %v5137, %v5191
    %v5193 = vpop.f32.mrb[0].mxu0
    %5194 = vdwg.mxu0
    %v5196 = vsel %vm206, %v3919, 0
    %v5199 = vsel %vm206, %v3920, 0
    %5201 = vmatprep.subr.bf16.mxu0 0
    %5202 = vmatpush1.bf16.xpose.msra.mxu0 %v3407
    %5203 = vmatprep.subr.bf16.mxu0 0
    %5204 = vmatpush1.bf16.xpose.msra.mxu0 %v3410
    %5205 = vmatprep.subr.bf16.mxu0 0
    %5206 = vmatpush1.bf16.xpose.msra.mxu0 0
    %5207 = vmatprep.subr.bf16.mxu0 0
    %5208 = vmatpush1.bf16.xpose.msra.mxu0 0
    %5209 = vmatprep.subr.bf16.mxu0 0
    %5210 = vmatpush1.bf16.xpose.msra.mxu0 0
    %5211 = vmatprep.subr.bf16.mxu0 0
    %5212 = vmatpush1.bf16.xpose.msra.mxu0 0
    %5213 = vmatprep.subr.bf16.mxu0 0
    %5214 = vmatpush1.bf16.xpose.msra.mxu0 0
    %5215 = vmatprep.subr.bf16.mxu0 0
    %5216 = vmatpush1.bf16.xpose.msra.mxu0 0
    %5217 = vmatprep.subr.bf16.mxu0 0
    %5218 = vmatpush1.bf16.xpose.msra.mxu0 0
    %5219 = vmatprep.subr.bf16.mxu0 0
    %5220 = vmatpush1.bf16.xpose.msra.mxu0 0
    %5221 = vmatprep.subr.bf16.mxu0 0
    %5222 = vmatpush1.bf16.xpose.msra.mxu0 0
    %5223 = vmatprep.subr.bf16.mxu0 0
    %5224 = vmatpush1.bf16.xpose.msra.mxu0 0
    %5225 = vmatprep.subr.bf16.mxu0 0
    %5226 = vmatpush1.bf16.xpose.msra.mxu0 0
    %5227 = vmatprep.subr.bf16.mxu0 0
    %5228 = vmatpush1.bf16.xpose.msra.mxu0 0
    %5229 = vmatprep.subr.bf16.mxu0 0
    %5230 = vmatpush1.bf16.xpose.msra.mxu0 0
    %5231 = vmatprep.subr.bf16.mxu0 0
    %5232 = vmatpush1.bf16.xpose.msra.mxu0 0
    %5233 = vmatprep.mubr.bf16.mxu0 0
    %5234 = vmatmul.mubr.bf16.gmra.mrb[0].mxu0 %v5196
    %v5235 = vpop.f32.mrb[0].mxu0
    %v5236 = vadd.f32 %v1316, %v5235
    %v5237 = vpop.f32.mrb[0].mxu0
    %v5238 = vpop.f32.mrb[0].mxu0
    %v5239 = vadd.f32 %v1316, %v5238
    %v5240 = vpop.f32.mrb[0].mxu0
    %5241 = vmatprep.mubr.bf16.mxu0 0
    %5242 = vmatmul.mubr.bf16.gmra.mrb[0].mxu0 %v5199
    %v5243 = vpop.f32.mrb[0].mxu0
    %v5244 = vadd.f32 %v1316, %v5243
    %v5245 = vpop.f32.mrb[0].mxu0
    %v5246 = vpop.f32.mrb[0].mxu0
    %v5247 = vadd.f32 %v1316, %v5246
    %v5248 = vpop.f32.mrb[0].mxu0
    %5249 = vdwg.mxu0
    %v5250 = vsel %vm1373, %v5236, -inf
    %5251 = vmax.xlane.f32.xlu0 %v5250
    %v5252 = vpop.xlane.xlu0 %5251
    %v5253 = vsel %vm1373, %v5239, -inf
    %5254 = vmax.xlane.f32.xlu0 %v5253
    %v5255 = vpop.xlane.xlu0 %5254
    %v5256 = vsel %vm1373, %v5244, -inf
    %5257 = vmax.xlane.f32.xlu0 %v5256
    %v5258 = vpop.xlane.xlu0 %5257
    %v5259 = vsel %vm1373, %v5247, -inf
    %5260 = vmax.xlane.f32.xlu0 %v5259
    %v5261 = vpop.xlane.xlu0 %5260
    %v5262 = vsub.f32 %v5236, %v5252
    %v5263 = vsub.f32 %v5239, %v5255
    %v5264 = vsub.f32 %v5244, %v5258
    %v5265 = vsub.f32 %v5247, %v5261
    %v5266 = vmul.f32 %v5262, 1.442695
    %v5267 = vpow.pop %v5266
    %v5268 = vmul.f32 %v5263, 1.442695
    %v5269 = vpow.pop %v5268
    %v5270 = vmul.f32 %v5264, 1.442695
    %v5271 = vpow.pop %v5270
    %v5272 = vmul.f32 %v5265, 1.442695
    %v5273 = vpow.pop %v5272
    %v5274 = vsel %vm1373, %v5267, 0.0
    %5275 = vadd.xlane.f32.xlu0 %v5274
    %v5276 = vpop.xlane.xlu0 %5275
    %v5277 = vsel %vm1373, %v5269, 0.0
    %5278 = vadd.xlane.f32.xlu0 %v5277
    %v5279 = vpop.xlane.xlu0 %5278
    %v5280 = vsel %vm1373, %v5271, 0.0
    %5281 = vadd.xlane.f32.xlu0 %v5280
    %v5282 = vpop.xlane.xlu0 %5281
    %v5283 = vsel %vm1373, %v5273, 0.0
    %5284 = vadd.xlane.f32.xlu0 %v5283
    %v5285 = vpop.xlane.xlu0 %5284
    %v5286 = vrcp.pop %v5276
    %v5287 = vrcp.pop %v5279
    %v5288 = vrcp.pop %v5282
    %v5289 = vrcp.pop %v5285
    %v5290 = vmul.f32 %v5267, %v5286
    %v5291 = vmul.f32 %v5269, %v5287
    %v5292 = vmul.f32 %v5271, %v5288
    %v5293 = vmul.f32 %v5273, %v5289
    %v5294 = vpack.c.bf16 %v5291, %v5290
    %v5295 = vpack.c.bf16 %v5293, %v5292
    %v5297 = vsel %vm1373, %v5294, 0
    %v5300 = vsel %vm1373, %v5295, 0
    %5302 = vmatprep.subr.bf16.mxu0 0
    %5303 = vmatpush1.bf16.msra.mxu0 %v4029
    %5304 = vmatprep.subr.bf16.mxu0 0
    %5305 = vmatpush1.bf16.msra.mxu0 %v4030
    %5306 = vmatprep.subr.bf16.mxu0 0
    %5307 = vmatpush1.bf16.msra.mxu0 0
    %5308 = vmatprep.subr.bf16.mxu0 0
    %5309 = vmatpush1.bf16.msra.mxu0 0
    %5310 = vmatprep.subr.bf16.mxu0 0
    %5311 = vmatpush1.bf16.msra.mxu0 0
    %5312 = vmatprep.subr.bf16.mxu0 0
    %5313 = vmatpush1.bf16.msra.mxu0 0
    %5314 = vmatprep.subr.bf16.mxu0 0
    %5315 = vmatpush1.bf16.msra.mxu0 0
    %5316 = vmatprep.subr.bf16.mxu0 0
    %5317 = vmatpush1.bf16.msra.mxu0 0
    %5318 = vmatprep.subr.bf16.mxu0 0
    %5319 = vmatpush1.bf16.msra.mxu0 0
    %5320 = vmatprep.subr.bf16.mxu0 0
    %5321 = vmatpush1.bf16.msra.mxu0 0
    %5322 = vmatprep.subr.bf16.mxu0 0
    %5323 = vmatpush1.bf16.msra.mxu0 0
    %5324 = vmatprep.subr.bf16.mxu0 0
    %5325 = vmatpush1.bf16.msra.mxu0 0
    %5326 = vmatprep.subr.bf16.mxu0 0
    %5327 = vmatpush1.bf16.msra.mxu0 0
    %5328 = vmatprep.subr.bf16.mxu0 0
    %5329 = vmatpush1.bf16.msra.mxu0 0
    %5330 = vmatprep.subr.bf16.mxu0 0
    %5331 = vmatpush1.bf16.msra.mxu0 0
    %5332 = vmatprep.subr.bf16.mxu0 0
    %5333 = vmatpush1.bf16.msra.mxu0 0
    %5334 = vmatprep.mubr.bf16.mxu0 0
    %5335 = vmatmul.mubr.bf16.gmra.mrb[0].mxu0 %v5297
    %v5336 = vpop.f32.mrb[0].mxu0
    %v5337 = vadd.f32 0.0, %v5336
    %v5338 = vpop.f32.mrb[0].mxu0
    %v5339 = vpop.f32.mrb[0].mxu0
    %v5340 = vadd.f32 0.0, %v5339
    %v5341 = vpop.f32.mrb[0].mxu0
    %5342 = vmatprep.mubr.bf16.mxu0 0
    %5343 = vmatmul.mubr.bf16.gmra.mrb[0].mxu0 %v5300
    %v5344 = vpop.f32.mrb[0].mxu0
    %v5345 = vadd.f32 0.0, %v5344
    %v5346 = vpop.f32.mrb[0].mxu0
    %v5347 = vpop.f32.mrb[0].mxu0
    %v5348 = vadd.f32 0.0, %v5347
    %v5349 = vpop.f32.mrb[0].mxu0
    %5350 = vdwg.mxu0
    %v5351 = vadd.f32 %v5181, %v5337
    %v5352 = vadd.f32 %v5184, %v5340
    %v5353 = vadd.f32 %v5189, %v5345
    %v5354 = vadd.f32 %v5192, %v5348
    %v5356 = vsel %vm206, %v4139, 0
    %v5359 = vsel %vm206, %v4140, 0
    %5361 = vmatprep.subr.bf16.mxu0 0
    %5362 = vmatpush1.bf16.xpose.msra.mxu0 %v3407
    %5363 = vmatprep.subr.bf16.mxu0 0
    %5364 = vmatpush1.bf16.xpose.msra.mxu0 %v3410
    %5365 = vmatprep.subr.bf16.mxu0 0
    %5366 = vmatpush1.bf16.xpose.msra.mxu0 0
    %5367 = vmatprep.subr.bf16.mxu0 0
    %5368 = vmatpush1.bf16.xpose.msra.mxu0 0
    %5369 = vmatprep.subr.bf16.mxu0 0
    %5370 = vmatpush1.bf16.xpose.msra.mxu0 0
    %5371 = vmatprep.subr.bf16.mxu0 0
    %5372 = vmatpush1.bf16.xpose.msra.mxu0 0
    %5373 = vmatprep.subr.bf16.mxu0 0
    %5374 = vmatpush1.bf16.xpose.msra.mxu0 0
    %5375 = vmatprep.subr.bf16.mxu0 0
    %5376 = vmatpush1.bf16.xpose.msra.mxu0 0
    %5377 = vmatprep.subr.bf16.mxu0 0
    %5378 = vmatpush1.bf16.xpose.msra.mxu0 0
    %5379 = vmatprep.subr.bf16.mxu0 0
    %5380 = vmatpush1.bf16.xpose.msra.mxu0 0
    %5381 = vmatprep.subr.bf16.mxu0 0
    %5382 = vmatpush1.bf16.xpose.msra.mxu0 0
    %5383 = vmatprep.subr.bf16.mxu0 0
    %5384 = vmatpush1.bf16.xpose.msra.mxu0 0
    %5385 = vmatprep.subr.bf16.mxu0 0
    %5386 = vmatpush1.bf16.xpose.msra.mxu0 0
    %5387 = vmatprep.subr.bf16.mxu0 0
    %5388 = vmatpush1.bf16.xpose.msra.mxu0 0
    %5389 = vmatprep.subr.bf16.mxu0 0
    %5390 = vmatpush1.bf16.xpose.msra.mxu0 0
    %5391 = vmatprep.subr.bf16.mxu0 0
    %5392 = vmatpush1.bf16.xpose.msra.mxu0 0
    %5393 = vmatprep.mubr.bf16.mxu0 0
    %5394 = vmatmul.mubr.bf16.gmra.mrb[0].mxu0 %v5356
    %v5395 = vpop.f32.mrb[0].mxu0
    %v5396 = vadd.f32 %v1316, %v5395
    %v5397 = vpop.f32.mrb[0].mxu0
    %v5398 = vpop.f32.mrb[0].mxu0
    %v5399 = vadd.f32 %v1316, %v5398
    %v5400 = vpop.f32.mrb[0].mxu0
    %5401 = vmatprep.mubr.bf16.mxu0 0
    %5402 = vmatmul.mubr.bf16.gmra.mrb[0].mxu0 %v5359
    %v5403 = vpop.f32.mrb[0].mxu0
    %v5404 = vadd.f32 %v1316, %v5403
    %v5405 = vpop.f32.mrb[0].mxu0
    %v5406 = vpop.f32.mrb[0].mxu0
    %v5407 = vadd.f32 %v1316, %v5406
    %v5408 = vpop.f32.mrb[0].mxu0
    %5409 = vdwg.mxu0
    %v5410 = vsel %vm1373, %v5396, -inf
    %5411 = vmax.xlane.f32.xlu0 %v5410
    %v5412 = vpop.xlane.xlu0 %5411
    %v5413 = vsel %vm1373, %v5399, -inf
    %5414 = vmax.xlane.f32.xlu0 %v5413
    %v5415 = vpop.xlane.xlu0 %5414
    %v5416 = vsel %vm1373, %v5404, -inf
    %5417 = vmax.xlane.f32.xlu0 %v5416
    %v5418 = vpop.xlane.xlu0 %5417
    %v5419 = vsel %vm1373, %v5407, -inf
    %5420 = vmax.xlane.f32.xlu0 %v5419
    %v5421 = vpop.xlane.xlu0 %5420
    %v5422 = vsub.f32 %v5396, %v5412
    %v5423 = vsub.f32 %v5399, %v5415
    %v5424 = vsub.f32 %v5404, %v5418
    %v5425 = vsub.f32 %v5407, %v5421
    %v5426 = vmul.f32 %v5422, 1.442695
    %v5427 = vpow.pop %v5426
    %v5428 = vmul.f32 %v5423, 1.442695
    %v5429 = vpow.pop %v5428
    %v5430 = vmul.f32 %v5424, 1.442695
    %v5431 = vpow.pop %v5430
    %v5432 = vmul.f32 %v5425, 1.442695
    %v5433 = vpow.pop %v5432
    %v5434 = vsel %vm1373, %v5427, 0.0
    %5435 = vadd.xlane.f32.xlu0 %v5434
    %v5436 = vpop.xlane.xlu0 %5435
    %v5437 = vsel %vm1373, %v5429, 0.0
    %5438 = vadd.xlane.f32.xlu0 %v5437
    %v5439 = vpop.xlane.xlu0 %5438
    %v5440 = vsel %vm1373, %v5431, 0.0
    %5441 = vadd.xlane.f32.xlu0 %v5440
    %v5442 = vpop.xlane.xlu0 %5441
    %v5443 = vsel %vm1373, %v5433, 0.0
    %5444 = vadd.xlane.f32.xlu0 %v5443
    %v5445 = vpop.xlane.xlu0 %5444
    %v5446 = vrcp.pop %v5436
    %v5447 = vrcp.pop %v5439
    %v5448 = vrcp.pop %v5442
    %v5449 = vrcp.pop %v5445
    %v5450 = vmul.f32 %v5427, %v5446
    %v5451 = vmul.f32 %v5429, %v5447
    %v5452 = vmul.f32 %v5431, %v5448
    %v5453 = vmul.f32 %v5433, %v5449
    %v5454 = vpack.c.bf16 %v5451, %v5450
    %v5455 = vpack.c.bf16 %v5453, %v5452
    %v5457 = vsel %vm1373, %v5454, 0
    %v5460 = vsel %vm1373, %v5455, 0
    %5462 = vmatprep.subr.bf16.mxu0 0
    %5463 = vmatpush1.bf16.msra.mxu0 %v4249
    %5464 = vmatprep.subr.bf16.mxu0 0
    %5465 = vmatpush1.bf16.msra.mxu0 %v4250
    %5466 = vmatprep.subr.bf16.mxu0 0
    %5467 = vmatpush1.bf16.msra.mxu0 0
    %5468 = vmatprep.subr.bf16.mxu0 0
    %5469 = vmatpush1.bf16.msra.mxu0 0
    %5470 = vmatprep.subr.bf16.mxu0 0
    %5471 = vmatpush1.bf16.msra.mxu0 0
    %5472 = vmatprep.subr.bf16.mxu0 0
    %5473 = vmatpush1.bf16.msra.mxu0 0
    %5474 = vmatprep.subr.bf16.mxu0 0
    %5475 = vmatpush1.bf16.msra.mxu0 0
    %5476 = vmatprep.subr.bf16.mxu0 0
    %5477 = vmatpush1.bf16.msra.mxu0 0
    %5478 = vmatprep.subr.bf16.mxu0 0
    %5479 = vmatpush1.bf16.msra.mxu0 0
    %5480 = vmatprep.subr.bf16.mxu0 0
    %5481 = vmatpush1.bf16.msra.mxu0 0
    %5482 = vmatprep.subr.bf16.mxu0 0
    %5483 = vmatpush1.bf16.msra.mxu0 0
    %5484 = vmatprep.subr.bf16.mxu0 0
    %5485 = vmatpush1.bf16.msra.mxu0 0
    %5486 = vmatprep.subr.bf16.mxu0 0
    %5487 = vmatpush1.bf16.msra.mxu0 0
    %5488 = vmatprep.subr.bf16.mxu0 0
    %5489 = vmatpush1.bf16.msra.mxu0 0
    %5490 = vmatprep.subr.bf16.mxu0 0
    %5491 = vmatpush1.bf16.msra.mxu0 0
    %5492 = vmatprep.subr.bf16.mxu0 0
    %5493 = vmatpush1.bf16.msra.mxu0 0
    %5494 = vmatprep.mubr.bf16.mxu0 0
    %5495 = vmatmul.mubr.bf16.gmra.mrb[0].mxu0 %v5457
    %v5496 = vpop.f32.mrb[0].mxu0
    %v5497 = vadd.f32 0.0, %v5496
    %v5498 = vpop.f32.mrb[0].mxu0
    %v5499 = vpop.f32.mrb[0].mxu0
    %v5500 = vadd.f32 0.0, %v5499
    %v5501 = vpop.f32.mrb[0].mxu0
    %5502 = vmatprep.mubr.bf16.mxu0 0
    %5503 = vmatmul.mubr.bf16.gmra.mrb[0].mxu0 %v5460
    %v5504 = vpop.f32.mrb[0].mxu0
    %v5505 = vadd.f32 0.0, %v5504
    %v5506 = vpop.f32.mrb[0].mxu0
    %v5507 = vpop.f32.mrb[0].mxu0
    %v5508 = vadd.f32 0.0, %v5507
    %v5509 = vpop.f32.mrb[0].mxu0
    %5510 = vdwg.mxu0
    %v5511 = vadd.f32 %v5351, %v5497
    %v5512 = vadd.f32 %v5352, %v5500
    %v5513 = vadd.f32 %v5353, %v5505
    %v5514 = vadd.f32 %v5354, %v5508
    %v5515 = vadd.f32 %v3211, %v4879
    %v5516 = vadd.f32 %v3212, %v4880
    %v5517 = vadd.f32 %v3213, %v4881
    %v5518 = vadd.f32 %v3214, %v4882
    %v5519 = vadd.f32 %v3215, %v5511
    %v5520 = vadd.f32 %v3216, %v5512
    %v5521 = vadd.f32 %v3217, %v5513
    %v5522 = vadd.f32 %v3218, %v5514
    %s5523 = scalar_lea.vmem %s10, 1
    %v5524 = vld [vmem:[%s5523] sm:$0x1]
    %v5526 = vlaneseq
    %v5527 = vshrl.u32 %v5526, 7
    %v5528 = vsub.s32 0, %v5527
    %v5529 = vrot.slane %v5524, %v5528
    %v5531 = vadd.f32 %v5515, %v5529
    %v5532 = vadd.f32 %v5516, %v5529
    %v5533 = vadd.f32 %v5517, %v5529
    %v5534 = vadd.f32 %v5518, %v5529
    %v5535 = vadd.f32 %v5519, %v5529
    %v5536 = vadd.f32 %v5520, %v5529
    %v5537 = vadd.f32 %v5521, %v5529
    %v5538 = vadd.f32 %v5522, %v5529
    %v5539 = vsel %vm206, %v5531, 0.0
    %5540 = vadd.xlane.f32.xlu0 %v5539
    %v5541 = vpop.xlane.xlu0 %5540
    %v5542 = vsel %vm206, %v5532, 0.0
    %5543 = vadd.xlane.f32.xlu0 %v5542
    %v5544 = vpop.xlane.xlu0 %5543
    %v5545 = vsel %vm206, %v5533, 0.0
    %5546 = vadd.xlane.f32.xlu0 %v5545
    %v5547 = vpop.xlane.xlu0 %5546
    %v5548 = vsel %vm206, %v5534, 0.0
    %5549 = vadd.xlane.f32.xlu0 %v5548
    %v5550 = vpop.xlane.xlu0 %5549
    %v5551 = vsel %vm206, %v5535, 0.0
    %5552 = vadd.xlane.f32.xlu0 %v5551
    %v5553 = vpop.xlane.xlu0 %5552
    %v5554 = vsel %vm206, %v5536, 0.0
    %5555 = vadd.xlane.f32.xlu0 %v5554
    %v5556 = vpop.xlane.xlu0 %5555
    %v5557 = vsel %vm206, %v5537, 0.0
    %5558 = vadd.xlane.f32.xlu0 %v5557
    %v5559 = vpop.xlane.xlu0 %5558
    %v5560 = vsel %vm206, %v5538, 0.0
    %5561 = vadd.xlane.f32.xlu0 %v5560
    %v5562 = vpop.xlane.xlu0 %5561
    %v5563 = vmul.f32 %v5541, %v311
    %v5564 = vmul.f32 %v5544, %v311
    %v5565 = vmul.f32 %v5547, %v311
    %v5566 = vmul.f32 %v5550, %v311
    %v5567 = vmul.f32 %v5553, %v311
    %v5568 = vmul.f32 %v5556, %v311
    %v5569 = vmul.f32 %v5559, %v311
    %v5570 = vmul.f32 %v5562, %v311
    %v5571 = vsub.f32 %v5531, %v5563
    %v5572 = vsub.f32 %v5532, %v5564
    %v5573 = vsub.f32 %v5533, %v5565
    %v5574 = vsub.f32 %v5534, %v5566
    %v5575 = vsub.f32 %v5535, %v5567
    %v5576 = vsub.f32 %v5536, %v5568
    %v5577 = vsub.f32 %v5537, %v5569
    %v5578 = vsub.f32 %v5538, %v5570
    %v5579 = vmul.f32 %v5571, %v5571
    %v5580 = vmul.f32 %v5572, %v5572
    %v5581 = vmul.f32 %v5573, %v5573
    %v5582 = vmul.f32 %v5574, %v5574
    %v5583 = vmul.f32 %v5575, %v5575
    %v5584 = vmul.f32 %v5576, %v5576
    %v5585 = vmul.f32 %v5577, %v5577
    %v5586 = vmul.f32 %v5578, %v5578
    %v5587 = vsel %vm206, %v5579, 0.0
    %5588 = vadd.xlane.f32.xlu0 %v5587
    %v5589 = vpop.xlane.xlu0 %5588
    %v5590 = vsel %vm206, %v5580, 0.0
    %5591 = vadd.xlane.f32.xlu0 %v5590
    %v5592 = vpop.xlane.xlu0 %5591
    %v5593 = vsel %vm206, %v5581, 0.0
    %5594 = vadd.xlane.f32.xlu0 %v5593
    %v5595 = vpop.xlane.xlu0 %5594
    %v5596 = vsel %vm206, %v5582, 0.0
    %5597 = vadd.xlane.f32.xlu0 %v5596
    %v5598 = vpop.xlane.xlu0 %5597
    %v5599 = vsel %vm206, %v5583, 0.0
    %5600 = vadd.xlane.f32.xlu0 %v5599
    %v5601 = vpop.xlane.xlu0 %5600
    %v5602 = vsel %vm206, %v5584, 0.0
    %5603 = vadd.xlane.f32.xlu0 %v5602
    %v5604 = vpop.xlane.xlu0 %5603
    %v5605 = vsel %vm206, %v5585, 0.0
    %5606 = vadd.xlane.f32.xlu0 %v5605
    %v5607 = vpop.xlane.xlu0 %5606
    %v5608 = vsel %vm206, %v5586, 0.0
    %5609 = vadd.xlane.f32.xlu0 %v5608
    %v5610 = vpop.xlane.xlu0 %5609
    %v5611 = vmul.f32 %v5589, %v311
    %v5612 = vmul.f32 %v5592, %v311
    %v5613 = vmul.f32 %v5595, %v311
    %v5614 = vmul.f32 %v5598, %v311
    %v5615 = vmul.f32 %v5601, %v311
    %v5616 = vmul.f32 %v5604, %v311
    %v5617 = vmul.f32 %v5607, %v311
    %v5618 = vmul.f32 %v5610, %v311
    %v5619 = vadd.f32 %v5611, 1e-06
    %v5620 = vadd.f32 %v5612, 1e-06
    %v5621 = vadd.f32 %v5613, 1e-06
    %v5622 = vadd.f32 %v5614, 1e-06
    %v5623 = vadd.f32 %v5615, 1e-06
    %v5624 = vadd.f32 %v5616, 1e-06
    %v5625 = vadd.f32 %v5617, 1e-06
    %v5626 = vadd.f32 %v5618, 1e-06
    %v5627 = vrsqrt.pop %v5619
    %v5628 = vrsqrt.pop %v5620
    %v5629 = vrsqrt.pop %v5621
    %v5630 = vrsqrt.pop %v5622
    %v5631 = vrsqrt.pop %v5623
    %v5632 = vrsqrt.pop %v5624
    %v5633 = vrsqrt.pop %v5625
    %v5634 = vrsqrt.pop %v5626
    %v5635 = vmul.f32 %v5571, %v5627
    %v5636 = vmul.f32 %v5572, %v5628
    %v5637 = vmul.f32 %v5573, %v5629
    %v5638 = vmul.f32 %v5574, %v5630
    %v5639 = vmul.f32 %v5575, %v5631
    %v5640 = vmul.f32 %v5576, %v5632
    %v5641 = vmul.f32 %v5577, %v5633
    %v5642 = vmul.f32 %v5578, %v5634
    %v5643 = vpack.c.bf16 %v5636, %v5635
    %v5644 = vpack.c.bf16 %v5638, %v5637
    %v5645 = vpack.c.bf16 %v5640, %v5639
    %v5646 = vpack.c.bf16 %v5642, %v5641
    %s5647 = scalar_lea.vmem %s11, 64
    %v5648 = vld [vmem:[%s5647] sm:$0xff]
    %v5649 = vld [vmem:[%s5647 + $0x8] sm:$0xff]
    %v5650 = vld [vmem:[%s5647 + $0x10] sm:$0xff]
    %v5651 = vld [vmem:[%s5647 + $0x18] sm:$0xff]
    %v5652 = vld [vmem:[%s5647 + $0x20] sm:$0xff]
    %v5653 = vld [vmem:[%s5647 + $0x28] sm:$0xff]
    %v5654 = vld [vmem:[%s5647 + $0x30] sm:$0xff]
    %v5655 = vld [vmem:[%s5647 + $0x38] sm:$0xff]
    %s5656 = scalar_lea.vmem %s12, 2
    %v5657 = vld [vmem:[%s5656] sm:$0x3]
    %v5659 = vlaneseq
    %v5660 = vshrl.u32 %v5659, 7
    %v5661 = vsub.s32 0, %v5660
    %v5662 = vrot.slane %v5657, %v5661
    %v5663 = vlaneseq
    %v5664 = vshrl.u32 %v5663, 7
    %v5665 = vsub.s32 1, %v5664
    %v5666 = vrot.slane %v5657, %v5665
    %v5677 = vunpack.c.l.b16 %v5648
    %v5678 = vunpack.c.h.b16 %v5648
    %v5679 = vunpack.c.l.b16 %v5649
    %v5680 = vunpack.c.h.b16 %v5649
    %v5681 = vunpack.c.l.b16 %v5650
    %v5682 = vunpack.c.h.b16 %v5650
    %v5683 = vunpack.c.l.b16 %v5651
    %v5684 = vunpack.c.h.b16 %v5651
    %v5685 = vunpack.c.l.b16 %v5652
    %v5686 = vunpack.c.h.b16 %v5652
    %v5687 = vunpack.c.l.b16 %v5653
    %v5688 = vunpack.c.h.b16 %v5653
    %v5689 = vunpack.c.l.b16 %v5654
    %v5690 = vunpack.c.h.b16 %v5654
    %v5691 = vunpack.c.l.b16 %v5655
    %v5692 = vunpack.c.h.b16 %v5655
    %v5693 = vpack.c.b16 %v5679, %v5677
    %v5694 = vpack.c.b16 %v5680, %v5678
    %v5695 = vpack.c.b16 %v5683, %v5681
    %v5696 = vpack.c.b16 %v5684, %v5682
    %v5697 = vpack.c.b16 %v5687, %v5685
    %v5698 = vpack.c.b16 %v5688, %v5686
    %v5699 = vpack.c.b16 %v5691, %v5689
    %v5700 = vpack.c.b16 %v5692, %v5690
    %v5710 = vsel %vm206, %v5643, 0
    %v5713 = vsel %vm206, %v5644, 0
    %v5716 = vsel %vm206, %v5645, 0
    %v5719 = vsel %vm206, %v5646, 0
    %5721 = vmatprep.subr.bf16.mxu0 %v5694
    %5722 = vmatpush1.bf16.msra.mxu0 %v5693
    %5723 = vmatprep.subr.bf16.mxu0 %v5696
    %5724 = vmatpush1.bf16.msra.mxu0 %v5695
    %5725 = vmatprep.subr.bf16.mxu0 %v5698
    %5726 = vmatpush1.bf16.msra.mxu0 %v5697
    %5727 = vmatprep.subr.bf16.mxu0 %v5700
    %5728 = vmatpush1.bf16.msra.mxu0 %v5699
    %5729 = vmatprep.subr.bf16.mxu0 0
    %5730 = vmatpush1.bf16.msra.mxu0 0
    %5731 = vmatprep.subr.bf16.mxu0 0
    %5732 = vmatpush1.bf16.msra.mxu0 0
    %5733 = vmatprep.subr.bf16.mxu0 0
    %5734 = vmatpush1.bf16.msra.mxu0 0
    %5735 = vmatprep.subr.bf16.mxu0 0
    %5736 = vmatpush1.bf16.msra.mxu0 0
    %5737 = vmatprep.subr.bf16.mxu0 0
    %5738 = vmatpush1.bf16.msra.mxu0 0
    %5739 = vmatprep.subr.bf16.mxu0 0
    %5740 = vmatpush1.bf16.msra.mxu0 0
    %5741 = vmatprep.subr.bf16.mxu0 0
    %5742 = vmatpush1.bf16.msra.mxu0 0
    %5743 = vmatprep.subr.bf16.mxu0 0
    %5744 = vmatpush1.bf16.msra.mxu0 0
    %5745 = vmatprep.subr.bf16.mxu0 0
    %5746 = vmatpush1.bf16.msra.mxu0 0
    %5747 = vmatprep.subr.bf16.mxu0 0
    %5748 = vmatpush1.bf16.msra.mxu0 0
    %5749 = vmatprep.subr.bf16.mxu0 0
    %5750 = vmatpush1.bf16.msra.mxu0 0
    %5751 = vmatprep.subr.bf16.mxu0 0
    %5752 = vmatpush1.bf16.msra.mxu0 0
    %5753 = vmatprep.mubr.bf16.mxu0 0
    %5754 = vmatmul.mubr.bf16.gmra.mrb[0].mxu0 %v5710
    %v5755 = vpop.f32.mrb[0].mxu0
    %v5756 = vadd.f32 %v5662, %v5755
    %v5757 = vpop.f32.mrb[0].mxu0
    %v5758 = vadd.f32 %v5666, %v5757
    %v5759 = vpop.f32.mrb[0].mxu0
    %v5760 = vadd.f32 %v5662, %v5759
    %v5761 = vpop.f32.mrb[0].mxu0
    %v5762 = vadd.f32 %v5666, %v5761
    %5763 = vmatprep.mubr.bf16.mxu0 0
    %5764 = vmatmul.mubr.bf16.gmra.mrb[0].mxu0 %v5713
    %v5765 = vpop.f32.mrb[0].mxu0
    %v5766 = vadd.f32 %v5662, %v5765
    %v5767 = vpop.f32.mrb[0].mxu0
    %v5768 = vadd.f32 %v5666, %v5767
    %v5769 = vpop.f32.mrb[0].mxu0
    %v5770 = vadd.f32 %v5662, %v5769
    %v5771 = vpop.f32.mrb[0].mxu0
    %v5772 = vadd.f32 %v5666, %v5771
    %5773 = vmatprep.mubr.bf16.mxu0 0
    %5774 = vmatmul.mubr.bf16.gmra.mrb[0].mxu0 %v5716
    %v5775 = vpop.f32.mrb[0].mxu0
    %v5776 = vadd.f32 %v5662, %v5775
    %v5777 = vpop.f32.mrb[0].mxu0
    %v5778 = vadd.f32 %v5666, %v5777
    %v5779 = vpop.f32.mrb[0].mxu0
    %v5780 = vadd.f32 %v5662, %v5779
    %v5781 = vpop.f32.mrb[0].mxu0
    %v5782 = vadd.f32 %v5666, %v5781
    %5783 = vmatprep.mubr.bf16.mxu0 0
    %5784 = vmatmul.mubr.bf16.gmra.mrb[0].mxu0 %v5719
    %v5785 = vpop.f32.mrb[0].mxu0
    %v5786 = vadd.f32 %v5662, %v5785
    %v5787 = vpop.f32.mrb[0].mxu0
    %v5788 = vadd.f32 %v5666, %v5787
    %v5789 = vpop.f32.mrb[0].mxu0
    %v5790 = vadd.f32 %v5662, %v5789
    %v5791 = vpop.f32.mrb[0].mxu0
    %v5792 = vadd.f32 %v5666, %v5791
    %5793 = vdwg.mxu0
    %v5794 = vmul.f32 %v5756, 0.044715
    %v5795 = vmul.f32 %v5758, 0.044715
    %v5796 = vmul.f32 %v5760, 0.044715
    %v5797 = vmul.f32 %v5762, 0.044715
    %v5798 = vmul.f32 %v5766, 0.044715
    %v5799 = vmul.f32 %v5768, 0.044715
    %v5800 = vmul.f32 %v5770, 0.044715
    %v5801 = vmul.f32 %v5772, 0.044715
    %v5802 = vmul.f32 %v5776, 0.044715
    %v5803 = vmul.f32 %v5778, 0.044715
    %v5804 = vmul.f32 %v5780, 0.044715
    %v5805 = vmul.f32 %v5782, 0.044715
    %v5806 = vmul.f32 %v5786, 0.044715
    %v5807 = vmul.f32 %v5788, 0.044715
    %v5808 = vmul.f32 %v5790, 0.044715
    %v5809 = vmul.f32 %v5792, 0.044715
    %v5810 = vmul.f32 %v5794, %v5756
    %v5811 = vmul.f32 %v5795, %v5758
    %v5812 = vmul.f32 %v5796, %v5760
    %v5813 = vmul.f32 %v5797, %v5762
    %v5814 = vmul.f32 %v5798, %v5766
    %v5815 = vmul.f32 %v5799, %v5768
    %v5816 = vmul.f32 %v5800, %v5770
    %v5817 = vmul.f32 %v5801, %v5772
    %v5818 = vmul.f32 %v5802, %v5776
    %v5819 = vmul.f32 %v5803, %v5778
    %v5820 = vmul.f32 %v5804, %v5780
    %v5821 = vmul.f32 %v5805, %v5782
    %v5822 = vmul.f32 %v5806, %v5786
    %v5823 = vmul.f32 %v5807, %v5788
    %v5824 = vmul.f32 %v5808, %v5790
    %v5825 = vmul.f32 %v5809, %v5792
    %v5826 = vmul.f32 %v5810, %v5756
    %v5827 = vmul.f32 %v5811, %v5758
    %v5828 = vmul.f32 %v5812, %v5760
    %v5829 = vmul.f32 %v5813, %v5762
    %v5830 = vmul.f32 %v5814, %v5766
    %v5831 = vmul.f32 %v5815, %v5768
    %v5832 = vmul.f32 %v5816, %v5770
    %v5833 = vmul.f32 %v5817, %v5772
    %v5834 = vmul.f32 %v5818, %v5776
    %v5835 = vmul.f32 %v5819, %v5778
    %v5836 = vmul.f32 %v5820, %v5780
    %v5837 = vmul.f32 %v5821, %v5782
    %v5838 = vmul.f32 %v5822, %v5786
    %v5839 = vmul.f32 %v5823, %v5788
    %v5840 = vmul.f32 %v5824, %v5790
    %v5841 = vmul.f32 %v5825, %v5792
    %v5842 = vadd.f32 %v5756, %v5826
    %v5843 = vadd.f32 %v5758, %v5827
    %v5844 = vadd.f32 %v5760, %v5828
    %v5845 = vadd.f32 %v5762, %v5829
    %v5846 = vadd.f32 %v5766, %v5830
    %v5847 = vadd.f32 %v5768, %v5831
    %v5848 = vadd.f32 %v5770, %v5832
    %v5849 = vadd.f32 %v5772, %v5833
    %v5850 = vadd.f32 %v5776, %v5834
    %v5851 = vadd.f32 %v5778, %v5835
    %v5852 = vadd.f32 %v5780, %v5836
    %v5853 = vadd.f32 %v5782, %v5837
    %v5854 = vadd.f32 %v5786, %v5838
    %v5855 = vadd.f32 %v5788, %v5839
    %v5856 = vadd.f32 %v5790, %v5840
    %v5857 = vadd.f32 %v5792, %v5841
    %v5858 = vmul.f32 %v5842, 0.7978846
    %v5859 = vmul.f32 %v5843, 0.7978846
    %v5860 = vmul.f32 %v5844, 0.7978846
    %v5861 = vmul.f32 %v5845, 0.7978846
    %v5862 = vmul.f32 %v5846, 0.7978846
    %v5863 = vmul.f32 %v5847, 0.7978846
    %v5864 = vmul.f32 %v5848, 0.7978846
    %v5865 = vmul.f32 %v5849, 0.7978846
    %v5866 = vmul.f32 %v5850, 0.7978846
    %v5867 = vmul.f32 %v5851, 0.7978846
    %v5868 = vmul.f32 %v5852, 0.7978846
    %v5869 = vmul.f32 %v5853, 0.7978846
    %v5870 = vmul.f32 %v5854, 0.7978846
    %v5871 = vmul.f32 %v5855, 0.7978846
    %v5872 = vmul.f32 %v5856, 0.7978846
    %v5873 = vmul.f32 %v5857, 0.7978846
    %v5874 = vmul.f32 %v5756, 0.5
    %v5875 = vmul.f32 %v5758, 0.5
    %v5876 = vmul.f32 %v5760, 0.5
    %v5877 = vmul.f32 %v5762, 0.5
    %v5878 = vmul.f32 %v5766, 0.5
    %v5879 = vmul.f32 %v5768, 0.5
    %v5880 = vmul.f32 %v5770, 0.5
    %v5881 = vmul.f32 %v5772, 0.5
    %v5882 = vmul.f32 %v5776, 0.5
    %v5883 = vmul.f32 %v5778, 0.5
    %v5884 = vmul.f32 %v5780, 0.5
    %v5885 = vmul.f32 %v5782, 0.5
    %v5886 = vmul.f32 %v5786, 0.5
    %v5887 = vmul.f32 %v5788, 0.5
    %v5888 = vmul.f32 %v5790, 0.5
    %v5889 = vmul.f32 %v5792, 0.5
    %v5890 = vtanh.pop %v5858
    %v5891 = vtanh.pop %v5859
    %v5892 = vtanh.pop %v5860
    %v5893 = vtanh.pop %v5861
    %v5894 = vtanh.pop %v5862
    %v5895 = vtanh.pop %v5863
    %v5896 = vtanh.pop %v5864
    %v5897 = vtanh.pop %v5865
    %v5898 = vtanh.pop %v5866
    %v5899 = vtanh.pop %v5867
    %v5900 = vtanh.pop %v5868
    %v5901 = vtanh.pop %v5869
    %v5902 = vtanh.pop %v5870
    %v5903 = vtanh.pop %v5871
    %v5904 = vtanh.pop %v5872
    %v5905 = vtanh.pop %v5873
    %v5906 = vadd.f32 %v5890, 1.0
    %v5907 = vadd.f32 %v5891, 1.0
    %v5908 = vadd.f32 %v5892, 1.0
    %v5909 = vadd.f32 %v5893, 1.0
    %v5910 = vadd.f32 %v5894, 1.0
    %v5911 = vadd.f32 %v5895, 1.0
    %v5912 = vadd.f32 %v5896, 1.0
    %v5913 = vadd.f32 %v5897, 1.0
    %v5914 = vadd.f32 %v5898, 1.0
    %v5915 = vadd.f32 %v5899, 1.0
    %v5916 = vadd.f32 %v5900, 1.0
    %v5917 = vadd.f32 %v5901, 1.0
    %v5918 = vadd.f32 %v5902, 1.0
    %v5919 = vadd.f32 %v5903, 1.0
    %v5920 = vadd.f32 %v5904, 1.0
    %v5921 = vadd.f32 %v5905, 1.0
    %v5922 = vmul.f32 %v5874, %v5906
    %v5923 = vmul.f32 %v5875, %v5907
    %v5924 = vmul.f32 %v5876, %v5908
    %v5925 = vmul.f32 %v5877, %v5909
    %v5926 = vmul.f32 %v5878, %v5910
    %v5927 = vmul.f32 %v5879, %v5911
    %v5928 = vmul.f32 %v5880, %v5912
    %v5929 = vmul.f32 %v5881, %v5913
    %v5930 = vmul.f32 %v5882, %v5914
    %v5931 = vmul.f32 %v5883, %v5915
    %v5932 = vmul.f32 %v5884, %v5916
    %v5933 = vmul.f32 %v5885, %v5917
    %v5934 = vmul.f32 %v5886, %v5918
    %v5935 = vmul.f32 %v5887, %v5919
    %v5936 = vmul.f32 %v5888, %v5920
    %v5937 = vmul.f32 %v5889, %v5921
    %v5938 = vpack.c.bf16 %v5924, %v5922
    %v5939 = vpack.c.bf16 %v5925, %v5923
    %v5940 = vpack.c.bf16 %v5928, %v5926
    %v5941 = vpack.c.bf16 %v5929, %v5927
    %v5942 = vpack.c.bf16 %v5932, %v5930
    %v5943 = vpack.c.bf16 %v5933, %v5931
    %v5944 = vpack.c.bf16 %v5936, %v5934
    %v5945 = vpack.c.bf16 %v5937, %v5935
    %s5946 = scalar_lea.vmem %s13, 128
    %v5947 = vld [vmem:[%s5946] sm:$0xf]
    %v5948 = vld [vmem:[%s5946 + $0x4] sm:$0xf]
    %v5949 = vld [vmem:[%s5946 + $0x8] sm:$0xf]
    %v5950 = vld [vmem:[%s5946 + $0xc] sm:$0xf]
    %v5951 = vld [vmem:[%s5946 + $0x10] sm:$0xf]
    %v5952 = vld [vmem:[%s5946 + $0x14] sm:$0xf]
    %v5953 = vld [vmem:[%s5946 + $0x18] sm:$0xf]
    %v5954 = vld [vmem:[%s5946 + $0x1c] sm:$0xf]
    %v5955 = vld [vmem:[%s5946 + $0x20] sm:$0xf]
    %v5956 = vld [vmem:[%s5946 + $0x24] sm:$0xf]
    %v5957 = vld [vmem:[%s5946 + $0x28] sm:$0xf]
    %v5958 = vld [vmem:[%s5946 + $0x2c] sm:$0xf]
    %v5959 = vld [vmem:[%s5946 + $0x30] sm:$0xf]
    %v5960 = vld [vmem:[%s5946 + $0x34] sm:$0xf]
    %v5961 = vld [vmem:[%s5946 + $0x38] sm:$0xf]
    %v5962 = vld [vmem:[%s5946 + $0x3c] sm:$0xf]
    %v5963 = vld [vmem:[%s5946 + $0x40] sm:$0xf]
    %v5964 = vld [vmem:[%s5946 + $0x44] sm:$0xf]
    %v5965 = vld [vmem:[%s5946 + $0x48] sm:$0xf]
    %v5966 = vld [vmem:[%s5946 + $0x4c] sm:$0xf]
    %v5967 = vld [vmem:[%s5946 + $0x50] sm:$0xf]
    %v5968 = vld [vmem:[%s5946 + $0x54] sm:$0xf]
    %v5969 = vld [vmem:[%s5946 + $0x58] sm:$0xf]
    %v5970 = vld [vmem:[%s5946 + $0x5c] sm:$0xf]
    %v5971 = vld [vmem:[%s5946 + $0x60] sm:$0xf]
    %v5972 = vld [vmem:[%s5946 + $0x64] sm:$0xf]
    %v5973 = vld [vmem:[%s5946 + $0x68] sm:$0xf]
    %v5974 = vld [vmem:[%s5946 + $0x6c] sm:$0xf]
    %v5975 = vld [vmem:[%s5946 + $0x70] sm:$0xf]
    %v5976 = vld [vmem:[%s5946 + $0x74] sm:$0xf]
    %v5977 = vld [vmem:[%s5946 + $0x78] sm:$0xf]
    %v5978 = vld [vmem:[%s5946 + $0x7c] sm:$0xf]
    %s5979 = scalar_lea.vmem %s14, 1
    %v5980 = vld [vmem:[%s5979] sm:$0x1]
    %v5982 = vlaneseq
    %v5983 = vshrl.u32 %v5982, 7
    %v5984 = vsub.s32 0, %v5983
    %v5985 = vrot.slane %v5980, %v5984
    %v6019 = vunpack.c.l.b16 %v5947
    %v6020 = vunpack.c.l.b16 %v5948
    %v6021 = vunpack.c.l.b16 %v5949
    %v6022 = vunpack.c.l.b16 %v5950
    %v6023 = vunpack.c.l.b16 %v5951
    %v6024 = vunpack.c.l.b16 %v5952
    %v6025 = vunpack.c.l.b16 %v5953
    %v6026 = vunpack.c.l.b16 %v5954
    %v6027 = vunpack.c.l.b16 %v5955
    %v6028 = vunpack.c.l.b16 %v5956
    %v6029 = vunpack.c.l.b16 %v5957
    %v6030 = vunpack.c.l.b16 %v5958
    %v6031 = vunpack.c.l.b16 %v5959
    %v6032 = vunpack.c.l.b16 %v5960
    %v6033 = vunpack.c.l.b16 %v5961
    %v6034 = vunpack.c.l.b16 %v5962
    %v6035 = vunpack.c.l.b16 %v5963
    %v6036 = vunpack.c.l.b16 %v5964
    %v6037 = vunpack.c.l.b16 %v5965
    %v6038 = vunpack.c.l.b16 %v5966
    %v6039 = vunpack.c.l.b16 %v5967
    %v6040 = vunpack.c.l.b16 %v5968
    %v6041 = vunpack.c.l.b16 %v5969
    %v6042 = vunpack.c.l.b16 %v5970
    %v6043 = vunpack.c.l.b16 %v5971
    %v6044 = vunpack.c.l.b16 %v5972
    %v6045 = vunpack.c.l.b16 %v5973
    %v6046 = vunpack.c.l.b16 %v5974
    %v6047 = vunpack.c.l.b16 %v5975
    %v6048 = vunpack.c.l.b16 %v5976
    %v6049 = vunpack.c.l.b16 %v5977
    %v6050 = vunpack.c.l.b16 %v5978
    %v6051 = vpack.c.b16 %v6020, %v6019
    %v6052 = vpack.c.b16 %v6022, %v6021
    %v6053 = vpack.c.b16 %v6024, %v6023
    %v6054 = vpack.c.b16 %v6026, %v6025
    %v6055 = vpack.c.b16 %v6028, %v6027
    %v6056 = vpack.c.b16 %v6030, %v6029
    %v6057 = vpack.c.b16 %v6032, %v6031
    %v6058 = vpack.c.b16 %v6034, %v6033
    %v6059 = vpack.c.b16 %v6036, %v6035
    %v6060 = vpack.c.b16 %v6038, %v6037
    %v6061 = vpack.c.b16 %v6040, %v6039
    %v6062 = vpack.c.b16 %v6042, %v6041
    %v6063 = vpack.c.b16 %v6044, %v6043
    %v6064 = vpack.c.b16 %v6046, %v6045
    %v6065 = vpack.c.b16 %v6048, %v6047
    %v6066 = vpack.c.b16 %v6050, %v6049
    %6083 = vmatprep.subr.bf16.mxu0 0
    %6084 = vmatpush1.bf16.msra.mxu0 %v6051
    %6085 = vmatprep.subr.bf16.mxu0 0
    %6086 = vmatpush1.bf16.msra.mxu0 %v6052
    %6087 = vmatprep.subr.bf16.mxu0 0
    %6088 = vmatpush1.bf16.msra.mxu0 %v6053
    %6089 = vmatprep.subr.bf16.mxu0 0
    %6090 = vmatpush1.bf16.msra.mxu0 %v6054
    %6091 = vmatprep.subr.bf16.mxu0 0
    %6092 = vmatpush1.bf16.msra.mxu0 %v6055
    %6093 = vmatprep.subr.bf16.mxu0 0
    %6094 = vmatpush1.bf16.msra.mxu0 %v6056
    %6095 = vmatprep.subr.bf16.mxu0 0
    %6096 = vmatpush1.bf16.msra.mxu0 %v6057
    %6097 = vmatprep.subr.bf16.mxu0 0
    %6098 = vmatpush1.bf16.msra.mxu0 %v6058
    %6099 = vmatprep.subr.bf16.mxu0 0
    %6100 = vmatpush1.bf16.msra.mxu0 %v6059
    %6101 = vmatprep.subr.bf16.mxu0 0
    %6102 = vmatpush1.bf16.msra.mxu0 %v6060
    %6103 = vmatprep.subr.bf16.mxu0 0
    %6104 = vmatpush1.bf16.msra.mxu0 %v6061
    %6105 = vmatprep.subr.bf16.mxu0 0
    %6106 = vmatpush1.bf16.msra.mxu0 %v6062
    %6107 = vmatprep.subr.bf16.mxu0 0
    %6108 = vmatpush1.bf16.msra.mxu0 %v6063
    %6109 = vmatprep.subr.bf16.mxu0 0
    %6110 = vmatpush1.bf16.msra.mxu0 %v6064
    %6111 = vmatprep.subr.bf16.mxu0 0
    %6112 = vmatpush1.bf16.msra.mxu0 %v6065
    %6113 = vmatprep.subr.bf16.mxu0 0
    %6114 = vmatpush1.bf16.msra.mxu0 %v6066
    %6115 = vmatprep.mubr.bf16.mxu0 %v5939
    %6116 = vmatmul.mubr.bf16.gmra.mrb[0].mxu0 %v5938
    %v6117 = vpop.f32.mrb[0].mxu0
    %v6118 = vadd.f32 %v5985, %v6117
    %v6119 = vpop.f32.mrb[0].mxu0
    %v6120 = vpop.f32.mrb[0].mxu0
    %v6121 = vpop.f32.mrb[0].mxu0
    %6122 = vmatprep.mubr.bf16.mxu0 %v5941
    %6123 = vmatmul.mubr.bf16.gmra.mrb[0].mxu0 %v5940
    %v6124 = vpop.f32.mrb[0].mxu0
    %v6125 = vpop.f32.mrb[0].mxu0
    %v6126 = vpop.f32.mrb[0].mxu0
    %v6127 = vpop.f32.mrb[0].mxu0
    %6128 = vmatprep.mubr.bf16.mxu0 %v5943
    %6129 = vmatmul.mubr.bf16.gmra.mrb[0].mxu0 %v5942
    %v6130 = vpop.f32.mrb[0].mxu0
    %v6131 = vadd.f32 %v5985, %v6130
    %v6132 = vpop.f32.mrb[0].mxu0
    %v6133 = vpop.f32.mrb[0].mxu0
    %v6134 = vpop.f32.mrb[0].mxu0
    %6135 = vmatprep.mubr.bf16.mxu0 %v5945
    %6136 = vmatmul.mubr.bf16.gmra.mrb[0].mxu0 %v5944
    %v6137 = vpop.f32.mrb[0].mxu0
    %v6138 = vpop.f32.mrb[0].mxu0
    %v6139 = vpop.f32.mrb[0].mxu0
    %v6140 = vpop.f32.mrb[0].mxu0
    %6141 = vdwg.mxu0
    %v6142 = vadd.f32 %v5531, %v6118
    %v6143 = vadd.f32 %v5535, %v6131
    %v6145 = vrot.slane %v6143, 7
    %vm6147 = vcmask 1040384
    %v6148 = vsel %vm6147, %v6142, %v6145
    %vm6149 = vcmask 517120
    %v6150 = vsel %vm6149, %v6148, 0.0
    %6151 = vadd.xlane.f32.xlu0 %v6150
    %v6152 = vpop.xlane.xlu0 %6151
    %v6153 = vmul.f32 %v6152, %v311
    %v6154 = vsub.f32 %v6148, %v6153
    %v6155 = vmul.f32 %v6154, %v6154
    %v6156 = vsel %vm6149, %v6155, 0.0
    %6157 = vadd.xlane.f32.xlu0 %v6156
    %v6158 = vpop.xlane.xlu0 %6157
    %v6159 = vmul.f32 %v6158, %v311
    %v6160 = vadd.f32 %v6159, 1e-06
    %v6161 = vrsqrt.pop %v6160
    %v6162 = vmul.f32 %v6154, %v6161
    %v6163 = vpack.c.bf16 %v6162, %v6162
    %v6164 = vld [vmem:[%s15] sm:$0xf]
    %v6165 = vld [vmem:[%s15 + $0x4] sm:$0xf]
    %v6166 = vld [vmem:[%s15 + $0x8] sm:$0xf]
    %v6167 = vld [vmem:[%s15 + $0xc] sm:$0xf]
    %v6168 = vld [vmem:[%s15 + $0x10] sm:$0xf]
    %v6169 = vld [vmem:[%s15 + $0x14] sm:$0xf]
    %v6170 = vld [vmem:[%s15 + $0x18] sm:$0xf]
    %v6171 = vld [vmem:[%s15 + $0x1c] sm:$0xf]
    %v6172 = vld [vmem:[%s16] sm:$0x1]
    %v6174 = vlaneseq
    %v6175 = vshrl.u32 %v6174, 7
    %v6176 = vsub.s32 0, %v6175
    %v6177 = vrot.slane %v6172, %v6176
    %v6187 = vunpack.c.l.b16 %v6164
    %v6188 = vunpack.c.l.b16 %v6165
    %v6189 = vunpack.c.l.b16 %v6166
    %v6190 = vunpack.c.l.b16 %v6167
    %v6191 = vunpack.c.l.b16 %v6168
    %v6192 = vunpack.c.l.b16 %v6169
    %v6193 = vunpack.c.l.b16 %v6170
    %v6194 = vunpack.c.l.b16 %v6171
    %v6195 = vpack.c.b16 %v6188, %v6187
    %v6196 = vpack.c.b16 %v6190, %v6189
    %v6197 = vpack.c.b16 %v6192, %v6191
    %v6198 = vpack.c.b16 %v6194, %v6193
    %v6204 = vsel %vm206, %v6163, 0
    %6206 = vmatprep.subr.bf16.mxu0 0
    %6207 = vmatpush1.bf16.msra.mxu0 %v6195
    %6208 = vmatprep.subr.bf16.mxu0 0
    %6209 = vmatpush1.bf16.msra.mxu0 %v6196
    %6210 = vmatprep.subr.bf16.mxu0 0
    %6211 = vmatpush1.bf16.msra.mxu0 %v6197
    %6212 = vmatprep.subr.bf16.mxu0 0
    %6213 = vmatpush1.bf16.msra.mxu0 %v6198
    %6214 = vmatprep.subr.bf16.mxu0 0
    %6215 = vmatpush1.bf16.msra.mxu0 0
    %6216 = vmatprep.subr.bf16.mxu0 0
    %6217 = vmatpush1.bf16.msra.mxu0 0
    %6218 = vmatprep.subr.bf16.mxu0 0
    %6219 = vmatpush1.bf16.msra.mxu0 0
    %6220 = vmatprep.subr.bf16.mxu0 0
    %6221 = vmatpush1.bf16.msra.mxu0 0
    %6222 = vmatprep.subr.bf16.mxu0 0
    %6223 = vmatpush1.bf16.msra.mxu0 0
    %6224 = vmatprep.subr.bf16.mxu0 0
    %6225 = vmatpush1.bf16.msra.mxu0 0
    %6226 = vmatprep.subr.bf16.mxu0 0
    %6227 = vmatpush1.bf16.msra.mxu0 0
    %6228 = vmatprep.subr.bf16.mxu0 0
    %6229 = vmatpush1.bf16.msra.mxu0 0
    %6230 = vmatprep.subr.bf16.mxu0 0
    %6231 = vmatpush1.bf16.msra.mxu0 0
    %6232 = vmatprep.subr.bf16.mxu0 0
    %6233 = vmatpush1.bf16.msra.mxu0 0
    %6234 = vmatprep.subr.bf16.mxu0 0
    %6235 = vmatpush1.bf16.msra.mxu0 0
    %6236 = vmatprep.subr.bf16.mxu0 0
    %6237 = vmatpush1.bf16.msra.mxu0 0
    %6238 = vmatprep.mubr.bf16.mxu0 0
    %6239 = vmatmul.mubr.bf16.gmra.mrb[0].mxu0 %v6204
    %v6240 = vpop.f32.mrb[0].mxu0
    %v6241 = vadd.f32 %v6177, %v6240
    %v6242 = vpop.f32.mrb[0].mxu0
    %v6243 = vpop.f32.mrb[0].mxu0
    %v6244 = vpop.f32.mrb[0].mxu0
    %6245 = vdwg.mxu0
    %6246 = vst [vmem:[#allocation2] sm:$0x3] %v6241
    // Predicated region
    $region70: #{vit_forward.1} parent=1 // pred_check
      _
    $region71: #{vit_forward.1} parent=1 // pred_check_branch
      %6248 = sbr.rel (0) target = $region73
    $region72: #{vit_forward.1} parent=1 // pred_region
      %s6250 = ssub.s32 32, 32
      %6251 = vsyncadd [#allocation3], %s6250
      %s6253 = sshll.u32 [#allocation2], 4
      %s6254 = int_to_ptr.vmem [resolvable:$true] %s6253
      %6256 = dma.vmem_to_hbm [thread:$0]  %s6254, 32, %s17, [#allocation3]
    $region73: #{vit_forward.1} parent=1 // pred_fallthru
      _
    // Predicated region
    $region74: #{vit_forward.1} parent=1 // pred_check
      _
    $region75: #{vit_forward.1} parent=1 // pred_check_branch
      %6258 = sbr.rel (0) target = $region77
    $region76: #{vit_forward.1} parent=1 // pred_region
      %6259 = dma.done [#allocation3], 32
    $region77: #{vit_forward.1} parent=1 // pred_fallthru
      _
    %6260 = vsyncpa [#allocation3], 1

</llo_original>
